<compile_context>
chip_gen: v5e
topology: v5e:2x2
jax: 0.10.0
libtpu: 0.0.40
codegen_flags: <defaults>
</compile_context>

<pallas_src>
import functools

import numpy as np

import jax
import jax.numpy as jnp
from jax import lax
from jax.experimental import pallas as pl
from jax.experimental.pallas import tpu as pltpu

# ---- model configuration (duration=0.5 -> final_size=16; 32x32 input so the
# conv output spatial 4x4=16 matches the LSTM input size the module requires).
BATCH = 2
IN_CH = 2
IMG = 32
SPEAKER = True
VOICES = 3
DURATION = 0.5
FINAL_SIZE = int(DURATION * 32)            # 16 = seq_len = lstm in = fc in
OUT_DIM = VOICES + 1 if SPEAKER else 2     # 4
HIDDEN = 10
NUM_LAYERS = 10
HC = 32                                    # per-gate lane slot (hidden 10 -> 32)
SEQ = FINAL_SIZE                           # 16 timesteps
KSIZE, STRIDE, PAD = 5, 2, 2
CONV_CHANNELS = [(IN_CH, 8), (8, 32), (32, FINAL_SIZE)]
HO3 = WO3 = IMG // 8                       # conv3 output spatial = 4


# --------------------------------- kernel ----------------------------------

def _fused_kernel(a1_ref,
                  sl1_ref, bt1_ref, bsp1_ref,
                  sl2_ref, bt2_ref, bsp2_ref,
                  sl3_ref, bt3_ref, bsp3_ref,
                  wih_ref, whh_ref, bg_ref, m2_ref, bfc_ref,
                  o_ref, gx_scr):
    f32 = jnp.float32

    # ---- conv stack: Conv(+bias) -> ReLU -> BatchNorm(eval), all as matmuls.
    def conv_layer(act, sl_ref, bt_ref, bsp_ref):
        acc = jnp.dot(jnp.dot(sl_ref[0], act, preferred_element_type=f32),
                      bt_ref[0], preferred_element_type=f32)
        for kh in range(1, KSIZE):
            rows = jnp.dot(sl_ref[kh], act, preferred_element_type=f32)
            acc = acc + jnp.dot(rows, bt_ref[kh], preferred_element_type=f32)
        bias = bsp_ref[0:1, :]
        scale = bsp_ref[1:2, :]
        shift = bsp_ref[2:3, :]
        return jnp.maximum(acc + bias, 0.0) * scale + shift

    a1 = a1_ref[...]                                     # (64, 64)   rows (h,b) cols (ci,w)
    a2 = conv_layer(a1, sl1_ref, bt1_ref, bsp1_ref)      # (32, 128)
    a3 = conv_layer(a2, sl2_ref, bt2_ref, bsp2_ref)      # (16, 256)
    x3 = conv_layer(a3, sl3_ref, bt3_ref, bsp3_ref)      # (8, 64)    rows (ho,b) cols (t,wo)

    # ---- layer-0 LSTM input projection gx = x_seq @ Wih0, consuming x3 directly.
    # x_seq[(t,b), ho*4+wo] = x3[(ho,b), t*4+wo]; the (ho <-> t) swap is folded
    # into a sum over ho of tiny matmuls (no transpose / scatter needed).
    wih0 = wih_ref[0]                                    # (32, 128), rows 0..15 live
    for t in range(SEQ):
        gx_t = jnp.zeros((BATCH, 4 * HC), f32)
        for ho in range(HO3):
            lhs = x3[ho * BATCH:(ho + 1) * BATCH, t * WO3:(t + 1) * WO3]   # (B, 4)
            rhs = wih0[ho * WO3:(ho + 1) * WO3, :]                         # (4, 128)
            gx_t = gx_t + jnp.dot(lhs, rhs, preferred_element_type=f32)
        gx_scr[pl.ds(t * BATCH, BATCH), :] = gx_t

    # ---- 10 stacked LSTM layers, uniform body inside a fori_loop.
    # Layer l reads gx_scr rows (t,b) (= x_t @ wih[l]) in place and overwrites
    # them with the NEXT layer's input projection h_t @ wih[l+1].  wih[L] is the
    # AdaptiveAvgPool1d(1) matrix, so after the loop gx_scr[:, 0] holds
    # mean_j h_last[t, b, j].
    def layer_body(l, carry):
        whh_l = whh_ref[l]             # (32, 128)
        wih_n = wih_ref[l + 1]         # (32, 128)
        b_l = bg_ref[l]                # (1, 128)
        h = jnp.zeros((BATCH, HC), f32)
        c = jnp.zeros((BATCH, HC), f32)
        for t in range(SEQ):           # time loop unrolled (static T=16)
            gx_row = gx_scr[pl.ds(t * BATCH, BATCH), :]
            gates = gx_row + jnp.dot(h, whh_l, preferred_element_type=f32) + b_l
            sig = jax.nn.sigmoid(gates)                    # i / f / o slots
            i_g = sig[:, 0 * HC:1 * HC]
            f_g = sig[:, 1 * HC:2 * HC]
            g_g = jnp.tanh(gates[:, 2 * HC:3 * HC])
            o_g = sig[:, 3 * HC:4 * HC]
            c = f_g * c + i_g * g_g                        # dead lanes stay exactly 0
            h = o_g * jnp.tanh(c)
            gx_scr[pl.ds(t * BATCH, BATCH), :] = jnp.dot(
                h, wih_n, preferred_element_type=f32)      # lane-dense (B,128) store
        return carry

    lax.fori_loop(0, NUM_LAYERS, layer_body, 0)

    # ---- AdaptiveAvgPool1d(1) + Linear epilogue, folded into one tiny reduce.
    pooled = gx_scr[:, 0:1]                                # (T*B, 1)
    o_ref[...] = jnp.sum(m2_ref[...] * pooled, axis=0, keepdims=True) + bfc_ref[...]


def _fused_call(inputs):
    return pl.pallas_call(
        _fused_kernel,
        out_shape=jax.ShapeDtypeStruct((1, BATCH * OUT_DIM), jnp.float32),
        scratch_shapes=[pltpu.VMEM((SEQ * BATCH, 4 * HC), jnp.float32)],
    )(*inputs)


# ------------------------------ forward pass --------------------------------

def neural_net_forward(params, x):
    # x is NCHW (B, 2, 32, 32) exactly like the PyTorch module.  One relayout to
    # the (h*B, ci*W) layout the fused kernel expects, one pallas_call, one
    # reshape of the (1, B*Out) result.
    B, C, H, W = x.shape
    a1 = jnp.transpose(x, (2, 0, 1, 3)).reshape(H * B, C * W)
    out = _fused_call((a1,) + params["mats"])
    return out.reshape(B, OUT_DIM)


# -------------------------------- parameters --------------------------------

def init_params(key):
    eps = 1e-5

    def nrm(k, shape, scl=0.1):
        return scl * jax.random.normal(k, shape, dtype=jnp.float32)

    keys = iter(jax.random.split(key, 64))

    # ---- conv layers: fold conv weight + stride-2 patch selection into per-kh
    # matmul operands.  SL_kh (left) selects unpadded input rows 2*ho+kh-2 per
    # batch (all-zero rows implement H padding); BigT_kh (right) applies the 5
    # kw taps with the conv weights and emits columns (cout, wo) (zero entries
    # implement W padding).
    conv_mats = []
    Hin = IMG
    for (cin, cout) in CONV_CHANNELS:
        Win = Hin
        Ho, Wo = Hin // 2, Win // 2

        w = np.asarray(nrm(next(keys), (cout, cin, KSIZE, KSIZE)))
        b = np.asarray(nrm(next(keys), (cout,)))
        gamma = np.asarray(1.0 + nrm(next(keys), (cout,)))
        beta = np.asarray(nrm(next(keys), (cout,)))
        rmean = np.asarray(nrm(next(keys), (cout,)))
        rvar = np.asarray(1.0 + 0.1 * jnp.abs(
            jax.random.normal(next(keys), (cout,), dtype=jnp.float32)))
        scale = gamma / np.sqrt(rvar + eps)          # folded eval-mode BatchNorm
        shift = beta - rmean * scale

        sl = np.zeros((KSIZE, Ho * BATCH, Hin * BATCH), np.float32)
        for kh in range(KSIZE):
            for ho in range(Ho):
                hh = STRIDE * ho + kh - PAD
                if 0 <= hh < Hin:
                    for bb in range(BATCH):
                        sl[kh, ho * BATCH + bb, hh * BATCH + bb] = 1.0

        bt = np.zeros((KSIZE, cin * Win, cout * Wo), np.float32)
        for kh in range(KSIZE):
            for wo in range(Wo):
                for kw in range(KSIZE):
                    wc = STRIDE * wo + kw - PAD
                    if 0 <= wc < Win:
                        for ci in range(cin):
                            bt[kh, ci * Win + wc, np.arange(cout) * Wo + wo] = \
                                w[:, ci, kh, kw]

        bsp = np.zeros((3, cout * Wo), np.float32)
        bsp[0] = np.repeat(b, Wo)
        bsp[1] = np.repeat(scale, Wo)
        bsp[2] = np.repeat(shift, Wo)

        conv_mats += [jnp.asarray(sl), jnp.asarray(bt), jnp.asarray(bsp)]
        Hin //= 2

    # ---- LSTM weights: gates packed into one 128-lane group (4 slots of HC=32
    # lanes, 10 live each).  Dead rows/cols/bias are exactly zero so padded
    # lanes of h/c/gx stay zero through the recurrence.  wih[NUM_LAYERS] is the
    # folded AdaptiveAvgPool1d(1) matrix (column 0 = 1/hidden).
    wih = np.zeros((NUM_LAYERS + 1, HC, 4 * HC), np.float32)
    whh = np.zeros((NUM_LAYERS, HC, 4 * HC), np.float32)
    bg = np.zeros((NUM_LAYERS, 1, 4 * HC), np.float32)
    in_size = FINAL_SIZE
    for l in range(NUM_LAYERS):
        w_ih = np.asarray(nrm(next(keys), (4 * HIDDEN, in_size)))
        w_hh = np.asarray(nrm(next(keys), (4 * HIDDEN, HIDDEN)))
        b_ih = np.asarray(nrm(next(keys), (4 * HIDDEN,)))
        b_hh = np.asarray(nrm(next(keys), (4 * HIDDEN,)))
        bsum = b_ih + b_hh
        for g in range(4):                    # PyTorch gate order i, f, g, o
            wih[l, 0:in_size, g * HC:g * HC + HIDDEN] = \
                w_ih[g * HIDDEN:(g + 1) * HIDDEN, :].T
            whh[l, 0:HIDDEN, g * HC:g * HC + HIDDEN] = \
                w_hh[g * HIDDEN:(g + 1) * HIDDEN, :].T
            bg[l, 0, g * HC:g * HC + HIDDEN] = bsum[g * HIDDEN:(g + 1) * HIDDEN]
        in_size = HIDDEN
    wih[NUM_LAYERS, 0:HIDDEN, 0] = 1.0 / HIDDEN   # AdaptiveAvgPool1d(1) over hidden

    # ---- final Linear folded over the (t, b) rows of the pooled sequence.
    fc_w = np.asarray(nrm(next(keys), (OUT_DIM, FINAL_SIZE)))
    fc_b = np.asarray(nrm(next(keys), (OUT_DIM,)))
    m2 = np.zeros((SEQ * BATCH, BATCH * OUT_DIM), np.float32)
    for t in range(SEQ):
        for bb in range(BATCH):
            m2[t * BATCH + bb, bb * OUT_DIM:(bb + 1) * OUT_DIM] = fc_w[:, t]
    bfc = np.tile(fc_b, BATCH)[None, :]

    mats = tuple(conv_mats) + (jnp.asarray(wih), jnp.asarray(whh),
                               jnp.asarray(bg), jnp.asarray(m2),
                               jnp.asarray(bfc))
    return dict(mats=mats)


if __name__ == "__main__":
    key = jax.random.PRNGKey(0)
    kx, kp = jax.random.split(key)

    x = jax.random.normal(kx, (BATCH, IN_CH, IMG, IMG), dtype=jnp.float32)
    params = init_params(kp)

    fwd = jax.jit(functools.partial(neural_net_forward, params))
    out = fwd(x)
    jax.block_until_ready(out)

    assert out.shape == (BATCH, OUT_DIM), out.shape
    assert bool(jnp.all(jnp.isfinite(out)))
    print("KERNEL_OK")
</pallas_src>

<mosaic_0001>
module attributes {stable_mosaic.version = 11 : i64} {
  func.func @_fused_kernel(%arg0: memref<64x64xf32, #tpu.memory_space<vmem>>, %arg1: memref<5x32x64xf32, #tpu.memory_space<vmem>>, %arg2: memref<5x64x128xf32, #tpu.memory_space<vmem>>, %arg3: memref<3x128xf32, #tpu.memory_space<vmem>>, %arg4: memref<5x16x32xf32, #tpu.memory_space<vmem>>, %arg5: memref<5x128x256xf32, #tpu.memory_space<vmem>>, %arg6: memref<3x256xf32, #tpu.memory_space<vmem>>, %arg7: memref<5x8x16xf32, #tpu.memory_space<vmem>>, %arg8: memref<5x256x64xf32, #tpu.memory_space<vmem>>, %arg9: memref<3x64xf32, #tpu.memory_space<vmem>>, %arg10: memref<11x32x128xf32, #tpu.memory_space<vmem>>, %arg11: memref<10x32x128xf32, #tpu.memory_space<vmem>>, %arg12: memref<10x1x128xf32, #tpu.memory_space<vmem>>, %arg13: memref<32x8xf32, #tpu.memory_space<vmem>>, %arg14: memref<1x8xf32, #tpu.memory_space<vmem>>, %arg15: memref<1x8xf32, #tpu.memory_space<vmem>>, %arg16: memref<32x128xf32, #tpu.memory_space<vmem>>) attributes {dimension_semantics = [], scalar_prefetch = 0 : i64, scratch_operands = 1 : i64, tpu.core_type = #tpu.core_type<tc>} {
    %c0 = arith.constant 0 : index
    %c0_0 = arith.constant 0 : index
    %0 = vector.load %arg0[%c0, %c0_0] : memref<64x64xf32, #tpu.memory_space<vmem>>, vector<64x64xf32>
    %c0_1 = arith.constant 0 : index
    %c0_2 = arith.constant 0 : index
    %c0_3 = arith.constant 0 : index
    %1 = vector.load %arg1[%c0_1, %c0_2, %c0_3] : memref<5x32x64xf32, #tpu.memory_space<vmem>>, vector<1x32x64xf32>
    %2 = vector.shape_cast %1 : vector<1x32x64xf32> to vector<32x64xf32>
    %cst = arith.constant dense<0.000000e+00> : vector<32x64xf32>
    %3 = tpu.matmul %2, %0, %cst {dimension_numbers = #tpu.dot_dimension_numbers<[1], [0], [0], [1], [0, 0, 1, 1], [], []>} : vector<32x64xf32>, vector<64x64xf32>, vector<32x64xf32> -> vector<32x64xf32>
    %c0_4 = arith.constant 0 : index
    %c0_5 = arith.constant 0 : index
    %c0_6 = arith.constant 0 : index
    %4 = vector.load %arg2[%c0_4, %c0_5, %c0_6] : memref<5x64x128xf32, #tpu.memory_space<vmem>>, vector<1x64x128xf32>
    %5 = vector.shape_cast %4 : vector<1x64x128xf32> to vector<64x128xf32>
    %cst_7 = arith.constant dense<0.000000e+00> : vector<32x128xf32>
    %6 = tpu.matmul %3, %5, %cst_7 {dimension_numbers = #tpu.dot_dimension_numbers<[1], [0], [0], [1], [0, 0, 1, 1], [], []>} : vector<32x64xf32>, vector<64x128xf32>, vector<32x128xf32> -> vector<32x128xf32>
    %c1 = arith.constant 1 : index
    %c0_8 = arith.constant 0 : index
    %c0_9 = arith.constant 0 : index
    %7 = vector.load %arg1[%c1, %c0_8, %c0_9] : memref<5x32x64xf32, #tpu.memory_space<vmem>>, vector<1x32x64xf32>
    %8 = vector.shape_cast %7 : vector<1x32x64xf32> to vector<32x64xf32>
    %cst_10 = arith.constant dense<0.000000e+00> : vector<32x64xf32>
    %9 = tpu.matmul %8, %0, %cst_10 {dimension_numbers = #tpu.dot_dimension_numbers<[1], [0], [0], [1], [0, 0, 1, 1], [], []>} : vector<32x64xf32>, vector<64x64xf32>, vector<32x64xf32> -> vector<32x64xf32>
    %c1_11 = arith.constant 1 : index
    %c0_12 = arith.constant 0 : index
    %c0_13 = arith.constant 0 : index
    %10 = vector.load %arg2[%c1_11, %c0_12, %c0_13] : memref<5x64x128xf32, #tpu.memory_space<vmem>>, vector<1x64x128xf32>
    %11 = vector.shape_cast %10 : vector<1x64x128xf32> to vector<64x128xf32>
    %cst_14 = arith.constant dense<0.000000e+00> : vector<32x128xf32>
    %12 = tpu.matmul %9, %11, %cst_14 {dimension_numbers = #tpu.dot_dimension_numbers<[1], [0], [0], [1], [0, 0, 1, 1], [], []>} : vector<32x64xf32>, vector<64x128xf32>, vector<32x128xf32> -> vector<32x128xf32>
    %13 = arith.addf %6, %12 : vector<32x128xf32>
    %c2 = arith.constant 2 : index
    %c0_15 = arith.constant 0 : index
    %c0_16 = arith.constant 0 : index
    %14 = vector.load %arg1[%c2, %c0_15, %c0_16] : memref<5x32x64xf32, #tpu.memory_space<vmem>>, vector<1x32x64xf32>
    %15 = vector.shape_cast %14 : vector<1x32x64xf32> to vector<32x64xf32>
    %cst_17 = arith.constant dense<0.000000e+00> : vector<32x64xf32>
    %16 = tpu.matmul %15, %0, %cst_17 {dimension_numbers = #tpu.dot_dimension_numbers<[1], [0], [0], [1], [0, 0, 1, 1], [], []>} : vector<32x64xf32>, vector<64x64xf32>, vector<32x64xf32> -> vector<32x64xf32>
    %c2_18 = arith.constant 2 : index
    %c0_19 = arith.constant 0 : index
    %c0_20 = arith.constant 0 : index
    %17 = vector.load %arg2[%c2_18, %c0_19, %c0_20] : memref<5x64x128xf32, #tpu.memory_space<vmem>>, vector<1x64x128xf32>
    %18 = vector.shape_cast %17 : vector<1x64x128xf32> to vector<64x128xf32>
    %cst_21 = arith.constant dense<0.000000e+00> : vector<32x128xf32>
    %19 = tpu.matmul %16, %18, %cst_21 {dimension_numbers = #tpu.dot_dimension_numbers<[1], [0], [0], [1], [0, 0, 1, 1], [], []>} : vector<32x64xf32>, vector<64x128xf32>, vector<32x128xf32> -> vector<32x128xf32>
    %20 = arith.addf %13, %19 : vector<32x128xf32>
    %c3 = arith.constant 3 : index
    %c0_22 = arith.constant 0 : index
    %c0_23 = arith.constant 0 : index
    %21 = vector.load %arg1[%c3, %c0_22, %c0_23] : memref<5x32x64xf32, #tpu.memory_space<vmem>>, vector<1x32x64xf32>
    %22 = vector.shape_cast %21 : vector<1x32x64xf32> to vector<32x64xf32>
    %cst_24 = arith.constant dense<0.000000e+00> : vector<32x64xf32>
    %23 = tpu.matmul %22, %0, %cst_24 {dimension_numbers = #tpu.dot_dimension_numbers<[1], [0], [0], [1], [0, 0, 1, 1], [], []>} : vector<32x64xf32>, vector<64x64xf32>, vector<32x64xf32> -> vector<32x64xf32>
    %c3_25 = arith.constant 3 : index
    %c0_26 = arith.constant 0 : index
    %c0_27 = arith.constant 0 : index
    %24 = vector.load %arg2[%c3_25, %c0_26, %c0_27] : memref<5x64x128xf32, #tpu.memory_space<vmem>>, vector<1x64x128xf32>
    %25 = vector.shape_cast %24 : vector<1x64x128xf32> to vector<64x128xf32>
    %cst_28 = arith.constant dense<0.000000e+00> : vector<32x128xf32>
    %26 = tpu.matmul %23, %25, %cst_28 {dimension_numbers = #tpu.dot_dimension_numbers<[1], [0], [0], [1], [0, 0, 1, 1], [], []>} : vector<32x64xf32>, vector<64x128xf32>, vector<32x128xf32> -> vector<32x128xf32>
    %27 = arith.addf %20, %26 : vector<32x128xf32>
    %c4 = arith.constant 4 : index
    %c0_29 = arith.constant 0 : index
    %c0_30 = arith.constant 0 : index
    %28 = vector.load %arg1[%c4, %c0_29, %c0_30] : memref<5x32x64xf32, #tpu.memory_space<vmem>>, vector<1x32x64xf32>
    %29 = vector.shape_cast %28 : vector<1x32x64xf32> to vector<32x64xf32>
    %cst_31 = arith.constant dense<0.000000e+00> : vector<32x64xf32>
    %30 = tpu.matmul %29, %0, %cst_31 {dimension_numbers = #tpu.dot_dimension_numbers<[1], [0], [0], [1], [0, 0, 1, 1], [], []>} : vector<32x64xf32>, vector<64x64xf32>, vector<32x64xf32> -> vector<32x64xf32>
    %c4_32 = arith.constant 4 : index
    %c0_33 = arith.constant 0 : index
    %c0_34 = arith.constant 0 : index
    %31 = vector.load %arg2[%c4_32, %c0_33, %c0_34] : memref<5x64x128xf32, #tpu.memory_space<vmem>>, vector<1x64x128xf32>
    %32 = vector.shape_cast %31 : vector<1x64x128xf32> to vector<64x128xf32>
    %cst_35 = arith.constant dense<0.000000e+00> : vector<32x128xf32>
    %33 = tpu.matmul %30, %32, %cst_35 {dimension_numbers = #tpu.dot_dimension_numbers<[1], [0], [0], [1], [0, 0, 1, 1], [], []>} : vector<32x64xf32>, vector<64x128xf32>, vector<32x128xf32> -> vector<32x128xf32>
    %34 = arith.addf %27, %33 : vector<32x128xf32>
    %c0_36 = arith.constant 0 : index
    %c0_37 = arith.constant 0 : index
    %35 = vector.load %arg3[%c0_36, %c0_37] : memref<3x128xf32, #tpu.memory_space<vmem>>, vector<1x128xf32>
    %c1_38 = arith.constant 1 : index
    %c0_39 = arith.constant 0 : index
    %36 = vector.load %arg3[%c1_38, %c0_39] : memref<3x128xf32, #tpu.memory_space<vmem>>, vector<1x128xf32>
    %c2_40 = arith.constant 2 : index
    %c0_41 = arith.constant 0 : index
    %37 = vector.load %arg3[%c2_40, %c0_41] : memref<3x128xf32, #tpu.memory_space<vmem>>, vector<1x128xf32>
    %38 = vector.broadcast %35 : vector<1x128xf32> to vector<32x128xf32>
    %39 = arith.addf %34, %38 : vector<32x128xf32>
    %cst_42 = arith.constant 0.000000e+00 : f32
    %40 = vector.broadcast %cst_42 : f32 to vector<32x128xf32>
    %41 = arith.maximumf %39, %40 : vector<32x128xf32>
    %42 = vector.broadcast %36 : vector<1x128xf32> to vector<32x128xf32>
    %43 = arith.mulf %41, %42 : vector<32x128xf32>
    %44 = vector.broadcast %37 : vector<1x128xf32> to vector<32x128xf32>
    %45 = arith.addf %43, %44 : vector<32x128xf32>
    %c0_43 = arith.constant 0 : index
    %c0_44 = arith.constant 0 : index
    %c0_45 = arith.constant 0 : index
    %46 = vector.load %arg4[%c0_43, %c0_44, %c0_45] : memref<5x16x32xf32, #tpu.memory_space<vmem>>, vector<1x16x32xf32>
    %47 = vector.shape_cast %46 : vector<1x16x32xf32> to vector<16x32xf32>
    %cst_46 = arith.constant dense<0.000000e+00> : vector<16x128xf32>
    %48 = tpu.matmul %47, %45, %cst_46 {dimension_numbers = #tpu.dot_dimension_numbers<[1], [0], [0], [1], [0, 0, 1, 1], [], []>} : vector<16x32xf32>, vector<32x128xf32>, vector<16x128xf32> -> vector<16x128xf32>
    %c0_47 = arith.constant 0 : index
    %c0_48 = arith.constant 0 : index
    %c0_49 = arith.constant 0 : index
    %49 = vector.load %arg5[%c0_47, %c0_48, %c0_49] : memref<5x128x256xf32, #tpu.memory_space<vmem>>, vector<1x128x256xf32>
    %50 = vector.shape_cast %49 : vector<1x128x256xf32> to vector<128x256xf32>
    %cst_50 = arith.constant dense<0.000000e+00> : vector<16x256xf32>
    %51 = tpu.matmul %48, %50, %cst_50 {dimension_numbers = #tpu.dot_dimension_numbers<[1], [0], [0], [1], [0, 0, 1, 1], [], []>} : vector<16x128xf32>, vector<128x256xf32>, vector<16x256xf32> -> vector<16x256xf32>
    %c1_51 = arith.constant 1 : index
    %c0_52 = arith.constant 0 : index
    %c0_53 = arith.constant 0 : index
    %52 = vector.load %arg4[%c1_51, %c0_52, %c0_53] : memref<5x16x32xf32, #tpu.memory_space<vmem>>, vector<1x16x32xf32>
    %53 = vector.shape_cast %52 : vector<1x16x32xf32> to vector<16x32xf32>
    %cst_54 = arith.constant dense<0.000000e+00> : vector<16x128xf32>
    %54 = tpu.matmul %53, %45, %cst_54 {dimension_numbers = #tpu.dot_dimension_numbers<[1], [0], [0], [1], [0, 0, 1, 1], [], []>} : vector<16x32xf32>, vector<32x128xf32>, vector<16x128xf32> -> vector<16x128xf32>
    %c1_55 = arith.constant 1 : index
    %c0_56 = arith.constant 0 : index
    %c0_57 = arith.constant 0 : index
    %55 = vector.load %arg5[%c1_55, %c0_56, %c0_57] : memref<5x128x256xf32, #tpu.memory_space<vmem>>, vector<1x128x256xf32>
    %56 = vector.shape_cast %55 : vector<1x128x256xf32> to vector<128x256xf32>
    %cst_58 = arith.constant dense<0.000000e+00> : vector<16x256xf32>
    %57 = tpu.matmul %54, %56, %cst_58 {dimension_numbers = #tpu.dot_dimension_numbers<[1], [0], [0], [1], [0, 0, 1, 1], [], []>} : vector<16x128xf32>, vector<128x256xf32>, vector<16x256xf32> -> vector<16x256xf32>
    %58 = arith.addf %51, %57 : vector<16x256xf32>
    %c2_59 = arith.constant 2 : index
    %c0_60 = arith.constant 0 : index
    %c0_61 = arith.constant 0 : index
    %59 = vector.load %arg4[%c2_59, %c0_60, %c0_61] : memref<5x16x32xf32, #tpu.memory_space<vmem>>, vector<1x16x32xf32>
    %60 = vector.shape_cast %59 : vector<1x16x32xf32> to vector<16x32xf32>
    %cst_62 = arith.constant dense<0.000000e+00> : vector<16x128xf32>
    %61 = tpu.matmul %60, %45, %cst_62 {dimension_numbers = #tpu.dot_dimension_numbers<[1], [0], [0], [1], [0, 0, 1, 1], [], []>} : vector<16x32xf32>, vector<32x128xf32>, vector<16x128xf32> -> vector<16x128xf32>
    %c2_63 = arith.constant 2 : index
    %c0_64 = arith.constant 0 : index
    %c0_65 = arith.constant 0 : index
    %62 = vector.load %arg5[%c2_63, %c0_64, %c0_65] : memref<5x128x256xf32, #tpu.memory_space<vmem>>, vector<1x128x256xf32>
    %63 = vector.shape_cast %62 : vector<1x128x256xf32> to vector<128x256xf32>
    %cst_66 = arith.constant dense<0.000000e+00> : vector<16x256xf32>
    %64 = tpu.matmul %61, %63, %cst_66 {dimension_numbers = #tpu.dot_dimension_numbers<[1], [0], [0], [1], [0, 0, 1, 1], [], []>} : vector<16x128xf32>, vector<128x256xf32>, vector<16x256xf32> -> vector<16x256xf32>
    %65 = arith.addf %58, %64 : vector<16x256xf32>
    %c3_67 = arith.constant 3 : index
    %c0_68 = arith.constant 0 : index
    %c0_69 = arith.constant 0 : index
    %66 = vector.load %arg4[%c3_67, %c0_68, %c0_69] : memref<5x16x32xf32, #tpu.memory_space<vmem>>, vector<1x16x32xf32>
    %67 = vector.shape_cast %66 : vector<1x16x32xf32> to vector<16x32xf32>
    %cst_70 = arith.constant dense<0.000000e+00> : vector<16x128xf32>
    %68 = tpu.matmul %67, %45, %cst_70 {dimension_numbers = #tpu.dot_dimension_numbers<[1], [0], [0], [1], [0, 0, 1, 1], [], []>} : vector<16x32xf32>, vector<32x128xf32>, vector<16x128xf32> -> vector<16x128xf32>
    %c3_71 = arith.constant 3 : index
    %c0_72 = arith.constant 0 : index
    %c0_73 = arith.constant 0 : index
    %69 = vector.load %arg5[%c3_71, %c0_72, %c0_73] : memref<5x128x256xf32, #tpu.memory_space<vmem>>, vector<1x128x256xf32>
    %70 = vector.shape_cast %69 : vector<1x128x256xf32> to vector<128x256xf32>
    %cst_74 = arith.constant dense<0.000000e+00> : vector<16x256xf32>
    %71 = tpu.matmul %68, %70, %cst_74 {dimension_numbers = #tpu.dot_dimension_numbers<[1], [0], [0], [1], [0, 0, 1, 1], [], []>} : vector<16x128xf32>, vector<128x256xf32>, vector<16x256xf32> -> vector<16x256xf32>
    %72 = arith.addf %65, %71 : vector<16x256xf32>
    %c4_75 = arith.constant 4 : index
    %c0_76 = arith.constant 0 : index
    %c0_77 = arith.constant 0 : index
    %73 = vector.load %arg4[%c4_75, %c0_76, %c0_77] : memref<5x16x32xf32, #tpu.memory_space<vmem>>, vector<1x16x32xf32>
    %74 = vector.shape_cast %73 : vector<1x16x32xf32> to vector<16x32xf32>
    %cst_78 = arith.constant dense<0.000000e+00> : vector<16x128xf32>
    %75 = tpu.matmul %74, %45, %cst_78 {dimension_numbers = #tpu.dot_dimension_numbers<[1], [0], [0], [1], [0, 0, 1, 1], [], []>} : vector<16x32xf32>, vector<32x128xf32>, vector<16x128xf32> -> vector<16x128xf32>
    %c4_79 = arith.constant 4 : index
    %c0_80 = arith.constant 0 : index
    %c0_81 = arith.constant 0 : index
    %76 = vector.load %arg5[%c4_79, %c0_80, %c0_81] : memref<5x128x256xf32, #tpu.memory_space<vmem>>, vector<1x128x256xf32>
    %77 = vector.shape_cast %76 : vector<1x128x256xf32> to vector<128x256xf32>
    %cst_82 = arith.constant dense<0.000000e+00> : vector<16x256xf32>
    %78 = tpu.matmul %75, %77, %cst_82 {dimension_numbers = #tpu.dot_dimension_numbers<[1], [0], [0], [1], [0, 0, 1, 1], [], []>} : vector<16x128xf32>, vector<128x256xf32>, vector<16x256xf32> -> vector<16x256xf32>
    %79 = arith.addf %72, %78 : vector<16x256xf32>
    %c0_83 = arith.constant 0 : index
    %c0_84 = arith.constant 0 : index
    %80 = vector.load %arg6[%c0_83, %c0_84] : memref<3x256xf32, #tpu.memory_space<vmem>>, vector<1x256xf32>
    %c1_85 = arith.constant 1 : index
    %c0_86 = arith.constant 0 : index
    %81 = vector.load %arg6[%c1_85, %c0_86] : memref<3x256xf32, #tpu.memory_space<vmem>>, vector<1x256xf32>
    %c2_87 = arith.constant 2 : index
    %c0_88 = arith.constant 0 : index
    %82 = vector.load %arg6[%c2_87, %c0_88] : memref<3x256xf32, #tpu.memory_space<vmem>>, vector<1x256xf32>
    %83 = vector.broadcast %80 : vector<1x256xf32> to vector<16x256xf32>
    %84 = arith.addf %79, %83 : vector<16x256xf32>
    %cst_89 = arith.constant 0.000000e+00 : f32
    %85 = vector.broadcast %cst_89 : f32 to vector<16x256xf32>
    %86 = arith.maximumf %84, %85 : vector<16x256xf32>
    %87 = vector.broadcast %81 : vector<1x256xf32> to vector<16x256xf32>
    %88 = arith.mulf %86, %87 : vector<16x256xf32>
    %89 = vector.broadcast %82 : vector<1x256xf32> to vector<16x256xf32>
    %90 = arith.addf %88, %89 : vector<16x256xf32>
    %c0_90 = arith.constant 0 : index
    %c0_91 = arith.constant 0 : index
    %c0_92 = arith.constant 0 : index
    %91 = vector.load %arg7[%c0_90, %c0_91, %c0_92] : memref<5x8x16xf32, #tpu.memory_space<vmem>>, vector<1x8x16xf32>
    %92 = vector.shape_cast %91 : vector<1x8x16xf32> to vector<8x16xf32>
    %cst_93 = arith.constant dense<0.000000e+00> : vector<8x256xf32>
    %93 = tpu.matmul %92, %90, %cst_93 {dimension_numbers = #tpu.dot_dimension_numbers<[1], [0], [0], [1], [0, 0, 1, 1], [], []>} : vector<8x16xf32>, vector<16x256xf32>, vector<8x256xf32> -> vector<8x256xf32>
    %c0_94 = arith.constant 0 : index
    %c0_95 = arith.constant 0 : index
    %c0_96 = arith.constant 0 : index
    %94 = vector.load %arg8[%c0_94, %c0_95, %c0_96] : memref<5x256x64xf32, #tpu.memory_space<vmem>>, vector<1x256x64xf32>
    %95 = vector.shape_cast %94 : vector<1x256x64xf32> to vector<256x64xf32>
    %cst_97 = arith.constant dense<0.000000e+00> : vector<8x64xf32>
    %96 = tpu.matmul %93, %95, %cst_97 {dimension_numbers = #tpu.dot_dimension_numbers<[1], [0], [0], [1], [0, 0, 1, 1], [], []>} : vector<8x256xf32>, vector<256x64xf32>, vector<8x64xf32> -> vector<8x64xf32>
    %c1_98 = arith.constant 1 : index
    %c0_99 = arith.constant 0 : index
    %c0_100 = arith.constant 0 : index
    %97 = vector.load %arg7[%c1_98, %c0_99, %c0_100] : memref<5x8x16xf32, #tpu.memory_space<vmem>>, vector<1x8x16xf32>
    %98 = vector.shape_cast %97 : vector<1x8x16xf32> to vector<8x16xf32>
    %cst_101 = arith.constant dense<0.000000e+00> : vector<8x256xf32>
    %99 = tpu.matmul %98, %90, %cst_101 {dimension_numbers = #tpu.dot_dimension_numbers<[1], [0], [0], [1], [0, 0, 1, 1], [], []>} : vector<8x16xf32>, vector<16x256xf32>, vector<8x256xf32> -> vector<8x256xf32>
    %c1_102 = arith.constant 1 : index
    %c0_103 = arith.constant 0 : index
    %c0_104 = arith.constant 0 : index
    %100 = vector.load %arg8[%c1_102, %c0_103, %c0_104] : memref<5x256x64xf32, #tpu.memory_space<vmem>>, vector<1x256x64xf32>
    %101 = vector.shape_cast %100 : vector<1x256x64xf32> to vector<256x64xf32>
    %cst_105 = arith.constant dense<0.000000e+00> : vector<8x64xf32>
    %102 = tpu.matmul %99, %101, %cst_105 {dimension_numbers = #tpu.dot_dimension_numbers<[1], [0], [0], [1], [0, 0, 1, 1], [], []>} : vector<8x256xf32>, vector<256x64xf32>, vector<8x64xf32> -> vector<8x64xf32>
    %103 = arith.addf %96, %102 : vector<8x64xf32>
    %c2_106 = arith.constant 2 : index
    %c0_107 = arith.constant 0 : index
    %c0_108 = arith.constant 0 : index
    %104 = vector.load %arg7[%c2_106, %c0_107, %c0_108] : memref<5x8x16xf32, #tpu.memory_space<vmem>>, vector<1x8x16xf32>
    %105 = vector.shape_cast %104 : vector<1x8x16xf32> to vector<8x16xf32>
    %cst_109 = arith.constant dense<0.000000e+00> : vector<8x256xf32>
    %106 = tpu.matmul %105, %90, %cst_109 {dimension_numbers = #tpu.dot_dimension_numbers<[1], [0], [0], [1], [0, 0, 1, 1], [], []>} : vector<8x16xf32>, vector<16x256xf32>, vector<8x256xf32> -> vector<8x256xf32>
    %c2_110 = arith.constant 2 : index
    %c0_111 = arith.constant 0 : index
    %c0_112 = arith.constant 0 : index
    %107 = vector.load %arg8[%c2_110, %c0_111, %c0_112] : memref<5x256x64xf32, #tpu.memory_space<vmem>>, vector<1x256x64xf32>
    %108 = vector.shape_cast %107 : vector<1x256x64xf32> to vector<256x64xf32>
    %cst_113 = arith.constant dense<0.000000e+00> : vector<8x64xf32>
    %109 = tpu.matmul %106, %108, %cst_113 {dimension_numbers = #tpu.dot_dimension_numbers<[1], [0], [0], [1], [0, 0, 1, 1], [], []>} : vector<8x256xf32>, vector<256x64xf32>, vector<8x64xf32> -> vector<8x64xf32>
    %110 = arith.addf %103, %109 : vector<8x64xf32>
    %c3_114 = arith.constant 3 : index
    %c0_115 = arith.constant 0 : index
    %c0_116 = arith.constant 0 : index
    %111 = vector.load %arg7[%c3_114, %c0_115, %c0_116] : memref<5x8x16xf32, #tpu.memory_space<vmem>>, vector<1x8x16xf32>
    %112 = vector.shape_cast %111 : vector<1x8x16xf32> to vector<8x16xf32>
    %cst_117 = arith.constant dense<0.000000e+00> : vector<8x256xf32>
    %113 = tpu.matmul %112, %90, %cst_117 {dimension_numbers = #tpu.dot_dimension_numbers<[1], [0], [0], [1], [0, 0, 1, 1], [], []>} : vector<8x16xf32>, vector<16x256xf32>, vector<8x256xf32> -> vector<8x256xf32>
    %c3_118 = arith.constant 3 : index
    %c0_119 = arith.constant 0 : index
    %c0_120 = arith.constant 0 : index
    %114 = vector.load %arg8[%c3_118, %c0_119, %c0_120] : memref<5x256x64xf32, #tpu.memory_space<vmem>>, vector<1x256x64xf32>
    %115 = vector.shape_cast %114 : vector<1x256x64xf32> to vector<256x64xf32>
    %cst_121 = arith.constant dense<0.000000e+00> : vector<8x64xf32>
    %116 = tpu.matmul %113, %115, %cst_121 {dimension_numbers = #tpu.dot_dimension_numbers<[1], [0], [0], [1], [0, 0, 1, 1], [], []>} : vector<8x256xf32>, vector<256x64xf32>, vector<8x64xf32> -> vector<8x64xf32>
    %117 = arith.addf %110, %116 : vector<8x64xf32>
    %c4_122 = arith.constant 4 : index
    %c0_123 = arith.constant 0 : index
    %c0_124 = arith.constant 0 : index
    %118 = vector.load %arg7[%c4_122, %c0_123, %c0_124] : memref<5x8x16xf32, #tpu.memory_space<vmem>>, vector<1x8x16xf32>
    %119 = vector.shape_cast %118 : vector<1x8x16xf32> to vector<8x16xf32>
    %cst_125 = arith.constant dense<0.000000e+00> : vector<8x256xf32>
    %120 = tpu.matmul %119, %90, %cst_125 {dimension_numbers = #tpu.dot_dimension_numbers<[1], [0], [0], [1], [0, 0, 1, 1], [], []>} : vector<8x16xf32>, vector<16x256xf32>, vector<8x256xf32> -> vector<8x256xf32>
    %c4_126 = arith.constant 4 : index
    %c0_127 = arith.constant 0 : index
    %c0_128 = arith.constant 0 : index
    %121 = vector.load %arg8[%c4_126, %c0_127, %c0_128] : memref<5x256x64xf32, #tpu.memory_space<vmem>>, vector<1x256x64xf32>
    %122 = vector.shape_cast %121 : vector<1x256x64xf32> to vector<256x64xf32>
    %cst_129 = arith.constant dense<0.000000e+00> : vector<8x64xf32>
    %123 = tpu.matmul %120, %122, %cst_129 {dimension_numbers = #tpu.dot_dimension_numbers<[1], [0], [0], [1], [0, 0, 1, 1], [], []>} : vector<8x256xf32>, vector<256x64xf32>, vector<8x64xf32> -> vector<8x64xf32>
    %124 = arith.addf %117, %123 : vector<8x64xf32>
    %c0_130 = arith.constant 0 : index
    %c0_131 = arith.constant 0 : index
    %125 = vector.load %arg9[%c0_130, %c0_131] : memref<3x64xf32, #tpu.memory_space<vmem>>, vector<1x64xf32>
    %c1_132 = arith.constant 1 : index
    %c0_133 = arith.constant 0 : index
    %126 = vector.load %arg9[%c1_132, %c0_133] : memref<3x64xf32, #tpu.memory_space<vmem>>, vector<1x64xf32>
    %c2_134 = arith.constant 2 : index
    %c0_135 = arith.constant 0 : index
    %127 = vector.load %arg9[%c2_134, %c0_135] : memref<3x64xf32, #tpu.memory_space<vmem>>, vector<1x64xf32>
    %128 = vector.broadcast %125 : vector<1x64xf32> to vector<8x64xf32>
    %129 = arith.addf %124, %128 : vector<8x64xf32>
    %cst_136 = arith.constant 0.000000e+00 : f32
    %130 = vector.broadcast %cst_136 : f32 to vector<8x64xf32>
    %131 = arith.maximumf %129, %130 : vector<8x64xf32>
    %132 = vector.broadcast %126 : vector<1x64xf32> to vector<8x64xf32>
    %133 = arith.mulf %131, %132 : vector<8x64xf32>
    %134 = vector.broadcast %127 : vector<1x64xf32> to vector<8x64xf32>
    %135 = arith.addf %133, %134 : vector<8x64xf32>
    %c0_137 = arith.constant 0 : index
    %c0_138 = arith.constant 0 : index
    %c0_139 = arith.constant 0 : index
    %136 = vector.load %arg10[%c0_137, %c0_138, %c0_139] : memref<11x32x128xf32, #tpu.memory_space<vmem>>, vector<1x32x128xf32>
    %137 = vector.shape_cast %136 : vector<1x32x128xf32> to vector<32x128xf32>
    %cst_140 = arith.constant 0.000000e+00 : f32
    %138 = vector.broadcast %cst_140 : f32 to vector<2x128xf32>
    %139 = vector.extract_strided_slice %135 {offsets = [0, 0], sizes = [2, 4], strides = [1, 1]} : vector<8x64xf32> to vector<2x4xf32>
    %140 = vector.extract_strided_slice %137 {offsets = [0, 0], sizes = [4, 128], strides = [1, 1]} : vector<32x128xf32> to vector<4x128xf32>
    %cst_141 = arith.constant dense<0.000000e+00> : vector<2x128xf32>
    %141 = tpu.matmul %139, %140, %cst_141 {dimension_numbers = #tpu.dot_dimension_numbers<[1], [0], [0], [1], [0, 0, 1, 1], [], []>} : vector<2x4xf32>, vector<4x128xf32>, vector<2x128xf32> -> vector<2x128xf32>
    %142 = arith.addf %138, %141 : vector<2x128xf32>
    %143 = vector.extract_strided_slice %135 {offsets = [2, 0], sizes = [2, 4], strides = [1, 1]} : vector<8x64xf32> to vector<2x4xf32>
    %144 = vector.extract_strided_slice %137 {offsets = [4, 0], sizes = [4, 128], strides = [1, 1]} : vector<32x128xf32> to vector<4x128xf32>
    %cst_142 = arith.constant dense<0.000000e+00> : vector<2x128xf32>
    %145 = tpu.matmul %143, %144, %cst_142 {dimension_numbers = #tpu.dot_dimension_numbers<[1], [0], [0], [1], [0, 0, 1, 1], [], []>} : vector<2x4xf32>, vector<4x128xf32>, vector<2x128xf32> -> vector<2x128xf32>
    %146 = arith.addf %142, %145 : vector<2x128xf32>
    %147 = vector.extract_strided_slice %135 {offsets = [4, 0], sizes = [2, 4], strides = [1, 1]} : vector<8x64xf32> to vector<2x4xf32>
    %148 = vector.extract_strided_slice %137 {offsets = [8, 0], sizes = [4, 128], strides = [1, 1]} : vector<32x128xf32> to vector<4x128xf32>
    %cst_143 = arith.constant dense<0.000000e+00> : vector<2x128xf32>
    %149 = tpu.matmul %147, %148, %cst_143 {dimension_numbers = #tpu.dot_dimension_numbers<[1], [0], [0], [1], [0, 0, 1, 1], [], []>} : vector<2x4xf32>, vector<4x128xf32>, vector<2x128xf32> -> vector<2x128xf32>
    %150 = arith.addf %146, %149 : vector<2x128xf32>
    %151 = vector.extract_strided_slice %135 {offsets = [6, 0], sizes = [2, 4], strides = [1, 1]} : vector<8x64xf32> to vector<2x4xf32>
    %152 = vector.extract_strided_slice %137 {offsets = [12, 0], sizes = [4, 128], strides = [1, 1]} : vector<32x128xf32> to vector<4x128xf32>
    %cst_144 = arith.constant dense<0.000000e+00> : vector<2x128xf32>
    %153 = tpu.matmul %151, %152, %cst_144 {dimension_numbers = #tpu.dot_dimension_numbers<[1], [0], [0], [1], [0, 0, 1, 1], [], []>} : vector<2x4xf32>, vector<4x128xf32>, vector<2x128xf32> -> vector<2x128xf32>
    %154 = arith.addf %150, %153 : vector<2x128xf32>
    %c0_145 = arith.constant 0 : index
    %c0_146 = arith.constant 0 : index
    %155 = vector.load %arg16[%c0_145, %c0_146] : memref<32x128xf32, #tpu.memory_space<vmem>>, vector<2x128xf32>
    tpu.vector_store %arg16[%c0_145, %c0_146], %154 {strides = array<i32>} : memref<32x128xf32, #tpu.memory_space<vmem>>, vector<2x128xf32>,
    %cst_147 = arith.constant 0.000000e+00 : f32
    %156 = vector.broadcast %cst_147 : f32 to vector<2x128xf32>
    %157 = vector.extract_strided_slice %135 {offsets = [0, 4], sizes = [2, 4], strides = [1, 1]} : vector<8x64xf32> to vector<2x4xf32>
    %158 = vector.extract_strided_slice %137 {offsets = [0, 0], sizes = [4, 128], strides = [1, 1]} : vector<32x128xf32> to vector<4x128xf32>
    %cst_148 = arith.constant dense<0.000000e+00> : vector<2x128xf32>
    %159 = tpu.matmul %157, %158, %cst_148 {dimension_numbers = #tpu.dot_dimension_numbers<[1], [0], [0], [1], [0, 0, 1, 1], [], []>} : vector<2x4xf32>, vector<4x128xf32>, vector<2x128xf32> -> vector<2x128xf32>
    %160 = arith.addf %156, %159 : vector<2x128xf32>
    %161 = vector.extract_strided_slice %135 {offsets = [2, 4], sizes = [2, 4], strides = [1, 1]} : vector<8x64xf32> to vector<2x4xf32>
    %162 = vector.extract_strided_slice %137 {offsets = [4, 0], sizes = [4, 128], strides = [1, 1]} : vector<32x128xf32> to vector<4x128xf32>
    %cst_149 = arith.constant dense<0.000000e+00> : vector<2x128xf32>
    %163 = tpu.matmul %161, %162, %cst_149 {dimension_numbers = #tpu.dot_dimension_numbers<[1], [0], [0], [1], [0, 0, 1, 1], [], []>} : vector<2x4xf32>, vector<4x128xf32>, vector<2x128xf32> -> vector<2x128xf32>
    %164 = arith.addf %160, %163 : vector<2x128xf32>
    %165 = vector.extract_strided_slice %135 {offsets = [4, 4], sizes = [2, 4], strides = [1, 1]} : vector<8x64xf32> to vector<2x4xf32>
    %166 = vector.extract_strided_slice %137 {offsets = [8, 0], sizes = [4, 128], strides = [1, 1]} : vector<32x128xf32> to vector<4x128xf32>
    %cst_150 = arith.constant dense<0.000000e+00> : vector<2x128xf32>
    %167 = tpu.matmul %165, %166, %cst_150 {dimension_numbers = #tpu.dot_dimension_numbers<[1], [0], [0], [1], [0, 0, 1, 1], [], []>} : vector<2x4xf32>, vector<4x128xf32>, vector<2x128xf32> -> vector<2x128xf32>
    %168 = arith.addf %164, %167 : vector<2x128xf32>
    %169 = vector.extract_strided_slice %135 {offsets = [6, 4], sizes = [2, 4], strides = [1, 1]} : vector<8x64xf32> to vector<2x4xf32>
    %170 = vector.extract_strided_slice %137 {offsets = [12, 0], sizes = [4, 128], strides = [1, 1]} : vector<32x128xf32> to vector<4x128xf32>
    %cst_151 = arith.constant dense<0.000000e+00> : vector<2x128xf32>
    %171 = tpu.matmul %169, %170, %cst_151 {dimension_numbers = #tpu.dot_dimension_numbers<[1], [0], [0], [1], [0, 0, 1, 1], [], []>} : vector<2x4xf32>, vector<4x128xf32>, vector<2x128xf32> -> vector<2x128xf32>
    %172 = arith.addf %168, %171 : vector<2x128xf32>
    %c2_152 = arith.constant 2 : index
    %c0_153 = arith.constant 0 : index
    %173 = vector.load %arg16[%c2_152, %c0_153] : memref<32x128xf32, #tpu.memory_space<vmem>>, vector<2x128xf32>
    tpu.vector_store %arg16[%c2_152, %c0_153], %172 {strides = array<i32>} : memref<32x128xf32, #tpu.memory_space<vmem>>, vector<2x128xf32>,
    %cst_154 = arith.constant 0.000000e+00 : f32
    %174 = vector.broadcast %cst_154 : f32 to vector<2x128xf32>
    %175 = vector.extract_strided_slice %135 {offsets = [0, 8], sizes = [2, 4], strides = [1, 1]} : vector<8x64xf32> to vector<2x4xf32>
    %176 = vector.extract_strided_slice %137 {offsets = [0, 0], sizes = [4, 128], strides = [1, 1]} : vector<32x128xf32> to vector<4x128xf32>
    %cst_155 = arith.constant dense<0.000000e+00> : vector<2x128xf32>
    %177 = tpu.matmul %175, %176, %cst_155 {dimension_numbers = #tpu.dot_dimension_numbers<[1], [0], [0], [1], [0, 0, 1, 1], [], []>} : vector<2x4xf32>, vector<4x128xf32>, vector<2x128xf32> -> vector<2x128xf32>
    %178 = arith.addf %174, %177 : vector<2x128xf32>
    %179 = vector.extract_strided_slice %135 {offsets = [2, 8], sizes = [2, 4], strides = [1, 1]} : vector<8x64xf32> to vector<2x4xf32>
    %180 = vector.extract_strided_slice %137 {offsets = [4, 0], sizes = [4, 128], strides = [1, 1]} : vector<32x128xf32> to vector<4x128xf32>
    %cst_156 = arith.constant dense<0.000000e+00> : vector<2x128xf32>
    %181 = tpu.matmul %179, %180, %cst_156 {dimension_numbers = #tpu.dot_dimension_numbers<[1], [0], [0], [1], [0, 0, 1, 1], [], []>} : vector<2x4xf32>, vector<4x128xf32>, vector<2x128xf32> -> vector<2x128xf32>
    %182 = arith.addf %178, %181 : vector<2x128xf32>
    %183 = vector.extract_strided_slice %135 {offsets = [4, 8], sizes = [2, 4], strides = [1, 1]} : vector<8x64xf32> to vector<2x4xf32>
    %184 = vector.extract_strided_slice %137 {offsets = [8, 0], sizes = [4, 128], strides = [1, 1]} : vector<32x128xf32> to vector<4x128xf32>
    %cst_157 = arith.constant dense<0.000000e+00> : vector<2x128xf32>
    %185 = tpu.matmul %183, %184, %cst_157 {dimension_numbers = #tpu.dot_dimension_numbers<[1], [0], [0], [1], [0, 0, 1, 1], [], []>} : vector<2x4xf32>, vector<4x128xf32>, vector<2x128xf32> -> vector<2x128xf32>
    %186 = arith.addf %182, %185 : vector<2x128xf32>
    %187 = vector.extract_strided_slice %135 {offsets = [6, 8], sizes = [2, 4], strides = [1, 1]} : vector<8x64xf32> to vector<2x4xf32>
    %188 = vector.extract_strided_slice %137 {offsets = [12, 0], sizes = [4, 128], strides = [1, 1]} : vector<32x128xf32> to vector<4x128xf32>
    %cst_158 = arith.constant dense<0.000000e+00> : vector<2x128xf32>
    %189 = tpu.matmul %187, %188, %cst_158 {dimension_numbers = #tpu.dot_dimension_numbers<[1], [0], [0], [1], [0, 0, 1, 1], [], []>} : vector<2x4xf32>, vector<4x128xf32>, vector<2x128xf32> -> vector<2x128xf32>
    %190 = arith.addf %186, %189 : vector<2x128xf32>
    %c4_159 = arith.constant 4 : index
    %c0_160 = arith.constant 0 : index
    %191 = vector.load %arg16[%c4_159, %c0_160] : memref<32x128xf32, #tpu.memory_space<vmem>>, vector<2x128xf32>
    tpu.vector_store %arg16[%c4_159, %c0_160], %190 {strides = array<i32>} : memref<32x128xf32, #tpu.memory_space<vmem>>, vector<2x128xf32>,
    %cst_161 = arith.constant 0.000000e+00 : f32
    %192 = vector.broadcast %cst_161 : f32 to vector<2x128xf32>
    %193 = vector.extract_strided_slice %135 {offsets = [0, 12], sizes = [2, 4], strides = [1, 1]} : vector<8x64xf32> to vector<2x4xf32>
    %194 = vector.extract_strided_slice %137 {offsets = [0, 0], sizes = [4, 128], strides = [1, 1]} : vector<32x128xf32> to vector<4x128xf32>
    %cst_162 = arith.constant dense<0.000000e+00> : vector<2x128xf32>
    %195 = tpu.matmul %193, %194, %cst_162 {dimension_numbers = #tpu.dot_dimension_numbers<[1], [0], [0], [1], [0, 0, 1, 1], [], []>} : vector<2x4xf32>, vector<4x128xf32>, vector<2x128xf32> -> vector<2x128xf32>
    %196 = arith.addf %192, %195 : vector<2x128xf32>
    %197 = vector.extract_strided_slice %135 {offsets = [2, 12], sizes = [2, 4], strides = [1, 1]} : vector<8x64xf32> to vector<2x4xf32>
    %198 = vector.extract_strided_slice %137 {offsets = [4, 0], sizes = [4, 128], strides = [1, 1]} : vector<32x128xf32> to vector<4x128xf32>
    %cst_163 = arith.constant dense<0.000000e+00> : vector<2x128xf32>
    %199 = tpu.matmul %197, %198, %cst_163 {dimension_numbers = #tpu.dot_dimension_numbers<[1], [0], [0], [1], [0, 0, 1, 1], [], []>} : vector<2x4xf32>, vector<4x128xf32>, vector<2x128xf32> -> vector<2x128xf32>
    %200 = arith.addf %196, %199 : vector<2x128xf32>
    %201 = vector.extract_strided_slice %135 {offsets = [4, 12], sizes = [2, 4], strides = [1, 1]} : vector<8x64xf32> to vector<2x4xf32>
    %202 = vector.extract_strided_slice %137 {offsets = [8, 0], sizes = [4, 128], strides = [1, 1]} : vector<32x128xf32> to vector<4x128xf32>
    %cst_164 = arith.constant dense<0.000000e+00> : vector<2x128xf32>
    %203 = tpu.matmul %201, %202, %cst_164 {dimension_numbers = #tpu.dot_dimension_numbers<[1], [0], [0], [1], [0, 0, 1, 1], [], []>} : vector<2x4xf32>, vector<4x128xf32>, vector<2x128xf32> -> vector<2x128xf32>
    %204 = arith.addf %200, %203 : vector<2x128xf32>
    %205 = vector.extract_strided_slice %135 {offsets = [6, 12], sizes = [2, 4], strides = [1, 1]} : vector<8x64xf32> to vector<2x4xf32>
    %206 = vector.extract_strided_slice %137 {offsets = [12, 0], sizes = [4, 128], strides = [1, 1]} : vector<32x128xf32> to vector<4x128xf32>
    %cst_165 = arith.constant dense<0.000000e+00> : vector<2x128xf32>
    %207 = tpu.matmul %205, %206, %cst_165 {dimension_numbers = #tpu.dot_dimension_numbers<[1], [0], [0], [1], [0, 0, 1, 1], [], []>} : vector<2x4xf32>, vector<4x128xf32>, vector<2x128xf32> -> vector<2x128xf32>
    %208 = arith.addf %204, %207 : vector<2x128xf32>
    %c6 = arith.constant 6 : index
    %c0_166 = arith.constant 0 : index
    %209 = vector.load %arg16[%c6, %c0_166] : memref<32x128xf32, #tpu.memory_space<vmem>>, vector<2x128xf32>
    tpu.vector_store %arg16[%c6, %c0_166], %208 {strides = array<i32>} : memref<32x128xf32, #tpu.memory_space<vmem>>, vector<2x128xf32>,
    %cst_167 = arith.constant 0.000000e+00 : f32
    %210 = vector.broadcast %cst_167 : f32 to vector<2x128xf32>
    %211 = vector.extract_strided_slice %135 {offsets = [0, 16], sizes = [2, 4], strides = [1, 1]} : vector<8x64xf32> to vector<2x4xf32>
    %212 = vector.extract_strided_slice %137 {offsets = [0, 0], sizes = [4, 128], strides = [1, 1]} : vector<32x128xf32> to vector<4x128xf32>
    %cst_168 = arith.constant dense<0.000000e+00> : vector<2x128xf32>
    %213 = tpu.matmul %211, %212, %cst_168 {dimension_numbers = #tpu.dot_dimension_numbers<[1], [0], [0], [1], [0, 0, 1, 1], [], []>} : vector<2x4xf32>, vector<4x128xf32>, vector<2x128xf32> -> vector<2x128xf32>
    %214 = arith.addf %210, %213 : vector<2x128xf32>
    %215 = vector.extract_strided_slice %135 {offsets = [2, 16], sizes = [2, 4], strides = [1, 1]} : vector<8x64xf32> to vector<2x4xf32>
    %216 = vector.extract_strided_slice %137 {offsets = [4, 0], sizes = [4, 128], strides = [1, 1]} : vector<32x128xf32> to vector<4x128xf32>
    %cst_169 = arith.constant dense<0.000000e+00> : vector<2x128xf32>
    %217 = tpu.matmul %215, %216, %cst_169 {dimension_numbers = #tpu.dot_dimension_numbers<[1], [0], [0], [1], [0, 0, 1, 1], [], []>} : vector<2x4xf32>, vector<4x128xf32>, vector<2x128xf32> -> vector<2x128xf32>
    %218 = arith.addf %214, %217 : vector<2x128xf32>
    %219 = vector.extract_strided_slice %135 {offsets = [4, 16], sizes = [2, 4], strides = [1, 1]} : vector<8x64xf32> to vector<2x4xf32>
    %220 = vector.extract_strided_slice %137 {offsets = [8, 0], sizes = [4, 128], strides = [1, 1]} : vector<32x128xf32> to vector<4x128xf32>
    %cst_170 = arith.constant dense<0.000000e+00> : vector<2x128xf32>
    %221 = tpu.matmul %219, %220, %cst_170 {dimension_numbers = #tpu.dot_dimension_numbers<[1], [0], [0], [1], [0, 0, 1, 1], [], []>} : vector<2x4xf32>, vector<4x128xf32>, vector<2x128xf32> -> vector<2x128xf32>
    %222 = arith.addf %218, %221 : vector<2x128xf32>
    %223 = vector.extract_strided_slice %135 {offsets = [6, 16], sizes = [2, 4], strides = [1, 1]} : vector<8x64xf32> to vector<2x4xf32>
    %224 = vector.extract_strided_slice %137 {offsets = [12, 0], sizes = [4, 128], strides = [1, 1]} : vector<32x128xf32> to vector<4x128xf32>
    %cst_171 = arith.constant dense<0.000000e+00> : vector<2x128xf32>
    %225 = tpu.matmul %223, %224, %cst_171 {dimension_numbers = #tpu.dot_dimension_numbers<[1], [0], [0], [1], [0, 0, 1, 1], [], []>} : vector<2x4xf32>, vector<4x128xf32>, vector<2x128xf32> -> vector<2x128xf32>
    %226 = arith.addf %222, %225 : vector<2x128xf32>
    %c8 = arith.constant 8 : index
    %c0_172 = arith.constant 0 : index
    %227 = vector.load %arg16[%c8, %c0_172] : memref<32x128xf32, #tpu.memory_space<vmem>>, vector<2x128xf32>
    tpu.vector_store %arg16[%c8, %c0_172], %226 {strides = array<i32>} : memref<32x128xf32, #tpu.memory_space<vmem>>, vector<2x128xf32>,
    %cst_173 = arith.constant 0.000000e+00 : f32
    %228 = vector.broadcast %cst_173 : f32 to vector<2x128xf32>
    %229 = vector.extract_strided_slice %135 {offsets = [0, 20], sizes = [2, 4], strides = [1, 1]} : vector<8x64xf32> to vector<2x4xf32>
    %230 = vector.extract_strided_slice %137 {offsets = [0, 0], sizes = [4, 128], strides = [1, 1]} : vector<32x128xf32> to vector<4x128xf32>
    %cst_174 = arith.constant dense<0.000000e+00> : vector<2x128xf32>
    %231 = tpu.matmul %229, %230, %cst_174 {dimension_numbers = #tpu.dot_dimension_numbers<[1], [0], [0], [1], [0, 0, 1, 1], [], []>} : vector<2x4xf32>, vector<4x128xf32>, vector<2x128xf32> -> vector<2x128xf32>
    %232 = arith.addf %228, %231 : vector<2x128xf32>
    %233 = vector.extract_strided_slice %135 {offsets = [2, 20], sizes = [2, 4], strides = [1, 1]} : vector<8x64xf32> to vector<2x4xf32>
    %234 = vector.extract_strided_slice %137 {offsets = [4, 0], sizes = [4, 128], strides = [1, 1]} : vector<32x128xf32> to vector<4x128xf32>
    %cst_175 = arith.constant dense<0.000000e+00> : vector<2x128xf32>
    %235 = tpu.matmul %233, %234, %cst_175 {dimension_numbers = #tpu.dot_dimension_numbers<[1], [0], [0], [1], [0, 0, 1, 1], [], []>} : vector<2x4xf32>, vector<4x128xf32>, vector<2x128xf32> -> vector<2x128xf32>
    %236 = arith.addf %232, %235 : vector<2x128xf32>
    %237 = vector.extract_strided_slice %135 {offsets = [4, 20], sizes = [2, 4], strides = [1, 1]} : vector<8x64xf32> to vector<2x4xf32>
    %238 = vector.extract_strided_slice %137 {offsets = [8, 0], sizes = [4, 128], strides = [1, 1]} : vector<32x128xf32> to vector<4x128xf32>
    %cst_176 = arith.constant dense<0.000000e+00> : vector<2x128xf32>
    %239 = tpu.matmul %237, %238, %cst_176 {dimension_numbers = #tpu.dot_dimension_numbers<[1], [0], [0], [1], [0, 0, 1, 1], [], []>} : vector<2x4xf32>, vector<4x128xf32>, vector<2x128xf32> -> vector<2x128xf32>
    %240 = arith.addf %236, %239 : vector<2x128xf32>
    %241 = vector.extract_strided_slice %135 {offsets = [6, 20], sizes = [2, 4], strides = [1, 1]} : vector<8x64xf32> to vector<2x4xf32>
    %242 = vector.extract_strided_slice %137 {offsets = [12, 0], sizes = [4, 128], strides = [1, 1]} : vector<32x128xf32> to vector<4x128xf32>
    %cst_177 = arith.constant dense<0.000000e+00> : vector<2x128xf32>
    %243 = tpu.matmul %241, %242, %cst_177 {dimension_numbers = #tpu.dot_dimension_numbers<[1], [0], [0], [1], [0, 0, 1, 1], [], []>} : vector<2x4xf32>, vector<4x128xf32>, vector<2x128xf32> -> vector<2x128xf32>
    %244 = arith.addf %240, %243 : vector<2x128xf32>
    %c10 = arith.constant 10 : index
    %c0_178 = arith.constant 0 : index
    %245 = vector.load %arg16[%c10, %c0_178] : memref<32x128xf32, #tpu.memory_space<vmem>>, vector<2x128xf32>
    tpu.vector_store %arg16[%c10, %c0_178], %244 {strides = array<i32>} : memref<32x128xf32, #tpu.memory_space<vmem>>, vector<2x128xf32>,
    %cst_179 = arith.constant 0.000000e+00 : f32
    %246 = vector.broadcast %cst_179 : f32 to vector<2x128xf32>
    %247 = vector.extract_strided_slice %135 {offsets = [0, 24], sizes = [2, 4], strides = [1, 1]} : vector<8x64xf32> to vector<2x4xf32>
    %248 = vector.extract_strided_slice %137 {offsets = [0, 0], sizes = [4, 128], strides = [1, 1]} : vector<32x128xf32> to vector<4x128xf32>
    %cst_180 = arith.constant dense<0.000000e+00> : vector<2x128xf32>
    %249 = tpu.matmul %247, %248, %cst_180 {dimension_numbers = #tpu.dot_dimension_numbers<[1], [0], [0], [1], [0, 0, 1, 1], [], []>} : vector<2x4xf32>, vector<4x128xf32>, vector<2x128xf32> -> vector<2x128xf32>
    %250 = arith.addf %246, %249 : vector<2x128xf32>
    %251 = vector.extract_strided_slice %135 {offsets = [2, 24], sizes = [2, 4], strides = [1, 1]} : vector<8x64xf32> to vector<2x4xf32>
    %252 = vector.extract_strided_slice %137 {offsets = [4, 0], sizes = [4, 128], strides = [1, 1]} : vector<32x128xf32> to vector<4x128xf32>
    %cst_181 = arith.constant dense<0.000000e+00> : vector<2x128xf32>
    %253 = tpu.matmul %251, %252, %cst_181 {dimension_numbers = #tpu.dot_dimension_numbers<[1], [0], [0], [1], [0, 0, 1, 1], [], []>} : vector<2x4xf32>, vector<4x128xf32>, vector<2x128xf32> -> vector<2x128xf32>
    %254 = arith.addf %250, %253 : vector<2x128xf32>
    %255 = vector.extract_strided_slice %135 {offsets = [4, 24], sizes = [2, 4], strides = [1, 1]} : vector<8x64xf32> to vector<2x4xf32>
    %256 = vector.extract_strided_slice %137 {offsets = [8, 0], sizes = [4, 128], strides = [1, 1]} : vector<32x128xf32> to vector<4x128xf32>
    %cst_182 = arith.constant dense<0.000000e+00> : vector<2x128xf32>
    %257 = tpu.matmul %255, %256, %cst_182 {dimension_numbers = #tpu.dot_dimension_numbers<[1], [0], [0], [1], [0, 0, 1, 1], [], []>} : vector<2x4xf32>, vector<4x128xf32>, vector<2x128xf32> -> vector<2x128xf32>
    %258 = arith.addf %254, %257 : vector<2x128xf32>
    %259 = vector.extract_strided_slice %135 {offsets = [6, 24], sizes = [2, 4], strides = [1, 1]} : vector<8x64xf32> to vector<2x4xf32>
    %260 = vector.extract_strided_slice %137 {offsets = [12, 0], sizes = [4, 128], strides = [1, 1]} : vector<32x128xf32> to vector<4x128xf32>
    %cst_183 = arith.constant dense<0.000000e+00> : vector<2x128xf32>
    %261 = tpu.matmul %259, %260, %cst_183 {dimension_numbers = #tpu.dot_dimension_numbers<[1], [0], [0], [1], [0, 0, 1, 1], [], []>} : vector<2x4xf32>, vector<4x128xf32>, vector<2x128xf32> -> vector<2x128xf32>
    %262 = arith.addf %258, %261 : vector<2x128xf32>
    %c12 = arith.constant 12 : index
    %c0_184 = arith.constant 0 : index
    %263 = vector.load %arg16[%c12, %c0_184] : memref<32x128xf32, #tpu.memory_space<vmem>>, vector<2x128xf32>
    tpu.vector_store %arg16[%c12, %c0_184], %262 {strides = array<i32>} : memref<32x128xf32, #tpu.memory_space<vmem>>, vector<2x128xf32>,
    %cst_185 = arith.constant 0.000000e+00 : f32
    %264 = vector.broadcast %cst_185 : f32 to vector<2x128xf32>
    %265 = vector.extract_strided_slice %135 {offsets = [0, 28], sizes = [2, 4], strides = [1, 1]} : vector<8x64xf32> to vector<2x4xf32>
    %266 = vector.extract_strided_slice %137 {offsets = [0, 0], sizes = [4, 128], strides = [1, 1]} : vector<32x128xf32> to vector<4x128xf32>
    %cst_186 = arith.constant dense<0.000000e+00> : vector<2x128xf32>
    %267 = tpu.matmul %265, %266, %cst_186 {dimension_numbers = #tpu.dot_dimension_numbers<[1], [0], [0], [1], [0, 0, 1, 1], [], []>} : vector<2x4xf32>, vector<4x128xf32>, vector<2x128xf32> -> vector<2x128xf32>
    %268 = arith.addf %264, %267 : vector<2x128xf32>
    %269 = vector.extract_strided_slice %135 {offsets = [2, 28], sizes = [2, 4], strides = [1, 1]} : vector<8x64xf32> to vector<2x4xf32>
    %270 = vector.extract_strided_slice %137 {offsets = [4, 0], sizes = [4, 128], strides = [1, 1]} : vector<32x128xf32> to vector<4x128xf32>
    %cst_187 = arith.constant dense<0.000000e+00> : vector<2x128xf32>
    %271 = tpu.matmul %269, %270, %cst_187 {dimension_numbers = #tpu.dot_dimension_numbers<[1], [0], [0], [1], [0, 0, 1, 1], [], []>} : vector<2x4xf32>, vector<4x128xf32>, vector<2x128xf32> -> vector<2x128xf32>
    %272 = arith.addf %268, %271 : vector<2x128xf32>
    %273 = vector.extract_strided_slice %135 {offsets = [4, 28], sizes = [2, 4], strides = [1, 1]} : vector<8x64xf32> to vector<2x4xf32>
    %274 = vector.extract_strided_slice %137 {offsets = [8, 0], sizes = [4, 128], strides = [1, 1]} : vector<32x128xf32> to vector<4x128xf32>
    %cst_188 = arith.constant dense<0.000000e+00> : vector<2x128xf32>
    %275 = tpu.matmul %273, %274, %cst_188 {dimension_numbers = #tpu.dot_dimension_numbers<[1], [0], [0], [1], [0, 0, 1, 1], [], []>} : vector<2x4xf32>, vector<4x128xf32>, vector<2x128xf32> -> vector<2x128xf32>
    %276 = arith.addf %272, %275 : vector<2x128xf32>
    %277 = vector.extract_strided_slice %135 {offsets = [6, 28], sizes = [2, 4], strides = [1, 1]} : vector<8x64xf32> to vector<2x4xf32>
    %278 = vector.extract_strided_slice %137 {offsets = [12, 0], sizes = [4, 128], strides = [1, 1]} : vector<32x128xf32> to vector<4x128xf32>
    %cst_189 = arith.constant dense<0.000000e+00> : vector<2x128xf32>
    %279 = tpu.matmul %277, %278, %cst_189 {dimension_numbers = #tpu.dot_dimension_numbers<[1], [0], [0], [1], [0, 0, 1, 1], [], []>} : vector<2x4xf32>, vector<4x128xf32>, vector<2x128xf32> -> vector<2x128xf32>
    %280 = arith.addf %276, %279 : vector<2x128xf32>
    %c14 = arith.constant 14 : index
    %c0_190 = arith.constant 0 : index
    %281 = vector.load %arg16[%c14, %c0_190] : memref<32x128xf32, #tpu.memory_space<vmem>>, vector<2x128xf32>
    tpu.vector_store %arg16[%c14, %c0_190], %280 {strides = array<i32>} : memref<32x128xf32, #tpu.memory_space<vmem>>, vector<2x128xf32>,
    %cst_191 = arith.constant 0.000000e+00 : f32
    %282 = vector.broadcast %cst_191 : f32 to vector<2x128xf32>
    %283 = vector.extract_strided_slice %135 {offsets = [0, 32], sizes = [2, 4], strides = [1, 1]} : vector<8x64xf32> to vector<2x4xf32>
    %284 = vector.extract_strided_slice %137 {offsets = [0, 0], sizes = [4, 128], strides = [1, 1]} : vector<32x128xf32> to vector<4x128xf32>
    %cst_192 = arith.constant dense<0.000000e+00> : vector<2x128xf32>
    %285 = tpu.matmul %283, %284, %cst_192 {dimension_numbers = #tpu.dot_dimension_numbers<[1], [0], [0], [1], [0, 0, 1, 1], [], []>} : vector<2x4xf32>, vector<4x128xf32>, vector<2x128xf32> -> vector<2x128xf32>
    %286 = arith.addf %282, %285 : vector<2x128xf32>
    %287 = vector.extract_strided_slice %135 {offsets = [2, 32], sizes = [2, 4], strides = [1, 1]} : vector<8x64xf32> to vector<2x4xf32>
    %288 = vector.extract_strided_slice %137 {offsets = [4, 0], sizes = [4, 128], strides = [1, 1]} : vector<32x128xf32> to vector<4x128xf32>
    %cst_193 = arith.constant dense<0.000000e+00> : vector<2x128xf32>
    %289 = tpu.matmul %287, %288, %cst_193 {dimension_numbers = #tpu.dot_dimension_numbers<[1], [0], [0], [1], [0, 0, 1, 1], [], []>} : vector<2x4xf32>, vector<4x128xf32>, vector<2x128xf32> -> vector<2x128xf32>
    %290 = arith.addf %286, %289 : vector<2x128xf32>
    %291 = vector.extract_strided_slice %135 {offsets = [4, 32], sizes = [2, 4], strides = [1, 1]} : vector<8x64xf32> to vector<2x4xf32>
    %292 = vector.extract_strided_slice %137 {offsets = [8, 0], sizes = [4, 128], strides = [1, 1]} : vector<32x128xf32> to vector<4x128xf32>
    %cst_194 = arith.constant dense<0.000000e+00> : vector<2x128xf32>
    %293 = tpu.matmul %291, %292, %cst_194 {dimension_numbers = #tpu.dot_dimension_numbers<[1], [0], [0], [1], [0, 0, 1, 1], [], []>} : vector<2x4xf32>, vector<4x128xf32>, vector<2x128xf32> -> vector<2x128xf32>
    %294 = arith.addf %290, %293 : vector<2x128xf32>
    %295 = vector.extract_strided_slice %135 {offsets = [6, 32], sizes = [2, 4], strides = [1, 1]} : vector<8x64xf32> to vector<2x4xf32>
    %296 = vector.extract_strided_slice %137 {offsets = [12, 0], sizes = [4, 128], strides = [1, 1]} : vector<32x128xf32> to vector<4x128xf32>
    %cst_195 = arith.constant dense<0.000000e+00> : vector<2x128xf32>
    %297 = tpu.matmul %295, %296, %cst_195 {dimension_numbers = #tpu.dot_dimension_numbers<[1], [0], [0], [1], [0, 0, 1, 1], [], []>} : vector<2x4xf32>, vector<4x128xf32>, vector<2x128xf32> -> vector<2x128xf32>
    %298 = arith.addf %294, %297 : vector<2x128xf32>
    %c16 = arith.constant 16 : index
    %c0_196 = arith.constant 0 : index
    %299 = vector.load %arg16[%c16, %c0_196] : memref<32x128xf32, #tpu.memory_space<vmem>>, vector<2x128xf32>
    tpu.vector_store %arg16[%c16, %c0_196], %298 {strides = array<i32>} : memref<32x128xf32, #tpu.memory_space<vmem>>, vector<2x128xf32>,
    %cst_197 = arith.constant 0.000000e+00 : f32
    %300 = vector.broadcast %cst_197 : f32 to vector<2x128xf32>
    %301 = vector.extract_strided_slice %135 {offsets = [0, 36], sizes = [2, 4], strides = [1, 1]} : vector<8x64xf32> to vector<2x4xf32>
    %302 = vector.extract_strided_slice %137 {offsets = [0, 0], sizes = [4, 128], strides = [1, 1]} : vector<32x128xf32> to vector<4x128xf32>
    %cst_198 = arith.constant dense<0.000000e+00> : vector<2x128xf32>
    %303 = tpu.matmul %301, %302, %cst_198 {dimension_numbers = #tpu.dot_dimension_numbers<[1], [0], [0], [1], [0, 0, 1, 1], [], []>} : vector<2x4xf32>, vector<4x128xf32>, vector<2x128xf32> -> vector<2x128xf32>
    %304 = arith.addf %300, %303 : vector<2x128xf32>
    %305 = vector.extract_strided_slice %135 {offsets = [2, 36], sizes = [2, 4], strides = [1, 1]} : vector<8x64xf32> to vector<2x4xf32>
    %306 = vector.extract_strided_slice %137 {offsets = [4, 0], sizes = [4, 128], strides = [1, 1]} : vector<32x128xf32> to vector<4x128xf32>
    %cst_199 = arith.constant dense<0.000000e+00> : vector<2x128xf32>
    %307 = tpu.matmul %305, %306, %cst_199 {dimension_numbers = #tpu.dot_dimension_numbers<[1], [0], [0], [1], [0, 0, 1, 1], [], []>} : vector<2x4xf32>, vector<4x128xf32>, vector<2x128xf32> -> vector<2x128xf32>
    %308 = arith.addf %304, %307 : vector<2x128xf32>
    %309 = vector.extract_strided_slice %135 {offsets = [4, 36], sizes = [2, 4], strides = [1, 1]} : vector<8x64xf32> to vector<2x4xf32>
    %310 = vector.extract_strided_slice %137 {offsets = [8, 0], sizes = [4, 128], strides = [1, 1]} : vector<32x128xf32> to vector<4x128xf32>
    %cst_200 = arith.constant dense<0.000000e+00> : vector<2x128xf32>
    %311 = tpu.matmul %309, %310, %cst_200 {dimension_numbers = #tpu.dot_dimension_numbers<[1], [0], [0], [1], [0, 0, 1, 1], [], []>} : vector<2x4xf32>, vector<4x128xf32>, vector<2x128xf32> -> vector<2x128xf32>
    %312 = arith.addf %308, %311 : vector<2x128xf32>
    %313 = vector.extract_strided_slice %135 {offsets = [6, 36], sizes = [2, 4], strides = [1, 1]} : vector<8x64xf32> to vector<2x4xf32>
    %314 = vector.extract_strided_slice %137 {offsets = [12, 0], sizes = [4, 128], strides = [1, 1]} : vector<32x128xf32> to vector<4x128xf32>
    %cst_201 = arith.constant dense<0.000000e+00> : vector<2x128xf32>
    %315 = tpu.matmul %313, %314, %cst_201 {dimension_numbers = #tpu.dot_dimension_numbers<[1], [0], [0], [1], [0, 0, 1, 1], [], []>} : vector<2x4xf32>, vector<4x128xf32>, vector<2x128xf32> -> vector<2x128xf32>
    %316 = arith.addf %312, %315 : vector<2x128xf32>
    %c18 = arith.constant 18 : index
    %c0_202 = arith.constant 0 : index
    %317 = vector.load %arg16[%c18, %c0_202] : memref<32x128xf32, #tpu.memory_space<vmem>>, vector<2x128xf32>
    tpu.vector_store %arg16[%c18, %c0_202], %316 {strides = array<i32>} : memref<32x128xf32, #tpu.memory_space<vmem>>, vector<2x128xf32>,
    %cst_203 = arith.constant 0.000000e+00 : f32
    %318 = vector.broadcast %cst_203 : f32 to vector<2x128xf32>
    %319 = vector.extract_strided_slice %135 {offsets = [0, 40], sizes = [2, 4], strides = [1, 1]} : vector<8x64xf32> to vector<2x4xf32>
    %320 = vector.extract_strided_slice %137 {offsets = [0, 0], sizes = [4, 128], strides = [1, 1]} : vector<32x128xf32> to vector<4x128xf32>
    %cst_204 = arith.constant dense<0.000000e+00> : vector<2x128xf32>
    %321 = tpu.matmul %319, %320, %cst_204 {dimension_numbers = #tpu.dot_dimension_numbers<[1], [0], [0], [1], [0, 0, 1, 1], [], []>} : vector<2x4xf32>, vector<4x128xf32>, vector<2x128xf32> -> vector<2x128xf32>
    %322 = arith.addf %318, %321 : vector<2x128xf32>
    %323 = vector.extract_strided_slice %135 {offsets = [2, 40], sizes = [2, 4], strides = [1, 1]} : vector<8x64xf32> to vector<2x4xf32>
    %324 = vector.extract_strided_slice %137 {offsets = [4, 0], sizes = [4, 128], strides = [1, 1]} : vector<32x128xf32> to vector<4x128xf32>
    %cst_205 = arith.constant dense<0.000000e+00> : vector<2x128xf32>
    %325 = tpu.matmul %323, %324, %cst_205 {dimension_numbers = #tpu.dot_dimension_numbers<[1], [0], [0], [1], [0, 0, 1, 1], [], []>} : vector<2x4xf32>, vector<4x128xf32>, vector<2x128xf32> -> vector<2x128xf32>
    %326 = arith.addf %322, %325 : vector<2x128xf32>
    %327 = vector.extract_strided_slice %135 {offsets = [4, 40], sizes = [2, 4], strides = [1, 1]} : vector<8x64xf32> to vector<2x4xf32>
    %328 = vector.extract_strided_slice %137 {offsets = [8, 0], sizes = [4, 128], strides = [1, 1]} : vector<32x128xf32> to vector<4x128xf32>
    %cst_206 = arith.constant dense<0.000000e+00> : vector<2x128xf32>
    %329 = tpu.matmul %327, %328, %cst_206 {dimension_numbers = #tpu.dot_dimension_numbers<[1], [0], [0], [1], [0, 0, 1, 1], [], []>} : vector<2x4xf32>, vector<4x128xf32>, vector<2x128xf32> -> vector<2x128xf32>
    %330 = arith.addf %326, %329 : vector<2x128xf32>
    %331 = vector.extract_strided_slice %135 {offsets = [6, 40], sizes = [2, 4], strides = [1, 1]} : vector<8x64xf32> to vector<2x4xf32>
    %332 = vector.extract_strided_slice %137 {offsets = [12, 0], sizes = [4, 128], strides = [1, 1]} : vector<32x128xf32> to vector<4x128xf32>
    %cst_207 = arith.constant dense<0.000000e+00> : vector<2x128xf32>
    %333 = tpu.matmul %331, %332, %cst_207 {dimension_numbers = #tpu.dot_dimension_numbers<[1], [0], [0], [1], [0, 0, 1, 1], [], []>} : vector<2x4xf32>, vector<4x128xf32>, vector<2x128xf32> -> vector<2x128xf32>
    %334 = arith.addf %330, %333 : vector<2x128xf32>
    %c20 = arith.constant 20 : index
    %c0_208 = arith.constant 0 : index
    %335 = vector.load %arg16[%c20, %c0_208] : memref<32x128xf32, #tpu.memory_space<vmem>>, vector<2x128xf32>
    tpu.vector_store %arg16[%c20, %c0_208], %334 {strides = array<i32>} : memref<32x128xf32, #tpu.memory_space<vmem>>, vector<2x128xf32>,
    %cst_209 = arith.constant 0.000000e+00 : f32
    %336 = vector.broadcast %cst_209 : f32 to vector<2x128xf32>
    %337 = vector.extract_strided_slice %135 {offsets = [0, 44], sizes = [2, 4], strides = [1, 1]} : vector<8x64xf32> to vector<2x4xf32>
    %338 = vector.extract_strided_slice %137 {offsets = [0, 0], sizes = [4, 128], strides = [1, 1]} : vector<32x128xf32> to vector<4x128xf32>
    %cst_210 = arith.constant dense<0.000000e+00> : vector<2x128xf32>
    %339 = tpu.matmul %337, %338, %cst_210 {dimension_numbers = #tpu.dot_dimension_numbers<[1], [0], [0], [1], [0, 0, 1, 1], [], []>} : vector<2x4xf32>, vector<4x128xf32>, vector<2x128xf32> -> vector<2x128xf32>
    %340 = arith.addf %336, %339 : vector<2x128xf32>
    %341 = vector.extract_strided_slice %135 {offsets = [2, 44], sizes = [2, 4], strides = [1, 1]} : vector<8x64xf32> to vector<2x4xf32>
    %342 = vector.extract_strided_slice %137 {offsets = [4, 0], sizes = [4, 128], strides = [1, 1]} : vector<32x128xf32> to vector<4x128xf32>
    %cst_211 = arith.constant dense<0.000000e+00> : vector<2x128xf32>
    %343 = tpu.matmul %341, %342, %cst_211 {dimension_numbers = #tpu.dot_dimension_numbers<[1], [0], [0], [1], [0, 0, 1, 1], [], []>} : vector<2x4xf32>, vector<4x128xf32>, vector<2x128xf32> -> vector<2x128xf32>
    %344 = arith.addf %340, %343 : vector<2x128xf32>
    %345 = vector.extract_strided_slice %135 {offsets = [4, 44], sizes = [2, 4], strides = [1, 1]} : vector<8x64xf32> to vector<2x4xf32>
    %346 = vector.extract_strided_slice %137 {offsets = [8, 0], sizes = [4, 128], strides = [1, 1]} : vector<32x128xf32> to vector<4x128xf32>
    %cst_212 = arith.constant dense<0.000000e+00> : vector<2x128xf32>
    %347 = tpu.matmul %345, %346, %cst_212 {dimension_numbers = #tpu.dot_dimension_numbers<[1], [0], [0], [1], [0, 0, 1, 1], [], []>} : vector<2x4xf32>, vector<4x128xf32>, vector<2x128xf32> -> vector<2x128xf32>
    %348 = arith.addf %344, %347 : vector<2x128xf32>
    %349 = vector.extract_strided_slice %135 {offsets = [6, 44], sizes = [2, 4], strides = [1, 1]} : vector<8x64xf32> to vector<2x4xf32>
    %350 = vector.extract_strided_slice %137 {offsets = [12, 0], sizes = [4, 128], strides = [1, 1]} : vector<32x128xf32> to vector<4x128xf32>
    %cst_213 = arith.constant dense<0.000000e+00> : vector<2x128xf32>
    %351 = tpu.matmul %349, %350, %cst_213 {dimension_numbers = #tpu.dot_dimension_numbers<[1], [0], [0], [1], [0, 0, 1, 1], [], []>} : vector<2x4xf32>, vector<4x128xf32>, vector<2x128xf32> -> vector<2x128xf32>
    %352 = arith.addf %348, %351 : vector<2x128xf32>
    %c22 = arith.constant 22 : index
    %c0_214 = arith.constant 0 : index
    %353 = vector.load %arg16[%c22, %c0_214] : memref<32x128xf32, #tpu.memory_space<vmem>>, vector<2x128xf32>
    tpu.vector_store %arg16[%c22, %c0_214], %352 {strides = array<i32>} : memref<32x128xf32, #tpu.memory_space<vmem>>, vector<2x128xf32>,
    %cst_215 = arith.constant 0.000000e+00 : f32
    %354 = vector.broadcast %cst_215 : f32 to vector<2x128xf32>
    %355 = vector.extract_strided_slice %135 {offsets = [0, 48], sizes = [2, 4], strides = [1, 1]} : vector<8x64xf32> to vector<2x4xf32>
    %356 = vector.extract_strided_slice %137 {offsets = [0, 0], sizes = [4, 128], strides = [1, 1]} : vector<32x128xf32> to vector<4x128xf32>
    %cst_216 = arith.constant dense<0.000000e+00> : vector<2x128xf32>
    %357 = tpu.matmul %355, %356, %cst_216 {dimension_numbers = #tpu.dot_dimension_numbers<[1], [0], [0], [1], [0, 0, 1, 1], [], []>} : vector<2x4xf32>, vector<4x128xf32>, vector<2x128xf32> -> vector<2x128xf32>
    %358 = arith.addf %354, %357 : vector<2x128xf32>
    %359 = vector.extract_strided_slice %135 {offsets = [2, 48], sizes = [2, 4], strides = [1, 1]} : vector<8x64xf32> to vector<2x4xf32>
    %360 = vector.extract_strided_slice %137 {offsets = [4, 0], sizes = [4, 128], strides = [1, 1]} : vector<32x128xf32> to vector<4x128xf32>
    %cst_217 = arith.constant dense<0.000000e+00> : vector<2x128xf32>
    %361 = tpu.matmul %359, %360, %cst_217 {dimension_numbers = #tpu.dot_dimension_numbers<[1], [0], [0], [1], [0, 0, 1, 1], [], []>} : vector<2x4xf32>, vector<4x128xf32>, vector<2x128xf32> -> vector<2x128xf32>
    %362 = arith.addf %358, %361 : vector<2x128xf32>
    %363 = vector.extract_strided_slice %135 {offsets = [4, 48], sizes = [2, 4], strides = [1, 1]} : vector<8x64xf32> to vector<2x4xf32>
    %364 = vector.extract_strided_slice %137 {offsets = [8, 0], sizes = [4, 128], strides = [1, 1]} : vector<32x128xf32> to vector<4x128xf32>
    %cst_218 = arith.constant dense<0.000000e+00> : vector<2x128xf32>
    %365 = tpu.matmul %363, %364, %cst_218 {dimension_numbers = #tpu.dot_dimension_numbers<[1], [0], [0], [1], [0, 0, 1, 1], [], []>} : vector<2x4xf32>, vector<4x128xf32>, vector<2x128xf32> -> vector<2x128xf32>
    %366 = arith.addf %362, %365 : vector<2x128xf32>
    %367 = vector.extract_strided_slice %135 {offsets = [6, 48], sizes = [2, 4], strides = [1, 1]} : vector<8x64xf32> to vector<2x4xf32>
    %368 = vector.extract_strided_slice %137 {offsets = [12, 0], sizes = [4, 128], strides = [1, 1]} : vector<32x128xf32> to vector<4x128xf32>
    %cst_219 = arith.constant dense<0.000000e+00> : vector<2x128xf32>
    %369 = tpu.matmul %367, %368, %cst_219 {dimension_numbers = #tpu.dot_dimension_numbers<[1], [0], [0], [1], [0, 0, 1, 1], [], []>} : vector<2x4xf32>, vector<4x128xf32>, vector<2x128xf32> -> vector<2x128xf32>
    %370 = arith.addf %366, %369 : vector<2x128xf32>
    %c24 = arith.constant 24 : index
    %c0_220 = arith.constant 0 : index
    %371 = vector.load %arg16[%c24, %c0_220] : memref<32x128xf32, #tpu.memory_space<vmem>>, vector<2x128xf32>
    tpu.vector_store %arg16[%c24, %c0_220], %370 {strides = array<i32>} : memref<32x128xf32, #tpu.memory_space<vmem>>, vector<2x128xf32>,
    %cst_221 = arith.constant 0.000000e+00 : f32
    %372 = vector.broadcast %cst_221 : f32 to vector<2x128xf32>
    %373 = vector.extract_strided_slice %135 {offsets = [0, 52], sizes = [2, 4], strides = [1, 1]} : vector<8x64xf32> to vector<2x4xf32>
    %374 = vector.extract_strided_slice %137 {offsets = [0, 0], sizes = [4, 128], strides = [1, 1]} : vector<32x128xf32> to vector<4x128xf32>
    %cst_222 = arith.constant dense<0.000000e+00> : vector<2x128xf32>
    %375 = tpu.matmul %373, %374, %cst_222 {dimension_numbers = #tpu.dot_dimension_numbers<[1], [0], [0], [1], [0, 0, 1, 1], [], []>} : vector<2x4xf32>, vector<4x128xf32>, vector<2x128xf32> -> vector<2x128xf32>
    %376 = arith.addf %372, %375 : vector<2x128xf32>
    %377 = vector.extract_strided_slice %135 {offsets = [2, 52], sizes = [2, 4], strides = [1, 1]} : vector<8x64xf32> to vector<2x4xf32>
    %378 = vector.extract_strided_slice %137 {offsets = [4, 0], sizes = [4, 128], strides = [1, 1]} : vector<32x128xf32> to vector<4x128xf32>
    %cst_223 = arith.constant dense<0.000000e+00> : vector<2x128xf32>
    %379 = tpu.matmul %377, %378, %cst_223 {dimension_numbers = #tpu.dot_dimension_numbers<[1], [0], [0], [1], [0, 0, 1, 1], [], []>} : vector<2x4xf32>, vector<4x128xf32>, vector<2x128xf32> -> vector<2x128xf32>
    %380 = arith.addf %376, %379 : vector<2x128xf32>
    %381 = vector.extract_strided_slice %135 {offsets = [4, 52], sizes = [2, 4], strides = [1, 1]} : vector<8x64xf32> to vector<2x4xf32>
    %382 = vector.extract_strided_slice %137 {offsets = [8, 0], sizes = [4, 128], strides = [1, 1]} : vector<32x128xf32> to vector<4x128xf32>
    %cst_224 = arith.constant dense<0.000000e+00> : vector<2x128xf32>
    %383 = tpu.matmul %381, %382, %cst_224 {dimension_numbers = #tpu.dot_dimension_numbers<[1], [0], [0], [1], [0, 0, 1, 1], [], []>} : vector<2x4xf32>, vector<4x128xf32>, vector<2x128xf32> -> vector<2x128xf32>
    %384 = arith.addf %380, %383 : vector<2x128xf32>
    %385 = vector.extract_strided_slice %135 {offsets = [6, 52], sizes = [2, 4], strides = [1, 1]} : vector<8x64xf32> to vector<2x4xf32>
    %386 = vector.extract_strided_slice %137 {offsets = [12, 0], sizes = [4, 128], strides = [1, 1]} : vector<32x128xf32> to vector<4x128xf32>
    %cst_225 = arith.constant dense<0.000000e+00> : vector<2x128xf32>
    %387 = tpu.matmul %385, %386, %cst_225 {dimension_numbers = #tpu.dot_dimension_numbers<[1], [0], [0], [1], [0, 0, 1, 1], [], []>} : vector<2x4xf32>, vector<4x128xf32>, vector<2x128xf32> -> vector<2x128xf32>
    %388 = arith.addf %384, %387 : vector<2x128xf32>
    %c26 = arith.constant 26 : index
    %c0_226 = arith.constant 0 : index
    %389 = vector.load %arg16[%c26, %c0_226] : memref<32x128xf32, #tpu.memory_space<vmem>>, vector<2x128xf32>
    tpu.vector_store %arg16[%c26, %c0_226], %388 {strides = array<i32>} : memref<32x128xf32, #tpu.memory_space<vmem>>, vector<2x128xf32>,
    %cst_227 = arith.constant 0.000000e+00 : f32
    %390 = vector.broadcast %cst_227 : f32 to vector<2x128xf32>
    %391 = vector.extract_strided_slice %135 {offsets = [0, 56], sizes = [2, 4], strides = [1, 1]} : vector<8x64xf32> to vector<2x4xf32>
    %392 = vector.extract_strided_slice %137 {offsets = [0, 0], sizes = [4, 128], strides = [1, 1]} : vector<32x128xf32> to vector<4x128xf32>
    %cst_228 = arith.constant dense<0.000000e+00> : vector<2x128xf32>
    %393 = tpu.matmul %391, %392, %cst_228 {dimension_numbers = #tpu.dot_dimension_numbers<[1], [0], [0], [1], [0, 0, 1, 1], [], []>} : vector<2x4xf32>, vector<4x128xf32>, vector<2x128xf32> -> vector<2x128xf32>
    %394 = arith.addf %390, %393 : vector<2x128xf32>
    %395 = vector.extract_strided_slice %135 {offsets = [2, 56], sizes = [2, 4], strides = [1, 1]} : vector<8x64xf32> to vector<2x4xf32>
    %396 = vector.extract_strided_slice %137 {offsets = [4, 0], sizes = [4, 128], strides = [1, 1]} : vector<32x128xf32> to vector<4x128xf32>
    %cst_229 = arith.constant dense<0.000000e+00> : vector<2x128xf32>
    %397 = tpu.matmul %395, %396, %cst_229 {dimension_numbers = #tpu.dot_dimension_numbers<[1], [0], [0], [1], [0, 0, 1, 1], [], []>} : vector<2x4xf32>, vector<4x128xf32>, vector<2x128xf32> -> vector<2x128xf32>
    %398 = arith.addf %394, %397 : vector<2x128xf32>
    %399 = vector.extract_strided_slice %135 {offsets = [4, 56], sizes = [2, 4], strides = [1, 1]} : vector<8x64xf32> to vector<2x4xf32>
    %400 = vector.extract_strided_slice %137 {offsets = [8, 0], sizes = [4, 128], strides = [1, 1]} : vector<32x128xf32> to vector<4x128xf32>
    %cst_230 = arith.constant dense<0.000000e+00> : vector<2x128xf32>
    %401 = tpu.matmul %399, %400, %cst_230 {dimension_numbers = #tpu.dot_dimension_numbers<[1], [0], [0], [1], [0, 0, 1, 1], [], []>} : vector<2x4xf32>, vector<4x128xf32>, vector<2x128xf32> -> vector<2x128xf32>
    %402 = arith.addf %398, %401 : vector<2x128xf32>
    %403 = vector.extract_strided_slice %135 {offsets = [6, 56], sizes = [2, 4], strides = [1, 1]} : vector<8x64xf32> to vector<2x4xf32>
    %404 = vector.extract_strided_slice %137 {offsets = [12, 0], sizes = [4, 128], strides = [1, 1]} : vector<32x128xf32> to vector<4x128xf32>
    %cst_231 = arith.constant dense<0.000000e+00> : vector<2x128xf32>
    %405 = tpu.matmul %403, %404, %cst_231 {dimension_numbers = #tpu.dot_dimension_numbers<[1], [0], [0], [1], [0, 0, 1, 1], [], []>} : vector<2x4xf32>, vector<4x128xf32>, vector<2x128xf32> -> vector<2x128xf32>
    %406 = arith.addf %402, %405 : vector<2x128xf32>
    %c28 = arith.constant 28 : index
    %c0_232 = arith.constant 0 : index
    %407 = vector.load %arg16[%c28, %c0_232] : memref<32x128xf32, #tpu.memory_space<vmem>>, vector<2x128xf32>
    tpu.vector_store %arg16[%c28, %c0_232], %406 {strides = array<i32>} : memref<32x128xf32, #tpu.memory_space<vmem>>, vector<2x128xf32>,
    %cst_233 = arith.constant 0.000000e+00 : f32
    %408 = vector.broadcast %cst_233 : f32 to vector<2x128xf32>
    %409 = vector.extract_strided_slice %135 {offsets = [0, 60], sizes = [2, 4], strides = [1, 1]} : vector<8x64xf32> to vector<2x4xf32>
    %410 = vector.extract_strided_slice %137 {offsets = [0, 0], sizes = [4, 128], strides = [1, 1]} : vector<32x128xf32> to vector<4x128xf32>
    %cst_234 = arith.constant dense<0.000000e+00> : vector<2x128xf32>
    %411 = tpu.matmul %409, %410, %cst_234 {dimension_numbers = #tpu.dot_dimension_numbers<[1], [0], [0], [1], [0, 0, 1, 1], [], []>} : vector<2x4xf32>, vector<4x128xf32>, vector<2x128xf32> -> vector<2x128xf32>
    %412 = arith.addf %408, %411 : vector<2x128xf32>
    %413 = vector.extract_strided_slice %135 {offsets = [2, 60], sizes = [2, 4], strides = [1, 1]} : vector<8x64xf32> to vector<2x4xf32>
    %414 = vector.extract_strided_slice %137 {offsets = [4, 0], sizes = [4, 128], strides = [1, 1]} : vector<32x128xf32> to vector<4x128xf32>
    %cst_235 = arith.constant dense<0.000000e+00> : vector<2x128xf32>
    %415 = tpu.matmul %413, %414, %cst_235 {dimension_numbers = #tpu.dot_dimension_numbers<[1], [0], [0], [1], [0, 0, 1, 1], [], []>} : vector<2x4xf32>, vector<4x128xf32>, vector<2x128xf32> -> vector<2x128xf32>
    %416 = arith.addf %412, %415 : vector<2x128xf32>
    %417 = vector.extract_strided_slice %135 {offsets = [4, 60], sizes = [2, 4], strides = [1, 1]} : vector<8x64xf32> to vector<2x4xf32>
    %418 = vector.extract_strided_slice %137 {offsets = [8, 0], sizes = [4, 128], strides = [1, 1]} : vector<32x128xf32> to vector<4x128xf32>
    %cst_236 = arith.constant dense<0.000000e+00> : vector<2x128xf32>
    %419 = tpu.matmul %417, %418, %cst_236 {dimension_numbers = #tpu.dot_dimension_numbers<[1], [0], [0], [1], [0, 0, 1, 1], [], []>} : vector<2x4xf32>, vector<4x128xf32>, vector<2x128xf32> -> vector<2x128xf32>
    %420 = arith.addf %416, %419 : vector<2x128xf32>
    %421 = vector.extract_strided_slice %135 {offsets = [6, 60], sizes = [2, 4], strides = [1, 1]} : vector<8x64xf32> to vector<2x4xf32>
    %422 = vector.extract_strided_slice %137 {offsets = [12, 0], sizes = [4, 128], strides = [1, 1]} : vector<32x128xf32> to vector<4x128xf32>
    %cst_237 = arith.constant dense<0.000000e+00> : vector<2x128xf32>
    %423 = tpu.matmul %421, %422, %cst_237 {dimension_numbers = #tpu.dot_dimension_numbers<[1], [0], [0], [1], [0, 0, 1, 1], [], []>} : vector<2x4xf32>, vector<4x128xf32>, vector<2x128xf32> -> vector<2x128xf32>
    %424 = arith.addf %420, %423 : vector<2x128xf32>
    %c30 = arith.constant 30 : index
    %c0_238 = arith.constant 0 : index
    %425 = vector.load %arg16[%c30, %c0_238] : memref<32x128xf32, #tpu.memory_space<vmem>>, vector<2x128xf32>
    tpu.vector_store %arg16[%c30, %c0_238], %424 {strides = array<i32>} : memref<32x128xf32, #tpu.memory_space<vmem>>, vector<2x128xf32>,
    %c0_i32 = arith.constant 0 : i32
    %c10_i32 = arith.constant 10 : i32
    %426 = arith.addi %c0_i32, %c10_i32 : i32
    %c1_i32 = arith.constant 1 : i32
    scf.for %arg17 = %c0_i32 to %426 step %c1_i32  : i32 {
      %436 = arith.index_cast %arg17 : i32 to index
      %c0_249 = arith.constant 0 : index
      %c0_250 = arith.constant 0 : index
      %437 = vector.load %arg11[%436, %c0_249, %c0_250] : memref<10x32x128xf32, #tpu.memory_space<vmem>>, vector<1x32x128xf32>
      %438 = vector.shape_cast %437 : vector<1x32x128xf32> to vector<32x128xf32>
      %c1_i32_251 = arith.constant 1 : i32
      %439 = arith.addi %arg17, %c1_i32_251 : i32
      %440 = arith.index_cast %439 : i32 to index
      %c0_252 = arith.constant 0 : index
      %c0_253 = arith.constant 0 : index
      %441 = vector.load %arg10[%440, %c0_252, %c0_253] : memref<11x32x128xf32, #tpu.memory_space<vmem>>, vector<1x32x128xf32>
      %442 = vector.shape_cast %441 : vector<1x32x128xf32> to vector<32x128xf32>
      %443 = arith.index_cast %arg17 : i32 to index
      %c0_254 = arith.constant 0 : index
      %c0_255 = arith.constant 0 : index
      %444 = vector.load %arg12[%443, %c0_254, %c0_255] : memref<10x1x128xf32, #tpu.memory_space<vmem>>, vector<1x1x128xf32>
      %445 = vector.shape_cast %444 : vector<1x1x128xf32> to vector<1x128xf32>
      %cst_256 = arith.constant 0.000000e+00 : f32
      %446 = vector.broadcast %cst_256 : f32 to vector<2x32xf32>
      %cst_257 = arith.constant 0.000000e+00 : f32
      %447 = vector.broadcast %cst_257 : f32 to vector<2x32xf32>
      %c0_258 = arith.constant 0 : index
      %c0_259 = arith.constant 0 : index
      %448 = vector.load %arg16[%c0_258, %c0_259] : memref<32x128xf32, #tpu.memory_space<vmem>>, vector<2x128xf32>
      %cst_260 = arith.constant dense<0.000000e+00> : vector<2x128xf32>
      %449 = tpu.matmul %446, %438, %cst_260 {dimension_numbers = #tpu.dot_dimension_numbers<[1], [0], [0], [1], [0, 0, 1, 1], [], []>} : vector<2x32xf32>, vector<32x128xf32>, vector<2x128xf32> -> vector<2x128xf32>
      %450 = arith.addf %448, %449 : vector<2x128xf32>
      %451 = vector.broadcast %445 : vector<1x128xf32> to vector<2x128xf32>
      %452 = arith.addf %450, %451 : vector<2x128xf32>
      %453 = arith.negf %452 : vector<2x128xf32>
      %454 = math.exp %453 : vector<2x128xf32>
      %cst_261 = arith.constant 1.000000e+00 : f32
      %455 = vector.broadcast %cst_261 : f32 to vector<2x128xf32>
      %456 = arith.addf %455, %454 : vector<2x128xf32>
      %457 = arith.divf %455, %456 : vector<2x128xf32>
      %458 = vector.extract_strided_slice %457 {offsets = [0, 0], sizes = [2, 32], strides = [1, 1]} : vector<2x128xf32> to vector<2x32xf32>
      %459 = vector.extract_strided_slice %457 {offsets = [0, 32], sizes = [2, 32], strides = [1, 1]} : vector<2x128xf32> to vector<2x32xf32>
      %460 = vector.extract_strided_slice %452 {offsets = [0, 64], sizes = [2, 32], strides = [1, 1]} : vector<2x128xf32> to vector<2x32xf32>
      %461 = math.tanh %460 : vector<2x32xf32>
      %462 = vector.extract_strided_slice %457 {offsets = [0, 96], sizes = [2, 32], strides = [1, 1]} : vector<2x128xf32> to vector<2x32xf32>
      %463 = arith.mulf %459, %447 : vector<2x32xf32>
      %464 = arith.mulf %458, %461 : vector<2x32xf32>
      %465 = arith.addf %463, %464 : vector<2x32xf32>
      %466 = math.tanh %465 : vector<2x32xf32>
      %467 = arith.mulf %462, %466 : vector<2x32xf32>
      %cst_262 = arith.constant dense<0.000000e+00> : vector<2x128xf32>
      %468 = tpu.matmul %467, %442, %cst_262 {dimension_numbers = #tpu.dot_dimension_numbers<[1], [0], [0], [1], [0, 0, 1, 1], [], []>} : vector<2x32xf32>, vector<32x128xf32>, vector<2x128xf32> -> vector<2x128xf32>
      %c0_263 = arith.constant 0 : index
      %c0_264 = arith.constant 0 : index
      %469 = vector.load %arg16[%c0_263, %c0_264] : memref<32x128xf32, #tpu.memory_space<vmem>>, vector<2x128xf32>
      tpu.vector_store %arg16[%c0_263, %c0_264], %468 {strides = array<i32>} : memref<32x128xf32, #tpu.memory_space<vmem>>, vector<2x128xf32>,
      %c2_265 = arith.constant 2 : index
      %c0_266 = arith.constant 0 : index
      %470 = vector.load %arg16[%c2_265, %c0_266] : memref<32x128xf32, #tpu.memory_space<vmem>>, vector<2x128xf32>
      %cst_267 = arith.constant dense<0.000000e+00> : vector<2x128xf32>
      %471 = tpu.matmul %467, %438, %cst_267 {dimension_numbers = #tpu.dot_dimension_numbers<[1], [0], [0], [1], [0, 0, 1, 1], [], []>} : vector<2x32xf32>, vector<32x128xf32>, vector<2x128xf32> -> vector<2x128xf32>
      %472 = arith.addf %470, %471 : vector<2x128xf32>
      %473 = vector.broadcast %445 : vector<1x128xf32> to vector<2x128xf32>
      %474 = arith.addf %472, %473 : vector<2x128xf32>
      %475 = arith.negf %474 : vector<2x128xf32>
      %476 = math.exp %475 : vector<2x128xf32>
      %cst_268 = arith.constant 1.000000e+00 : f32
      %477 = vector.broadcast %cst_268 : f32 to vector<2x128xf32>
      %478 = arith.addf %477, %476 : vector<2x128xf32>
      %479 = arith.divf %477, %478 : vector<2x128xf32>
      %480 = vector.extract_strided_slice %479 {offsets = [0, 0], sizes = [2, 32], strides = [1, 1]} : vector<2x128xf32> to vector<2x32xf32>
      %481 = vector.extract_strided_slice %479 {offsets = [0, 32], sizes = [2, 32], strides = [1, 1]} : vector<2x128xf32> to vector<2x32xf32>
      %482 = vector.extract_strided_slice %474 {offsets = [0, 64], sizes = [2, 32], strides = [1, 1]} : vector<2x128xf32> to vector<2x32xf32>
      %483 = math.tanh %482 : vector<2x32xf32>
      %484 = vector.extract_strided_slice %479 {offsets = [0, 96], sizes = [2, 32], strides = [1, 1]} : vector<2x128xf32> to vector<2x32xf32>
      %485 = arith.mulf %481, %465 : vector<2x32xf32>
      %486 = arith.mulf %480, %483 : vector<2x32xf32>
      %487 = arith.addf %485, %486 : vector<2x32xf32>
      %488 = math.tanh %487 : vector<2x32xf32>
      %489 = arith.mulf %484, %488 : vector<2x32xf32>
      %cst_269 = arith.constant dense<0.000000e+00> : vector<2x128xf32>
      %490 = tpu.matmul %489, %442, %cst_269 {dimension_numbers = #tpu.dot_dimension_numbers<[1], [0], [0], [1], [0, 0, 1, 1], [], []>} : vector<2x32xf32>, vector<32x128xf32>, vector<2x128xf32> -> vector<2x128xf32>
      %c2_270 = arith.constant 2 : index
      %c0_271 = arith.constant 0 : index
      %491 = vector.load %arg16[%c2_270, %c0_271] : memref<32x128xf32, #tpu.memory_space<vmem>>, vector<2x128xf32>
      tpu.vector_store %arg16[%c2_270, %c0_271], %490 {strides = array<i32>} : memref<32x128xf32, #tpu.memory_space<vmem>>, vector<2x128xf32>,
      %c4_272 = arith.constant 4 : index
      %c0_273 = arith.constant 0 : index
      %492 = vector.load %arg16[%c4_272, %c0_273] : memref<32x128xf32, #tpu.memory_space<vmem>>, vector<2x128xf32>
      %cst_274 = arith.constant dense<0.000000e+00> : vector<2x128xf32>
      %493 = tpu.matmul %489, %438, %cst_274 {dimension_numbers = #tpu.dot_dimension_numbers<[1], [0], [0], [1], [0, 0, 1, 1], [], []>} : vector<2x32xf32>, vector<32x128xf32>, vector<2x128xf32> -> vector<2x128xf32>
      %494 = arith.addf %492, %493 : vector<2x128xf32>
      %495 = vector.broadcast %445 : vector<1x128xf32> to vector<2x128xf32>
      %496 = arith.addf %494, %495 : vector<2x128xf32>
      %497 = arith.negf %496 : vector<2x128xf32>
      %498 = math.exp %497 : vector<2x128xf32>
      %cst_275 = arith.constant 1.000000e+00 : f32
      %499 = vector.broadcast %cst_275 : f32 to vector<2x128xf32>
      %500 = arith.addf %499, %498 : vector<2x128xf32>
      %501 = arith.divf %499, %500 : vector<2x128xf32>
      %502 = vector.extract_strided_slice %501 {offsets = [0, 0], sizes = [2, 32], strides = [1, 1]} : vector<2x128xf32> to vector<2x32xf32>
      %503 = vector.extract_strided_slice %501 {offsets = [0, 32], sizes = [2, 32], strides = [1, 1]} : vector<2x128xf32> to vector<2x32xf32>
      %504 = vector.extract_strided_slice %496 {offsets = [0, 64], sizes = [2, 32], strides = [1, 1]} : vector<2x128xf32> to vector<2x32xf32>
      %505 = math.tanh %504 : vector<2x32xf32>
      %506 = vector.extract_strided_slice %501 {offsets = [0, 96], sizes = [2, 32], strides = [1, 1]} : vector<2x128xf32> to vector<2x32xf32>
      %507 = arith.mulf %503, %487 : vector<2x32xf32>
      %508 = arith.mulf %502, %505 : vector<2x32xf32>
      %509 = arith.addf %507, %508 : vector<2x32xf32>
      %510 = math.tanh %509 : vector<2x32xf32>
      %511 = arith.mulf %506, %510 : vector<2x32xf32>
      %cst_276 = arith.constant dense<0.000000e+00> : vector<2x128xf32>
      %512 = tpu.matmul %511, %442, %cst_276 {dimension_numbers = #tpu.dot_dimension_numbers<[1], [0], [0], [1], [0, 0, 1, 1], [], []>} : vector<2x32xf32>, vector<32x128xf32>, vector<2x128xf32> -> vector<2x128xf32>
      %c4_277 = arith.constant 4 : index
      %c0_278 = arith.constant 0 : index
      %513 = vector.load %arg16[%c4_277, %c0_278] : memref<32x128xf32, #tpu.memory_space<vmem>>, vector<2x128xf32>
      tpu.vector_store %arg16[%c4_277, %c0_278], %512 {strides = array<i32>} : memref<32x128xf32, #tpu.memory_space<vmem>>, vector<2x128xf32>,
      %c6_279 = arith.constant 6 : index
      %c0_280 = arith.constant 0 : index
      %514 = vector.load %arg16[%c6_279, %c0_280] : memref<32x128xf32, #tpu.memory_space<vmem>>, vector<2x128xf32>
      %cst_281 = arith.constant dense<0.000000e+00> : vector<2x128xf32>
      %515 = tpu.matmul %511, %438, %cst_281 {dimension_numbers = #tpu.dot_dimension_numbers<[1], [0], [0], [1], [0, 0, 1, 1], [], []>} : vector<2x32xf32>, vector<32x128xf32>, vector<2x128xf32> -> vector<2x128xf32>
      %516 = arith.addf %514, %515 : vector<2x128xf32>
      %517 = vector.broadcast %445 : vector<1x128xf32> to vector<2x128xf32>
      %518 = arith.addf %516, %517 : vector<2x128xf32>
      %519 = arith.negf %518 : vector<2x128xf32>
      %520 = math.exp %519 : vector<2x128xf32>
      %cst_282 = arith.constant 1.000000e+00 : f32
      %521 = vector.broadcast %cst_282 : f32 to vector<2x128xf32>
      %522 = arith.addf %521, %520 : vector<2x128xf32>
      %523 = arith.divf %521, %522 : vector<2x128xf32>
      %524 = vector.extract_strided_slice %523 {offsets = [0, 0], sizes = [2, 32], strides = [1, 1]} : vector<2x128xf32> to vector<2x32xf32>
      %525 = vector.extract_strided_slice %523 {offsets = [0, 32], sizes = [2, 32], strides = [1, 1]} : vector<2x128xf32> to vector<2x32xf32>
      %526 = vector.extract_strided_slice %518 {offsets = [0, 64], sizes = [2, 32], strides = [1, 1]} : vector<2x128xf32> to vector<2x32xf32>
      %527 = math.tanh %526 : vector<2x32xf32>
      %528 = vector.extract_strided_slice %523 {offsets = [0, 96], sizes = [2, 32], strides = [1, 1]} : vector<2x128xf32> to vector<2x32xf32>
      %529 = arith.mulf %525, %509 : vector<2x32xf32>
      %530 = arith.mulf %524, %527 : vector<2x32xf32>
      %531 = arith.addf %529, %530 : vector<2x32xf32>
      %532 = math.tanh %531 : vector<2x32xf32>
      %533 = arith.mulf %528, %532 : vector<2x32xf32>
      %cst_283 = arith.constant dense<0.000000e+00> : vector<2x128xf32>
      %534 = tpu.matmul %533, %442, %cst_283 {dimension_numbers = #tpu.dot_dimension_numbers<[1], [0], [0], [1], [0, 0, 1, 1], [], []>} : vector<2x32xf32>, vector<32x128xf32>, vector<2x128xf32> -> vector<2x128xf32>
      %c6_284 = arith.constant 6 : index
      %c0_285 = arith.constant 0 : index
      %535 = vector.load %arg16[%c6_284, %c0_285] : memref<32x128xf32, #tpu.memory_space<vmem>>, vector<2x128xf32>
      tpu.vector_store %arg16[%c6_284, %c0_285], %534 {strides = array<i32>} : memref<32x128xf32, #tpu.memory_space<vmem>>, vector<2x128xf32>,
      %c8_286 = arith.constant 8 : index
      %c0_287 = arith.constant 0 : index
      %536 = vector.load %arg16[%c8_286, %c0_287] : memref<32x128xf32, #tpu.memory_space<vmem>>, vector<2x128xf32>
      %cst_288 = arith.constant dense<0.000000e+00> : vector<2x128xf32>
      %537 = tpu.matmul %533, %438, %cst_288 {dimension_numbers = #tpu.dot_dimension_numbers<[1], [0], [0], [1], [0, 0, 1, 1], [], []>} : vector<2x32xf32>, vector<32x128xf32>, vector<2x128xf32> -> vector<2x128xf32>
      %538 = arith.addf %536, %537 : vector<2x128xf32>
      %539 = vector.broadcast %445 : vector<1x128xf32> to vector<2x128xf32>
      %540 = arith.addf %538, %539 : vector<2x128xf32>
      %541 = arith.negf %540 : vector<2x128xf32>
      %542 = math.exp %541 : vector<2x128xf32>
      %cst_289 = arith.constant 1.000000e+00 : f32
      %543 = vector.broadcast %cst_289 : f32 to vector<2x128xf32>
      %544 = arith.addf %543, %542 : vector<2x128xf32>
      %545 = arith.divf %543, %544 : vector<2x128xf32>
      %546 = vector.extract_strided_slice %545 {offsets = [0, 0], sizes = [2, 32], strides = [1, 1]} : vector<2x128xf32> to vector<2x32xf32>
      %547 = vector.extract_strided_slice %545 {offsets = [0, 32], sizes = [2, 32], strides = [1, 1]} : vector<2x128xf32> to vector<2x32xf32>
      %548 = vector.extract_strided_slice %540 {offsets = [0, 64], sizes = [2, 32], strides = [1, 1]} : vector<2x128xf32> to vector<2x32xf32>
      %549 = math.tanh %548 : vector<2x32xf32>
      %550 = vector.extract_strided_slice %545 {offsets = [0, 96], sizes = [2, 32], strides = [1, 1]} : vector<2x128xf32> to vector<2x32xf32>
      %551 = arith.mulf %547, %531 : vector<2x32xf32>
      %552 = arith.mulf %546, %549 : vector<2x32xf32>
      %553 = arith.addf %551, %552 : vector<2x32xf32>
      %554 = math.tanh %553 : vector<2x32xf32>
      %555 = arith.mulf %550, %554 : vector<2x32xf32>
      %cst_290 = arith.constant dense<0.000000e+00> : vector<2x128xf32>
      %556 = tpu.matmul %555, %442, %cst_290 {dimension_numbers = #tpu.dot_dimension_numbers<[1], [0], [0], [1], [0, 0, 1, 1], [], []>} : vector<2x32xf32>, vector<32x128xf32>, vector<2x128xf32> -> vector<2x128xf32>
      %c8_291 = arith.constant 8 : index
      %c0_292 = arith.constant 0 : index
      %557 = vector.load %arg16[%c8_291, %c0_292] : memref<32x128xf32, #tpu.memory_space<vmem>>, vector<2x128xf32>
      tpu.vector_store %arg16[%c8_291, %c0_292], %556 {strides = array<i32>} : memref<32x128xf32, #tpu.memory_space<vmem>>, vector<2x128xf32>,
      %c10_293 = arith.constant 10 : index
      %c0_294 = arith.constant 0 : index
      %558 = vector.load %arg16[%c10_293, %c0_294] : memref<32x128xf32, #tpu.memory_space<vmem>>, vector<2x128xf32>
      %cst_295 = arith.constant dense<0.000000e+00> : vector<2x128xf32>
      %559 = tpu.matmul %555, %438, %cst_295 {dimension_numbers = #tpu.dot_dimension_numbers<[1], [0], [0], [1], [0, 0, 1, 1], [], []>} : vector<2x32xf32>, vector<32x128xf32>, vector<2x128xf32> -> vector<2x128xf32>
      %560 = arith.addf %558, %559 : vector<2x128xf32>
      %561 = vector.broadcast %445 : vector<1x128xf32> to vector<2x128xf32>
      %562 = arith.addf %560, %561 : vector<2x128xf32>
      %563 = arith.negf %562 : vector<2x128xf32>
      %564 = math.exp %563 : vector<2x128xf32>
      %cst_296 = arith.constant 1.000000e+00 : f32
      %565 = vector.broadcast %cst_296 : f32 to vector<2x128xf32>
      %566 = arith.addf %565, %564 : vector<2x128xf32>
      %567 = arith.divf %565, %566 : vector<2x128xf32>
      %568 = vector.extract_strided_slice %567 {offsets = [0, 0], sizes = [2, 32], strides = [1, 1]} : vector<2x128xf32> to vector<2x32xf32>
      %569 = vector.extract_strided_slice %567 {offsets = [0, 32], sizes = [2, 32], strides = [1, 1]} : vector<2x128xf32> to vector<2x32xf32>
      %570 = vector.extract_strided_slice %562 {offsets = [0, 64], sizes = [2, 32], strides = [1, 1]} : vector<2x128xf32> to vector<2x32xf32>
      %571 = math.tanh %570 : vector<2x32xf32>
      %572 = vector.extract_strided_slice %567 {offsets = [0, 96], sizes = [2, 32], strides = [1, 1]} : vector<2x128xf32> to vector<2x32xf32>
      %573 = arith.mulf %569, %553 : vector<2x32xf32>
      %574 = arith.mulf %568, %571 : vector<2x32xf32>
      %575 = arith.addf %573, %574 : vector<2x32xf32>
      %576 = math.tanh %575 : vector<2x32xf32>
      %577 = arith.mulf %572, %576 : vector<2x32xf32>
      %cst_297 = arith.constant dense<0.000000e+00> : vector<2x128xf32>
      %578 = tpu.matmul %577, %442, %cst_297 {dimension_numbers = #tpu.dot_dimension_numbers<[1], [0], [0], [1], [0, 0, 1, 1], [], []>} : vector<2x32xf32>, vector<32x128xf32>, vector<2x128xf32> -> vector<2x128xf32>
      %c10_298 = arith.constant 10 : index
      %c0_299 = arith.constant 0 : index
      %579 = vector.load %arg16[%c10_298, %c0_299] : memref<32x128xf32, #tpu.memory_space<vmem>>, vector<2x128xf32>
      tpu.vector_store %arg16[%c10_298, %c0_299], %578 {strides = array<i32>} : memref<32x128xf32, #tpu.memory_space<vmem>>, vector<2x128xf32>,
      %c12_300 = arith.constant 12 : index
      %c0_301 = arith.constant 0 : index
      %580 = vector.load %arg16[%c12_300, %c0_301] : memref<32x128xf32, #tpu.memory_space<vmem>>, vector<2x128xf32>
      %cst_302 = arith.constant dense<0.000000e+00> : vector<2x128xf32>
      %581 = tpu.matmul %577, %438, %cst_302 {dimension_numbers = #tpu.dot_dimension_numbers<[1], [0], [0], [1], [0, 0, 1, 1], [], []>} : vector<2x32xf32>, vector<32x128xf32>, vector<2x128xf32> -> vector<2x128xf32>
      %582 = arith.addf %580, %581 : vector<2x128xf32>
      %583 = vector.broadcast %445 : vector<1x128xf32> to vector<2x128xf32>
      %584 = arith.addf %582, %583 : vector<2x128xf32>
      %585 = arith.negf %584 : vector<2x128xf32>
      %586 = math.exp %585 : vector<2x128xf32>
      %cst_303 = arith.constant 1.000000e+00 : f32
      %587 = vector.broadcast %cst_303 : f32 to vector<2x128xf32>
      %588 = arith.addf %587, %586 : vector<2x128xf32>
      %589 = arith.divf %587, %588 : vector<2x128xf32>
      %590 = vector.extract_strided_slice %589 {offsets = [0, 0], sizes = [2, 32], strides = [1, 1]} : vector<2x128xf32> to vector<2x32xf32>
      %591 = vector.extract_strided_slice %589 {offsets = [0, 32], sizes = [2, 32], strides = [1, 1]} : vector<2x128xf32> to vector<2x32xf32>
      %592 = vector.extract_strided_slice %584 {offsets = [0, 64], sizes = [2, 32], strides = [1, 1]} : vector<2x128xf32> to vector<2x32xf32>
      %593 = math.tanh %592 : vector<2x32xf32>
      %594 = vector.extract_strided_slice %589 {offsets = [0, 96], sizes = [2, 32], strides = [1, 1]} : vector<2x128xf32> to vector<2x32xf32>
      %595 = arith.mulf %591, %575 : vector<2x32xf32>
      %596 = arith.mulf %590, %593 : vector<2x32xf32>
      %597 = arith.addf %595, %596 : vector<2x32xf32>
      %598 = math.tanh %597 : vector<2x32xf32>
      %599 = arith.mulf %594, %598 : vector<2x32xf32>
      %cst_304 = arith.constant dense<0.000000e+00> : vector<2x128xf32>
      %600 = tpu.matmul %599, %442, %cst_304 {dimension_numbers = #tpu.dot_dimension_numbers<[1], [0], [0], [1], [0, 0, 1, 1], [], []>} : vector<2x32xf32>, vector<32x128xf32>, vector<2x128xf32> -> vector<2x128xf32>
      %c12_305 = arith.constant 12 : index
      %c0_306 = arith.constant 0 : index
      %601 = vector.load %arg16[%c12_305, %c0_306] : memref<32x128xf32, #tpu.memory_space<vmem>>, vector<2x128xf32>
      tpu.vector_store %arg16[%c12_305, %c0_306], %600 {strides = array<i32>} : memref<32x128xf32, #tpu.memory_space<vmem>>, vector<2x128xf32>,
      %c14_307 = arith.constant 14 : index
      %c0_308 = arith.constant 0 : index
      %602 = vector.load %arg16[%c14_307, %c0_308] : memref<32x128xf32, #tpu.memory_space<vmem>>, vector<2x128xf32>
      %cst_309 = arith.constant dense<0.000000e+00> : vector<2x128xf32>
      %603 = tpu.matmul %599, %438, %cst_309 {dimension_numbers = #tpu.dot_dimension_numbers<[1], [0], [0], [1], [0, 0, 1, 1], [], []>} : vector<2x32xf32>, vector<32x128xf32>, vector<2x128xf32> -> vector<2x128xf32>
      %604 = arith.addf %602, %603 : vector<2x128xf32>
      %605 = vector.broadcast %445 : vector<1x128xf32> to vector<2x128xf32>
      %606 = arith.addf %604, %605 : vector<2x128xf32>
      %607 = arith.negf %606 : vector<2x128xf32>
      %608 = math.exp %607 : vector<2x128xf32>
      %cst_310 = arith.constant 1.000000e+00 : f32
      %609 = vector.broadcast %cst_310 : f32 to vector<2x128xf32>
      %610 = arith.addf %609, %608 : vector<2x128xf32>
      %611 = arith.divf %609, %610 : vector<2x128xf32>
      %612 = vector.extract_strided_slice %611 {offsets = [0, 0], sizes = [2, 32], strides = [1, 1]} : vector<2x128xf32> to vector<2x32xf32>
      %613 = vector.extract_strided_slice %611 {offsets = [0, 32], sizes = [2, 32], strides = [1, 1]} : vector<2x128xf32> to vector<2x32xf32>
      %614 = vector.extract_strided_slice %606 {offsets = [0, 64], sizes = [2, 32], strides = [1, 1]} : vector<2x128xf32> to vector<2x32xf32>
      %615 = math.tanh %614 : vector<2x32xf32>
      %616 = vector.extract_strided_slice %611 {offsets = [0, 96], sizes = [2, 32], strides = [1, 1]} : vector<2x128xf32> to vector<2x32xf32>
      %617 = arith.mulf %613, %597 : vector<2x32xf32>
      %618 = arith.mulf %612, %615 : vector<2x32xf32>
      %619 = arith.addf %617, %618 : vector<2x32xf32>
      %620 = math.tanh %619 : vector<2x32xf32>
      %621 = arith.mulf %616, %620 : vector<2x32xf32>
      %cst_311 = arith.constant dense<0.000000e+00> : vector<2x128xf32>
      %622 = tpu.matmul %621, %442, %cst_311 {dimension_numbers = #tpu.dot_dimension_numbers<[1], [0], [0], [1], [0, 0, 1, 1], [], []>} : vector<2x32xf32>, vector<32x128xf32>, vector<2x128xf32> -> vector<2x128xf32>
      %c14_312 = arith.constant 14 : index
      %c0_313 = arith.constant 0 : index
      %623 = vector.load %arg16[%c14_312, %c0_313] : memref<32x128xf32, #tpu.memory_space<vmem>>, vector<2x128xf32>
      tpu.vector_store %arg16[%c14_312, %c0_313], %622 {strides = array<i32>} : memref<32x128xf32, #tpu.memory_space<vmem>>, vector<2x128xf32>,
      %c16_314 = arith.constant 16 : index
      %c0_315 = arith.constant 0 : index
      %624 = vector.load %arg16[%c16_314, %c0_315] : memref<32x128xf32, #tpu.memory_space<vmem>>, vector<2x128xf32>
      %cst_316 = arith.constant dense<0.000000e+00> : vector<2x128xf32>
      %625 = tpu.matmul %621, %438, %cst_316 {dimension_numbers = #tpu.dot_dimension_numbers<[1], [0], [0], [1], [0, 0, 1, 1], [], []>} : vector<2x32xf32>, vector<32x128xf32>, vector<2x128xf32> -> vector<2x128xf32>
      %626 = arith.addf %624, %625 : vector<2x128xf32>
      %627 = vector.broadcast %445 : vector<1x128xf32> to vector<2x128xf32>
      %628 = arith.addf %626, %627 : vector<2x128xf32>
      %629 = arith.negf %628 : vector<2x128xf32>
      %630 = math.exp %629 : vector<2x128xf32>
      %cst_317 = arith.constant 1.000000e+00 : f32
      %631 = vector.broadcast %cst_317 : f32 to vector<2x128xf32>
      %632 = arith.addf %631, %630 : vector<2x128xf32>
      %633 = arith.divf %631, %632 : vector<2x128xf32>
      %634 = vector.extract_strided_slice %633 {offsets = [0, 0], sizes = [2, 32], strides = [1, 1]} : vector<2x128xf32> to vector<2x32xf32>
      %635 = vector.extract_strided_slice %633 {offsets = [0, 32], sizes = [2, 32], strides = [1, 1]} : vector<2x128xf32> to vector<2x32xf32>
      %636 = vector.extract_strided_slice %628 {offsets = [0, 64], sizes = [2, 32], strides = [1, 1]} : vector<2x128xf32> to vector<2x32xf32>
      %637 = math.tanh %636 : vector<2x32xf32>
      %638 = vector.extract_strided_slice %633 {offsets = [0, 96], sizes = [2, 32], strides = [1, 1]} : vector<2x128xf32> to vector<2x32xf32>
      %639 = arith.mulf %635, %619 : vector<2x32xf32>
      %640 = arith.mulf %634, %637 : vector<2x32xf32>
      %641 = arith.addf %639, %640 : vector<2x32xf32>
      %642 = math.tanh %641 : vector<2x32xf32>
      %643 = arith.mulf %638, %642 : vector<2x32xf32>
      %cst_318 = arith.constant dense<0.000000e+00> : vector<2x128xf32>
      %644 = tpu.matmul %643, %442, %cst_318 {dimension_numbers = #tpu.dot_dimension_numbers<[1], [0], [0], [1], [0, 0, 1, 1], [], []>} : vector<2x32xf32>, vector<32x128xf32>, vector<2x128xf32> -> vector<2x128xf32>
      %c16_319 = arith.constant 16 : index
      %c0_320 = arith.constant 0 : index
      %645 = vector.load %arg16[%c16_319, %c0_320] : memref<32x128xf32, #tpu.memory_space<vmem>>, vector<2x128xf32>
      tpu.vector_store %arg16[%c16_319, %c0_320], %644 {strides = array<i32>} : memref<32x128xf32, #tpu.memory_space<vmem>>, vector<2x128xf32>,
      %c18_321 = arith.constant 18 : index
      %c0_322 = arith.constant 0 : index
      %646 = vector.load %arg16[%c18_321, %c0_322] : memref<32x128xf32, #tpu.memory_space<vmem>>, vector<2x128xf32>
      %cst_323 = arith.constant dense<0.000000e+00> : vector<2x128xf32>
      %647 = tpu.matmul %643, %438, %cst_323 {dimension_numbers = #tpu.dot_dimension_numbers<[1], [0], [0], [1], [0, 0, 1, 1], [], []>} : vector<2x32xf32>, vector<32x128xf32>, vector<2x128xf32> -> vector<2x128xf32>
      %648 = arith.addf %646, %647 : vector<2x128xf32>
      %649 = vector.broadcast %445 : vector<1x128xf32> to vector<2x128xf32>
      %650 = arith.addf %648, %649 : vector<2x128xf32>
      %651 = arith.negf %650 : vector<2x128xf32>
      %652 = math.exp %651 : vector<2x128xf32>
      %cst_324 = arith.constant 1.000000e+00 : f32
      %653 = vector.broadcast %cst_324 : f32 to vector<2x128xf32>
      %654 = arith.addf %653, %652 : vector<2x128xf32>
      %655 = arith.divf %653, %654 : vector<2x128xf32>
      %656 = vector.extract_strided_slice %655 {offsets = [0, 0], sizes = [2, 32], strides = [1, 1]} : vector<2x128xf32> to vector<2x32xf32>
      %657 = vector.extract_strided_slice %655 {offsets = [0, 32], sizes = [2, 32], strides = [1, 1]} : vector<2x128xf32> to vector<2x32xf32>
      %658 = vector.extract_strided_slice %650 {offsets = [0, 64], sizes = [2, 32], strides = [1, 1]} : vector<2x128xf32> to vector<2x32xf32>
      %659 = math.tanh %658 : vector<2x32xf32>
      %660 = vector.extract_strided_slice %655 {offsets = [0, 96], sizes = [2, 32], strides = [1, 1]} : vector<2x128xf32> to vector<2x32xf32>
      %661 = arith.mulf %657, %641 : vector<2x32xf32>
      %662 = arith.mulf %656, %659 : vector<2x32xf32>
      %663 = arith.addf %661, %662 : vector<2x32xf32>
      %664 = math.tanh %663 : vector<2x32xf32>
      %665 = arith.mulf %660, %664 : vector<2x32xf32>
      %cst_325 = arith.constant dense<0.000000e+00> : vector<2x128xf32>
      %666 = tpu.matmul %665, %442, %cst_325 {dimension_numbers = #tpu.dot_dimension_numbers<[1], [0], [0], [1], [0, 0, 1, 1], [], []>} : vector<2x32xf32>, vector<32x128xf32>, vector<2x128xf32> -> vector<2x128xf32>
      %c18_326 = arith.constant 18 : index
      %c0_327 = arith.constant 0 : index
      %667 = vector.load %arg16[%c18_326, %c0_327] : memref<32x128xf32, #tpu.memory_space<vmem>>, vector<2x128xf32>
      tpu.vector_store %arg16[%c18_326, %c0_327], %666 {strides = array<i32>} : memref<32x128xf32, #tpu.memory_space<vmem>>, vector<2x128xf32>,
      %c20_328 = arith.constant 20 : index
      %c0_329 = arith.constant 0 : index
      %668 = vector.load %arg16[%c20_328, %c0_329] : memref<32x128xf32, #tpu.memory_space<vmem>>, vector<2x128xf32>
      %cst_330 = arith.constant dense<0.000000e+00> : vector<2x128xf32>
      %669 = tpu.matmul %665, %438, %cst_330 {dimension_numbers = #tpu.dot_dimension_numbers<[1], [0], [0], [1], [0, 0, 1, 1], [], []>} : vector<2x32xf32>, vector<32x128xf32>, vector<2x128xf32> -> vector<2x128xf32>
      %670 = arith.addf %668, %669 : vector<2x128xf32>
      %671 = vector.broadcast %445 : vector<1x128xf32> to vector<2x128xf32>
      %672 = arith.addf %670, %671 : vector<2x128xf32>
      %673 = arith.negf %672 : vector<2x128xf32>
      %674 = math.exp %673 : vector<2x128xf32>
      %cst_331 = arith.constant 1.000000e+00 : f32
      %675 = vector.broadcast %cst_331 : f32 to vector<2x128xf32>
      %676 = arith.addf %675, %674 : vector<2x128xf32>
      %677 = arith.divf %675, %676 : vector<2x128xf32>
      %678 = vector.extract_strided_slice %677 {offsets = [0, 0], sizes = [2, 32], strides = [1, 1]} : vector<2x128xf32> to vector<2x32xf32>
      %679 = vector.extract_strided_slice %677 {offsets = [0, 32], sizes = [2, 32], strides = [1, 1]} : vector<2x128xf32> to vector<2x32xf32>
      %680 = vector.extract_strided_slice %672 {offsets = [0, 64], sizes = [2, 32], strides = [1, 1]} : vector<2x128xf32> to vector<2x32xf32>
      %681 = math.tanh %680 : vector<2x32xf32>
      %682 = vector.extract_strided_slice %677 {offsets = [0, 96], sizes = [2, 32], strides = [1, 1]} : vector<2x128xf32> to vector<2x32xf32>
      %683 = arith.mulf %679, %663 : vector<2x32xf32>
      %684 = arith.mulf %678, %681 : vector<2x32xf32>
      %685 = arith.addf %683, %684 : vector<2x32xf32>
      %686 = math.tanh %685 : vector<2x32xf32>
      %687 = arith.mulf %682, %686 : vector<2x32xf32>
      %cst_332 = arith.constant dense<0.000000e+00> : vector<2x128xf32>
      %688 = tpu.matmul %687, %442, %cst_332 {dimension_numbers = #tpu.dot_dimension_numbers<[1], [0], [0], [1], [0, 0, 1, 1], [], []>} : vector<2x32xf32>, vector<32x128xf32>, vector<2x128xf32> -> vector<2x128xf32>
      %c20_333 = arith.constant 20 : index
      %c0_334 = arith.constant 0 : index
      %689 = vector.load %arg16[%c20_333, %c0_334] : memref<32x128xf32, #tpu.memory_space<vmem>>, vector<2x128xf32>
      tpu.vector_store %arg16[%c20_333, %c0_334], %688 {strides = array<i32>} : memref<32x128xf32, #tpu.memory_space<vmem>>, vector<2x128xf32>,
      %c22_335 = arith.constant 22 : index
      %c0_336 = arith.constant 0 : index
      %690 = vector.load %arg16[%c22_335, %c0_336] : memref<32x128xf32, #tpu.memory_space<vmem>>, vector<2x128xf32>
      %cst_337 = arith.constant dense<0.000000e+00> : vector<2x128xf32>
      %691 = tpu.matmul %687, %438, %cst_337 {dimension_numbers = #tpu.dot_dimension_numbers<[1], [0], [0], [1], [0, 0, 1, 1], [], []>} : vector<2x32xf32>, vector<32x128xf32>, vector<2x128xf32> -> vector<2x128xf32>
      %692 = arith.addf %690, %691 : vector<2x128xf32>
      %693 = vector.broadcast %445 : vector<1x128xf32> to vector<2x128xf32>
      %694 = arith.addf %692, %693 : vector<2x128xf32>
      %695 = arith.negf %694 : vector<2x128xf32>
      %696 = math.exp %695 : vector<2x128xf32>
      %cst_338 = arith.constant 1.000000e+00 : f32
      %697 = vector.broadcast %cst_338 : f32 to vector<2x128xf32>
      %698 = arith.addf %697, %696 : vector<2x128xf32>
      %699 = arith.divf %697, %698 : vector<2x128xf32>
      %700 = vector.extract_strided_slice %699 {offsets = [0, 0], sizes = [2, 32], strides = [1, 1]} : vector<2x128xf32> to vector<2x32xf32>
      %701 = vector.extract_strided_slice %699 {offsets = [0, 32], sizes = [2, 32], strides = [1, 1]} : vector<2x128xf32> to vector<2x32xf32>
      %702 = vector.extract_strided_slice %694 {offsets = [0, 64], sizes = [2, 32], strides = [1, 1]} : vector<2x128xf32> to vector<2x32xf32>
      %703 = math.tanh %702 : vector<2x32xf32>
      %704 = vector.extract_strided_slice %699 {offsets = [0, 96], sizes = [2, 32], strides = [1, 1]} : vector<2x128xf32> to vector<2x32xf32>
      %705 = arith.mulf %701, %685 : vector<2x32xf32>
      %706 = arith.mulf %700, %703 : vector<2x32xf32>
      %707 = arith.addf %705, %706 : vector<2x32xf32>
      %708 = math.tanh %707 : vector<2x32xf32>
      %709 = arith.mulf %704, %708 : vector<2x32xf32>
      %cst_339 = arith.constant dense<0.000000e+00> : vector<2x128xf32>
      %710 = tpu.matmul %709, %442, %cst_339 {dimension_numbers = #tpu.dot_dimension_numbers<[1], [0], [0], [1], [0, 0, 1, 1], [], []>} : vector<2x32xf32>, vector<32x128xf32>, vector<2x128xf32> -> vector<2x128xf32>
      %c22_340 = arith.constant 22 : index
      %c0_341 = arith.constant 0 : index
      %711 = vector.load %arg16[%c22_340, %c0_341] : memref<32x128xf32, #tpu.memory_space<vmem>>, vector<2x128xf32>
      tpu.vector_store %arg16[%c22_340, %c0_341], %710 {strides = array<i32>} : memref<32x128xf32, #tpu.memory_space<vmem>>, vector<2x128xf32>,
      %c24_342 = arith.constant 24 : index
      %c0_343 = arith.constant 0 : index
      %712 = vector.load %arg16[%c24_342, %c0_343] : memref<32x128xf32, #tpu.memory_space<vmem>>, vector<2x128xf32>
      %cst_344 = arith.constant dense<0.000000e+00> : vector<2x128xf32>
      %713 = tpu.matmul %709, %438, %cst_344 {dimension_numbers = #tpu.dot_dimension_numbers<[1], [0], [0], [1], [0, 0, 1, 1], [], []>} : vector<2x32xf32>, vector<32x128xf32>, vector<2x128xf32> -> vector<2x128xf32>
      %714 = arith.addf %712, %713 : vector<2x128xf32>
      %715 = vector.broadcast %445 : vector<1x128xf32> to vector<2x128xf32>
      %716 = arith.addf %714, %715 : vector<2x128xf32>
      %717 = arith.negf %716 : vector<2x128xf32>
      %718 = math.exp %717 : vector<2x128xf32>
      %cst_345 = arith.constant 1.000000e+00 : f32
      %719 = vector.broadcast %cst_345 : f32 to vector<2x128xf32>
      %720 = arith.addf %719, %718 : vector<2x128xf32>
      %721 = arith.divf %719, %720 : vector<2x128xf32>
      %722 = vector.extract_strided_slice %721 {offsets = [0, 0], sizes = [2, 32], strides = [1, 1]} : vector<2x128xf32> to vector<2x32xf32>
      %723 = vector.extract_strided_slice %721 {offsets = [0, 32], sizes = [2, 32], strides = [1, 1]} : vector<2x128xf32> to vector<2x32xf32>
      %724 = vector.extract_strided_slice %716 {offsets = [0, 64], sizes = [2, 32], strides = [1, 1]} : vector<2x128xf32> to vector<2x32xf32>
      %725 = math.tanh %724 : vector<2x32xf32>
      %726 = vector.extract_strided_slice %721 {offsets = [0, 96], sizes = [2, 32], strides = [1, 1]} : vector<2x128xf32> to vector<2x32xf32>
      %727 = arith.mulf %723, %707 : vector<2x32xf32>
      %728 = arith.mulf %722, %725 : vector<2x32xf32>
      %729 = arith.addf %727, %728 : vector<2x32xf32>
      %730 = math.tanh %729 : vector<2x32xf32>
      %731 = arith.mulf %726, %730 : vector<2x32xf32>
      %cst_346 = arith.constant dense<0.000000e+00> : vector<2x128xf32>
      %732 = tpu.matmul %731, %442, %cst_346 {dimension_numbers = #tpu.dot_dimension_numbers<[1], [0], [0], [1], [0, 0, 1, 1], [], []>} : vector<2x32xf32>, vector<32x128xf32>, vector<2x128xf32> -> vector<2x128xf32>
      %c24_347 = arith.constant 24 : index
      %c0_348 = arith.constant 0 : index
      %733 = vector.load %arg16[%c24_347, %c0_348] : memref<32x128xf32, #tpu.memory_space<vmem>>, vector<2x128xf32>
      tpu.vector_store %arg16[%c24_347, %c0_348], %732 {strides = array<i32>} : memref<32x128xf32, #tpu.memory_space<vmem>>, vector<2x128xf32>,
      %c26_349 = arith.constant 26 : index
      %c0_350 = arith.constant 0 : index
      %734 = vector.load %arg16[%c26_349, %c0_350] : memref<32x128xf32, #tpu.memory_space<vmem>>, vector<2x128xf32>
      %cst_351 = arith.constant dense<0.000000e+00> : vector<2x128xf32>
      %735 = tpu.matmul %731, %438, %cst_351 {dimension_numbers = #tpu.dot_dimension_numbers<[1], [0], [0], [1], [0, 0, 1, 1], [], []>} : vector<2x32xf32>, vector<32x128xf32>, vector<2x128xf32> -> vector<2x128xf32>
      %736 = arith.addf %734, %735 : vector<2x128xf32>
      %737 = vector.broadcast %445 : vector<1x128xf32> to vector<2x128xf32>
      %738 = arith.addf %736, %737 : vector<2x128xf32>
      %739 = arith.negf %738 : vector<2x128xf32>
      %740 = math.exp %739 : vector<2x128xf32>
      %cst_352 = arith.constant 1.000000e+00 : f32
      %741 = vector.broadcast %cst_352 : f32 to vector<2x128xf32>
      %742 = arith.addf %741, %740 : vector<2x128xf32>
      %743 = arith.divf %741, %742 : vector<2x128xf32>
      %744 = vector.extract_strided_slice %743 {offsets = [0, 0], sizes = [2, 32], strides = [1, 1]} : vector<2x128xf32> to vector<2x32xf32>
      %745 = vector.extract_strided_slice %743 {offsets = [0, 32], sizes = [2, 32], strides = [1, 1]} : vector<2x128xf32> to vector<2x32xf32>
      %746 = vector.extract_strided_slice %738 {offsets = [0, 64], sizes = [2, 32], strides = [1, 1]} : vector<2x128xf32> to vector<2x32xf32>
      %747 = math.tanh %746 : vector<2x32xf32>
      %748 = vector.extract_strided_slice %743 {offsets = [0, 96], sizes = [2, 32], strides = [1, 1]} : vector<2x128xf32> to vector<2x32xf32>
      %749 = arith.mulf %745, %729 : vector<2x32xf32>
      %750 = arith.mulf %744, %747 : vector<2x32xf32>
      %751 = arith.addf %749, %750 : vector<2x32xf32>
      %752 = math.tanh %751 : vector<2x32xf32>
      %753 = arith.mulf %748, %752 : vector<2x32xf32>
      %cst_353 = arith.constant dense<0.000000e+00> : vector<2x128xf32>
      %754 = tpu.matmul %753, %442, %cst_353 {dimension_numbers = #tpu.dot_dimension_numbers<[1], [0], [0], [1], [0, 0, 1, 1], [], []>} : vector<2x32xf32>, vector<32x128xf32>, vector<2x128xf32> -> vector<2x128xf32>
      %c26_354 = arith.constant 26 : index
      %c0_355 = arith.constant 0 : index
      %755 = vector.load %arg16[%c26_354, %c0_355] : memref<32x128xf32, #tpu.memory_space<vmem>>, vector<2x128xf32>
      tpu.vector_store %arg16[%c26_354, %c0_355], %754 {strides = array<i32>} : memref<32x128xf32, #tpu.memory_space<vmem>>, vector<2x128xf32>,
      %c28_356 = arith.constant 28 : index
      %c0_357 = arith.constant 0 : index
      %756 = vector.load %arg16[%c28_356, %c0_357] : memref<32x128xf32, #tpu.memory_space<vmem>>, vector<2x128xf32>
      %cst_358 = arith.constant dense<0.000000e+00> : vector<2x128xf32>
      %757 = tpu.matmul %753, %438, %cst_358 {dimension_numbers = #tpu.dot_dimension_numbers<[1], [0], [0], [1], [0, 0, 1, 1], [], []>} : vector<2x32xf32>, vector<32x128xf32>, vector<2x128xf32> -> vector<2x128xf32>
      %758 = arith.addf %756, %757 : vector<2x128xf32>
      %759 = vector.broadcast %445 : vector<1x128xf32> to vector<2x128xf32>
      %760 = arith.addf %758, %759 : vector<2x128xf32>
      %761 = arith.negf %760 : vector<2x128xf32>
      %762 = math.exp %761 : vector<2x128xf32>
      %cst_359 = arith.constant 1.000000e+00 : f32
      %763 = vector.broadcast %cst_359 : f32 to vector<2x128xf32>
      %764 = arith.addf %763, %762 : vector<2x128xf32>
      %765 = arith.divf %763, %764 : vector<2x128xf32>
      %766 = vector.extract_strided_slice %765 {offsets = [0, 0], sizes = [2, 32], strides = [1, 1]} : vector<2x128xf32> to vector<2x32xf32>
      %767 = vector.extract_strided_slice %765 {offsets = [0, 32], sizes = [2, 32], strides = [1, 1]} : vector<2x128xf32> to vector<2x32xf32>
      %768 = vector.extract_strided_slice %760 {offsets = [0, 64], sizes = [2, 32], strides = [1, 1]} : vector<2x128xf32> to vector<2x32xf32>
      %769 = math.tanh %768 : vector<2x32xf32>
      %770 = vector.extract_strided_slice %765 {offsets = [0, 96], sizes = [2, 32], strides = [1, 1]} : vector<2x128xf32> to vector<2x32xf32>
      %771 = arith.mulf %767, %751 : vector<2x32xf32>
      %772 = arith.mulf %766, %769 : vector<2x32xf32>
      %773 = arith.addf %771, %772 : vector<2x32xf32>
      %774 = math.tanh %773 : vector<2x32xf32>
      %775 = arith.mulf %770, %774 : vector<2x32xf32>
      %cst_360 = arith.constant dense<0.000000e+00> : vector<2x128xf32>
      %776 = tpu.matmul %775, %442, %cst_360 {dimension_numbers = #tpu.dot_dimension_numbers<[1], [0], [0], [1], [0, 0, 1, 1], [], []>} : vector<2x32xf32>, vector<32x128xf32>, vector<2x128xf32> -> vector<2x128xf32>
      %c28_361 = arith.constant 28 : index
      %c0_362 = arith.constant 0 : index
      %777 = vector.load %arg16[%c28_361, %c0_362] : memref<32x128xf32, #tpu.memory_space<vmem>>, vector<2x128xf32>
      tpu.vector_store %arg16[%c28_361, %c0_362], %776 {strides = array<i32>} : memref<32x128xf32, #tpu.memory_space<vmem>>, vector<2x128xf32>,
      %c30_363 = arith.constant 30 : index
      %c0_364 = arith.constant 0 : index
      %778 = vector.load %arg16[%c30_363, %c0_364] : memref<32x128xf32, #tpu.memory_space<vmem>>, vector<2x128xf32>
      %cst_365 = arith.constant dense<0.000000e+00> : vector<2x128xf32>
      %779 = tpu.matmul %775, %438, %cst_365 {dimension_numbers = #tpu.dot_dimension_numbers<[1], [0], [0], [1], [0, 0, 1, 1], [], []>} : vector<2x32xf32>, vector<32x128xf32>, vector<2x128xf32> -> vector<2x128xf32>
      %780 = arith.addf %778, %779 : vector<2x128xf32>
      %781 = vector.broadcast %445 : vector<1x128xf32> to vector<2x128xf32>
      %782 = arith.addf %780, %781 : vector<2x128xf32>
      %783 = arith.negf %782 : vector<2x128xf32>
      %784 = math.exp %783 : vector<2x128xf32>
      %cst_366 = arith.constant 1.000000e+00 : f32
      %785 = vector.broadcast %cst_366 : f32 to vector<2x128xf32>
      %786 = arith.addf %785, %784 : vector<2x128xf32>
      %787 = arith.divf %785, %786 : vector<2x128xf32>
      %788 = vector.extract_strided_slice %787 {offsets = [0, 0], sizes = [2, 32], strides = [1, 1]} : vector<2x128xf32> to vector<2x32xf32>
      %789 = vector.extract_strided_slice %787 {offsets = [0, 32], sizes = [2, 32], strides = [1, 1]} : vector<2x128xf32> to vector<2x32xf32>
      %790 = vector.extract_strided_slice %782 {offsets = [0, 64], sizes = [2, 32], strides = [1, 1]} : vector<2x128xf32> to vector<2x32xf32>
      %791 = math.tanh %790 : vector<2x32xf32>
      %792 = vector.extract_strided_slice %787 {offsets = [0, 96], sizes = [2, 32], strides = [1, 1]} : vector<2x128xf32> to vector<2x32xf32>
      %793 = arith.mulf %789, %773 : vector<2x32xf32>
      %794 = arith.mulf %788, %791 : vector<2x32xf32>
      %795 = arith.addf %793, %794 : vector<2x32xf32>
      %796 = math.tanh %795 : vector<2x32xf32>
      %797 = arith.mulf %792, %796 : vector<2x32xf32>
      %cst_367 = arith.constant dense<0.000000e+00> : vector<2x128xf32>
      %798 = tpu.matmul %797, %442, %cst_367 {dimension_numbers = #tpu.dot_dimension_numbers<[1], [0], [0], [1], [0, 0, 1, 1], [], []>} : vector<2x32xf32>, vector<32x128xf32>, vector<2x128xf32> -> vector<2x128xf32>
      %c30_368 = arith.constant 30 : index
      %c0_369 = arith.constant 0 : index
      %799 = vector.load %arg16[%c30_368, %c0_369] : memref<32x128xf32, #tpu.memory_space<vmem>>, vector<2x128xf32>
      tpu.vector_store %arg16[%c30_368, %c0_369], %798 {strides = array<i32>} : memref<32x128xf32, #tpu.memory_space<vmem>>, vector<2x128xf32>,
    }
    %c10_i32_239 = arith.constant 10 : i32
    %c0_240 = arith.constant 0 : index
    %c0_241 = arith.constant 0 : index
    %427 = vector.load %arg16[%c0_240, %c0_241] : memref<32x128xf32, #tpu.memory_space<vmem>>, vector<32x1xf32>
    %c0_242 = arith.constant 0 : index
    %c0_243 = arith.constant 0 : index
    %428 = vector.load %arg13[%c0_242, %c0_243] : memref<32x8xf32, #tpu.memory_space<vmem>>, vector<32x8xf32>
    %429 = vector.broadcast %427 : vector<32x1xf32> to vector<32x8xf32>
    %430 = arith.mulf %428, %429 : vector<32x8xf32>
    %cst_244 = arith.constant dense<0.000000e+00> : vector<8xf32>
    %431 = vector.multi_reduction <add>, %430, %cst_244 [0] : vector<32x8xf32> to vector<8xf32>
    %432 = vector.shape_cast %431 : vector<8xf32> to vector<1x8xf32>
    %c0_245 = arith.constant 0 : index
    %c0_246 = arith.constant 0 : index
    %433 = vector.load %arg14[%c0_245, %c0_246] : memref<1x8xf32, #tpu.memory_space<vmem>>, vector<1x8xf32>
    %434 = arith.addf %432, %433 : vector<1x8xf32>
    %c0_247 = arith.constant 0 : index
    %c0_248 = arith.constant 0 : index
    %435 = vector.load %arg15[%c0_247, %c0_248] : memref<1x8xf32, #tpu.memory_space<vmem>>, vector<1x8xf32>
    tpu.vector_store %arg15[%c0_247, %c0_248], %434 {strides = array<i32>} : memref<1x8xf32, #tpu.memory_space<vmem>>, vector<1x8xf32>,
    return
  }
}

</mosaic_0001>

<llo_original>
// kernel: neural_net_forward.1
$region0: #{neural_net_forward.1}
  #allocation0 [shape = 'u32[]', space=smem, size = 0x4, offset = 0x4, fixed_abs, tag = 'smem constant byte address 0x4 - core index']
  #allocation1 [shape = 'u32[72,128]{1,0:T(1,128)}', space=vmem, size = 0x9000, scoped, tag = 'internal scratch']
  #allocation2 [shape = 'f32[32,128]{1,0:T(8,128)}', space=vmem, size = 0x4000, scoped, tag = 'scratch operand']
  %s0 = inlined_call_operand.vmem [shape: f32[64,64], index: 0, kind: input, shape index: {}]
  %s1 = inlined_call_operand.hbm [shape: f32[5,32,64], index: 1, kind: input, shape index: {}]
  %s2 = inlined_call_operand.hbm [shape: f32[5,64,128], index: 2, kind: input, shape index: {}]
  %s3 = inlined_call_operand.vmem [shape: f32[3,128], index: 3, kind: input, shape index: {}]
  %s4 = inlined_call_operand.vmem [shape: f32[5,16,32], index: 4, kind: input, shape index: {}]
  %s5 = inlined_call_operand.hbm [shape: f32[5,128,256], index: 5, kind: input, shape index: {}]
  %s6 = inlined_call_operand.vmem [shape: f32[3,256], index: 6, kind: input, shape index: {}]
  %s7 = inlined_call_operand.hbm [shape: f32[5,8,16], index: 7, kind: input, shape index: {}]
  %s8 = inlined_call_operand.hbm [shape: f32[5,256,64], index: 8, kind: input, shape index: {}]
  %s9 = inlined_call_operand.hbm [shape: f32[3,64], index: 9, kind: input, shape index: {}]
  %s10 = inlined_call_operand.vmem [shape: f32[11,32,128], index: 10, kind: input, shape index: {}]
  %s11 = inlined_call_operand.hbm [shape: f32[10,32,128], index: 11, kind: input, shape index: {}]
  %s12 = inlined_call_operand.vmem [shape: f32[10,1,128], index: 12, kind: input, shape index: {}]
  %s13 = inlined_call_operand.hbm [shape: f32[32,8], index: 13, kind: input, shape index: {}]
  %s14 = inlined_call_operand.hbm [shape: f32[1,8], index: 14, kind: input, shape index: {}]
  %s15 = inlined_call_operand.vmem [shape: f32[1,8], index: 15, kind: output, shape index: {}]
  %s16 = sld [smem:[#allocation0]]
  $region113: #{neural_net_forward.1} parent=0
    _
  %s18 = ssub.s32 1, %s16
  %s19 = scalar_select 0, %s18, %s16
  $region1: #{neural_net_forward.1} parent=0
    #allocation3 [shape = 'u8[81920]{0}', space=vmem, size = 0x14000, scoped, tag = 'input window, operand 1, single buffered']
    #allocation4 [shape = 's32[1]{0}', space=sflag, size = 0x4, scoped, tag = 'scoped memory for neural_net_forward.1']
    #allocation5 [shape = 'u8[163840]{0}', space=vmem, size = 0x28000, scoped, tag = 'input window, operand 2, single buffered']
    #allocation6 [shape = 's32[1]{0}', space=sflag, size = 0x4, scoped, tag = 'scoped memory for neural_net_forward.1']
    #allocation7 [shape = 'u8[655360]{0}', space=vmem, size = 0xa0000, scoped, tag = 'input window, operand 5, single buffered']
    #allocation8 [shape = 'u8[20480]{0}', space=vmem, size = 0x5000, scoped, tag = 'input window, operand 7, single buffered']
    #allocation9 [shape = 's32[1]{0}', space=sflag, size = 0x4, scoped, tag = 'scoped memory for neural_net_forward.1']
    #allocation10 [shape = 'u8[655360]{0}', space=vmem, size = 0xa0000, scoped, tag = 'input window, operand 8, single buffered']
    #allocation11 [shape = 'u8[2048]{0}', space=vmem, size = 0x800, scoped, tag = 'input window, operand 9, single buffered']
    #allocation12 [shape = 's32[1]{0}', space=sflag, size = 0x4, scoped, tag = 'scoped memory for neural_net_forward.1']
    #allocation13 [shape = 'u8[163840]{0}', space=vmem, size = 0x28000, scoped, tag = 'input window, operand 11, single buffered']
    #allocation14 [shape = 'u8[16384]{0}', space=vmem, size = 0x4000, scoped, tag = 'input window, operand 13, single buffered']
    #allocation15 [shape = 's32[1]{0}', space=sflag, size = 0x4, scoped, tag = 'scoped memory for neural_net_forward.1']
    #allocation16 [shape = 'u8[512]{0}', space=vmem, size = 0x400, scoped, tag = 'input window, operand 14, single buffered']
    %20 = vsyncpa [#allocation4], 0
    %21 = vsyncpa [#allocation6], 0
    %22 = vsyncpa [#allocation9], 0
    %23 = vsyncpa [#allocation12], 0
    %24 = vsyncpa [#allocation15], 0
    // Predicated region
    $region2: #{neural_net_forward.1} parent=1 // pred_check
      _
    $region3: #{neural_net_forward.1} parent=1 // pred_check_branch
      %26 = sbr.rel (0) target = $region5
    $region4: #{neural_net_forward.1} parent=1 // pred_region
      _
    $region5: #{neural_net_forward.1} parent=1 // pred_fallthru
      _
    // Predicated region
    $region6: #{neural_net_forward.1} parent=1 // pred_check
      _
    $region7: #{neural_net_forward.1} parent=1 // pred_check_branch
      %28 = sbr.rel (0) target = $region9
    $region8: #{neural_net_forward.1} parent=1 // pred_region
      %30 = vsyncadd [#allocation4], 0
      %s31 = sshll.u32 %s1, 4
      %s32 = int_to_ptr.hbm [resolvable:$true] %s31
      %s33 = sshll.u32 [#allocation3], 4
      %s34 = int_to_ptr.vmem [resolvable:$true] %s33
      %39 = dma.hbm_to_vmem [thread:$0]  %s32, 2560, %s34, [#allocation4], 128, 128, 8
    $region9: #{neural_net_forward.1} parent=1 // pred_fallthru
      _
    // Predicated region
    $region10: #{neural_net_forward.1} parent=1 // pred_check
      _
    $region11: #{neural_net_forward.1} parent=1 // pred_check_branch
      %41 = sbr.rel (0) target = $region13
    $region12: #{neural_net_forward.1} parent=1 // pred_region
      %43 = vsyncadd [#allocation6], 0
      %s44 = sshll.u32 %s2, 4
      %s45 = int_to_ptr.hbm [resolvable:$true] %s44
      %s46 = sshll.u32 [#allocation5], 4
      %s47 = int_to_ptr.vmem [resolvable:$true] %s46
      %52 = dma.hbm_to_vmem [thread:$0]  %s45, 5120, %s47, [#allocation6], 128, 128, 8
    $region13: #{neural_net_forward.1} parent=1 // pred_fallthru
      _
    // Predicated region
    $region14: #{neural_net_forward.1} parent=1 // pred_check
      _
    $region15: #{neural_net_forward.1} parent=1 // pred_check_branch
      %54 = sbr.rel (0) target = $region17
    $region16: #{neural_net_forward.1} parent=1 // pred_region
      _
    $region17: #{neural_net_forward.1} parent=1 // pred_fallthru
      _
    // Predicated region
    $region18: #{neural_net_forward.1} parent=1 // pred_check
      _
    $region19: #{neural_net_forward.1} parent=1 // pred_check_branch
      %56 = sbr.rel (0) target = $region21
    $region20: #{neural_net_forward.1} parent=1 // pred_region
      _
    $region21: #{neural_net_forward.1} parent=1 // pred_fallthru
      _
    // Predicated region
    $region22: #{neural_net_forward.1} parent=1 // pred_check
      _
    $region23: #{neural_net_forward.1} parent=1 // pred_check_branch
      %58 = sbr.rel (0) target = $region25
    $region24: #{neural_net_forward.1} parent=1 // pred_region
      %60 = vsyncadd [#allocation6], 0
      %s61 = sshll.u32 %s5, 4
      %s62 = int_to_ptr.hbm [resolvable:$true] %s61
      %s63 = sshll.u32 [#allocation7], 4
      %s64 = int_to_ptr.vmem [resolvable:$true] %s63
      %69 = dma.hbm_to_vmem [thread:$0]  %s62, 20480, %s64, [#allocation6], 256, 256, 16
    $region25: #{neural_net_forward.1} parent=1 // pred_fallthru
      _
    // Predicated region
    $region26: #{neural_net_forward.1} parent=1 // pred_check
      _
    $region27: #{neural_net_forward.1} parent=1 // pred_check_branch
      %71 = sbr.rel (0) target = $region29
    $region28: #{neural_net_forward.1} parent=1 // pred_region
      _
    $region29: #{neural_net_forward.1} parent=1 // pred_fallthru
      _
    // Predicated region
    $region30: #{neural_net_forward.1} parent=1 // pred_check
      _
    $region31: #{neural_net_forward.1} parent=1 // pred_check_branch
      %73 = sbr.rel (0) target = $region33
    $region32: #{neural_net_forward.1} parent=1 // pred_region
      %75 = vsyncadd [#allocation9], 0
      %s76 = sshll.u32 %s7, 4
      %s77 = int_to_ptr.hbm [resolvable:$true] %s76
      %s78 = sshll.u32 [#allocation8], 4
      %s79 = int_to_ptr.vmem [resolvable:$true] %s78
      %84 = dma.hbm_to_vmem [thread:$0]  %s77, 640, %s79, [#allocation9], 128, 128, 8
    $region33: #{neural_net_forward.1} parent=1 // pred_fallthru
      _
    // Predicated region
    $region34: #{neural_net_forward.1} parent=1 // pred_check
      _
    $region35: #{neural_net_forward.1} parent=1 // pred_check_branch
      %86 = sbr.rel (0) target = $region37
    $region36: #{neural_net_forward.1} parent=1 // pred_region
      %88 = vsyncadd [#allocation9], 0
      %s89 = sshll.u32 %s8, 4
      %s90 = int_to_ptr.hbm [resolvable:$true] %s89
      %s91 = sshll.u32 [#allocation10], 4
      %s92 = int_to_ptr.vmem [resolvable:$true] %s91
      %97 = dma.hbm_to_vmem [thread:$0]  %s90, 20480, %s92, [#allocation9], 128, 128, 8
    $region37: #{neural_net_forward.1} parent=1 // pred_fallthru
      _
    // Predicated region
    $region38: #{neural_net_forward.1} parent=1 // pred_check
      _
    $region39: #{neural_net_forward.1} parent=1 // pred_check_branch
      %99 = sbr.rel (0) target = $region41
    $region40: #{neural_net_forward.1} parent=1 // pred_region
      %101 = vsyncadd [#allocation12], 0
      %s103 = sshll.u32 %s9, 4
      %s104 = int_to_ptr.hbm [resolvable:$true] %s103
      %s105 = sshll.u32 [#allocation11], 4
      %s106 = int_to_ptr.vmem [resolvable:$true] %s105
      %108 = dma.hbm_to_vmem [thread:$0]  %s104, 64, %s106, [#allocation12]
    $region41: #{neural_net_forward.1} parent=1 // pred_fallthru
      _
    // Predicated region
    $region42: #{neural_net_forward.1} parent=1 // pred_check
      _
    $region43: #{neural_net_forward.1} parent=1 // pred_check_branch
      %110 = sbr.rel (0) target = $region45
    $region44: #{neural_net_forward.1} parent=1 // pred_region
      _
    $region45: #{neural_net_forward.1} parent=1 // pred_fallthru
      _
    // Predicated region
    $region46: #{neural_net_forward.1} parent=1 // pred_check
      _
    $region47: #{neural_net_forward.1} parent=1 // pred_check_branch
      %112 = sbr.rel (0) target = $region49
    $region48: #{neural_net_forward.1} parent=1 // pred_region
      %114 = vsyncadd [#allocation12], 0
      %s115 = sshll.u32 %s11, 4
      %s116 = int_to_ptr.hbm [resolvable:$true] %s115
      %s117 = sshll.u32 [#allocation13], 4
      %s118 = int_to_ptr.vmem [resolvable:$true] %s117
      %123 = dma.hbm_to_vmem [thread:$0]  %s116, 5120, %s118, [#allocation12], 128, 128, 8
    $region49: #{neural_net_forward.1} parent=1 // pred_fallthru
      _
    // Predicated region
    $region50: #{neural_net_forward.1} parent=1 // pred_check
      _
    $region51: #{neural_net_forward.1} parent=1 // pred_check_branch
      %125 = sbr.rel (0) target = $region53
    $region52: #{neural_net_forward.1} parent=1 // pred_region
      _
    $region53: #{neural_net_forward.1} parent=1 // pred_fallthru
      _
    // Predicated region
    $region54: #{neural_net_forward.1} parent=1 // pred_check
      _
    $region55: #{neural_net_forward.1} parent=1 // pred_check_branch
      %127 = sbr.rel (0) target = $region57
    $region56: #{neural_net_forward.1} parent=1 // pred_region
      %129 = vsyncadd [#allocation15], 0
      %s130 = sshll.u32 %s13, 4
      %s131 = int_to_ptr.hbm [resolvable:$true] %s130
      %s132 = sshll.u32 [#allocation14], 4
      %s133 = int_to_ptr.vmem [resolvable:$true] %s132
      %138 = dma.hbm_to_vmem [thread:$0]  %s131, 512, %s133, [#allocation15], 128, 128, 8
    $region57: #{neural_net_forward.1} parent=1 // pred_fallthru
      _
    // Predicated region
    $region58: #{neural_net_forward.1} parent=1 // pred_check
      _
    $region59: #{neural_net_forward.1} parent=1 // pred_check_branch
      %140 = sbr.rel (0) target = $region61
    $region60: #{neural_net_forward.1} parent=1 // pred_region
      %142 = vsyncadd [#allocation15], 0
      %s144 = sshll.u32 %s14, 4
      %s145 = int_to_ptr.hbm [resolvable:$true] %s144
      %s146 = sshll.u32 [#allocation16], 4
      %s147 = int_to_ptr.vmem [resolvable:$true] %s146
      %149 = dma.hbm_to_vmem [thread:$0]  %s145, 16, %s147, [#allocation15]
    $region61: #{neural_net_forward.1} parent=1 // pred_fallthru
      _
    // Predicated region
    $region62: #{neural_net_forward.1} parent=1 // pred_check
      _
    $region63: #{neural_net_forward.1} parent=1 // pred_check_branch
      %151 = sbr.rel (0) target = $region65
    $region64: #{neural_net_forward.1} parent=1 // pred_region
      %153 = dma.done [#allocation4], 2560
    $region65: #{neural_net_forward.1} parent=1 // pred_fallthru
      _
    // Predicated region
    $region66: #{neural_net_forward.1} parent=1 // pred_check
      _
    $region67: #{neural_net_forward.1} parent=1 // pred_check_branch
      %155 = sbr.rel (0) target = $region69
    $region68: #{neural_net_forward.1} parent=1 // pred_region
      %157 = dma.done [#allocation6], 5120
    $region69: #{neural_net_forward.1} parent=1 // pred_fallthru
      _
    // Predicated region
    $region70: #{neural_net_forward.1} parent=1 // pred_check
      _
    $region71: #{neural_net_forward.1} parent=1 // pred_check_branch
      %159 = sbr.rel (0) target = $region73
    $region72: #{neural_net_forward.1} parent=1 // pred_region
      %161 = dma.done [#allocation6], 20480
    $region73: #{neural_net_forward.1} parent=1 // pred_fallthru
      _
    // Predicated region
    $region74: #{neural_net_forward.1} parent=1 // pred_check
      _
    $region75: #{neural_net_forward.1} parent=1 // pred_check_branch
      %163 = sbr.rel (0) target = $region77
    $region76: #{neural_net_forward.1} parent=1 // pred_region
      %165 = dma.done [#allocation9], 640
    $region77: #{neural_net_forward.1} parent=1 // pred_fallthru
      _
    // Predicated region
    $region78: #{neural_net_forward.1} parent=1 // pred_check
      _
    $region79: #{neural_net_forward.1} parent=1 // pred_check_branch
      %167 = sbr.rel (0) target = $region81
    $region80: #{neural_net_forward.1} parent=1 // pred_region
      %169 = dma.done [#allocation9], 20480
    $region81: #{neural_net_forward.1} parent=1 // pred_fallthru
      _
    // Predicated region
    $region82: #{neural_net_forward.1} parent=1 // pred_check
      _
    $region83: #{neural_net_forward.1} parent=1 // pred_check_branch
      %171 = sbr.rel (0) target = $region85
    $region84: #{neural_net_forward.1} parent=1 // pred_region
      %173 = dma.done [#allocation12], 64
    $region85: #{neural_net_forward.1} parent=1 // pred_fallthru
      _
    // Predicated region
    $region86: #{neural_net_forward.1} parent=1 // pred_check
      _
    $region87: #{neural_net_forward.1} parent=1 // pred_check_branch
      %175 = sbr.rel (0) target = $region89
    $region88: #{neural_net_forward.1} parent=1 // pred_region
      %177 = dma.done [#allocation12], 5120
    $region89: #{neural_net_forward.1} parent=1 // pred_fallthru
      _
    // Predicated region
    $region90: #{neural_net_forward.1} parent=1 // pred_check
      _
    $region91: #{neural_net_forward.1} parent=1 // pred_check_branch
      %179 = sbr.rel (0) target = $region93
    $region92: #{neural_net_forward.1} parent=1 // pred_region
      %181 = dma.done [#allocation15], 512
    $region93: #{neural_net_forward.1} parent=1 // pred_fallthru
      _
    // Predicated region
    $region94: #{neural_net_forward.1} parent=1 // pred_check
      _
    $region95: #{neural_net_forward.1} parent=1 // pred_check_branch
      %183 = sbr.rel (0) target = $region97
    $region96: #{neural_net_forward.1} parent=1 // pred_region
      %185 = dma.done [#allocation15], 16
    $region97: #{neural_net_forward.1} parent=1 // pred_fallthru
      _
    %v186 = vld [vmem:[%s0] sm:$0xff]
    %v187 = vld [vmem:[%s0 + $0x8] sm:$0xff]
    %v188 = vld [vmem:[%s0 + $0x10] sm:$0xff]
    %v189 = vld [vmem:[%s0 + $0x18] sm:$0xff]
    %v190 = vld [vmem:[%s0 + $0x20] sm:$0xff]
    %v191 = vld [vmem:[%s0 + $0x28] sm:$0xff]
    %v192 = vld [vmem:[%s0 + $0x30] sm:$0xff]
    %v193 = vld [vmem:[%s0 + $0x38] sm:$0xff]
    %v194 = vld [vmem:[#allocation3] sm:$0xff]
    %v195 = vld [vmem:[#allocation3 + $0x8] sm:$0xff]
    %v196 = vld [vmem:[#allocation3 + $0x10] sm:$0xff]
    %v197 = vld [vmem:[#allocation3 + $0x18] sm:$0xff]
    %vm198 = vcmask 523264
    %v200 = vsel %vm198, %v194, 0
    %v203 = vsel %vm198, %v195, 0
    %v206 = vsel %vm198, %v196, 0
    %v209 = vsel %vm198, %v197, 0
    %211 = vmatpush.msra.mxu0 0.0
    %212 = vmatpush.msra.mxu0 0.0
    %213 = vmatpush.msra.mxu0 0.0
    %214 = vmatpush.msra.mxu0 0.0
    %215 = vmatpush.msra.mxu0 0.0
    %216 = vmatpush.msra.mxu0 0.0
    %217 = vmatpush.msra.mxu0 0.0
    %218 = vmatpush.msra.mxu0 0.0
    %219 = vmatpush.msra.mxu0 %v193
    %220 = vmatpush.msra.mxu0 %v192
    %221 = vmatpush.msra.mxu0 %v191
    %222 = vmatpush.msra.mxu0 %v190
    %223 = vmatpush.msra.mxu0 %v189
    %224 = vmatpush.msra.mxu0 %v188
    %225 = vmatpush.msra.mxu0 %v187
    %226 = vmatpush.msra.mxu0 %v186
    %227 = vmatmul.f32.gmra.mxu0 %v200
    %v228 = vpop.f32.mrf.mxu0
    %v229 = vadd.f32 0.0, %v228
    %230 = vmatmul.f32.gmra.mxu0 %v203
    %v231 = vpop.f32.mrf.mxu0
    %v232 = vadd.f32 0.0, %v231
    %233 = vmatmul.f32.gmra.mxu0 %v206
    %v234 = vpop.f32.mrf.mxu0
    %v235 = vadd.f32 0.0, %v234
    %236 = vmatmul.f32.gmra.mxu0 %v209
    %v237 = vpop.f32.mrf.mxu0
    %v238 = vadd.f32 0.0, %v237
    %239 = vdwg.mxu0
    %v240 = vld [vmem:[#allocation5] sm:$0xff]
    %v241 = vld [vmem:[#allocation5 + $0x8] sm:$0xff]
    %v242 = vld [vmem:[#allocation5 + $0x10] sm:$0xff]
    %v243 = vld [vmem:[#allocation5 + $0x18] sm:$0xff]
    %v244 = vld [vmem:[#allocation5 + $0x20] sm:$0xff]
    %v245 = vld [vmem:[#allocation5 + $0x28] sm:$0xff]
    %v246 = vld [vmem:[#allocation5 + $0x30] sm:$0xff]
    %v247 = vld [vmem:[#allocation5 + $0x38] sm:$0xff]
    %s248 = scalar_lea.vmem [#allocation3], 32
    %v249 = vld [vmem:[%s248] sm:$0xff]
    %v250 = vld [vmem:[%s248 + $0x8] sm:$0xff]
    %v251 = vld [vmem:[%s248 + $0x10] sm:$0xff]
    %v252 = vld [vmem:[%s248 + $0x18] sm:$0xff]
    %v254 = vsel %vm198, %v249, 0
    %v257 = vsel %vm198, %v250, 0
    %v260 = vsel %vm198, %v251, 0
    %v263 = vsel %vm198, %v252, 0
    %265 = vmatpush.msra.mxu0 0.0
    %266 = vmatpush.msra.mxu0 0.0
    %267 = vmatpush.msra.mxu0 0.0
    %268 = vmatpush.msra.mxu0 0.0
    %269 = vmatpush.msra.mxu0 0.0
    %270 = vmatpush.msra.mxu0 0.0
    %271 = vmatpush.msra.mxu0 0.0
    %272 = vmatpush.msra.mxu0 0.0
    %273 = vmatpush.msra.mxu0 %v193
    %274 = vmatpush.msra.mxu0 %v192
    %275 = vmatpush.msra.mxu0 %v191
    %276 = vmatpush.msra.mxu0 %v190
    %277 = vmatpush.msra.mxu0 %v189
    %278 = vmatpush.msra.mxu0 %v188
    %279 = vmatpush.msra.mxu0 %v187
    %280 = vmatpush.msra.mxu0 %v186
    %281 = vmatmul.f32.gmra.mxu0 %v254
    %v282 = vpop.f32.mrf.mxu0
    %v283 = vadd.f32 0.0, %v282
    %284 = vmatmul.f32.gmra.mxu0 %v257
    %v285 = vpop.f32.mrf.mxu0
    %v286 = vadd.f32 0.0, %v285
    %287 = vmatmul.f32.gmra.mxu0 %v260
    %v288 = vpop.f32.mrf.mxu0
    %v289 = vadd.f32 0.0, %v288
    %290 = vmatmul.f32.gmra.mxu0 %v263
    %v291 = vpop.f32.mrf.mxu0
    %v292 = vadd.f32 0.0, %v291
    %293 = vdwg.mxu0
    %s294 = scalar_lea.vmem [#allocation5], 64
    %v295 = vld [vmem:[%s294] sm:$0xff]
    %v296 = vld [vmem:[%s294 + $0x8] sm:$0xff]
    %v297 = vld [vmem:[%s294 + $0x10] sm:$0xff]
    %v298 = vld [vmem:[%s294 + $0x18] sm:$0xff]
    %v299 = vld [vmem:[%s294 + $0x20] sm:$0xff]
    %v300 = vld [vmem:[%s294 + $0x28] sm:$0xff]
    %v301 = vld [vmem:[%s294 + $0x30] sm:$0xff]
    %v302 = vld [vmem:[%s294 + $0x38] sm:$0xff]
    %v304 = vsel %vm198, %v283, 0
    %v307 = vsel %vm198, %v286, 0
    %v310 = vsel %vm198, %v289, 0
    %v313 = vsel %vm198, %v292, 0
    %315 = vmatpush.msra.mxu0 0.0
    %316 = vmatpush.msra.mxu0 0.0
    %317 = vmatpush.msra.mxu0 0.0
    %318 = vmatpush.msra.mxu0 0.0
    %319 = vmatpush.msra.mxu0 0.0
    %320 = vmatpush.msra.mxu0 0.0
    %321 = vmatpush.msra.mxu0 0.0
    %322 = vmatpush.msra.mxu0 0.0
    %323 = vmatpush.msra.mxu0 %v302
    %324 = vmatpush.msra.mxu0 %v301
    %325 = vmatpush.msra.mxu0 %v300
    %326 = vmatpush.msra.mxu0 %v299
    %327 = vmatpush.msra.mxu0 %v298
    %328 = vmatpush.msra.mxu0 %v297
    %329 = vmatpush.msra.mxu0 %v296
    %330 = vmatpush.msra.mxu0 %v295
    %331 = vmatmul.f32.gmra.mxu0 %v304
    %v332 = vpop.f32.mrf.mxu0
    %v333 = vadd.f32 0.0, %v332
    %334 = vmatmul.f32.gmra.mxu0 %v307
    %v335 = vpop.f32.mrf.mxu0
    %v336 = vadd.f32 0.0, %v335
    %337 = vmatmul.f32.gmra.mxu0 %v310
    %v338 = vpop.f32.mrf.mxu0
    %v339 = vadd.f32 0.0, %v338
    %340 = vmatmul.f32.gmra.mxu0 %v313
    %v341 = vpop.f32.mrf.mxu0
    %v342 = vadd.f32 0.0, %v341
    %343 = vdwg.mxu0
    %v345 = vsel %vm198, %v229, 0
    %v348 = vsel %vm198, %v232, 0
    %v351 = vsel %vm198, %v235, 0
    %v354 = vsel %vm198, %v238, 0
    %356 = vmatpush.msra.mxu0 0.0
    %357 = vmatpush.msra.mxu0 0.0
    %358 = vmatpush.msra.mxu0 0.0
    %359 = vmatpush.msra.mxu0 0.0
    %360 = vmatpush.msra.mxu0 0.0
    %361 = vmatpush.msra.mxu0 0.0
    %362 = vmatpush.msra.mxu0 0.0
    %363 = vmatpush.msra.mxu0 0.0
    %364 = vmatpush.msra.mxu0 %v247
    %365 = vmatpush.msra.mxu0 %v246
    %366 = vmatpush.msra.mxu0 %v245
    %367 = vmatpush.msra.mxu0 %v244
    %368 = vmatpush.msra.mxu0 %v243
    %369 = vmatpush.msra.mxu0 %v242
    %370 = vmatpush.msra.mxu0 %v241
    %371 = vmatpush.msra.mxu0 %v240
    %372 = vmatmul.f32.gmra.mxu0 %v345
    %v373 = vpop.f32.mrf.mxu0
    %v374 = vadd.f32 %v333, %v373
    %375 = vmatmul.f32.gmra.mxu0 %v348
    %v376 = vpop.f32.mrf.mxu0
    %v377 = vadd.f32 %v336, %v376
    %378 = vmatmul.f32.gmra.mxu0 %v351
    %v379 = vpop.f32.mrf.mxu0
    %v380 = vadd.f32 %v339, %v379
    %381 = vmatmul.f32.gmra.mxu0 %v354
    %v382 = vpop.f32.mrf.mxu0
    %v383 = vadd.f32 %v342, %v382
    %384 = vdwg.mxu0
    %s385 = scalar_lea.vmem [#allocation3], 64
    %v386 = vld [vmem:[%s385] sm:$0xff]
    %v387 = vld [vmem:[%s385 + $0x8] sm:$0xff]
    %v388 = vld [vmem:[%s385 + $0x10] sm:$0xff]
    %v389 = vld [vmem:[%s385 + $0x18] sm:$0xff]
    %v391 = vsel %vm198, %v386, 0
    %v394 = vsel %vm198, %v387, 0
    %v397 = vsel %vm198, %v388, 0
    %v400 = vsel %vm198, %v389, 0
    %402 = vmatpush.msra.mxu0 0.0
    %403 = vmatpush.msra.mxu0 0.0
    %404 = vmatpush.msra.mxu0 0.0
    %405 = vmatpush.msra.mxu0 0.0
    %406 = vmatpush.msra.mxu0 0.0
    %407 = vmatpush.msra.mxu0 0.0
    %408 = vmatpush.msra.mxu0 0.0
    %409 = vmatpush.msra.mxu0 0.0
    %410 = vmatpush.msra.mxu0 %v193
    %411 = vmatpush.msra.mxu0 %v192
    %412 = vmatpush.msra.mxu0 %v191
    %413 = vmatpush.msra.mxu0 %v190
    %414 = vmatpush.msra.mxu0 %v189
    %415 = vmatpush.msra.mxu0 %v188
    %416 = vmatpush.msra.mxu0 %v187
    %417 = vmatpush.msra.mxu0 %v186
    %418 = vmatmul.f32.gmra.mxu0 %v391
    %v419 = vpop.f32.mrf.mxu0
    %v420 = vadd.f32 0.0, %v419
    %421 = vmatmul.f32.gmra.mxu0 %v394
    %v422 = vpop.f32.mrf.mxu0
    %v423 = vadd.f32 0.0, %v422
    %424 = vmatmul.f32.gmra.mxu0 %v397
    %v425 = vpop.f32.mrf.mxu0
    %v426 = vadd.f32 0.0, %v425
    %427 = vmatmul.f32.gmra.mxu0 %v400
    %v428 = vpop.f32.mrf.mxu0
    %v429 = vadd.f32 0.0, %v428
    %430 = vdwg.mxu0
    %s431 = scalar_lea.vmem [#allocation5], 128
    %v432 = vld [vmem:[%s431] sm:$0xff]
    %v433 = vld [vmem:[%s431 + $0x8] sm:$0xff]
    %v434 = vld [vmem:[%s431 + $0x10] sm:$0xff]
    %v435 = vld [vmem:[%s431 + $0x18] sm:$0xff]
    %v436 = vld [vmem:[%s431 + $0x20] sm:$0xff]
    %v437 = vld [vmem:[%s431 + $0x28] sm:$0xff]
    %v438 = vld [vmem:[%s431 + $0x30] sm:$0xff]
    %v439 = vld [vmem:[%s431 + $0x38] sm:$0xff]
    %v441 = vsel %vm198, %v420, 0
    %v444 = vsel %vm198, %v423, 0
    %v447 = vsel %vm198, %v426, 0
    %v450 = vsel %vm198, %v429, 0
    %452 = vmatpush.msra.mxu0 0.0
    %453 = vmatpush.msra.mxu0 0.0
    %454 = vmatpush.msra.mxu0 0.0
    %455 = vmatpush.msra.mxu0 0.0
    %456 = vmatpush.msra.mxu0 0.0
    %457 = vmatpush.msra.mxu0 0.0
    %458 = vmatpush.msra.mxu0 0.0
    %459 = vmatpush.msra.mxu0 0.0
    %460 = vmatpush.msra.mxu0 %v439
    %461 = vmatpush.msra.mxu0 %v438
    %462 = vmatpush.msra.mxu0 %v437
    %463 = vmatpush.msra.mxu0 %v436
    %464 = vmatpush.msra.mxu0 %v435
    %465 = vmatpush.msra.mxu0 %v434
    %466 = vmatpush.msra.mxu0 %v433
    %467 = vmatpush.msra.mxu0 %v432
    %468 = vmatmul.f32.gmra.mxu0 %v441
    %v469 = vpop.f32.mrf.mxu0
    %v470 = vadd.f32 0.0, %v469
    %471 = vmatmul.f32.gmra.mxu0 %v444
    %v472 = vpop.f32.mrf.mxu0
    %v473 = vadd.f32 0.0, %v472
    %474 = vmatmul.f32.gmra.mxu0 %v447
    %v475 = vpop.f32.mrf.mxu0
    %v476 = vadd.f32 0.0, %v475
    %477 = vmatmul.f32.gmra.mxu0 %v450
    %v478 = vpop.f32.mrf.mxu0
    %v479 = vadd.f32 0.0, %v478
    %480 = vdwg.mxu0
    %v481 = vadd.f32 %v374, %v470
    %v482 = vadd.f32 %v377, %v473
    %v483 = vadd.f32 %v380, %v476
    %v484 = vadd.f32 %v383, %v479
    %s485 = scalar_lea.vmem [#allocation3], 96
    %v486 = vld [vmem:[%s485] sm:$0xff]
    %v487 = vld [vmem:[%s485 + $0x8] sm:$0xff]
    %v488 = vld [vmem:[%s485 + $0x10] sm:$0xff]
    %v489 = vld [vmem:[%s485 + $0x18] sm:$0xff]
    %v491 = vsel %vm198, %v486, 0
    %v494 = vsel %vm198, %v487, 0
    %v497 = vsel %vm198, %v488, 0
    %v500 = vsel %vm198, %v489, 0
    %502 = vmatpush.msra.mxu0 0.0
    %503 = vmatpush.msra.mxu0 0.0
    %504 = vmatpush.msra.mxu0 0.0
    %505 = vmatpush.msra.mxu0 0.0
    %506 = vmatpush.msra.mxu0 0.0
    %507 = vmatpush.msra.mxu0 0.0
    %508 = vmatpush.msra.mxu0 0.0
    %509 = vmatpush.msra.mxu0 0.0
    %510 = vmatpush.msra.mxu0 %v193
    %511 = vmatpush.msra.mxu0 %v192
    %512 = vmatpush.msra.mxu0 %v191
    %513 = vmatpush.msra.mxu0 %v190
    %514 = vmatpush.msra.mxu0 %v189
    %515 = vmatpush.msra.mxu0 %v188
    %516 = vmatpush.msra.mxu0 %v187
    %517 = vmatpush.msra.mxu0 %v186
    %518 = vmatmul.f32.gmra.mxu0 %v491
    %v519 = vpop.f32.mrf.mxu0
    %v520 = vadd.f32 0.0, %v519
    %521 = vmatmul.f32.gmra.mxu0 %v494
    %v522 = vpop.f32.mrf.mxu0
    %v523 = vadd.f32 0.0, %v522
    %524 = vmatmul.f32.gmra.mxu0 %v497
    %v525 = vpop.f32.mrf.mxu0
    %v526 = vadd.f32 0.0, %v525
    %527 = vmatmul.f32.gmra.mxu0 %v500
    %v528 = vpop.f32.mrf.mxu0
    %v529 = vadd.f32 0.0, %v528
    %530 = vdwg.mxu0
    %s531 = scalar_lea.vmem [#allocation5], 192
    %v532 = vld [vmem:[%s531] sm:$0xff]
    %v533 = vld [vmem:[%s531 + $0x8] sm:$0xff]
    %v534 = vld [vmem:[%s531 + $0x10] sm:$0xff]
    %v535 = vld [vmem:[%s531 + $0x18] sm:$0xff]
    %v536 = vld [vmem:[%s531 + $0x20] sm:$0xff]
    %v537 = vld [vmem:[%s531 + $0x28] sm:$0xff]
    %v538 = vld [vmem:[%s531 + $0x30] sm:$0xff]
    %v539 = vld [vmem:[%s531 + $0x38] sm:$0xff]
    %v541 = vsel %vm198, %v520, 0
    %v544 = vsel %vm198, %v523, 0
    %v547 = vsel %vm198, %v526, 0
    %v550 = vsel %vm198, %v529, 0
    %552 = vmatpush.msra.mxu0 0.0
    %553 = vmatpush.msra.mxu0 0.0
    %554 = vmatpush.msra.mxu0 0.0
    %555 = vmatpush.msra.mxu0 0.0
    %556 = vmatpush.msra.mxu0 0.0
    %557 = vmatpush.msra.mxu0 0.0
    %558 = vmatpush.msra.mxu0 0.0
    %559 = vmatpush.msra.mxu0 0.0
    %560 = vmatpush.msra.mxu0 %v539
    %561 = vmatpush.msra.mxu0 %v538
    %562 = vmatpush.msra.mxu0 %v537
    %563 = vmatpush.msra.mxu0 %v536
    %564 = vmatpush.msra.mxu0 %v535
    %565 = vmatpush.msra.mxu0 %v534
    %566 = vmatpush.msra.mxu0 %v533
    %567 = vmatpush.msra.mxu0 %v532
    %568 = vmatmul.f32.gmra.mxu0 %v541
    %v569 = vpop.f32.mrf.mxu0
    %v570 = vadd.f32 0.0, %v569
    %571 = vmatmul.f32.gmra.mxu0 %v544
    %v572 = vpop.f32.mrf.mxu0
    %v573 = vadd.f32 0.0, %v572
    %574 = vmatmul.f32.gmra.mxu0 %v547
    %v575 = vpop.f32.mrf.mxu0
    %v576 = vadd.f32 0.0, %v575
    %577 = vmatmul.f32.gmra.mxu0 %v550
    %v578 = vpop.f32.mrf.mxu0
    %v579 = vadd.f32 0.0, %v578
    %580 = vdwg.mxu0
    %v581 = vadd.f32 %v481, %v570
    %v582 = vadd.f32 %v482, %v573
    %v583 = vadd.f32 %v483, %v576
    %v584 = vadd.f32 %v484, %v579
    %s585 = scalar_lea.vmem [#allocation3], 128
    %v586 = vld [vmem:[%s585] sm:$0xff]
    %v587 = vld [vmem:[%s585 + $0x8] sm:$0xff]
    %v588 = vld [vmem:[%s585 + $0x10] sm:$0xff]
    %v589 = vld [vmem:[%s585 + $0x18] sm:$0xff]
    %v591 = vsel %vm198, %v586, 0
    %v594 = vsel %vm198, %v587, 0
    %v597 = vsel %vm198, %v588, 0
    %v600 = vsel %vm198, %v589, 0
    %602 = vmatpush.msra.mxu0 0.0
    %603 = vmatpush.msra.mxu0 0.0
    %604 = vmatpush.msra.mxu0 0.0
    %605 = vmatpush.msra.mxu0 0.0
    %606 = vmatpush.msra.mxu0 0.0
    %607 = vmatpush.msra.mxu0 0.0
    %608 = vmatpush.msra.mxu0 0.0
    %609 = vmatpush.msra.mxu0 0.0
    %610 = vmatpush.msra.mxu0 %v193
    %611 = vmatpush.msra.mxu0 %v192
    %612 = vmatpush.msra.mxu0 %v191
    %613 = vmatpush.msra.mxu0 %v190
    %614 = vmatpush.msra.mxu0 %v189
    %615 = vmatpush.msra.mxu0 %v188
    %616 = vmatpush.msra.mxu0 %v187
    %617 = vmatpush.msra.mxu0 %v186
    %618 = vmatmul.f32.gmra.mxu0 %v591
    %v619 = vpop.f32.mrf.mxu0
    %v620 = vadd.f32 0.0, %v619
    %621 = vmatmul.f32.gmra.mxu0 %v594
    %v622 = vpop.f32.mrf.mxu0
    %v623 = vadd.f32 0.0, %v622
    %624 = vmatmul.f32.gmra.mxu0 %v597
    %v625 = vpop.f32.mrf.mxu0
    %v626 = vadd.f32 0.0, %v625
    %627 = vmatmul.f32.gmra.mxu0 %v600
    %v628 = vpop.f32.mrf.mxu0
    %v629 = vadd.f32 0.0, %v628
    %630 = vdwg.mxu0
    %s631 = scalar_lea.vmem [#allocation5], 256
    %v632 = vld [vmem:[%s631] sm:$0xff]
    %v633 = vld [vmem:[%s631 + $0x8] sm:$0xff]
    %v634 = vld [vmem:[%s631 + $0x10] sm:$0xff]
    %v635 = vld [vmem:[%s631 + $0x18] sm:$0xff]
    %v636 = vld [vmem:[%s631 + $0x20] sm:$0xff]
    %v637 = vld [vmem:[%s631 + $0x28] sm:$0xff]
    %v638 = vld [vmem:[%s631 + $0x30] sm:$0xff]
    %v639 = vld [vmem:[%s631 + $0x38] sm:$0xff]
    %v641 = vsel %vm198, %v620, 0
    %v644 = vsel %vm198, %v623, 0
    %v647 = vsel %vm198, %v626, 0
    %v650 = vsel %vm198, %v629, 0
    %652 = vmatpush.msra.mxu0 0.0
    %653 = vmatpush.msra.mxu0 0.0
    %654 = vmatpush.msra.mxu0 0.0
    %655 = vmatpush.msra.mxu0 0.0
    %656 = vmatpush.msra.mxu0 0.0
    %657 = vmatpush.msra.mxu0 0.0
    %658 = vmatpush.msra.mxu0 0.0
    %659 = vmatpush.msra.mxu0 0.0
    %660 = vmatpush.msra.mxu0 %v639
    %661 = vmatpush.msra.mxu0 %v638
    %662 = vmatpush.msra.mxu0 %v637
    %663 = vmatpush.msra.mxu0 %v636
    %664 = vmatpush.msra.mxu0 %v635
    %665 = vmatpush.msra.mxu0 %v634
    %666 = vmatpush.msra.mxu0 %v633
    %667 = vmatpush.msra.mxu0 %v632
    %668 = vmatmul.f32.gmra.mxu0 %v641
    %v669 = vpop.f32.mrf.mxu0
    %v670 = vadd.f32 0.0, %v669
    %671 = vmatmul.f32.gmra.mxu0 %v644
    %v672 = vpop.f32.mrf.mxu0
    %v673 = vadd.f32 0.0, %v672
    %674 = vmatmul.f32.gmra.mxu0 %v647
    %v675 = vpop.f32.mrf.mxu0
    %v676 = vadd.f32 0.0, %v675
    %677 = vmatmul.f32.gmra.mxu0 %v650
    %v678 = vpop.f32.mrf.mxu0
    %v679 = vadd.f32 0.0, %v678
    %680 = vdwg.mxu0
    %v681 = vadd.f32 %v581, %v670
    %v682 = vadd.f32 %v582, %v673
    %v683 = vadd.f32 %v583, %v676
    %v684 = vadd.f32 %v584, %v679
    %v685 = vld [vmem:[%s3] sm:$0x1]
    %v686 = vld [vmem:[%s3 + $0x1] sm:$0x1]
    %v687 = vld [vmem:[%s3 + $0x2] sm:$0x1]
    %v688 = vperm.slane %v685, 0
    %v689 = vadd.f32 %v681, %v688
    %v690 = vadd.f32 %v682, %v688
    %v691 = vadd.f32 %v683, %v688
    %v692 = vadd.f32 %v684, %v688
    %v693 = vmax.f32 %v689, 0.0
    %v694 = vmax.f32 %v690, 0.0
    %v695 = vmax.f32 %v691, 0.0
    %v696 = vmax.f32 %v692, 0.0
    %v697 = vperm.slane %v686, 0
    %v698 = vmul.f32 %v693, %v697
    %v699 = vmul.f32 %v694, %v697
    %v700 = vmul.f32 %v695, %v697
    %v701 = vmul.f32 %v696, %v697
    %v702 = vperm.slane %v687, 0
    %v703 = vadd.f32 %v698, %v702
    %v704 = vadd.f32 %v699, %v702
    %v705 = vadd.f32 %v700, %v702
    %v706 = vadd.f32 %v701, %v702
    %v707 = vld [vmem:[%s4] sm:$0xff]
    %v708 = vld [vmem:[%s4 + $0x8] sm:$0xff]
    %vm709 = vcmask 261120
    %v711 = vsel %vm709, %v707, 0
    %v714 = vsel %vm709, %v708, 0
    %716 = vmatpush.msra.mxu0 0.0
    %717 = vmatpush.msra.mxu0 0.0
    %718 = vmatpush.msra.mxu0 0.0
    %719 = vmatpush.msra.mxu0 0.0
    %720 = vmatpush.msra.mxu0 0.0
    %721 = vmatpush.msra.mxu0 0.0
    %722 = vmatpush.msra.mxu0 0.0
    %723 = vmatpush.msra.mxu0 0.0
    %724 = vmatpush.msra.mxu0 0.0
    %725 = vmatpush.msra.mxu0 0.0
    %726 = vmatpush.msra.mxu0 0.0
    %727 = vmatpush.msra.mxu0 0.0
    %728 = vmatpush.msra.mxu0 %v706
    %729 = vmatpush.msra.mxu0 %v705
    %730 = vmatpush.msra.mxu0 %v704
    %731 = vmatpush.msra.mxu0 %v703
    %732 = vmatmul.f32.gmra.mxu0 %v711
    %v733 = vpop.f32.mrf.mxu0
    %v734 = vadd.f32 0.0, %v733
    %735 = vmatmul.f32.gmra.mxu0 %v714
    %v736 = vpop.f32.mrf.mxu0
    %v737 = vadd.f32 0.0, %v736
    %738 = vdwg.mxu0
    %v739 = vld [vmem:[#allocation7] sm:$0xff]
    %v740 = vld [vmem:[#allocation7 + $0x8] sm:$0xff]
    %v741 = vld [vmem:[#allocation7 + $0x10] sm:$0xff]
    %v742 = vld [vmem:[#allocation7 + $0x18] sm:$0xff]
    %v743 = vld [vmem:[#allocation7 + $0x20] sm:$0xff]
    %v744 = vld [vmem:[#allocation7 + $0x28] sm:$0xff]
    %v745 = vld [vmem:[#allocation7 + $0x30] sm:$0xff]
    %v746 = vld [vmem:[#allocation7 + $0x38] sm:$0xff]
    %v747 = vld [vmem:[#allocation7 + $0x40] sm:$0xff]
    %v748 = vld [vmem:[#allocation7 + $0x48] sm:$0xff]
    %v749 = vld [vmem:[#allocation7 + $0x50] sm:$0xff]
    %v750 = vld [vmem:[#allocation7 + $0x58] sm:$0xff]
    %v751 = vld [vmem:[#allocation7 + $0x60] sm:$0xff]
    %v752 = vld [vmem:[#allocation7 + $0x68] sm:$0xff]
    %v753 = vld [vmem:[#allocation7 + $0x70] sm:$0xff]
    %v754 = vld [vmem:[#allocation7 + $0x78] sm:$0xff]
    %v755 = vld [vmem:[#allocation7 + $0x80] sm:$0xff]
    %v756 = vld [vmem:[#allocation7 + $0x88] sm:$0xff]
    %v757 = vld [vmem:[#allocation7 + $0x90] sm:$0xff]
    %v758 = vld [vmem:[#allocation7 + $0x98] sm:$0xff]
    %v759 = vld [vmem:[#allocation7 + $0xa0] sm:$0xff]
    %v760 = vld [vmem:[#allocation7 + $0xa8] sm:$0xff]
    %v761 = vld [vmem:[#allocation7 + $0xb0] sm:$0xff]
    %v762 = vld [vmem:[#allocation7 + $0xb8] sm:$0xff]
    %v763 = vld [vmem:[#allocation7 + $0xc0] sm:$0xff]
    %v764 = vld [vmem:[#allocation7 + $0xc8] sm:$0xff]
    %v765 = vld [vmem:[#allocation7 + $0xd0] sm:$0xff]
    %v766 = vld [vmem:[#allocation7 + $0xd8] sm:$0xff]
    %v767 = vld [vmem:[#allocation7 + $0xe0] sm:$0xff]
    %v768 = vld [vmem:[#allocation7 + $0xe8] sm:$0xff]
    %v769 = vld [vmem:[#allocation7 + $0xf0] sm:$0xff]
    %v770 = vld [vmem:[#allocation7 + $0xf8] sm:$0xff]
    %s771 = scalar_lea.vmem %s4, 16
    %v772 = vld [vmem:[%s771] sm:$0xff]
    %v773 = vld [vmem:[%s771 + $0x8] sm:$0xff]
    %v775 = vsel %vm709, %v772, 0
    %v778 = vsel %vm709, %v773, 0
    %780 = vmatpush.msra.mxu0 0.0
    %781 = vmatpush.msra.mxu0 0.0
    %782 = vmatpush.msra.mxu0 0.0
    %783 = vmatpush.msra.mxu0 0.0
    %784 = vmatpush.msra.mxu0 0.0
    %785 = vmatpush.msra.mxu0 0.0
    %786 = vmatpush.msra.mxu0 0.0
    %787 = vmatpush.msra.mxu0 0.0
    %788 = vmatpush.msra.mxu0 0.0
    %789 = vmatpush.msra.mxu0 0.0
    %790 = vmatpush.msra.mxu0 0.0
    %791 = vmatpush.msra.mxu0 0.0
    %792 = vmatpush.msra.mxu0 %v706
    %793 = vmatpush.msra.mxu0 %v705
    %794 = vmatpush.msra.mxu0 %v704
    %795 = vmatpush.msra.mxu0 %v703
    %796 = vmatmul.f32.gmra.mxu0 %v775
    %v797 = vpop.f32.mrf.mxu0
    %v798 = vadd.f32 0.0, %v797
    %799 = vmatmul.f32.gmra.mxu0 %v778
    %v800 = vpop.f32.mrf.mxu0
    %v801 = vadd.f32 0.0, %v800
    %802 = vdwg.mxu0
    %s803 = scalar_lea.vmem [#allocation7], 256
    %v804 = vld [vmem:[%s803] sm:$0xff]
    %v805 = vld [vmem:[%s803 + $0x8] sm:$0xff]
    %v806 = vld [vmem:[%s803 + $0x10] sm:$0xff]
    %v807 = vld [vmem:[%s803 + $0x18] sm:$0xff]
    %v808 = vld [vmem:[%s803 + $0x20] sm:$0xff]
    %v809 = vld [vmem:[%s803 + $0x28] sm:$0xff]
    %v810 = vld [vmem:[%s803 + $0x30] sm:$0xff]
    %v811 = vld [vmem:[%s803 + $0x38] sm:$0xff]
    %v812 = vld [vmem:[%s803 + $0x40] sm:$0xff]
    %v813 = vld [vmem:[%s803 + $0x48] sm:$0xff]
    %v814 = vld [vmem:[%s803 + $0x50] sm:$0xff]
    %v815 = vld [vmem:[%s803 + $0x58] sm:$0xff]
    %v816 = vld [vmem:[%s803 + $0x60] sm:$0xff]
    %v817 = vld [vmem:[%s803 + $0x68] sm:$0xff]
    %v818 = vld [vmem:[%s803 + $0x70] sm:$0xff]
    %v819 = vld [vmem:[%s803 + $0x78] sm:$0xff]
    %v820 = vld [vmem:[%s803 + $0x80] sm:$0xff]
    %v821 = vld [vmem:[%s803 + $0x88] sm:$0xff]
    %v822 = vld [vmem:[%s803 + $0x90] sm:$0xff]
    %v823 = vld [vmem:[%s803 + $0x98] sm:$0xff]
    %v824 = vld [vmem:[%s803 + $0xa0] sm:$0xff]
    %v825 = vld [vmem:[%s803 + $0xa8] sm:$0xff]
    %v826 = vld [vmem:[%s803 + $0xb0] sm:$0xff]
    %v827 = vld [vmem:[%s803 + $0xb8] sm:$0xff]
    %v828 = vld [vmem:[%s803 + $0xc0] sm:$0xff]
    %v829 = vld [vmem:[%s803 + $0xc8] sm:$0xff]
    %v830 = vld [vmem:[%s803 + $0xd0] sm:$0xff]
    %v831 = vld [vmem:[%s803 + $0xd8] sm:$0xff]
    %v832 = vld [vmem:[%s803 + $0xe0] sm:$0xff]
    %v833 = vld [vmem:[%s803 + $0xe8] sm:$0xff]
    %v834 = vld [vmem:[%s803 + $0xf0] sm:$0xff]
    %v835 = vld [vmem:[%s803 + $0xf8] sm:$0xff]
    %836 = vmatpush.msra.mxu0 %v834
    %837 = vmatpush.msra.mxu0 %v832
    %838 = vmatpush.msra.mxu0 %v830
    %839 = vmatpush.msra.mxu0 %v828
    %840 = vmatpush.msra.mxu0 %v826
    %841 = vmatpush.msra.mxu0 %v824
    %842 = vmatpush.msra.mxu0 %v822
    %843 = vmatpush.msra.mxu0 %v820
    %844 = vmatpush.msra.mxu0 %v818
    %845 = vmatpush.msra.mxu0 %v816
    %846 = vmatpush.msra.mxu0 %v814
    %847 = vmatpush.msra.mxu0 %v812
    %848 = vmatpush.msra.mxu0 %v810
    %849 = vmatpush.msra.mxu0 %v808
    %850 = vmatpush.msra.mxu0 %v806
    %851 = vmatpush.msra.mxu0 %v804
    %852 = vmatmul.f32.gmra.mxu0 %v798
    %v853 = vpop.f32.mrf.mxu0
    %v854 = vadd.f32 0.0, %v853
    %855 = vmatmul.f32.gmra.mxu0 %v801
    %v856 = vpop.f32.mrf.mxu0
    %v857 = vadd.f32 0.0, %v856
    %858 = vdwg.mxu0
    %859 = vmatpush.msra.mxu0 %v835
    %860 = vmatpush.msra.mxu0 %v833
    %861 = vmatpush.msra.mxu0 %v831
    %862 = vmatpush.msra.mxu0 %v829
    %863 = vmatpush.msra.mxu0 %v827
    %864 = vmatpush.msra.mxu0 %v825
    %865 = vmatpush.msra.mxu0 %v823
    %866 = vmatpush.msra.mxu0 %v821
    %867 = vmatpush.msra.mxu0 %v819
    %868 = vmatpush.msra.mxu0 %v817
    %869 = vmatpush.msra.mxu0 %v815
    %870 = vmatpush.msra.mxu0 %v813
    %871 = vmatpush.msra.mxu0 %v811
    %872 = vmatpush.msra.mxu0 %v809
    %873 = vmatpush.msra.mxu0 %v807
    %874 = vmatpush.msra.mxu0 %v805
    %875 = vmatmul.f32.gmra.mxu0 %v798
    %v876 = vpop.f32.mrf.mxu0
    %v877 = vadd.f32 0.0, %v876
    %878 = vmatmul.f32.gmra.mxu0 %v801
    %v879 = vpop.f32.mrf.mxu0
    %v880 = vadd.f32 0.0, %v879
    %881 = vdwg.mxu0
    %882 = vmatpush.msra.mxu0 %v769
    %883 = vmatpush.msra.mxu0 %v767
    %884 = vmatpush.msra.mxu0 %v765
    %885 = vmatpush.msra.mxu0 %v763
    %886 = vmatpush.msra.mxu0 %v761
    %887 = vmatpush.msra.mxu0 %v759
    %888 = vmatpush.msra.mxu0 %v757
    %889 = vmatpush.msra.mxu0 %v755
    %890 = vmatpush.msra.mxu0 %v753
    %891 = vmatpush.msra.mxu0 %v751
    %892 = vmatpush.msra.mxu0 %v749
    %893 = vmatpush.msra.mxu0 %v747
    %894 = vmatpush.msra.mxu0 %v745
    %895 = vmatpush.msra.mxu0 %v743
    %896 = vmatpush.msra.mxu0 %v741
    %897 = vmatpush.msra.mxu0 %v739
    %898 = vmatmul.f32.gmra.mxu0 %v734
    %v899 = vpop.f32.mrf.mxu0
    %v900 = vadd.f32 %v854, %v899
    %901 = vmatmul.f32.gmra.mxu0 %v737
    %v902 = vpop.f32.mrf.mxu0
    %v903 = vadd.f32 %v857, %v902
    %904 = vdwg.mxu0
    %905 = vmatpush.msra.mxu0 %v770
    %906 = vmatpush.msra.mxu0 %v768
    %907 = vmatpush.msra.mxu0 %v766
    %908 = vmatpush.msra.mxu0 %v764
    %909 = vmatpush.msra.mxu0 %v762
    %910 = vmatpush.msra.mxu0 %v760
    %911 = vmatpush.msra.mxu0 %v758
    %912 = vmatpush.msra.mxu0 %v756
    %913 = vmatpush.msra.mxu0 %v754
    %914 = vmatpush.msra.mxu0 %v752
    %915 = vmatpush.msra.mxu0 %v750
    %916 = vmatpush.msra.mxu0 %v748
    %917 = vmatpush.msra.mxu0 %v746
    %918 = vmatpush.msra.mxu0 %v744
    %919 = vmatpush.msra.mxu0 %v742
    %920 = vmatpush.msra.mxu0 %v740
    %921 = vmatmul.f32.gmra.mxu0 %v734
    %v922 = vpop.f32.mrf.mxu0
    %v923 = vadd.f32 %v877, %v922
    %924 = vmatmul.f32.gmra.mxu0 %v737
    %v925 = vpop.f32.mrf.mxu0
    %v926 = vadd.f32 %v880, %v925
    %927 = vdwg.mxu0
    %s928 = scalar_lea.vmem %s4, 32
    %v929 = vld [vmem:[%s928] sm:$0xff]
    %v930 = vld [vmem:[%s928 + $0x8] sm:$0xff]
    %v932 = vsel %vm709, %v929, 0
    %v935 = vsel %vm709, %v930, 0
    %937 = vmatpush.msra.mxu0 0.0
    %938 = vmatpush.msra.mxu0 0.0
    %939 = vmatpush.msra.mxu0 0.0
    %940 = vmatpush.msra.mxu0 0.0
    %941 = vmatpush.msra.mxu0 0.0
    %942 = vmatpush.msra.mxu0 0.0
    %943 = vmatpush.msra.mxu0 0.0
    %944 = vmatpush.msra.mxu0 0.0
    %945 = vmatpush.msra.mxu0 0.0
    %946 = vmatpush.msra.mxu0 0.0
    %947 = vmatpush.msra.mxu0 0.0
    %948 = vmatpush.msra.mxu0 0.0
    %949 = vmatpush.msra.mxu0 %v706
    %950 = vmatpush.msra.mxu0 %v705
    %951 = vmatpush.msra.mxu0 %v704
    %952 = vmatpush.msra.mxu0 %v703
    %953 = vmatmul.f32.gmra.mxu0 %v932
    %v954 = vpop.f32.mrf.mxu0
    %v955 = vadd.f32 0.0, %v954
    %956 = vmatmul.f32.gmra.mxu0 %v935
    %v957 = vpop.f32.mrf.mxu0
    %v958 = vadd.f32 0.0, %v957
    %959 = vdwg.mxu0
    %s960 = scalar_lea.vmem [#allocation7], 512
    %v961 = vld [vmem:[%s960] sm:$0xff]
    %v962 = vld [vmem:[%s960 + $0x8] sm:$0xff]
    %v963 = vld [vmem:[%s960 + $0x10] sm:$0xff]
    %v964 = vld [vmem:[%s960 + $0x18] sm:$0xff]
    %v965 = vld [vmem:[%s960 + $0x20] sm:$0xff]
    %v966 = vld [vmem:[%s960 + $0x28] sm:$0xff]
    %v967 = vld [vmem:[%s960 + $0x30] sm:$0xff]
    %v968 = vld [vmem:[%s960 + $0x38] sm:$0xff]
    %v969 = vld [vmem:[%s960 + $0x40] sm:$0xff]
    %v970 = vld [vmem:[%s960 + $0x48] sm:$0xff]
    %v971 = vld [vmem:[%s960 + $0x50] sm:$0xff]
    %v972 = vld [vmem:[%s960 + $0x58] sm:$0xff]
    %v973 = vld [vmem:[%s960 + $0x60] sm:$0xff]
    %v974 = vld [vmem:[%s960 + $0x68] sm:$0xff]
    %v975 = vld [vmem:[%s960 + $0x70] sm:$0xff]
    %v976 = vld [vmem:[%s960 + $0x78] sm:$0xff]
    %v977 = vld [vmem:[%s960 + $0x80] sm:$0xff]
    %v978 = vld [vmem:[%s960 + $0x88] sm:$0xff]
    %v979 = vld [vmem:[%s960 + $0x90] sm:$0xff]
    %v980 = vld [vmem:[%s960 + $0x98] sm:$0xff]
    %v981 = vld [vmem:[%s960 + $0xa0] sm:$0xff]
    %v982 = vld [vmem:[%s960 + $0xa8] sm:$0xff]
    %v983 = vld [vmem:[%s960 + $0xb0] sm:$0xff]
    %v984 = vld [vmem:[%s960 + $0xb8] sm:$0xff]
    %v985 = vld [vmem:[%s960 + $0xc0] sm:$0xff]
    %v986 = vld [vmem:[%s960 + $0xc8] sm:$0xff]
    %v987 = vld [vmem:[%s960 + $0xd0] sm:$0xff]
    %v988 = vld [vmem:[%s960 + $0xd8] sm:$0xff]
    %v989 = vld [vmem:[%s960 + $0xe0] sm:$0xff]
    %v990 = vld [vmem:[%s960 + $0xe8] sm:$0xff]
    %v991 = vld [vmem:[%s960 + $0xf0] sm:$0xff]
    %v992 = vld [vmem:[%s960 + $0xf8] sm:$0xff]
    %993 = vmatpush.msra.mxu0 %v991
    %994 = vmatpush.msra.mxu0 %v989
    %995 = vmatpush.msra.mxu0 %v987
    %996 = vmatpush.msra.mxu0 %v985
    %997 = vmatpush.msra.mxu0 %v983
    %998 = vmatpush.msra.mxu0 %v981
    %999 = vmatpush.msra.mxu0 %v979
    %1000 = vmatpush.msra.mxu0 %v977
    %1001 = vmatpush.msra.mxu0 %v975
    %1002 = vmatpush.msra.mxu0 %v973
    %1003 = vmatpush.msra.mxu0 %v971
    %1004 = vmatpush.msra.mxu0 %v969
    %1005 = vmatpush.msra.mxu0 %v967
    %1006 = vmatpush.msra.mxu0 %v965
    %1007 = vmatpush.msra.mxu0 %v963
    %1008 = vmatpush.msra.mxu0 %v961
    %1009 = vmatmul.f32.gmra.mxu0 %v955
    %v1010 = vpop.f32.mrf.mxu0
    %v1011 = vadd.f32 0.0, %v1010
    %1012 = vmatmul.f32.gmra.mxu0 %v958
    %v1013 = vpop.f32.mrf.mxu0
    %v1014 = vadd.f32 0.0, %v1013
    %1015 = vdwg.mxu0
    %1016 = vmatpush.msra.mxu0 %v992
    %1017 = vmatpush.msra.mxu0 %v990
    %1018 = vmatpush.msra.mxu0 %v988
    %1019 = vmatpush.msra.mxu0 %v986
    %1020 = vmatpush.msra.mxu0 %v984
    %1021 = vmatpush.msra.mxu0 %v982
    %1022 = vmatpush.msra.mxu0 %v980
    %1023 = vmatpush.msra.mxu0 %v978
    %1024 = vmatpush.msra.mxu0 %v976
    %1025 = vmatpush.msra.mxu0 %v974
    %1026 = vmatpush.msra.mxu0 %v972
    %1027 = vmatpush.msra.mxu0 %v970
    %1028 = vmatpush.msra.mxu0 %v968
    %1029 = vmatpush.msra.mxu0 %v966
    %1030 = vmatpush.msra.mxu0 %v964
    %1031 = vmatpush.msra.mxu0 %v962
    %1032 = vmatmul.f32.gmra.mxu0 %v955
    %v1033 = vpop.f32.mrf.mxu0
    %v1034 = vadd.f32 0.0, %v1033
    %1035 = vmatmul.f32.gmra.mxu0 %v958
    %v1036 = vpop.f32.mrf.mxu0
    %v1037 = vadd.f32 0.0, %v1036
    %1038 = vdwg.mxu0
    %v1039 = vadd.f32 %v900, %v1011
    %v1040 = vadd.f32 %v923, %v1034
    %v1041 = vadd.f32 %v903, %v1014
    %v1042 = vadd.f32 %v926, %v1037
    %s1043 = scalar_lea.vmem %s4, 48
    %v1044 = vld [vmem:[%s1043] sm:$0xff]
    %v1045 = vld [vmem:[%s1043 + $0x8] sm:$0xff]
    %v1047 = vsel %vm709, %v1044, 0
    %v1050 = vsel %vm709, %v1045, 0
    %1052 = vmatpush.msra.mxu0 0.0
    %1053 = vmatpush.msra.mxu0 0.0
    %1054 = vmatpush.msra.mxu0 0.0
    %1055 = vmatpush.msra.mxu0 0.0
    %1056 = vmatpush.msra.mxu0 0.0
    %1057 = vmatpush.msra.mxu0 0.0
    %1058 = vmatpush.msra.mxu0 0.0
    %1059 = vmatpush.msra.mxu0 0.0
    %1060 = vmatpush.msra.mxu0 0.0
    %1061 = vmatpush.msra.mxu0 0.0
    %1062 = vmatpush.msra.mxu0 0.0
    %1063 = vmatpush.msra.mxu0 0.0
    %1064 = vmatpush.msra.mxu0 %v706
    %1065 = vmatpush.msra.mxu0 %v705
    %1066 = vmatpush.msra.mxu0 %v704
    %1067 = vmatpush.msra.mxu0 %v703
    %1068 = vmatmul.f32.gmra.mxu0 %v1047
    %v1069 = vpop.f32.mrf.mxu0
    %v1070 = vadd.f32 0.0, %v1069
    %1071 = vmatmul.f32.gmra.mxu0 %v1050
    %v1072 = vpop.f32.mrf.mxu0
    %v1073 = vadd.f32 0.0, %v1072
    %1074 = vdwg.mxu0
    %s1075 = scalar_lea.vmem [#allocation7], 768
    %v1076 = vld [vmem:[%s1075] sm:$0xff]
    %v1077 = vld [vmem:[%s1075 + $0x8] sm:$0xff]
    %v1078 = vld [vmem:[%s1075 + $0x10] sm:$0xff]
    %v1079 = vld [vmem:[%s1075 + $0x18] sm:$0xff]
    %v1080 = vld [vmem:[%s1075 + $0x20] sm:$0xff]
    %v1081 = vld [vmem:[%s1075 + $0x28] sm:$0xff]
    %v1082 = vld [vmem:[%s1075 + $0x30] sm:$0xff]
    %v1083 = vld [vmem:[%s1075 + $0x38] sm:$0xff]
    %v1084 = vld [vmem:[%s1075 + $0x40] sm:$0xff]
    %v1085 = vld [vmem:[%s1075 + $0x48] sm:$0xff]
    %v1086 = vld [vmem:[%s1075 + $0x50] sm:$0xff]
    %v1087 = vld [vmem:[%s1075 + $0x58] sm:$0xff]
    %v1088 = vld [vmem:[%s1075 + $0x60] sm:$0xff]
    %v1089 = vld [vmem:[%s1075 + $0x68] sm:$0xff]
    %v1090 = vld [vmem:[%s1075 + $0x70] sm:$0xff]
    %v1091 = vld [vmem:[%s1075 + $0x78] sm:$0xff]
    %v1092 = vld [vmem:[%s1075 + $0x80] sm:$0xff]
    %v1093 = vld [vmem:[%s1075 + $0x88] sm:$0xff]
    %v1094 = vld [vmem:[%s1075 + $0x90] sm:$0xff]
    %v1095 = vld [vmem:[%s1075 + $0x98] sm:$0xff]
    %v1096 = vld [vmem:[%s1075 + $0xa0] sm:$0xff]
    %v1097 = vld [vmem:[%s1075 + $0xa8] sm:$0xff]
    %v1098 = vld [vmem:[%s1075 + $0xb0] sm:$0xff]
    %v1099 = vld [vmem:[%s1075 + $0xb8] sm:$0xff]
    %v1100 = vld [vmem:[%s1075 + $0xc0] sm:$0xff]
    %v1101 = vld [vmem:[%s1075 + $0xc8] sm:$0xff]
    %v1102 = vld [vmem:[%s1075 + $0xd0] sm:$0xff]
    %v1103 = vld [vmem:[%s1075 + $0xd8] sm:$0xff]
    %v1104 = vld [vmem:[%s1075 + $0xe0] sm:$0xff]
    %v1105 = vld [vmem:[%s1075 + $0xe8] sm:$0xff]
    %v1106 = vld [vmem:[%s1075 + $0xf0] sm:$0xff]
    %v1107 = vld [vmem:[%s1075 + $0xf8] sm:$0xff]
    %1108 = vmatpush.msra.mxu0 %v1106
    %1109 = vmatpush.msra.mxu0 %v1104
    %1110 = vmatpush.msra.mxu0 %v1102
    %1111 = vmatpush.msra.mxu0 %v1100
    %1112 = vmatpush.msra.mxu0 %v1098
    %1113 = vmatpush.msra.mxu0 %v1096
    %1114 = vmatpush.msra.mxu0 %v1094
    %1115 = vmatpush.msra.mxu0 %v1092
    %1116 = vmatpush.msra.mxu0 %v1090
    %1117 = vmatpush.msra.mxu0 %v1088
    %1118 = vmatpush.msra.mxu0 %v1086
    %1119 = vmatpush.msra.mxu0 %v1084
    %1120 = vmatpush.msra.mxu0 %v1082
    %1121 = vmatpush.msra.mxu0 %v1080
    %1122 = vmatpush.msra.mxu0 %v1078
    %1123 = vmatpush.msra.mxu0 %v1076
    %1124 = vmatmul.f32.gmra.mxu0 %v1070
    %v1125 = vpop.f32.mrf.mxu0
    %v1126 = vadd.f32 0.0, %v1125
    %1127 = vmatmul.f32.gmra.mxu0 %v1073
    %v1128 = vpop.f32.mrf.mxu0
    %v1129 = vadd.f32 0.0, %v1128
    %1130 = vdwg.mxu0
    %1131 = vmatpush.msra.mxu0 %v1107
    %1132 = vmatpush.msra.mxu0 %v1105
    %1133 = vmatpush.msra.mxu0 %v1103
    %1134 = vmatpush.msra.mxu0 %v1101
    %1135 = vmatpush.msra.mxu0 %v1099
    %1136 = vmatpush.msra.mxu0 %v1097
    %1137 = vmatpush.msra.mxu0 %v1095
    %1138 = vmatpush.msra.mxu0 %v1093
    %1139 = vmatpush.msra.mxu0 %v1091
    %1140 = vmatpush.msra.mxu0 %v1089
    %1141 = vmatpush.msra.mxu0 %v1087
    %1142 = vmatpush.msra.mxu0 %v1085
    %1143 = vmatpush.msra.mxu0 %v1083
    %1144 = vmatpush.msra.mxu0 %v1081
    %1145 = vmatpush.msra.mxu0 %v1079
    %1146 = vmatpush.msra.mxu0 %v1077
    %1147 = vmatmul.f32.gmra.mxu0 %v1070
    %v1148 = vpop.f32.mrf.mxu0
    %v1149 = vadd.f32 0.0, %v1148
    %1150 = vmatmul.f32.gmra.mxu0 %v1073
    %v1151 = vpop.f32.mrf.mxu0
    %v1152 = vadd.f32 0.0, %v1151
    %1153 = vdwg.mxu0
    %v1154 = vadd.f32 %v1039, %v1126
    %v1155 = vadd.f32 %v1040, %v1149
    %v1156 = vadd.f32 %v1041, %v1129
    %v1157 = vadd.f32 %v1042, %v1152
    %s1158 = scalar_lea.vmem %s4, 64
    %v1159 = vld [vmem:[%s1158] sm:$0xff]
    %v1160 = vld [vmem:[%s1158 + $0x8] sm:$0xff]
    %v1162 = vsel %vm709, %v1159, 0
    %v1165 = vsel %vm709, %v1160, 0
    %1167 = vmatpush.msra.mxu0 0.0
    %1168 = vmatpush.msra.mxu0 0.0
    %1169 = vmatpush.msra.mxu0 0.0
    %1170 = vmatpush.msra.mxu0 0.0
    %1171 = vmatpush.msra.mxu0 0.0
    %1172 = vmatpush.msra.mxu0 0.0
    %1173 = vmatpush.msra.mxu0 0.0
    %1174 = vmatpush.msra.mxu0 0.0
    %1175 = vmatpush.msra.mxu0 0.0
    %1176 = vmatpush.msra.mxu0 0.0
    %1177 = vmatpush.msra.mxu0 0.0
    %1178 = vmatpush.msra.mxu0 0.0
    %1179 = vmatpush.msra.mxu0 %v706
    %1180 = vmatpush.msra.mxu0 %v705
    %1181 = vmatpush.msra.mxu0 %v704
    %1182 = vmatpush.msra.mxu0 %v703
    %1183 = vmatmul.f32.gmra.mxu0 %v1162
    %v1184 = vpop.f32.mrf.mxu0
    %v1185 = vadd.f32 0.0, %v1184
    %1186 = vmatmul.f32.gmra.mxu0 %v1165
    %v1187 = vpop.f32.mrf.mxu0
    %v1188 = vadd.f32 0.0, %v1187
    %1189 = vdwg.mxu0
    %s1190 = scalar_lea.vmem [#allocation7], 1024
    %v1191 = vld [vmem:[%s1190] sm:$0xff]
    %v1192 = vld [vmem:[%s1190 + $0x8] sm:$0xff]
    %v1193 = vld [vmem:[%s1190 + $0x10] sm:$0xff]
    %v1194 = vld [vmem:[%s1190 + $0x18] sm:$0xff]
    %v1195 = vld [vmem:[%s1190 + $0x20] sm:$0xff]
    %v1196 = vld [vmem:[%s1190 + $0x28] sm:$0xff]
    %v1197 = vld [vmem:[%s1190 + $0x30] sm:$0xff]
    %v1198 = vld [vmem:[%s1190 + $0x38] sm:$0xff]
    %v1199 = vld [vmem:[%s1190 + $0x40] sm:$0xff]
    %v1200 = vld [vmem:[%s1190 + $0x48] sm:$0xff]
    %v1201 = vld [vmem:[%s1190 + $0x50] sm:$0xff]
    %v1202 = vld [vmem:[%s1190 + $0x58] sm:$0xff]
    %v1203 = vld [vmem:[%s1190 + $0x60] sm:$0xff]
    %v1204 = vld [vmem:[%s1190 + $0x68] sm:$0xff]
    %v1205 = vld [vmem:[%s1190 + $0x70] sm:$0xff]
    %v1206 = vld [vmem:[%s1190 + $0x78] sm:$0xff]
    %v1207 = vld [vmem:[%s1190 + $0x80] sm:$0xff]
    %v1208 = vld [vmem:[%s1190 + $0x88] sm:$0xff]
    %v1209 = vld [vmem:[%s1190 + $0x90] sm:$0xff]
    %v1210 = vld [vmem:[%s1190 + $0x98] sm:$0xff]
    %v1211 = vld [vmem:[%s1190 + $0xa0] sm:$0xff]
    %v1212 = vld [vmem:[%s1190 + $0xa8] sm:$0xff]
    %v1213 = vld [vmem:[%s1190 + $0xb0] sm:$0xff]
    %v1214 = vld [vmem:[%s1190 + $0xb8] sm:$0xff]
    %v1215 = vld [vmem:[%s1190 + $0xc0] sm:$0xff]
    %v1216 = vld [vmem:[%s1190 + $0xc8] sm:$0xff]
    %v1217 = vld [vmem:[%s1190 + $0xd0] sm:$0xff]
    %v1218 = vld [vmem:[%s1190 + $0xd8] sm:$0xff]
    %v1219 = vld [vmem:[%s1190 + $0xe0] sm:$0xff]
    %v1220 = vld [vmem:[%s1190 + $0xe8] sm:$0xff]
    %v1221 = vld [vmem:[%s1190 + $0xf0] sm:$0xff]
    %v1222 = vld [vmem:[%s1190 + $0xf8] sm:$0xff]
    %1223 = vmatpush.msra.mxu0 %v1221
    %1224 = vmatpush.msra.mxu0 %v1219
    %1225 = vmatpush.msra.mxu0 %v1217
    %1226 = vmatpush.msra.mxu0 %v1215
    %1227 = vmatpush.msra.mxu0 %v1213
    %1228 = vmatpush.msra.mxu0 %v1211
    %1229 = vmatpush.msra.mxu0 %v1209
    %1230 = vmatpush.msra.mxu0 %v1207
    %1231 = vmatpush.msra.mxu0 %v1205
    %1232 = vmatpush.msra.mxu0 %v1203
    %1233 = vmatpush.msra.mxu0 %v1201
    %1234 = vmatpush.msra.mxu0 %v1199
    %1235 = vmatpush.msra.mxu0 %v1197
    %1236 = vmatpush.msra.mxu0 %v1195
    %1237 = vmatpush.msra.mxu0 %v1193
    %1238 = vmatpush.msra.mxu0 %v1191
    %1239 = vmatmul.f32.gmra.mxu0 %v1185
    %v1240 = vpop.f32.mrf.mxu0
    %v1241 = vadd.f32 0.0, %v1240
    %1242 = vmatmul.f32.gmra.mxu0 %v1188
    %v1243 = vpop.f32.mrf.mxu0
    %v1244 = vadd.f32 0.0, %v1243
    %1245 = vdwg.mxu0
    %1246 = vmatpush.msra.mxu0 %v1222
    %1247 = vmatpush.msra.mxu0 %v1220
    %1248 = vmatpush.msra.mxu0 %v1218
    %1249 = vmatpush.msra.mxu0 %v1216
    %1250 = vmatpush.msra.mxu0 %v1214
    %1251 = vmatpush.msra.mxu0 %v1212
    %1252 = vmatpush.msra.mxu0 %v1210
    %1253 = vmatpush.msra.mxu0 %v1208
    %1254 = vmatpush.msra.mxu0 %v1206
    %1255 = vmatpush.msra.mxu0 %v1204
    %1256 = vmatpush.msra.mxu0 %v1202
    %1257 = vmatpush.msra.mxu0 %v1200
    %1258 = vmatpush.msra.mxu0 %v1198
    %1259 = vmatpush.msra.mxu0 %v1196
    %1260 = vmatpush.msra.mxu0 %v1194
    %1261 = vmatpush.msra.mxu0 %v1192
    %1262 = vmatmul.f32.gmra.mxu0 %v1185
    %v1263 = vpop.f32.mrf.mxu0
    %v1264 = vadd.f32 0.0, %v1263
    %1265 = vmatmul.f32.gmra.mxu0 %v1188
    %v1266 = vpop.f32.mrf.mxu0
    %v1267 = vadd.f32 0.0, %v1266
    %1268 = vdwg.mxu0
    %v1269 = vadd.f32 %v1154, %v1241
    %v1270 = vadd.f32 %v1155, %v1264
    %v1271 = vadd.f32 %v1156, %v1244
    %v1272 = vadd.f32 %v1157, %v1267
    %v1273 = vld [vmem:[%s6] ss:$4 sm:$0x3]
    %s1274 = scalar_lea.vmem %s6, 1
    %v1275 = vld [vmem:[%s1274] ss:$4 sm:$0x3]
    %s1276 = scalar_lea.vmem %s6, 2
    %v1277 = vld [vmem:[%s1276] ss:$4 sm:$0x3]
    %v1279 = vperm.slane %v1273, 0
    %v1280 = vperm.slane %v1273, 1
    %v1283 = vadd.f32 %v1269, %v1279
    %v1284 = vadd.f32 %v1270, %v1280
    %v1285 = vadd.f32 %v1271, %v1279
    %v1286 = vadd.f32 %v1272, %v1280
    %v1287 = vmax.f32 %v1283, 0.0
    %v1288 = vmax.f32 %v1284, 0.0
    %v1289 = vmax.f32 %v1285, 0.0
    %v1290 = vmax.f32 %v1286, 0.0
    %v1292 = vperm.slane %v1275, 0
    %v1293 = vperm.slane %v1275, 1
    %v1296 = vmul.f32 %v1287, %v1292
    %v1297 = vmul.f32 %v1288, %v1293
    %v1298 = vmul.f32 %v1289, %v1292
    %v1299 = vmul.f32 %v1290, %v1293
    %v1301 = vperm.slane %v1277, 0
    %v1302 = vperm.slane %v1277, 1
    %v1305 = vadd.f32 %v1296, %v1301
    %v1306 = vadd.f32 %v1297, %v1302
    %v1307 = vadd.f32 %v1298, %v1301
    %v1308 = vadd.f32 %v1299, %v1302
    %v1309 = vld [vmem:[#allocation8] sm:$0xff]
    %vm1310 = vcmask 130048
    %v1312 = vsel %vm1310, %v1309, 0
    %1314 = vmatpush.msra.mxu0 0.0
    %1315 = vmatpush.msra.mxu0 0.0
    %1316 = vmatpush.msra.mxu0 0.0
    %1317 = vmatpush.msra.mxu0 0.0
    %1318 = vmatpush.msra.mxu0 0.0
    %1319 = vmatpush.msra.mxu0 0.0
    %1320 = vmatpush.msra.mxu0 0.0
    %1321 = vmatpush.msra.mxu0 0.0
    %1322 = vmatpush.msra.mxu0 0.0
    %1323 = vmatpush.msra.mxu0 0.0
    %1324 = vmatpush.msra.mxu0 0.0
    %1325 = vmatpush.msra.mxu0 0.0
    %1326 = vmatpush.msra.mxu0 0.0
    %1327 = vmatpush.msra.mxu0 0.0
    %1328 = vmatpush.msra.mxu0 %v1307
    %1329 = vmatpush.msra.mxu0 %v1305
    %1330 = vmatmul.f32.gmra.mxu0 %v1312
    %v1331 = vpop.f32.mrf.mxu0
    %v1332 = vadd.f32 0.0, %v1331
    %1333 = vdwg.mxu0
    %1334 = vmatpush.msra.mxu0 0.0
    %1335 = vmatpush.msra.mxu0 0.0
    %1336 = vmatpush.msra.mxu0 0.0
    %1337 = vmatpush.msra.mxu0 0.0
    %1338 = vmatpush.msra.mxu0 0.0
    %1339 = vmatpush.msra.mxu0 0.0
    %1340 = vmatpush.msra.mxu0 0.0
    %1341 = vmatpush.msra.mxu0 0.0
    %1342 = vmatpush.msra.mxu0 0.0
    %1343 = vmatpush.msra.mxu0 0.0
    %1344 = vmatpush.msra.mxu0 0.0
    %1345 = vmatpush.msra.mxu0 0.0
    %1346 = vmatpush.msra.mxu0 0.0
    %1347 = vmatpush.msra.mxu0 0.0
    %1348 = vmatpush.msra.mxu0 %v1308
    %1349 = vmatpush.msra.mxu0 %v1306
    %1350 = vmatmul.f32.gmra.mxu0 %v1312
    %v1351 = vpop.f32.mrf.mxu0
    %v1352 = vadd.f32 0.0, %v1351
    %1353 = vdwg.mxu0
    %v1354 = vld [vmem:[#allocation10] sm:$0xff]
    %v1355 = vld [vmem:[#allocation10 + $0x8] sm:$0xff]
    %v1356 = vld [vmem:[#allocation10 + $0x10] sm:$0xff]
    %v1357 = vld [vmem:[#allocation10 + $0x18] sm:$0xff]
    %v1358 = vld [vmem:[#allocation10 + $0x20] sm:$0xff]
    %v1359 = vld [vmem:[#allocation10 + $0x28] sm:$0xff]
    %v1360 = vld [vmem:[#allocation10 + $0x30] sm:$0xff]
    %v1361 = vld [vmem:[#allocation10 + $0x38] sm:$0xff]
    %v1362 = vld [vmem:[#allocation10 + $0x40] sm:$0xff]
    %v1363 = vld [vmem:[#allocation10 + $0x48] sm:$0xff]
    %v1364 = vld [vmem:[#allocation10 + $0x50] sm:$0xff]
    %v1365 = vld [vmem:[#allocation10 + $0x58] sm:$0xff]
    %v1366 = vld [vmem:[#allocation10 + $0x60] sm:$0xff]
    %v1367 = vld [vmem:[#allocation10 + $0x68] sm:$0xff]
    %v1368 = vld [vmem:[#allocation10 + $0x70] sm:$0xff]
    %v1369 = vld [vmem:[#allocation10 + $0x78] sm:$0xff]
    %v1370 = vld [vmem:[#allocation10 + $0x80] sm:$0xff]
    %v1371 = vld [vmem:[#allocation10 + $0x88] sm:$0xff]
    %v1372 = vld [vmem:[#allocation10 + $0x90] sm:$0xff]
    %v1373 = vld [vmem:[#allocation10 + $0x98] sm:$0xff]
    %v1374 = vld [vmem:[#allocation10 + $0xa0] sm:$0xff]
    %v1375 = vld [vmem:[#allocation10 + $0xa8] sm:$0xff]
    %v1376 = vld [vmem:[#allocation10 + $0xb0] sm:$0xff]
    %v1377 = vld [vmem:[#allocation10 + $0xb8] sm:$0xff]
    %v1378 = vld [vmem:[#allocation10 + $0xc0] sm:$0xff]
    %v1379 = vld [vmem:[#allocation10 + $0xc8] sm:$0xff]
    %v1380 = vld [vmem:[#allocation10 + $0xd0] sm:$0xff]
    %v1381 = vld [vmem:[#allocation10 + $0xd8] sm:$0xff]
    %v1382 = vld [vmem:[#allocation10 + $0xe0] sm:$0xff]
    %v1383 = vld [vmem:[#allocation10 + $0xe8] sm:$0xff]
    %v1384 = vld [vmem:[#allocation10 + $0xf0] sm:$0xff]
    %v1385 = vld [vmem:[#allocation10 + $0xf8] sm:$0xff]
    %s1386 = scalar_lea.vmem [#allocation8], 8
    %v1387 = vld [vmem:[%s1386] sm:$0xff]
    %v1389 = vsel %vm1310, %v1387, 0
    %1391 = vmatpush.msra.mxu0 0.0
    %1392 = vmatpush.msra.mxu0 0.0
    %1393 = vmatpush.msra.mxu0 0.0
    %1394 = vmatpush.msra.mxu0 0.0
    %1395 = vmatpush.msra.mxu0 0.0
    %1396 = vmatpush.msra.mxu0 0.0
    %1397 = vmatpush.msra.mxu0 0.0
    %1398 = vmatpush.msra.mxu0 0.0
    %1399 = vmatpush.msra.mxu0 0.0
    %1400 = vmatpush.msra.mxu0 0.0
    %1401 = vmatpush.msra.mxu0 0.0
    %1402 = vmatpush.msra.mxu0 0.0
    %1403 = vmatpush.msra.mxu0 0.0
    %1404 = vmatpush.msra.mxu0 0.0
    %1405 = vmatpush.msra.mxu0 %v1307
    %1406 = vmatpush.msra.mxu0 %v1305
    %1407 = vmatmul.f32.gmra.mxu0 %v1389
    %v1408 = vpop.f32.mrf.mxu0
    %v1409 = vadd.f32 0.0, %v1408
    %1410 = vdwg.mxu0
    %1411 = vmatpush.msra.mxu0 0.0
    %1412 = vmatpush.msra.mxu0 0.0
    %1413 = vmatpush.msra.mxu0 0.0
    %1414 = vmatpush.msra.mxu0 0.0
    %1415 = vmatpush.msra.mxu0 0.0
    %1416 = vmatpush.msra.mxu0 0.0
    %1417 = vmatpush.msra.mxu0 0.0
    %1418 = vmatpush.msra.mxu0 0.0
    %1419 = vmatpush.msra.mxu0 0.0
    %1420 = vmatpush.msra.mxu0 0.0
    %1421 = vmatpush.msra.mxu0 0.0
    %1422 = vmatpush.msra.mxu0 0.0
    %1423 = vmatpush.msra.mxu0 0.0
    %1424 = vmatpush.msra.mxu0 0.0
    %1425 = vmatpush.msra.mxu0 %v1308
    %1426 = vmatpush.msra.mxu0 %v1306
    %1427 = vmatmul.f32.gmra.mxu0 %v1389
    %v1428 = vpop.f32.mrf.mxu0
    %v1429 = vadd.f32 0.0, %v1428
    %1430 = vdwg.mxu0
    %s1431 = scalar_lea.vmem [#allocation10], 256
    %v1432 = vld [vmem:[%s1431] sm:$0xff]
    %v1433 = vld [vmem:[%s1431 + $0x8] sm:$0xff]
    %v1434 = vld [vmem:[%s1431 + $0x10] sm:$0xff]
    %v1435 = vld [vmem:[%s1431 + $0x18] sm:$0xff]
    %v1436 = vld [vmem:[%s1431 + $0x20] sm:$0xff]
    %v1437 = vld [vmem:[%s1431 + $0x28] sm:$0xff]
    %v1438 = vld [vmem:[%s1431 + $0x30] sm:$0xff]
    %v1439 = vld [vmem:[%s1431 + $0x38] sm:$0xff]
    %v1440 = vld [vmem:[%s1431 + $0x40] sm:$0xff]
    %v1441 = vld [vmem:[%s1431 + $0x48] sm:$0xff]
    %v1442 = vld [vmem:[%s1431 + $0x50] sm:$0xff]
    %v1443 = vld [vmem:[%s1431 + $0x58] sm:$0xff]
    %v1444 = vld [vmem:[%s1431 + $0x60] sm:$0xff]
    %v1445 = vld [vmem:[%s1431 + $0x68] sm:$0xff]
    %v1446 = vld [vmem:[%s1431 + $0x70] sm:$0xff]
    %v1447 = vld [vmem:[%s1431 + $0x78] sm:$0xff]
    %v1448 = vld [vmem:[%s1431 + $0x80] sm:$0xff]
    %v1449 = vld [vmem:[%s1431 + $0x88] sm:$0xff]
    %v1450 = vld [vmem:[%s1431 + $0x90] sm:$0xff]
    %v1451 = vld [vmem:[%s1431 + $0x98] sm:$0xff]
    %v1452 = vld [vmem:[%s1431 + $0xa0] sm:$0xff]
    %v1453 = vld [vmem:[%s1431 + $0xa8] sm:$0xff]
    %v1454 = vld [vmem:[%s1431 + $0xb0] sm:$0xff]
    %v1455 = vld [vmem:[%s1431 + $0xb8] sm:$0xff]
    %v1456 = vld [vmem:[%s1431 + $0xc0] sm:$0xff]
    %v1457 = vld [vmem:[%s1431 + $0xc8] sm:$0xff]
    %v1458 = vld [vmem:[%s1431 + $0xd0] sm:$0xff]
    %v1459 = vld [vmem:[%s1431 + $0xd8] sm:$0xff]
    %v1460 = vld [vmem:[%s1431 + $0xe0] sm:$0xff]
    %v1461 = vld [vmem:[%s1431 + $0xe8] sm:$0xff]
    %v1462 = vld [vmem:[%s1431 + $0xf0] sm:$0xff]
    %v1463 = vld [vmem:[%s1431 + $0xf8] sm:$0xff]
    %1464 = vmatpush.msra.mxu0 %v1447
    %1465 = vmatpush.msra.mxu0 %v1446
    %1466 = vmatpush.msra.mxu0 %v1445
    %1467 = vmatpush.msra.mxu0 %v1444
    %1468 = vmatpush.msra.mxu0 %v1443
    %1469 = vmatpush.msra.mxu0 %v1442
    %1470 = vmatpush.msra.mxu0 %v1441
    %1471 = vmatpush.msra.mxu0 %v1440
    %1472 = vmatpush.msra.mxu0 %v1439
    %1473 = vmatpush.msra.mxu0 %v1438
    %1474 = vmatpush.msra.mxu0 %v1437
    %1475 = vmatpush.msra.mxu0 %v1436
    %1476 = vmatpush.msra.mxu0 %v1435
    %1477 = vmatpush.msra.mxu0 %v1434
    %1478 = vmatpush.msra.mxu0 %v1433
    %1479 = vmatpush.msra.mxu0 %v1432
    %1480 = vmatmul.f32.gmra.mxu0 %v1409
    %v1481 = vpop.f32.mrf.mxu0
    %v1482 = vadd.f32 0.0, %v1481
    %1483 = vdwg.mxu0
    %1484 = vmatpush.msra.mxu0 %v1463
    %1485 = vmatpush.msra.mxu0 %v1462
    %1486 = vmatpush.msra.mxu0 %v1461
    %1487 = vmatpush.msra.mxu0 %v1460
    %1488 = vmatpush.msra.mxu0 %v1459
    %1489 = vmatpush.msra.mxu0 %v1458
    %1490 = vmatpush.msra.mxu0 %v1457
    %1491 = vmatpush.msra.mxu0 %v1456
    %1492 = vmatpush.msra.mxu0 %v1455
    %1493 = vmatpush.msra.mxu0 %v1454
    %1494 = vmatpush.msra.mxu0 %v1453
    %1495 = vmatpush.msra.mxu0 %v1452
    %1496 = vmatpush.msra.mxu0 %v1451
    %1497 = vmatpush.msra.mxu0 %v1450
    %1498 = vmatpush.msra.mxu0 %v1449
    %1499 = vmatpush.msra.mxu0 %v1448
    %1500 = vmatmul.f32.gmra.mxu0 %v1429
    %v1501 = vpop.f32.mrf.mxu0
    %v1502 = vadd.f32 %v1482, %v1501
    %1503 = vdwg.mxu0
    %1504 = vmatpush.msra.mxu0 %v1369
    %1505 = vmatpush.msra.mxu0 %v1368
    %1506 = vmatpush.msra.mxu0 %v1367
    %1507 = vmatpush.msra.mxu0 %v1366
    %1508 = vmatpush.msra.mxu0 %v1365
    %1509 = vmatpush.msra.mxu0 %v1364
    %1510 = vmatpush.msra.mxu0 %v1363
    %1511 = vmatpush.msra.mxu0 %v1362
    %1512 = vmatpush.msra.mxu0 %v1361
    %1513 = vmatpush.msra.mxu0 %v1360
    %1514 = vmatpush.msra.mxu0 %v1359
    %1515 = vmatpush.msra.mxu0 %v1358
    %1516 = vmatpush.msra.mxu0 %v1357
    %1517 = vmatpush.msra.mxu0 %v1356
    %1518 = vmatpush.msra.mxu0 %v1355
    %1519 = vmatpush.msra.mxu0 %v1354
    %1520 = vmatmul.f32.gmra.mxu0 %v1332
    %v1521 = vpop.f32.mrf.mxu0
    %v1522 = vadd.f32 %v1502, %v1521
    %1523 = vdwg.mxu0
    %1524 = vmatpush.msra.mxu0 %v1385
    %1525 = vmatpush.msra.mxu0 %v1384
    %1526 = vmatpush.msra.mxu0 %v1383
    %1527 = vmatpush.msra.mxu0 %v1382
    %1528 = vmatpush.msra.mxu0 %v1381
    %1529 = vmatpush.msra.mxu0 %v1380
    %1530 = vmatpush.msra.mxu0 %v1379
    %1531 = vmatpush.msra.mxu0 %v1378
    %1532 = vmatpush.msra.mxu0 %v1377
    %1533 = vmatpush.msra.mxu0 %v1376
    %1534 = vmatpush.msra.mxu0 %v1375
    %1535 = vmatpush.msra.mxu0 %v1374
    %1536 = vmatpush.msra.mxu0 %v1373
    %1537 = vmatpush.msra.mxu0 %v1372
    %1538 = vmatpush.msra.mxu0 %v1371
    %1539 = vmatpush.msra.mxu0 %v1370
    %1540 = vmatmul.f32.gmra.mxu0 %v1352
    %v1541 = vpop.f32.mrf.mxu0
    %v1542 = vadd.f32 %v1522, %v1541
    %1543 = vdwg.mxu0
    %s1544 = scalar_lea.vmem [#allocation8], 16
    %v1545 = vld [vmem:[%s1544] sm:$0xff]
    %v1547 = vsel %vm1310, %v1545, 0
    %1549 = vmatpush.msra.mxu0 0.0
    %1550 = vmatpush.msra.mxu0 0.0
    %1551 = vmatpush.msra.mxu0 0.0
    %1552 = vmatpush.msra.mxu0 0.0
    %1553 = vmatpush.msra.mxu0 0.0
    %1554 = vmatpush.msra.mxu0 0.0
    %1555 = vmatpush.msra.mxu0 0.0
    %1556 = vmatpush.msra.mxu0 0.0
    %1557 = vmatpush.msra.mxu0 0.0
    %1558 = vmatpush.msra.mxu0 0.0
    %1559 = vmatpush.msra.mxu0 0.0
    %1560 = vmatpush.msra.mxu0 0.0
    %1561 = vmatpush.msra.mxu0 0.0
    %1562 = vmatpush.msra.mxu0 0.0
    %1563 = vmatpush.msra.mxu0 %v1307
    %1564 = vmatpush.msra.mxu0 %v1305
    %1565 = vmatmul.f32.gmra.mxu0 %v1547
    %v1566 = vpop.f32.mrf.mxu0
    %v1567 = vadd.f32 0.0, %v1566
    %1568 = vdwg.mxu0
    %1569 = vmatpush.msra.mxu0 0.0
    %1570 = vmatpush.msra.mxu0 0.0
    %1571 = vmatpush.msra.mxu0 0.0
    %1572 = vmatpush.msra.mxu0 0.0
    %1573 = vmatpush.msra.mxu0 0.0
    %1574 = vmatpush.msra.mxu0 0.0
    %1575 = vmatpush.msra.mxu0 0.0
    %1576 = vmatpush.msra.mxu0 0.0
    %1577 = vmatpush.msra.mxu0 0.0
    %1578 = vmatpush.msra.mxu0 0.0
    %1579 = vmatpush.msra.mxu0 0.0
    %1580 = vmatpush.msra.mxu0 0.0
    %1581 = vmatpush.msra.mxu0 0.0
    %1582 = vmatpush.msra.mxu0 0.0
    %1583 = vmatpush.msra.mxu0 %v1308
    %1584 = vmatpush.msra.mxu0 %v1306
    %1585 = vmatmul.f32.gmra.mxu0 %v1547
    %v1586 = vpop.f32.mrf.mxu0
    %v1587 = vadd.f32 0.0, %v1586
    %1588 = vdwg.mxu0
    %s1589 = scalar_lea.vmem [#allocation10], 512
    %v1590 = vld [vmem:[%s1589] sm:$0xff]
    %v1591 = vld [vmem:[%s1589 + $0x8] sm:$0xff]
    %v1592 = vld [vmem:[%s1589 + $0x10] sm:$0xff]
    %v1593 = vld [vmem:[%s1589 + $0x18] sm:$0xff]
    %v1594 = vld [vmem:[%s1589 + $0x20] sm:$0xff]
    %v1595 = vld [vmem:[%s1589 + $0x28] sm:$0xff]
    %v1596 = vld [vmem:[%s1589 + $0x30] sm:$0xff]
    %v1597 = vld [vmem:[%s1589 + $0x38] sm:$0xff]
    %v1598 = vld [vmem:[%s1589 + $0x40] sm:$0xff]
    %v1599 = vld [vmem:[%s1589 + $0x48] sm:$0xff]
    %v1600 = vld [vmem:[%s1589 + $0x50] sm:$0xff]
    %v1601 = vld [vmem:[%s1589 + $0x58] sm:$0xff]
    %v1602 = vld [vmem:[%s1589 + $0x60] sm:$0xff]
    %v1603 = vld [vmem:[%s1589 + $0x68] sm:$0xff]
    %v1604 = vld [vmem:[%s1589 + $0x70] sm:$0xff]
    %v1605 = vld [vmem:[%s1589 + $0x78] sm:$0xff]
    %v1606 = vld [vmem:[%s1589 + $0x80] sm:$0xff]
    %v1607 = vld [vmem:[%s1589 + $0x88] sm:$0xff]
    %v1608 = vld [vmem:[%s1589 + $0x90] sm:$0xff]
    %v1609 = vld [vmem:[%s1589 + $0x98] sm:$0xff]
    %v1610 = vld [vmem:[%s1589 + $0xa0] sm:$0xff]
    %v1611 = vld [vmem:[%s1589 + $0xa8] sm:$0xff]
    %v1612 = vld [vmem:[%s1589 + $0xb0] sm:$0xff]
    %v1613 = vld [vmem:[%s1589 + $0xb8] sm:$0xff]
    %v1614 = vld [vmem:[%s1589 + $0xc0] sm:$0xff]
    %v1615 = vld [vmem:[%s1589 + $0xc8] sm:$0xff]
    %v1616 = vld [vmem:[%s1589 + $0xd0] sm:$0xff]
    %v1617 = vld [vmem:[%s1589 + $0xd8] sm:$0xff]
    %v1618 = vld [vmem:[%s1589 + $0xe0] sm:$0xff]
    %v1619 = vld [vmem:[%s1589 + $0xe8] sm:$0xff]
    %v1620 = vld [vmem:[%s1589 + $0xf0] sm:$0xff]
    %v1621 = vld [vmem:[%s1589 + $0xf8] sm:$0xff]
    %1622 = vmatpush.msra.mxu0 %v1605
    %1623 = vmatpush.msra.mxu0 %v1604
    %1624 = vmatpush.msra.mxu0 %v1603
    %1625 = vmatpush.msra.mxu0 %v1602
    %1626 = vmatpush.msra.mxu0 %v1601
    %1627 = vmatpush.msra.mxu0 %v1600
    %1628 = vmatpush.msra.mxu0 %v1599
    %1629 = vmatpush.msra.mxu0 %v1598
    %1630 = vmatpush.msra.mxu0 %v1597
    %1631 = vmatpush.msra.mxu0 %v1596
    %1632 = vmatpush.msra.mxu0 %v1595
    %1633 = vmatpush.msra.mxu0 %v1594
    %1634 = vmatpush.msra.mxu0 %v1593
    %1635 = vmatpush.msra.mxu0 %v1592
    %1636 = vmatpush.msra.mxu0 %v1591
    %1637 = vmatpush.msra.mxu0 %v1590
    %1638 = vmatmul.f32.gmra.mxu0 %v1567
    %v1639 = vpop.f32.mrf.mxu0
    %v1640 = vadd.f32 0.0, %v1639
    %1641 = vdwg.mxu0
    %1642 = vmatpush.msra.mxu0 %v1621
    %1643 = vmatpush.msra.mxu0 %v1620
    %1644 = vmatpush.msra.mxu0 %v1619
    %1645 = vmatpush.msra.mxu0 %v1618
    %1646 = vmatpush.msra.mxu0 %v1617
    %1647 = vmatpush.msra.mxu0 %v1616
    %1648 = vmatpush.msra.mxu0 %v1615
    %1649 = vmatpush.msra.mxu0 %v1614
    %1650 = vmatpush.msra.mxu0 %v1613
    %1651 = vmatpush.msra.mxu0 %v1612
    %1652 = vmatpush.msra.mxu0 %v1611
    %1653 = vmatpush.msra.mxu0 %v1610
    %1654 = vmatpush.msra.mxu0 %v1609
    %1655 = vmatpush.msra.mxu0 %v1608
    %1656 = vmatpush.msra.mxu0 %v1607
    %1657 = vmatpush.msra.mxu0 %v1606
    %1658 = vmatmul.f32.gmra.mxu0 %v1587
    %v1659 = vpop.f32.mrf.mxu0
    %v1660 = vadd.f32 %v1640, %v1659
    %1661 = vdwg.mxu0
    %v1662 = vadd.f32 %v1542, %v1660
    %s1663 = scalar_lea.vmem [#allocation8], 24
    %v1664 = vld [vmem:[%s1663] sm:$0xff]
    %v1666 = vsel %vm1310, %v1664, 0
    %1668 = vmatpush.msra.mxu0 0.0
    %1669 = vmatpush.msra.mxu0 0.0
    %1670 = vmatpush.msra.mxu0 0.0
    %1671 = vmatpush.msra.mxu0 0.0
    %1672 = vmatpush.msra.mxu0 0.0
    %1673 = vmatpush.msra.mxu0 0.0
    %1674 = vmatpush.msra.mxu0 0.0
    %1675 = vmatpush.msra.mxu0 0.0
    %1676 = vmatpush.msra.mxu0 0.0
    %1677 = vmatpush.msra.mxu0 0.0
    %1678 = vmatpush.msra.mxu0 0.0
    %1679 = vmatpush.msra.mxu0 0.0
    %1680 = vmatpush.msra.mxu0 0.0
    %1681 = vmatpush.msra.mxu0 0.0
    %1682 = vmatpush.msra.mxu0 %v1307
    %1683 = vmatpush.msra.mxu0 %v1305
    %1684 = vmatmul.f32.gmra.mxu0 %v1666
    %v1685 = vpop.f32.mrf.mxu0
    %v1686 = vadd.f32 0.0, %v1685
    %1687 = vdwg.mxu0
    %1688 = vmatpush.msra.mxu0 0.0
    %1689 = vmatpush.msra.mxu0 0.0
    %1690 = vmatpush.msra.mxu0 0.0
    %1691 = vmatpush.msra.mxu0 0.0
    %1692 = vmatpush.msra.mxu0 0.0
    %1693 = vmatpush.msra.mxu0 0.0
    %1694 = vmatpush.msra.mxu0 0.0
    %1695 = vmatpush.msra.mxu0 0.0
    %1696 = vmatpush.msra.mxu0 0.0
    %1697 = vmatpush.msra.mxu0 0.0
    %1698 = vmatpush.msra.mxu0 0.0
    %1699 = vmatpush.msra.mxu0 0.0
    %1700 = vmatpush.msra.mxu0 0.0
    %1701 = vmatpush.msra.mxu0 0.0
    %1702 = vmatpush.msra.mxu0 %v1308
    %1703 = vmatpush.msra.mxu0 %v1306
    %1704 = vmatmul.f32.gmra.mxu0 %v1666
    %v1705 = vpop.f32.mrf.mxu0
    %v1706 = vadd.f32 0.0, %v1705
    %1707 = vdwg.mxu0
    %s1708 = scalar_lea.vmem [#allocation10], 768
    %v1709 = vld [vmem:[%s1708] sm:$0xff]
    %v1710 = vld [vmem:[%s1708 + $0x8] sm:$0xff]
    %v1711 = vld [vmem:[%s1708 + $0x10] sm:$0xff]
    %v1712 = vld [vmem:[%s1708 + $0x18] sm:$0xff]
    %v1713 = vld [vmem:[%s1708 + $0x20] sm:$0xff]
    %v1714 = vld [vmem:[%s1708 + $0x28] sm:$0xff]
    %v1715 = vld [vmem:[%s1708 + $0x30] sm:$0xff]
    %v1716 = vld [vmem:[%s1708 + $0x38] sm:$0xff]
    %v1717 = vld [vmem:[%s1708 + $0x40] sm:$0xff]
    %v1718 = vld [vmem:[%s1708 + $0x48] sm:$0xff]
    %v1719 = vld [vmem:[%s1708 + $0x50] sm:$0xff]
    %v1720 = vld [vmem:[%s1708 + $0x58] sm:$0xff]
    %v1721 = vld [vmem:[%s1708 + $0x60] sm:$0xff]
    %v1722 = vld [vmem:[%s1708 + $0x68] sm:$0xff]
    %v1723 = vld [vmem:[%s1708 + $0x70] sm:$0xff]
    %v1724 = vld [vmem:[%s1708 + $0x78] sm:$0xff]
    %v1725 = vld [vmem:[%s1708 + $0x80] sm:$0xff]
    %v1726 = vld [vmem:[%s1708 + $0x88] sm:$0xff]
    %v1727 = vld [vmem:[%s1708 + $0x90] sm:$0xff]
    %v1728 = vld [vmem:[%s1708 + $0x98] sm:$0xff]
    %v1729 = vld [vmem:[%s1708 + $0xa0] sm:$0xff]
    %v1730 = vld [vmem:[%s1708 + $0xa8] sm:$0xff]
    %v1731 = vld [vmem:[%s1708 + $0xb0] sm:$0xff]
    %v1732 = vld [vmem:[%s1708 + $0xb8] sm:$0xff]
    %v1733 = vld [vmem:[%s1708 + $0xc0] sm:$0xff]
    %v1734 = vld [vmem:[%s1708 + $0xc8] sm:$0xff]
    %v1735 = vld [vmem:[%s1708 + $0xd0] sm:$0xff]
    %v1736 = vld [vmem:[%s1708 + $0xd8] sm:$0xff]
    %v1737 = vld [vmem:[%s1708 + $0xe0] sm:$0xff]
    %v1738 = vld [vmem:[%s1708 + $0xe8] sm:$0xff]
    %v1739 = vld [vmem:[%s1708 + $0xf0] sm:$0xff]
    %v1740 = vld [vmem:[%s1708 + $0xf8] sm:$0xff]
    %1741 = vmatpush.msra.mxu0 %v1724
    %1742 = vmatpush.msra.mxu0 %v1723
    %1743 = vmatpush.msra.mxu0 %v1722
    %1744 = vmatpush.msra.mxu0 %v1721
    %1745 = vmatpush.msra.mxu0 %v1720
    %1746 = vmatpush.msra.mxu0 %v1719
    %1747 = vmatpush.msra.mxu0 %v1718
    %1748 = vmatpush.msra.mxu0 %v1717
    %1749 = vmatpush.msra.mxu0 %v1716
    %1750 = vmatpush.msra.mxu0 %v1715
    %1751 = vmatpush.msra.mxu0 %v1714
    %1752 = vmatpush.msra.mxu0 %v1713
    %1753 = vmatpush.msra.mxu0 %v1712
    %1754 = vmatpush.msra.mxu0 %v1711
    %1755 = vmatpush.msra.mxu0 %v1710
    %1756 = vmatpush.msra.mxu0 %v1709
    %1757 = vmatmul.f32.gmra.mxu0 %v1686
    %v1758 = vpop.f32.mrf.mxu0
    %v1759 = vadd.f32 0.0, %v1758
    %1760 = vdwg.mxu0
    %1761 = vmatpush.msra.mxu0 %v1740
    %1762 = vmatpush.msra.mxu0 %v1739
    %1763 = vmatpush.msra.mxu0 %v1738
    %1764 = vmatpush.msra.mxu0 %v1737
    %1765 = vmatpush.msra.mxu0 %v1736
    %1766 = vmatpush.msra.mxu0 %v1735
    %1767 = vmatpush.msra.mxu0 %v1734
    %1768 = vmatpush.msra.mxu0 %v1733
    %1769 = vmatpush.msra.mxu0 %v1732
    %1770 = vmatpush.msra.mxu0 %v1731
    %1771 = vmatpush.msra.mxu0 %v1730
    %1772 = vmatpush.msra.mxu0 %v1729
    %1773 = vmatpush.msra.mxu0 %v1728
    %1774 = vmatpush.msra.mxu0 %v1727
    %1775 = vmatpush.msra.mxu0 %v1726
    %1776 = vmatpush.msra.mxu0 %v1725
    %1777 = vmatmul.f32.gmra.mxu0 %v1706
    %v1778 = vpop.f32.mrf.mxu0
    %v1779 = vadd.f32 %v1759, %v1778
    %1780 = vdwg.mxu0
    %v1781 = vadd.f32 %v1662, %v1779
    %s1782 = scalar_lea.vmem [#allocation8], 32
    %v1783 = vld [vmem:[%s1782] sm:$0xff]
    %v1785 = vsel %vm1310, %v1783, 0
    %1787 = vmatpush.msra.mxu0 0.0
    %1788 = vmatpush.msra.mxu0 0.0
    %1789 = vmatpush.msra.mxu0 0.0
    %1790 = vmatpush.msra.mxu0 0.0
    %1791 = vmatpush.msra.mxu0 0.0
    %1792 = vmatpush.msra.mxu0 0.0
    %1793 = vmatpush.msra.mxu0 0.0
    %1794 = vmatpush.msra.mxu0 0.0
    %1795 = vmatpush.msra.mxu0 0.0
    %1796 = vmatpush.msra.mxu0 0.0
    %1797 = vmatpush.msra.mxu0 0.0
    %1798 = vmatpush.msra.mxu0 0.0
    %1799 = vmatpush.msra.mxu0 0.0
    %1800 = vmatpush.msra.mxu0 0.0
    %1801 = vmatpush.msra.mxu0 %v1307
    %1802 = vmatpush.msra.mxu0 %v1305
    %1803 = vmatmul.f32.gmra.mxu0 %v1785
    %v1804 = vpop.f32.mrf.mxu0
    %v1805 = vadd.f32 0.0, %v1804
    %1806 = vdwg.mxu0
    %1807 = vmatpush.msra.mxu0 0.0
    %1808 = vmatpush.msra.mxu0 0.0
    %1809 = vmatpush.msra.mxu0 0.0
    %1810 = vmatpush.msra.mxu0 0.0
    %1811 = vmatpush.msra.mxu0 0.0
    %1812 = vmatpush.msra.mxu0 0.0
    %1813 = vmatpush.msra.mxu0 0.0
    %1814 = vmatpush.msra.mxu0 0.0
    %1815 = vmatpush.msra.mxu0 0.0
    %1816 = vmatpush.msra.mxu0 0.0
    %1817 = vmatpush.msra.mxu0 0.0
    %1818 = vmatpush.msra.mxu0 0.0
    %1819 = vmatpush.msra.mxu0 0.0
    %1820 = vmatpush.msra.mxu0 0.0
    %1821 = vmatpush.msra.mxu0 %v1308
    %1822 = vmatpush.msra.mxu0 %v1306
    %1823 = vmatmul.f32.gmra.mxu0 %v1785
    %v1824 = vpop.f32.mrf.mxu0
    %v1825 = vadd.f32 0.0, %v1824
    %1826 = vdwg.mxu0
    %s1827 = scalar_lea.vmem [#allocation10], 1024
    %v1828 = vld [vmem:[%s1827] sm:$0xff]
    %v1829 = vld [vmem:[%s1827 + $0x8] sm:$0xff]
    %v1830 = vld [vmem:[%s1827 + $0x10] sm:$0xff]
    %v1831 = vld [vmem:[%s1827 + $0x18] sm:$0xff]
    %v1832 = vld [vmem:[%s1827 + $0x20] sm:$0xff]
    %v1833 = vld [vmem:[%s1827 + $0x28] sm:$0xff]
    %v1834 = vld [vmem:[%s1827 + $0x30] sm:$0xff]
    %v1835 = vld [vmem:[%s1827 + $0x38] sm:$0xff]
    %v1836 = vld [vmem:[%s1827 + $0x40] sm:$0xff]
    %v1837 = vld [vmem:[%s1827 + $0x48] sm:$0xff]
    %v1838 = vld [vmem:[%s1827 + $0x50] sm:$0xff]
    %v1839 = vld [vmem:[%s1827 + $0x58] sm:$0xff]
    %v1840 = vld [vmem:[%s1827 + $0x60] sm:$0xff]
    %v1841 = vld [vmem:[%s1827 + $0x68] sm:$0xff]
    %v1842 = vld [vmem:[%s1827 + $0x70] sm:$0xff]
    %v1843 = vld [vmem:[%s1827 + $0x78] sm:$0xff]
    %v1844 = vld [vmem:[%s1827 + $0x80] sm:$0xff]
    %v1845 = vld [vmem:[%s1827 + $0x88] sm:$0xff]
    %v1846 = vld [vmem:[%s1827 + $0x90] sm:$0xff]
    %v1847 = vld [vmem:[%s1827 + $0x98] sm:$0xff]
    %v1848 = vld [vmem:[%s1827 + $0xa0] sm:$0xff]
    %v1849 = vld [vmem:[%s1827 + $0xa8] sm:$0xff]
    %v1850 = vld [vmem:[%s1827 + $0xb0] sm:$0xff]
    %v1851 = vld [vmem:[%s1827 + $0xb8] sm:$0xff]
    %v1852 = vld [vmem:[%s1827 + $0xc0] sm:$0xff]
    %v1853 = vld [vmem:[%s1827 + $0xc8] sm:$0xff]
    %v1854 = vld [vmem:[%s1827 + $0xd0] sm:$0xff]
    %v1855 = vld [vmem:[%s1827 + $0xd8] sm:$0xff]
    %v1856 = vld [vmem:[%s1827 + $0xe0] sm:$0xff]
    %v1857 = vld [vmem:[%s1827 + $0xe8] sm:$0xff]
    %v1858 = vld [vmem:[%s1827 + $0xf0] sm:$0xff]
    %v1859 = vld [vmem:[%s1827 + $0xf8] sm:$0xff]
    %1860 = vmatpush.msra.mxu0 %v1843
    %1861 = vmatpush.msra.mxu0 %v1842
    %1862 = vmatpush.msra.mxu0 %v1841
    %1863 = vmatpush.msra.mxu0 %v1840
    %1864 = vmatpush.msra.mxu0 %v1839
    %1865 = vmatpush.msra.mxu0 %v1838
    %1866 = vmatpush.msra.mxu0 %v1837
    %1867 = vmatpush.msra.mxu0 %v1836
    %1868 = vmatpush.msra.mxu0 %v1835
    %1869 = vmatpush.msra.mxu0 %v1834
    %1870 = vmatpush.msra.mxu0 %v1833
    %1871 = vmatpush.msra.mxu0 %v1832
    %1872 = vmatpush.msra.mxu0 %v1831
    %1873 = vmatpush.msra.mxu0 %v1830
    %1874 = vmatpush.msra.mxu0 %v1829
    %1875 = vmatpush.msra.mxu0 %v1828
    %1876 = vmatmul.f32.gmra.mxu0 %v1805
    %v1877 = vpop.f32.mrf.mxu0
    %v1878 = vadd.f32 0.0, %v1877
    %1879 = vdwg.mxu0
    %1880 = vmatpush.msra.mxu0 %v1859
    %1881 = vmatpush.msra.mxu0 %v1858
    %1882 = vmatpush.msra.mxu0 %v1857
    %1883 = vmatpush.msra.mxu0 %v1856
    %1884 = vmatpush.msra.mxu0 %v1855
    %1885 = vmatpush.msra.mxu0 %v1854
    %1886 = vmatpush.msra.mxu0 %v1853
    %1887 = vmatpush.msra.mxu0 %v1852
    %1888 = vmatpush.msra.mxu0 %v1851
    %1889 = vmatpush.msra.mxu0 %v1850
    %1890 = vmatpush.msra.mxu0 %v1849
    %1891 = vmatpush.msra.mxu0 %v1848
    %1892 = vmatpush.msra.mxu0 %v1847
    %1893 = vmatpush.msra.mxu0 %v1846
    %1894 = vmatpush.msra.mxu0 %v1845
    %1895 = vmatpush.msra.mxu0 %v1844
    %1896 = vmatmul.f32.gmra.mxu0 %v1825
    %v1897 = vpop.f32.mrf.mxu0
    %v1898 = vadd.f32 %v1878, %v1897
    %1899 = vdwg.mxu0
    %v1900 = vadd.f32 %v1781, %v1898
    %v1901 = vld [vmem:[#allocation11] sm:$0x1]
    %v1902 = vld [vmem:[#allocation11 + $0x1] sm:$0x1]
    %v1903 = vld [vmem:[#allocation11 + $0x2] sm:$0x1]
    %v1904 = vperm.slane %v1901, 0
    %v1905 = vadd.f32 %v1900, %v1904
    %v1906 = vmax.f32 %v1905, 0.0
    %v1907 = vperm.slane %v1902, 0
    %v1908 = vmul.f32 %v1906, %v1907
    %v1909 = vperm.slane %v1903, 0
    %v1910 = vadd.f32 %v1908, %v1909
    %v1911 = vld [vmem:[%s10] sm:$0xff]
    %v1912 = vld [vmem:[%s10 + $0x8] sm:$0xff]
    %v1914 = vrot.slane %v1910, 2
    %v1916 = vrot.slane %v1911, 4
    %vm1917 = vcmask 31744
    %v1918 = vsel %vm1917, %v1914, 0
    %vm1920 = vcmask 1043456
    %v1921 = vsel %vm1920, %v1916, 0
    %1923 = vmatpush.msra.mxu0 0.0
    %1924 = vmatpush.msra.mxu0 0.0
    %1925 = vmatpush.msra.mxu0 0.0
    %1926 = vmatpush.msra.mxu0 0.0
    %1927 = vmatpush.msra.mxu0 0.0
    %1928 = vmatpush.msra.mxu0 0.0
    %1929 = vmatpush.msra.mxu0 0.0
    %1930 = vmatpush.msra.mxu0 0.0
    %1931 = vmatpush.msra.mxu0 0.0
    %1932 = vmatpush.msra.mxu0 0.0
    %1933 = vmatpush.msra.mxu0 0.0
    %1934 = vmatpush.msra.mxu0 0.0
    %1935 = vmatpush.msra.mxu0 0.0
    %1936 = vmatpush.msra.mxu0 0.0
    %1937 = vmatpush.msra.mxu0 0.0
    %1938 = vmatpush.msra.mxu0 %v1921
    %1939 = vmatmul.f32.gmra.mxu0 %v1918
    %v1940 = vpop.f32.mrf.mxu0
    %v1941 = vadd.f32 0.0, %v1940
    %1942 = vdwg.mxu0
    %v1943 = vsel %vm1917, %v1910, 0
    %v1945 = vsel %vm1920, %v1911, 0
    %1947 = vmatpush.msra.mxu0 0.0
    %1948 = vmatpush.msra.mxu0 0.0
    %1949 = vmatpush.msra.mxu0 0.0
    %1950 = vmatpush.msra.mxu0 0.0
    %1951 = vmatpush.msra.mxu0 0.0
    %1952 = vmatpush.msra.mxu0 0.0
    %1953 = vmatpush.msra.mxu0 0.0
    %1954 = vmatpush.msra.mxu0 0.0
    %1955 = vmatpush.msra.mxu0 0.0
    %1956 = vmatpush.msra.mxu0 0.0
    %1957 = vmatpush.msra.mxu0 0.0
    %1958 = vmatpush.msra.mxu0 0.0
    %1959 = vmatpush.msra.mxu0 0.0
    %1960 = vmatpush.msra.mxu0 0.0
    %1961 = vmatpush.msra.mxu0 0.0
    %1962 = vmatpush.msra.mxu0 %v1945
    %1963 = vmatmul.f32.gmra.mxu0 %v1943
    %v1964 = vpop.f32.mrf.mxu0
    %v1965 = vadd.f32 %v1941, %v1964
    %1966 = vdwg.mxu0
    %v1967 = vrot.slane %v1910, 4
    %v1968 = vsel %vm1917, %v1967, 0
    %v1971 = vsel %vm1920, %v1912, 0
    %1973 = vmatpush.msra.mxu0 0.0
    %1974 = vmatpush.msra.mxu0 0.0
    %1975 = vmatpush.msra.mxu0 0.0
    %1976 = vmatpush.msra.mxu0 0.0
    %1977 = vmatpush.msra.mxu0 0.0
    %1978 = vmatpush.msra.mxu0 0.0
    %1979 = vmatpush.msra.mxu0 0.0
    %1980 = vmatpush.msra.mxu0 0.0
    %1981 = vmatpush.msra.mxu0 0.0
    %1982 = vmatpush.msra.mxu0 0.0
    %1983 = vmatpush.msra.mxu0 0.0
    %1984 = vmatpush.msra.mxu0 0.0
    %1985 = vmatpush.msra.mxu0 0.0
    %1986 = vmatpush.msra.mxu0 0.0
    %1987 = vmatpush.msra.mxu0 0.0
    %1988 = vmatpush.msra.mxu0 %v1971
    %1989 = vmatmul.f32.gmra.mxu0 %v1968
    %v1990 = vpop.f32.mrf.mxu0
    %v1991 = vadd.f32 0.0, %v1990
    %1992 = vdwg.mxu0
    %v1993 = vadd.f32 %v1965, %v1991
    %v1994 = vrot.slane %v1910, 6
    %v1995 = vrot.slane %v1912, 4
    %v1996 = vsel %vm1917, %v1994, 0
    %v1998 = vsel %vm1920, %v1995, 0
    %2000 = vmatpush.msra.mxu0 0.0
    %2001 = vmatpush.msra.mxu0 0.0
    %2002 = vmatpush.msra.mxu0 0.0
    %2003 = vmatpush.msra.mxu0 0.0
    %2004 = vmatpush.msra.mxu0 0.0
    %2005 = vmatpush.msra.mxu0 0.0
    %2006 = vmatpush.msra.mxu0 0.0
    %2007 = vmatpush.msra.mxu0 0.0
    %2008 = vmatpush.msra.mxu0 0.0
    %2009 = vmatpush.msra.mxu0 0.0
    %2010 = vmatpush.msra.mxu0 0.0
    %2011 = vmatpush.msra.mxu0 0.0
    %2012 = vmatpush.msra.mxu0 0.0
    %2013 = vmatpush.msra.mxu0 0.0
    %2014 = vmatpush.msra.mxu0 0.0
    %2015 = vmatpush.msra.mxu0 %v1998
    %2016 = vmatmul.f32.gmra.mxu0 %v1996
    %v2017 = vpop.f32.mrf.mxu0
    %v2018 = vadd.f32 0.0, %v2017
    %2019 = vdwg.mxu0
    %v2020 = vadd.f32 %v1993, %v2018
    %2021 = vst [vmem:[#allocation2] sm:$0x3] %v2020
    %2022 = vrot.lane.b32.xlu0 %v1914, 124
    %v2023 = vpop.permute.xlu0 %2022
    %v2024 = vsel %vm1917, %v2023, 0
    %2026 = vmatpush.msra.mxu0 0.0
    %2027 = vmatpush.msra.mxu0 0.0
    %2028 = vmatpush.msra.mxu0 0.0
    %2029 = vmatpush.msra.mxu0 0.0
    %2030 = vmatpush.msra.mxu0 0.0
    %2031 = vmatpush.msra.mxu0 0.0
    %2032 = vmatpush.msra.mxu0 0.0
    %2033 = vmatpush.msra.mxu0 0.0
    %2034 = vmatpush.msra.mxu0 0.0
    %2035 = vmatpush.msra.mxu0 0.0
    %2036 = vmatpush.msra.mxu0 0.0
    %2037 = vmatpush.msra.mxu0 0.0
    %2038 = vmatpush.msra.mxu0 0.0
    %2039 = vmatpush.msra.mxu0 0.0
    %2040 = vmatpush.msra.mxu0 0.0
    %2041 = vmatpush.msra.mxu0 %v1921
    %2042 = vmatmul.f32.gmra.mxu0 %v2024
    %v2043 = vpop.f32.mrf.mxu0
    %v2044 = vadd.f32 0.0, %v2043
    %2045 = vdwg.mxu0
    %2046 = vrot.lane.b32.xlu0 %v1910, 124
    %v2047 = vpop.permute.xlu0 %2046
    %v2048 = vsel %vm1917, %v2047, 0
    %2050 = vmatpush.msra.mxu0 0.0
    %2051 = vmatpush.msra.mxu0 0.0
    %2052 = vmatpush.msra.mxu0 0.0
    %2053 = vmatpush.msra.mxu0 0.0
    %2054 = vmatpush.msra.mxu0 0.0
    %2055 = vmatpush.msra.mxu0 0.0
    %2056 = vmatpush.msra.mxu0 0.0
    %2057 = vmatpush.msra.mxu0 0.0
    %2058 = vmatpush.msra.mxu0 0.0
    %2059 = vmatpush.msra.mxu0 0.0
    %2060 = vmatpush.msra.mxu0 0.0
    %2061 = vmatpush.msra.mxu0 0.0
    %2062 = vmatpush.msra.mxu0 0.0
    %2063 = vmatpush.msra.mxu0 0.0
    %2064 = vmatpush.msra.mxu0 0.0
    %2065 = vmatpush.msra.mxu0 %v1945
    %2066 = vmatmul.f32.gmra.mxu0 %v2048
    %v2067 = vpop.f32.mrf.mxu0
    %v2068 = vadd.f32 %v2044, %v2067
    %2069 = vdwg.mxu0
    %2070 = vrot.lane.b32.xlu0 %v1967, 124
    %v2071 = vpop.permute.xlu0 %2070
    %v2072 = vsel %vm1917, %v2071, 0
    %2074 = vmatpush.msra.mxu0 0.0
    %2075 = vmatpush.msra.mxu0 0.0
    %2076 = vmatpush.msra.mxu0 0.0
    %2077 = vmatpush.msra.mxu0 0.0
    %2078 = vmatpush.msra.mxu0 0.0
    %2079 = vmatpush.msra.mxu0 0.0
    %2080 = vmatpush.msra.mxu0 0.0
    %2081 = vmatpush.msra.mxu0 0.0
    %2082 = vmatpush.msra.mxu0 0.0
    %2083 = vmatpush.msra.mxu0 0.0
    %2084 = vmatpush.msra.mxu0 0.0
    %2085 = vmatpush.msra.mxu0 0.0
    %2086 = vmatpush.msra.mxu0 0.0
    %2087 = vmatpush.msra.mxu0 0.0
    %2088 = vmatpush.msra.mxu0 0.0
    %2089 = vmatpush.msra.mxu0 %v1971
    %2090 = vmatmul.f32.gmra.mxu0 %v2072
    %v2091 = vpop.f32.mrf.mxu0
    %v2092 = vadd.f32 0.0, %v2091
    %2093 = vdwg.mxu0
    %v2094 = vadd.f32 %v2068, %v2092
    %2095 = vrot.lane.b32.xlu0 %v1994, 124
    %v2096 = vpop.permute.xlu0 %2095
    %v2097 = vsel %vm1917, %v2096, 0
    %2099 = vmatpush.msra.mxu0 0.0
    %2100 = vmatpush.msra.mxu0 0.0
    %2101 = vmatpush.msra.mxu0 0.0
    %2102 = vmatpush.msra.mxu0 0.0
    %2103 = vmatpush.msra.mxu0 0.0
    %2104 = vmatpush.msra.mxu0 0.0
    %2105 = vmatpush.msra.mxu0 0.0
    %2106 = vmatpush.msra.mxu0 0.0
    %2107 = vmatpush.msra.mxu0 0.0
    %2108 = vmatpush.msra.mxu0 0.0
    %2109 = vmatpush.msra.mxu0 0.0
    %2110 = vmatpush.msra.mxu0 0.0
    %2111 = vmatpush.msra.mxu0 0.0
    %2112 = vmatpush.msra.mxu0 0.0
    %2113 = vmatpush.msra.mxu0 0.0
    %2114 = vmatpush.msra.mxu0 %v1998
    %2115 = vmatmul.f32.gmra.mxu0 %v2097
    %v2116 = vpop.f32.mrf.mxu0
    %v2117 = vadd.f32 0.0, %v2116
    %2118 = vdwg.mxu0
    %v2119 = vadd.f32 %v2094, %v2117
    %2120 = vst [vmem:[#allocation2 + $0x2] sm:$0x3] %v2119
    %2121 = vrot.lane.b32.xlu0 %v1914, 120
    %v2122 = vpop.permute.xlu0 %2121
    %v2123 = vsel %vm1917, %v2122, 0
    %2125 = vmatpush.msra.mxu0 0.0
    %2126 = vmatpush.msra.mxu0 0.0
    %2127 = vmatpush.msra.mxu0 0.0
    %2128 = vmatpush.msra.mxu0 0.0
    %2129 = vmatpush.msra.mxu0 0.0
    %2130 = vmatpush.msra.mxu0 0.0
    %2131 = vmatpush.msra.mxu0 0.0
    %2132 = vmatpush.msra.mxu0 0.0
    %2133 = vmatpush.msra.mxu0 0.0
    %2134 = vmatpush.msra.mxu0 0.0
    %2135 = vmatpush.msra.mxu0 0.0
    %2136 = vmatpush.msra.mxu0 0.0
    %2137 = vmatpush.msra.mxu0 0.0
    %2138 = vmatpush.msra.mxu0 0.0
    %2139 = vmatpush.msra.mxu0 0.0
    %2140 = vmatpush.msra.mxu0 %v1921
    %2141 = vmatmul.f32.gmra.mxu0 %v2123
    %v2142 = vpop.f32.mrf.mxu0
    %v2143 = vadd.f32 0.0, %v2142
    %2144 = vdwg.mxu0
    %2145 = vrot.lane.b32.xlu0 %v1910, 120
    %v2146 = vpop.permute.xlu0 %2145
    %v2147 = vsel %vm1917, %v2146, 0
    %2149 = vmatpush.msra.mxu0 0.0
    %2150 = vmatpush.msra.mxu0 0.0
    %2151 = vmatpush.msra.mxu0 0.0
    %2152 = vmatpush.msra.mxu0 0.0
    %2153 = vmatpush.msra.mxu0 0.0
    %2154 = vmatpush.msra.mxu0 0.0
    %2155 = vmatpush.msra.mxu0 0.0
    %2156 = vmatpush.msra.mxu0 0.0
    %2157 = vmatpush.msra.mxu0 0.0
    %2158 = vmatpush.msra.mxu0 0.0
    %2159 = vmatpush.msra.mxu0 0.0
    %2160 = vmatpush.msra.mxu0 0.0
    %2161 = vmatpush.msra.mxu0 0.0
    %2162 = vmatpush.msra.mxu0 0.0
    %2163 = vmatpush.msra.mxu0 0.0
    %2164 = vmatpush.msra.mxu0 %v1945
    %2165 = vmatmul.f32.gmra.mxu0 %v2147
    %v2166 = vpop.f32.mrf.mxu0
    %v2167 = vadd.f32 %v2143, %v2166
    %2168 = vdwg.mxu0
    %2169 = vrot.lane.b32.xlu0 %v1967, 120
    %v2170 = vpop.permute.xlu0 %2169
    %v2171 = vsel %vm1917, %v2170, 0
    %2173 = vmatpush.msra.mxu0 0.0
    %2174 = vmatpush.msra.mxu0 0.0
    %2175 = vmatpush.msra.mxu0 0.0
    %2176 = vmatpush.msra.mxu0 0.0
    %2177 = vmatpush.msra.mxu0 0.0
    %2178 = vmatpush.msra.mxu0 0.0
    %2179 = vmatpush.msra.mxu0 0.0
    %2180 = vmatpush.msra.mxu0 0.0
    %2181 = vmatpush.msra.mxu0 0.0
    %2182 = vmatpush.msra.mxu0 0.0
    %2183 = vmatpush.msra.mxu0 0.0
    %2184 = vmatpush.msra.mxu0 0.0
    %2185 = vmatpush.msra.mxu0 0.0
    %2186 = vmatpush.msra.mxu0 0.0
    %2187 = vmatpush.msra.mxu0 0.0
    %2188 = vmatpush.msra.mxu0 %v1971
    %2189 = vmatmul.f32.gmra.mxu0 %v2171
    %v2190 = vpop.f32.mrf.mxu0
    %v2191 = vadd.f32 0.0, %v2190
    %2192 = vdwg.mxu0
    %v2193 = vadd.f32 %v2167, %v2191
    %2194 = vrot.lane.b32.xlu0 %v1994, 120
    %v2195 = vpop.permute.xlu0 %2194
    %v2196 = vsel %vm1917, %v2195, 0
    %2198 = vmatpush.msra.mxu0 0.0
    %2199 = vmatpush.msra.mxu0 0.0
    %2200 = vmatpush.msra.mxu0 0.0
    %2201 = vmatpush.msra.mxu0 0.0
    %2202 = vmatpush.msra.mxu0 0.0
    %2203 = vmatpush.msra.mxu0 0.0
    %2204 = vmatpush.msra.mxu0 0.0
    %2205 = vmatpush.msra.mxu0 0.0
    %2206 = vmatpush.msra.mxu0 0.0
    %2207 = vmatpush.msra.mxu0 0.0
    %2208 = vmatpush.msra.mxu0 0.0
    %2209 = vmatpush.msra.mxu0 0.0
    %2210 = vmatpush.msra.mxu0 0.0
    %2211 = vmatpush.msra.mxu0 0.0
    %2212 = vmatpush.msra.mxu0 0.0
    %2213 = vmatpush.msra.mxu0 %v1998
    %2214 = vmatmul.f32.gmra.mxu0 %v2196
    %v2215 = vpop.f32.mrf.mxu0
    %v2216 = vadd.f32 0.0, %v2215
    %2217 = vdwg.mxu0
    %v2218 = vadd.f32 %v2193, %v2216
    %2219 = vst [vmem:[#allocation2 + $0x4] sm:$0x3] %v2218
    %2220 = vrot.lane.b32.xlu0 %v1914, 116
    %v2221 = vpop.permute.xlu0 %2220
    %v2222 = vsel %vm1917, %v2221, 0
    %2224 = vmatpush.msra.mxu0 0.0
    %2225 = vmatpush.msra.mxu0 0.0
    %2226 = vmatpush.msra.mxu0 0.0
    %2227 = vmatpush.msra.mxu0 0.0
    %2228 = vmatpush.msra.mxu0 0.0
    %2229 = vmatpush.msra.mxu0 0.0
    %2230 = vmatpush.msra.mxu0 0.0
    %2231 = vmatpush.msra.mxu0 0.0
    %2232 = vmatpush.msra.mxu0 0.0
    %2233 = vmatpush.msra.mxu0 0.0
    %2234 = vmatpush.msra.mxu0 0.0
    %2235 = vmatpush.msra.mxu0 0.0
    %2236 = vmatpush.msra.mxu0 0.0
    %2237 = vmatpush.msra.mxu0 0.0
    %2238 = vmatpush.msra.mxu0 0.0
    %2239 = vmatpush.msra.mxu0 %v1921
    %2240 = vmatmul.f32.gmra.mxu0 %v2222
    %v2241 = vpop.f32.mrf.mxu0
    %v2242 = vadd.f32 0.0, %v2241
    %2243 = vdwg.mxu0
    %2244 = vrot.lane.b32.xlu0 %v1910, 116
    %v2245 = vpop.permute.xlu0 %2244
    %v2246 = vsel %vm1917, %v2245, 0
    %2248 = vmatpush.msra.mxu0 0.0
    %2249 = vmatpush.msra.mxu0 0.0
    %2250 = vmatpush.msra.mxu0 0.0
    %2251 = vmatpush.msra.mxu0 0.0
    %2252 = vmatpush.msra.mxu0 0.0
    %2253 = vmatpush.msra.mxu0 0.0
    %2254 = vmatpush.msra.mxu0 0.0
    %2255 = vmatpush.msra.mxu0 0.0
    %2256 = vmatpush.msra.mxu0 0.0
    %2257 = vmatpush.msra.mxu0 0.0
    %2258 = vmatpush.msra.mxu0 0.0
    %2259 = vmatpush.msra.mxu0 0.0
    %2260 = vmatpush.msra.mxu0 0.0
    %2261 = vmatpush.msra.mxu0 0.0
    %2262 = vmatpush.msra.mxu0 0.0
    %2263 = vmatpush.msra.mxu0 %v1945
    %2264 = vmatmul.f32.gmra.mxu0 %v2246
    %v2265 = vpop.f32.mrf.mxu0
    %v2266 = vadd.f32 %v2242, %v2265
    %2267 = vdwg.mxu0
    %2268 = vrot.lane.b32.xlu0 %v1967, 116
    %v2269 = vpop.permute.xlu0 %2268
    %v2270 = vsel %vm1917, %v2269, 0
    %2272 = vmatpush.msra.mxu0 0.0
    %2273 = vmatpush.msra.mxu0 0.0
    %2274 = vmatpush.msra.mxu0 0.0
    %2275 = vmatpush.msra.mxu0 0.0
    %2276 = vmatpush.msra.mxu0 0.0
    %2277 = vmatpush.msra.mxu0 0.0
    %2278 = vmatpush.msra.mxu0 0.0
    %2279 = vmatpush.msra.mxu0 0.0
    %2280 = vmatpush.msra.mxu0 0.0
    %2281 = vmatpush.msra.mxu0 0.0
    %2282 = vmatpush.msra.mxu0 0.0
    %2283 = vmatpush.msra.mxu0 0.0
    %2284 = vmatpush.msra.mxu0 0.0
    %2285 = vmatpush.msra.mxu0 0.0
    %2286 = vmatpush.msra.mxu0 0.0
    %2287 = vmatpush.msra.mxu0 %v1971
    %2288 = vmatmul.f32.gmra.mxu0 %v2270
    %v2289 = vpop.f32.mrf.mxu0
    %v2290 = vadd.f32 0.0, %v2289
    %2291 = vdwg.mxu0
    %v2292 = vadd.f32 %v2266, %v2290
    %2293 = vrot.lane.b32.xlu0 %v1994, 116
    %v2294 = vpop.permute.xlu0 %2293
    %v2295 = vsel %vm1917, %v2294, 0
    %2297 = vmatpush.msra.mxu0 0.0
    %2298 = vmatpush.msra.mxu0 0.0
    %2299 = vmatpush.msra.mxu0 0.0
    %2300 = vmatpush.msra.mxu0 0.0
    %2301 = vmatpush.msra.mxu0 0.0
    %2302 = vmatpush.msra.mxu0 0.0
    %2303 = vmatpush.msra.mxu0 0.0
    %2304 = vmatpush.msra.mxu0 0.0
    %2305 = vmatpush.msra.mxu0 0.0
    %2306 = vmatpush.msra.mxu0 0.0
    %2307 = vmatpush.msra.mxu0 0.0
    %2308 = vmatpush.msra.mxu0 0.0
    %2309 = vmatpush.msra.mxu0 0.0
    %2310 = vmatpush.msra.mxu0 0.0
    %2311 = vmatpush.msra.mxu0 0.0
    %2312 = vmatpush.msra.mxu0 %v1998
    %2313 = vmatmul.f32.gmra.mxu0 %v2295
    %v2314 = vpop.f32.mrf.mxu0
    %v2315 = vadd.f32 0.0, %v2314
    %2316 = vdwg.mxu0
    %v2317 = vadd.f32 %v2292, %v2315
    %2318 = vst [vmem:[#allocation2 + $0x6] sm:$0x3] %v2317
    %2319 = vrot.lane.b32.xlu0 %v1914, 112
    %v2320 = vpop.permute.xlu0 %2319
    %v2321 = vsel %vm1917, %v2320, 0
    %2323 = vmatpush.msra.mxu0 0.0
    %2324 = vmatpush.msra.mxu0 0.0
    %2325 = vmatpush.msra.mxu0 0.0
    %2326 = vmatpush.msra.mxu0 0.0
    %2327 = vmatpush.msra.mxu0 0.0
    %2328 = vmatpush.msra.mxu0 0.0
    %2329 = vmatpush.msra.mxu0 0.0
    %2330 = vmatpush.msra.mxu0 0.0
    %2331 = vmatpush.msra.mxu0 0.0
    %2332 = vmatpush.msra.mxu0 0.0
    %2333 = vmatpush.msra.mxu0 0.0
    %2334 = vmatpush.msra.mxu0 0.0
    %2335 = vmatpush.msra.mxu0 0.0
    %2336 = vmatpush.msra.mxu0 0.0
    %2337 = vmatpush.msra.mxu0 0.0
    %2338 = vmatpush.msra.mxu0 %v1921
    %2339 = vmatmul.f32.gmra.mxu0 %v2321
    %v2340 = vpop.f32.mrf.mxu0
    %v2341 = vadd.f32 0.0, %v2340
    %2342 = vdwg.mxu0
    %2343 = vrot.lane.b32.xlu0 %v1910, 112
    %v2344 = vpop.permute.xlu0 %2343
    %v2345 = vsel %vm1917, %v2344, 0
    %2347 = vmatpush.msra.mxu0 0.0
    %2348 = vmatpush.msra.mxu0 0.0
    %2349 = vmatpush.msra.mxu0 0.0
    %2350 = vmatpush.msra.mxu0 0.0
    %2351 = vmatpush.msra.mxu0 0.0
    %2352 = vmatpush.msra.mxu0 0.0
    %2353 = vmatpush.msra.mxu0 0.0
    %2354 = vmatpush.msra.mxu0 0.0
    %2355 = vmatpush.msra.mxu0 0.0
    %2356 = vmatpush.msra.mxu0 0.0
    %2357 = vmatpush.msra.mxu0 0.0
    %2358 = vmatpush.msra.mxu0 0.0
    %2359 = vmatpush.msra.mxu0 0.0
    %2360 = vmatpush.msra.mxu0 0.0
    %2361 = vmatpush.msra.mxu0 0.0
    %2362 = vmatpush.msra.mxu0 %v1945
    %2363 = vmatmul.f32.gmra.mxu0 %v2345
    %v2364 = vpop.f32.mrf.mxu0
    %v2365 = vadd.f32 %v2341, %v2364
    %2366 = vdwg.mxu0
    %2367 = vrot.lane.b32.xlu0 %v1967, 112
    %v2368 = vpop.permute.xlu0 %2367
    %v2369 = vsel %vm1917, %v2368, 0
    %2371 = vmatpush.msra.mxu0 0.0
    %2372 = vmatpush.msra.mxu0 0.0
    %2373 = vmatpush.msra.mxu0 0.0
    %2374 = vmatpush.msra.mxu0 0.0
    %2375 = vmatpush.msra.mxu0 0.0
    %2376 = vmatpush.msra.mxu0 0.0
    %2377 = vmatpush.msra.mxu0 0.0
    %2378 = vmatpush.msra.mxu0 0.0
    %2379 = vmatpush.msra.mxu0 0.0
    %2380 = vmatpush.msra.mxu0 0.0
    %2381 = vmatpush.msra.mxu0 0.0
    %2382 = vmatpush.msra.mxu0 0.0
    %2383 = vmatpush.msra.mxu0 0.0
    %2384 = vmatpush.msra.mxu0 0.0
    %2385 = vmatpush.msra.mxu0 0.0
    %2386 = vmatpush.msra.mxu0 %v1971
    %2387 = vmatmul.f32.gmra.mxu0 %v2369
    %v2388 = vpop.f32.mrf.mxu0
    %v2389 = vadd.f32 0.0, %v2388
    %2390 = vdwg.mxu0
    %v2391 = vadd.f32 %v2365, %v2389
    %2392 = vrot.lane.b32.xlu0 %v1994, 112
    %v2393 = vpop.permute.xlu0 %2392
    %v2394 = vsel %vm1917, %v2393, 0
    %2396 = vmatpush.msra.mxu0 0.0
    %2397 = vmatpush.msra.mxu0 0.0
    %2398 = vmatpush.msra.mxu0 0.0
    %2399 = vmatpush.msra.mxu0 0.0
    %2400 = vmatpush.msra.mxu0 0.0
    %2401 = vmatpush.msra.mxu0 0.0
    %2402 = vmatpush.msra.mxu0 0.0
    %2403 = vmatpush.msra.mxu0 0.0
    %2404 = vmatpush.msra.mxu0 0.0
    %2405 = vmatpush.msra.mxu0 0.0
    %2406 = vmatpush.msra.mxu0 0.0
    %2407 = vmatpush.msra.mxu0 0.0
    %2408 = vmatpush.msra.mxu0 0.0
    %2409 = vmatpush.msra.mxu0 0.0
    %2410 = vmatpush.msra.mxu0 0.0
    %2411 = vmatpush.msra.mxu0 %v1998
    %2412 = vmatmul.f32.gmra.mxu0 %v2394
    %v2413 = vpop.f32.mrf.mxu0
    %v2414 = vadd.f32 0.0, %v2413
    %2415 = vdwg.mxu0
    %v2416 = vadd.f32 %v2391, %v2414
    %2417 = vst [vmem:[#allocation2 + $0x8] sm:$0x3] %v2416
    %2418 = vrot.lane.b32.xlu0 %v1914, 108
    %v2419 = vpop.permute.xlu0 %2418
    %v2420 = vsel %vm1917, %v2419, 0
    %2422 = vmatpush.msra.mxu0 0.0
    %2423 = vmatpush.msra.mxu0 0.0
    %2424 = vmatpush.msra.mxu0 0.0
    %2425 = vmatpush.msra.mxu0 0.0
    %2426 = vmatpush.msra.mxu0 0.0
    %2427 = vmatpush.msra.mxu0 0.0
    %2428 = vmatpush.msra.mxu0 0.0
    %2429 = vmatpush.msra.mxu0 0.0
    %2430 = vmatpush.msra.mxu0 0.0
    %2431 = vmatpush.msra.mxu0 0.0
    %2432 = vmatpush.msra.mxu0 0.0
    %2433 = vmatpush.msra.mxu0 0.0
    %2434 = vmatpush.msra.mxu0 0.0
    %2435 = vmatpush.msra.mxu0 0.0
    %2436 = vmatpush.msra.mxu0 0.0
    %2437 = vmatpush.msra.mxu0 %v1921
    %2438 = vmatmul.f32.gmra.mxu0 %v2420
    %v2439 = vpop.f32.mrf.mxu0
    %v2440 = vadd.f32 0.0, %v2439
    %2441 = vdwg.mxu0
    %2442 = vrot.lane.b32.xlu0 %v1910, 108
    %v2443 = vpop.permute.xlu0 %2442
    %v2444 = vsel %vm1917, %v2443, 0
    %2446 = vmatpush.msra.mxu0 0.0
    %2447 = vmatpush.msra.mxu0 0.0
    %2448 = vmatpush.msra.mxu0 0.0
    %2449 = vmatpush.msra.mxu0 0.0
    %2450 = vmatpush.msra.mxu0 0.0
    %2451 = vmatpush.msra.mxu0 0.0
    %2452 = vmatpush.msra.mxu0 0.0
    %2453 = vmatpush.msra.mxu0 0.0
    %2454 = vmatpush.msra.mxu0 0.0
    %2455 = vmatpush.msra.mxu0 0.0
    %2456 = vmatpush.msra.mxu0 0.0
    %2457 = vmatpush.msra.mxu0 0.0
    %2458 = vmatpush.msra.mxu0 0.0
    %2459 = vmatpush.msra.mxu0 0.0
    %2460 = vmatpush.msra.mxu0 0.0
    %2461 = vmatpush.msra.mxu0 %v1945
    %2462 = vmatmul.f32.gmra.mxu0 %v2444
    %v2463 = vpop.f32.mrf.mxu0
    %v2464 = vadd.f32 %v2440, %v2463
    %2465 = vdwg.mxu0
    %2466 = vrot.lane.b32.xlu0 %v1967, 108
    %v2467 = vpop.permute.xlu0 %2466
    %v2468 = vsel %vm1917, %v2467, 0
    %2470 = vmatpush.msra.mxu0 0.0
    %2471 = vmatpush.msra.mxu0 0.0
    %2472 = vmatpush.msra.mxu0 0.0
    %2473 = vmatpush.msra.mxu0 0.0
    %2474 = vmatpush.msra.mxu0 0.0
    %2475 = vmatpush.msra.mxu0 0.0
    %2476 = vmatpush.msra.mxu0 0.0
    %2477 = vmatpush.msra.mxu0 0.0
    %2478 = vmatpush.msra.mxu0 0.0
    %2479 = vmatpush.msra.mxu0 0.0
    %2480 = vmatpush.msra.mxu0 0.0
    %2481 = vmatpush.msra.mxu0 0.0
    %2482 = vmatpush.msra.mxu0 0.0
    %2483 = vmatpush.msra.mxu0 0.0
    %2484 = vmatpush.msra.mxu0 0.0
    %2485 = vmatpush.msra.mxu0 %v1971
    %2486 = vmatmul.f32.gmra.mxu0 %v2468
    %v2487 = vpop.f32.mrf.mxu0
    %v2488 = vadd.f32 0.0, %v2487
    %2489 = vdwg.mxu0
    %v2490 = vadd.f32 %v2464, %v2488
    %2491 = vrot.lane.b32.xlu0 %v1994, 108
    %v2492 = vpop.permute.xlu0 %2491
    %v2493 = vsel %vm1917, %v2492, 0
    %2495 = vmatpush.msra.mxu0 0.0
    %2496 = vmatpush.msra.mxu0 0.0
    %2497 = vmatpush.msra.mxu0 0.0
    %2498 = vmatpush.msra.mxu0 0.0
    %2499 = vmatpush.msra.mxu0 0.0
    %2500 = vmatpush.msra.mxu0 0.0
    %2501 = vmatpush.msra.mxu0 0.0
    %2502 = vmatpush.msra.mxu0 0.0
    %2503 = vmatpush.msra.mxu0 0.0
    %2504 = vmatpush.msra.mxu0 0.0
    %2505 = vmatpush.msra.mxu0 0.0
    %2506 = vmatpush.msra.mxu0 0.0
    %2507 = vmatpush.msra.mxu0 0.0
    %2508 = vmatpush.msra.mxu0 0.0
    %2509 = vmatpush.msra.mxu0 0.0
    %2510 = vmatpush.msra.mxu0 %v1998
    %2511 = vmatmul.f32.gmra.mxu0 %v2493
    %v2512 = vpop.f32.mrf.mxu0
    %v2513 = vadd.f32 0.0, %v2512
    %2514 = vdwg.mxu0
    %v2515 = vadd.f32 %v2490, %v2513
    %2516 = vst [vmem:[#allocation2 + $0xa] sm:$0x3] %v2515
    %2517 = vrot.lane.b32.xlu0 %v1914, 104
    %v2518 = vpop.permute.xlu0 %2517
    %v2519 = vsel %vm1917, %v2518, 0
    %2521 = vmatpush.msra.mxu0 0.0
    %2522 = vmatpush.msra.mxu0 0.0
    %2523 = vmatpush.msra.mxu0 0.0
    %2524 = vmatpush.msra.mxu0 0.0
    %2525 = vmatpush.msra.mxu0 0.0
    %2526 = vmatpush.msra.mxu0 0.0
    %2527 = vmatpush.msra.mxu0 0.0
    %2528 = vmatpush.msra.mxu0 0.0
    %2529 = vmatpush.msra.mxu0 0.0
    %2530 = vmatpush.msra.mxu0 0.0
    %2531 = vmatpush.msra.mxu0 0.0
    %2532 = vmatpush.msra.mxu0 0.0
    %2533 = vmatpush.msra.mxu0 0.0
    %2534 = vmatpush.msra.mxu0 0.0
    %2535 = vmatpush.msra.mxu0 0.0
    %2536 = vmatpush.msra.mxu0 %v1921
    %2537 = vmatmul.f32.gmra.mxu0 %v2519
    %v2538 = vpop.f32.mrf.mxu0
    %v2539 = vadd.f32 0.0, %v2538
    %2540 = vdwg.mxu0
    %2541 = vrot.lane.b32.xlu0 %v1910, 104
    %v2542 = vpop.permute.xlu0 %2541
    %v2543 = vsel %vm1917, %v2542, 0
    %2545 = vmatpush.msra.mxu0 0.0
    %2546 = vmatpush.msra.mxu0 0.0
    %2547 = vmatpush.msra.mxu0 0.0
    %2548 = vmatpush.msra.mxu0 0.0
    %2549 = vmatpush.msra.mxu0 0.0
    %2550 = vmatpush.msra.mxu0 0.0
    %2551 = vmatpush.msra.mxu0 0.0
    %2552 = vmatpush.msra.mxu0 0.0
    %2553 = vmatpush.msra.mxu0 0.0
    %2554 = vmatpush.msra.mxu0 0.0
    %2555 = vmatpush.msra.mxu0 0.0
    %2556 = vmatpush.msra.mxu0 0.0
    %2557 = vmatpush.msra.mxu0 0.0
    %2558 = vmatpush.msra.mxu0 0.0
    %2559 = vmatpush.msra.mxu0 0.0
    %2560 = vmatpush.msra.mxu0 %v1945
    %2561 = vmatmul.f32.gmra.mxu0 %v2543
    %v2562 = vpop.f32.mrf.mxu0
    %v2563 = vadd.f32 %v2539, %v2562
    %2564 = vdwg.mxu0
    %2565 = vrot.lane.b32.xlu0 %v1967, 104
    %v2566 = vpop.permute.xlu0 %2565
    %v2567 = vsel %vm1917, %v2566, 0
    %2569 = vmatpush.msra.mxu0 0.0
    %2570 = vmatpush.msra.mxu0 0.0
    %2571 = vmatpush.msra.mxu0 0.0
    %2572 = vmatpush.msra.mxu0 0.0
    %2573 = vmatpush.msra.mxu0 0.0
    %2574 = vmatpush.msra.mxu0 0.0
    %2575 = vmatpush.msra.mxu0 0.0
    %2576 = vmatpush.msra.mxu0 0.0
    %2577 = vmatpush.msra.mxu0 0.0
    %2578 = vmatpush.msra.mxu0 0.0
    %2579 = vmatpush.msra.mxu0 0.0
    %2580 = vmatpush.msra.mxu0 0.0
    %2581 = vmatpush.msra.mxu0 0.0
    %2582 = vmatpush.msra.mxu0 0.0
    %2583 = vmatpush.msra.mxu0 0.0
    %2584 = vmatpush.msra.mxu0 %v1971
    %2585 = vmatmul.f32.gmra.mxu0 %v2567
    %v2586 = vpop.f32.mrf.mxu0
    %v2587 = vadd.f32 0.0, %v2586
    %2588 = vdwg.mxu0
    %v2589 = vadd.f32 %v2563, %v2587
    %2590 = vrot.lane.b32.xlu0 %v1994, 104
    %v2591 = vpop.permute.xlu0 %2590
    %v2592 = vsel %vm1917, %v2591, 0
    %2594 = vmatpush.msra.mxu0 0.0
    %2595 = vmatpush.msra.mxu0 0.0
    %2596 = vmatpush.msra.mxu0 0.0
    %2597 = vmatpush.msra.mxu0 0.0
    %2598 = vmatpush.msra.mxu0 0.0
    %2599 = vmatpush.msra.mxu0 0.0
    %2600 = vmatpush.msra.mxu0 0.0
    %2601 = vmatpush.msra.mxu0 0.0
    %2602 = vmatpush.msra.mxu0 0.0
    %2603 = vmatpush.msra.mxu0 0.0
    %2604 = vmatpush.msra.mxu0 0.0
    %2605 = vmatpush.msra.mxu0 0.0
    %2606 = vmatpush.msra.mxu0 0.0
    %2607 = vmatpush.msra.mxu0 0.0
    %2608 = vmatpush.msra.mxu0 0.0
    %2609 = vmatpush.msra.mxu0 %v1998
    %2610 = vmatmul.f32.gmra.mxu0 %v2592
    %v2611 = vpop.f32.mrf.mxu0
    %v2612 = vadd.f32 0.0, %v2611
    %2613 = vdwg.mxu0
    %v2614 = vadd.f32 %v2589, %v2612
    %2615 = vst [vmem:[#allocation2 + $0xc] sm:$0x3] %v2614
    %2616 = vrot.lane.b32.xlu0 %v1914, 100
    %v2617 = vpop.permute.xlu0 %2616
    %v2618 = vsel %vm1917, %v2617, 0
    %2620 = vmatpush.msra.mxu0 0.0
    %2621 = vmatpush.msra.mxu0 0.0
    %2622 = vmatpush.msra.mxu0 0.0
    %2623 = vmatpush.msra.mxu0 0.0
    %2624 = vmatpush.msra.mxu0 0.0
    %2625 = vmatpush.msra.mxu0 0.0
    %2626 = vmatpush.msra.mxu0 0.0
    %2627 = vmatpush.msra.mxu0 0.0
    %2628 = vmatpush.msra.mxu0 0.0
    %2629 = vmatpush.msra.mxu0 0.0
    %2630 = vmatpush.msra.mxu0 0.0
    %2631 = vmatpush.msra.mxu0 0.0
    %2632 = vmatpush.msra.mxu0 0.0
    %2633 = vmatpush.msra.mxu0 0.0
    %2634 = vmatpush.msra.mxu0 0.0
    %2635 = vmatpush.msra.mxu0 %v1921
    %2636 = vmatmul.f32.gmra.mxu0 %v2618
    %v2637 = vpop.f32.mrf.mxu0
    %v2638 = vadd.f32 0.0, %v2637
    %2639 = vdwg.mxu0
    %2640 = vrot.lane.b32.xlu0 %v1910, 100
    %v2641 = vpop.permute.xlu0 %2640
    %v2642 = vsel %vm1917, %v2641, 0
    %2644 = vmatpush.msra.mxu0 0.0
    %2645 = vmatpush.msra.mxu0 0.0
    %2646 = vmatpush.msra.mxu0 0.0
    %2647 = vmatpush.msra.mxu0 0.0
    %2648 = vmatpush.msra.mxu0 0.0
    %2649 = vmatpush.msra.mxu0 0.0
    %2650 = vmatpush.msra.mxu0 0.0
    %2651 = vmatpush.msra.mxu0 0.0
    %2652 = vmatpush.msra.mxu0 0.0
    %2653 = vmatpush.msra.mxu0 0.0
    %2654 = vmatpush.msra.mxu0 0.0
    %2655 = vmatpush.msra.mxu0 0.0
    %2656 = vmatpush.msra.mxu0 0.0
    %2657 = vmatpush.msra.mxu0 0.0
    %2658 = vmatpush.msra.mxu0 0.0
    %2659 = vmatpush.msra.mxu0 %v1945
    %2660 = vmatmul.f32.gmra.mxu0 %v2642
    %v2661 = vpop.f32.mrf.mxu0
    %v2662 = vadd.f32 %v2638, %v2661
    %2663 = vdwg.mxu0
    %2664 = vrot.lane.b32.xlu0 %v1967, 100
    %v2665 = vpop.permute.xlu0 %2664
    %v2666 = vsel %vm1917, %v2665, 0
    %2668 = vmatpush.msra.mxu0 0.0
    %2669 = vmatpush.msra.mxu0 0.0
    %2670 = vmatpush.msra.mxu0 0.0
    %2671 = vmatpush.msra.mxu0 0.0
    %2672 = vmatpush.msra.mxu0 0.0
    %2673 = vmatpush.msra.mxu0 0.0
    %2674 = vmatpush.msra.mxu0 0.0
    %2675 = vmatpush.msra.mxu0 0.0
    %2676 = vmatpush.msra.mxu0 0.0
    %2677 = vmatpush.msra.mxu0 0.0
    %2678 = vmatpush.msra.mxu0 0.0
    %2679 = vmatpush.msra.mxu0 0.0
    %2680 = vmatpush.msra.mxu0 0.0
    %2681 = vmatpush.msra.mxu0 0.0
    %2682 = vmatpush.msra.mxu0 0.0
    %2683 = vmatpush.msra.mxu0 %v1971
    %2684 = vmatmul.f32.gmra.mxu0 %v2666
    %v2685 = vpop.f32.mrf.mxu0
    %v2686 = vadd.f32 0.0, %v2685
    %2687 = vdwg.mxu0
    %v2688 = vadd.f32 %v2662, %v2686
    %2689 = vrot.lane.b32.xlu0 %v1994, 100
    %v2690 = vpop.permute.xlu0 %2689
    %v2691 = vsel %vm1917, %v2690, 0
    %2693 = vmatpush.msra.mxu0 0.0
    %2694 = vmatpush.msra.mxu0 0.0
    %2695 = vmatpush.msra.mxu0 0.0
    %2696 = vmatpush.msra.mxu0 0.0
    %2697 = vmatpush.msra.mxu0 0.0
    %2698 = vmatpush.msra.mxu0 0.0
    %2699 = vmatpush.msra.mxu0 0.0
    %2700 = vmatpush.msra.mxu0 0.0
    %2701 = vmatpush.msra.mxu0 0.0
    %2702 = vmatpush.msra.mxu0 0.0
    %2703 = vmatpush.msra.mxu0 0.0
    %2704 = vmatpush.msra.mxu0 0.0
    %2705 = vmatpush.msra.mxu0 0.0
    %2706 = vmatpush.msra.mxu0 0.0
    %2707 = vmatpush.msra.mxu0 0.0
    %2708 = vmatpush.msra.mxu0 %v1998
    %2709 = vmatmul.f32.gmra.mxu0 %v2691
    %v2710 = vpop.f32.mrf.mxu0
    %v2711 = vadd.f32 0.0, %v2710
    %2712 = vdwg.mxu0
    %v2713 = vadd.f32 %v2688, %v2711
    %2714 = vst [vmem:[#allocation2 + $0xe] sm:$0x3] %v2713
    %2715 = vrot.lane.b32.xlu0 %v1914, 96
    %v2716 = vpop.permute.xlu0 %2715
    %v2717 = vsel %vm1917, %v2716, 0
    %2719 = vmatpush.msra.mxu0 0.0
    %2720 = vmatpush.msra.mxu0 0.0
    %2721 = vmatpush.msra.mxu0 0.0
    %2722 = vmatpush.msra.mxu0 0.0
    %2723 = vmatpush.msra.mxu0 0.0
    %2724 = vmatpush.msra.mxu0 0.0
    %2725 = vmatpush.msra.mxu0 0.0
    %2726 = vmatpush.msra.mxu0 0.0
    %2727 = vmatpush.msra.mxu0 0.0
    %2728 = vmatpush.msra.mxu0 0.0
    %2729 = vmatpush.msra.mxu0 0.0
    %2730 = vmatpush.msra.mxu0 0.0
    %2731 = vmatpush.msra.mxu0 0.0
    %2732 = vmatpush.msra.mxu0 0.0
    %2733 = vmatpush.msra.mxu0 0.0
    %2734 = vmatpush.msra.mxu0 %v1921
    %2735 = vmatmul.f32.gmra.mxu0 %v2717
    %v2736 = vpop.f32.mrf.mxu0
    %v2737 = vadd.f32 0.0, %v2736
    %2738 = vdwg.mxu0
    %2739 = vrot.lane.b32.xlu0 %v1910, 96
    %v2740 = vpop.permute.xlu0 %2739
    %v2741 = vsel %vm1917, %v2740, 0
    %2743 = vmatpush.msra.mxu0 0.0
    %2744 = vmatpush.msra.mxu0 0.0
    %2745 = vmatpush.msra.mxu0 0.0
    %2746 = vmatpush.msra.mxu0 0.0
    %2747 = vmatpush.msra.mxu0 0.0
    %2748 = vmatpush.msra.mxu0 0.0
    %2749 = vmatpush.msra.mxu0 0.0
    %2750 = vmatpush.msra.mxu0 0.0
    %2751 = vmatpush.msra.mxu0 0.0
    %2752 = vmatpush.msra.mxu0 0.0
    %2753 = vmatpush.msra.mxu0 0.0
    %2754 = vmatpush.msra.mxu0 0.0
    %2755 = vmatpush.msra.mxu0 0.0
    %2756 = vmatpush.msra.mxu0 0.0
    %2757 = vmatpush.msra.mxu0 0.0
    %2758 = vmatpush.msra.mxu0 %v1945
    %2759 = vmatmul.f32.gmra.mxu0 %v2741
    %v2760 = vpop.f32.mrf.mxu0
    %v2761 = vadd.f32 %v2737, %v2760
    %2762 = vdwg.mxu0
    %2763 = vrot.lane.b32.xlu0 %v1967, 96
    %v2764 = vpop.permute.xlu0 %2763
    %v2765 = vsel %vm1917, %v2764, 0
    %2767 = vmatpush.msra.mxu0 0.0
    %2768 = vmatpush.msra.mxu0 0.0
    %2769 = vmatpush.msra.mxu0 0.0
    %2770 = vmatpush.msra.mxu0 0.0
    %2771 = vmatpush.msra.mxu0 0.0
    %2772 = vmatpush.msra.mxu0 0.0
    %2773 = vmatpush.msra.mxu0 0.0
    %2774 = vmatpush.msra.mxu0 0.0
    %2775 = vmatpush.msra.mxu0 0.0
    %2776 = vmatpush.msra.mxu0 0.0
    %2777 = vmatpush.msra.mxu0 0.0
    %2778 = vmatpush.msra.mxu0 0.0
    %2779 = vmatpush.msra.mxu0 0.0
    %2780 = vmatpush.msra.mxu0 0.0
    %2781 = vmatpush.msra.mxu0 0.0
    %2782 = vmatpush.msra.mxu0 %v1971
    %2783 = vmatmul.f32.gmra.mxu0 %v2765
    %v2784 = vpop.f32.mrf.mxu0
    %v2785 = vadd.f32 0.0, %v2784
    %2786 = vdwg.mxu0
    %v2787 = vadd.f32 %v2761, %v2785
    %2788 = vrot.lane.b32.xlu0 %v1994, 96
    %v2789 = vpop.permute.xlu0 %2788
    %v2790 = vsel %vm1917, %v2789, 0
    %2792 = vmatpush.msra.mxu0 0.0
    %2793 = vmatpush.msra.mxu0 0.0
    %2794 = vmatpush.msra.mxu0 0.0
    %2795 = vmatpush.msra.mxu0 0.0
    %2796 = vmatpush.msra.mxu0 0.0
    %2797 = vmatpush.msra.mxu0 0.0
    %2798 = vmatpush.msra.mxu0 0.0
    %2799 = vmatpush.msra.mxu0 0.0
    %2800 = vmatpush.msra.mxu0 0.0
    %2801 = vmatpush.msra.mxu0 0.0
    %2802 = vmatpush.msra.mxu0 0.0
    %2803 = vmatpush.msra.mxu0 0.0
    %2804 = vmatpush.msra.mxu0 0.0
    %2805 = vmatpush.msra.mxu0 0.0
    %2806 = vmatpush.msra.mxu0 0.0
    %2807 = vmatpush.msra.mxu0 %v1998
    %2808 = vmatmul.f32.gmra.mxu0 %v2790
    %v2809 = vpop.f32.mrf.mxu0
    %v2810 = vadd.f32 0.0, %v2809
    %2811 = vdwg.mxu0
    %v2812 = vadd.f32 %v2787, %v2810
    %2813 = vst [vmem:[#allocation2 + $0x10] sm:$0x3] %v2812
    %2814 = vrot.lane.b32.xlu0 %v1914, 92
    %v2815 = vpop.permute.xlu0 %2814
    %v2816 = vsel %vm1917, %v2815, 0
    %2818 = vmatpush.msra.mxu0 0.0
    %2819 = vmatpush.msra.mxu0 0.0
    %2820 = vmatpush.msra.mxu0 0.0
    %2821 = vmatpush.msra.mxu0 0.0
    %2822 = vmatpush.msra.mxu0 0.0
    %2823 = vmatpush.msra.mxu0 0.0
    %2824 = vmatpush.msra.mxu0 0.0
    %2825 = vmatpush.msra.mxu0 0.0
    %2826 = vmatpush.msra.mxu0 0.0
    %2827 = vmatpush.msra.mxu0 0.0
    %2828 = vmatpush.msra.mxu0 0.0
    %2829 = vmatpush.msra.mxu0 0.0
    %2830 = vmatpush.msra.mxu0 0.0
    %2831 = vmatpush.msra.mxu0 0.0
    %2832 = vmatpush.msra.mxu0 0.0
    %2833 = vmatpush.msra.mxu0 %v1921
    %2834 = vmatmul.f32.gmra.mxu0 %v2816
    %v2835 = vpop.f32.mrf.mxu0
    %v2836 = vadd.f32 0.0, %v2835
    %2837 = vdwg.mxu0
    %2838 = vrot.lane.b32.xlu0 %v1910, 92
    %v2839 = vpop.permute.xlu0 %2838
    %v2840 = vsel %vm1917, %v2839, 0
    %2842 = vmatpush.msra.mxu0 0.0
    %2843 = vmatpush.msra.mxu0 0.0
    %2844 = vmatpush.msra.mxu0 0.0
    %2845 = vmatpush.msra.mxu0 0.0
    %2846 = vmatpush.msra.mxu0 0.0
    %2847 = vmatpush.msra.mxu0 0.0
    %2848 = vmatpush.msra.mxu0 0.0
    %2849 = vmatpush.msra.mxu0 0.0
    %2850 = vmatpush.msra.mxu0 0.0
    %2851 = vmatpush.msra.mxu0 0.0
    %2852 = vmatpush.msra.mxu0 0.0
    %2853 = vmatpush.msra.mxu0 0.0
    %2854 = vmatpush.msra.mxu0 0.0
    %2855 = vmatpush.msra.mxu0 0.0
    %2856 = vmatpush.msra.mxu0 0.0
    %2857 = vmatpush.msra.mxu0 %v1945
    %2858 = vmatmul.f32.gmra.mxu0 %v2840
    %v2859 = vpop.f32.mrf.mxu0
    %v2860 = vadd.f32 %v2836, %v2859
    %2861 = vdwg.mxu0
    %2862 = vrot.lane.b32.xlu0 %v1967, 92
    %v2863 = vpop.permute.xlu0 %2862
    %v2864 = vsel %vm1917, %v2863, 0
    %2866 = vmatpush.msra.mxu0 0.0
    %2867 = vmatpush.msra.mxu0 0.0
    %2868 = vmatpush.msra.mxu0 0.0
    %2869 = vmatpush.msra.mxu0 0.0
    %2870 = vmatpush.msra.mxu0 0.0
    %2871 = vmatpush.msra.mxu0 0.0
    %2872 = vmatpush.msra.mxu0 0.0
    %2873 = vmatpush.msra.mxu0 0.0
    %2874 = vmatpush.msra.mxu0 0.0
    %2875 = vmatpush.msra.mxu0 0.0
    %2876 = vmatpush.msra.mxu0 0.0
    %2877 = vmatpush.msra.mxu0 0.0
    %2878 = vmatpush.msra.mxu0 0.0
    %2879 = vmatpush.msra.mxu0 0.0
    %2880 = vmatpush.msra.mxu0 0.0
    %2881 = vmatpush.msra.mxu0 %v1971
    %2882 = vmatmul.f32.gmra.mxu0 %v2864
    %v2883 = vpop.f32.mrf.mxu0
    %v2884 = vadd.f32 0.0, %v2883
    %2885 = vdwg.mxu0
    %v2886 = vadd.f32 %v2860, %v2884
    %2887 = vrot.lane.b32.xlu0 %v1994, 92
    %v2888 = vpop.permute.xlu0 %2887
    %v2889 = vsel %vm1917, %v2888, 0
    %2891 = vmatpush.msra.mxu0 0.0
    %2892 = vmatpush.msra.mxu0 0.0
    %2893 = vmatpush.msra.mxu0 0.0
    %2894 = vmatpush.msra.mxu0 0.0
    %2895 = vmatpush.msra.mxu0 0.0
    %2896 = vmatpush.msra.mxu0 0.0
    %2897 = vmatpush.msra.mxu0 0.0
    %2898 = vmatpush.msra.mxu0 0.0
    %2899 = vmatpush.msra.mxu0 0.0
    %2900 = vmatpush.msra.mxu0 0.0
    %2901 = vmatpush.msra.mxu0 0.0
    %2902 = vmatpush.msra.mxu0 0.0
    %2903 = vmatpush.msra.mxu0 0.0
    %2904 = vmatpush.msra.mxu0 0.0
    %2905 = vmatpush.msra.mxu0 0.0
    %2906 = vmatpush.msra.mxu0 %v1998
    %2907 = vmatmul.f32.gmra.mxu0 %v2889
    %v2908 = vpop.f32.mrf.mxu0
    %v2909 = vadd.f32 0.0, %v2908
    %2910 = vdwg.mxu0
    %v2911 = vadd.f32 %v2886, %v2909
    %2912 = vst [vmem:[#allocation2 + $0x12] sm:$0x3] %v2911
    %2913 = vrot.lane.b32.xlu0 %v1914, 88
    %v2914 = vpop.permute.xlu0 %2913
    %v2915 = vsel %vm1917, %v2914, 0
    %2917 = vmatpush.msra.mxu0 0.0
    %2918 = vmatpush.msra.mxu0 0.0
    %2919 = vmatpush.msra.mxu0 0.0
    %2920 = vmatpush.msra.mxu0 0.0
    %2921 = vmatpush.msra.mxu0 0.0
    %2922 = vmatpush.msra.mxu0 0.0
    %2923 = vmatpush.msra.mxu0 0.0
    %2924 = vmatpush.msra.mxu0 0.0
    %2925 = vmatpush.msra.mxu0 0.0
    %2926 = vmatpush.msra.mxu0 0.0
    %2927 = vmatpush.msra.mxu0 0.0
    %2928 = vmatpush.msra.mxu0 0.0
    %2929 = vmatpush.msra.mxu0 0.0
    %2930 = vmatpush.msra.mxu0 0.0
    %2931 = vmatpush.msra.mxu0 0.0
    %2932 = vmatpush.msra.mxu0 %v1921
    %2933 = vmatmul.f32.gmra.mxu0 %v2915
    %v2934 = vpop.f32.mrf.mxu0
    %v2935 = vadd.f32 0.0, %v2934
    %2936 = vdwg.mxu0
    %2937 = vrot.lane.b32.xlu0 %v1910, 88
    %v2938 = vpop.permute.xlu0 %2937
    %v2939 = vsel %vm1917, %v2938, 0
    %2941 = vmatpush.msra.mxu0 0.0
    %2942 = vmatpush.msra.mxu0 0.0
    %2943 = vmatpush.msra.mxu0 0.0
    %2944 = vmatpush.msra.mxu0 0.0
    %2945 = vmatpush.msra.mxu0 0.0
    %2946 = vmatpush.msra.mxu0 0.0
    %2947 = vmatpush.msra.mxu0 0.0
    %2948 = vmatpush.msra.mxu0 0.0
    %2949 = vmatpush.msra.mxu0 0.0
    %2950 = vmatpush.msra.mxu0 0.0
    %2951 = vmatpush.msra.mxu0 0.0
    %2952 = vmatpush.msra.mxu0 0.0
    %2953 = vmatpush.msra.mxu0 0.0
    %2954 = vmatpush.msra.mxu0 0.0
    %2955 = vmatpush.msra.mxu0 0.0
    %2956 = vmatpush.msra.mxu0 %v1945
    %2957 = vmatmul.f32.gmra.mxu0 %v2939
    %v2958 = vpop.f32.mrf.mxu0
    %v2959 = vadd.f32 %v2935, %v2958
    %2960 = vdwg.mxu0
    %2961 = vrot.lane.b32.xlu0 %v1967, 88
    %v2962 = vpop.permute.xlu0 %2961
    %v2963 = vsel %vm1917, %v2962, 0
    %2965 = vmatpush.msra.mxu0 0.0
    %2966 = vmatpush.msra.mxu0 0.0
    %2967 = vmatpush.msra.mxu0 0.0
    %2968 = vmatpush.msra.mxu0 0.0
    %2969 = vmatpush.msra.mxu0 0.0
    %2970 = vmatpush.msra.mxu0 0.0
    %2971 = vmatpush.msra.mxu0 0.0
    %2972 = vmatpush.msra.mxu0 0.0
    %2973 = vmatpush.msra.mxu0 0.0
    %2974 = vmatpush.msra.mxu0 0.0
    %2975 = vmatpush.msra.mxu0 0.0
    %2976 = vmatpush.msra.mxu0 0.0
    %2977 = vmatpush.msra.mxu0 0.0
    %2978 = vmatpush.msra.mxu0 0.0
    %2979 = vmatpush.msra.mxu0 0.0
    %2980 = vmatpush.msra.mxu0 %v1971
    %2981 = vmatmul.f32.gmra.mxu0 %v2963
    %v2982 = vpop.f32.mrf.mxu0
    %v2983 = vadd.f32 0.0, %v2982
    %2984 = vdwg.mxu0
    %v2985 = vadd.f32 %v2959, %v2983
    %2986 = vrot.lane.b32.xlu0 %v1994, 88
    %v2987 = vpop.permute.xlu0 %2986
    %v2988 = vsel %vm1917, %v2987, 0
    %2990 = vmatpush.msra.mxu0 0.0
    %2991 = vmatpush.msra.mxu0 0.0
    %2992 = vmatpush.msra.mxu0 0.0
    %2993 = vmatpush.msra.mxu0 0.0
    %2994 = vmatpush.msra.mxu0 0.0
    %2995 = vmatpush.msra.mxu0 0.0
    %2996 = vmatpush.msra.mxu0 0.0
    %2997 = vmatpush.msra.mxu0 0.0
    %2998 = vmatpush.msra.mxu0 0.0
    %2999 = vmatpush.msra.mxu0 0.0
    %3000 = vmatpush.msra.mxu0 0.0
    %3001 = vmatpush.msra.mxu0 0.0
    %3002 = vmatpush.msra.mxu0 0.0
    %3003 = vmatpush.msra.mxu0 0.0
    %3004 = vmatpush.msra.mxu0 0.0
    %3005 = vmatpush.msra.mxu0 %v1998
    %3006 = vmatmul.f32.gmra.mxu0 %v2988
    %v3007 = vpop.f32.mrf.mxu0
    %v3008 = vadd.f32 0.0, %v3007
    %3009 = vdwg.mxu0
    %v3010 = vadd.f32 %v2985, %v3008
    %3011 = vst [vmem:[#allocation2 + $0x14] sm:$0x3] %v3010
    %3012 = vrot.lane.b32.xlu0 %v1914, 84
    %v3013 = vpop.permute.xlu0 %3012
    %v3014 = vsel %vm1917, %v3013, 0
    %3016 = vmatpush.msra.mxu0 0.0
    %3017 = vmatpush.msra.mxu0 0.0
    %3018 = vmatpush.msra.mxu0 0.0
    %3019 = vmatpush.msra.mxu0 0.0
    %3020 = vmatpush.msra.mxu0 0.0
    %3021 = vmatpush.msra.mxu0 0.0
    %3022 = vmatpush.msra.mxu0 0.0
    %3023 = vmatpush.msra.mxu0 0.0
    %3024 = vmatpush.msra.mxu0 0.0
    %3025 = vmatpush.msra.mxu0 0.0
    %3026 = vmatpush.msra.mxu0 0.0
    %3027 = vmatpush.msra.mxu0 0.0
    %3028 = vmatpush.msra.mxu0 0.0
    %3029 = vmatpush.msra.mxu0 0.0
    %3030 = vmatpush.msra.mxu0 0.0
    %3031 = vmatpush.msra.mxu0 %v1921
    %3032 = vmatmul.f32.gmra.mxu0 %v3014
    %v3033 = vpop.f32.mrf.mxu0
    %v3034 = vadd.f32 0.0, %v3033
    %3035 = vdwg.mxu0
    %3036 = vrot.lane.b32.xlu0 %v1910, 84
    %v3037 = vpop.permute.xlu0 %3036
    %v3038 = vsel %vm1917, %v3037, 0
    %3040 = vmatpush.msra.mxu0 0.0
    %3041 = vmatpush.msra.mxu0 0.0
    %3042 = vmatpush.msra.mxu0 0.0
    %3043 = vmatpush.msra.mxu0 0.0
    %3044 = vmatpush.msra.mxu0 0.0
    %3045 = vmatpush.msra.mxu0 0.0
    %3046 = vmatpush.msra.mxu0 0.0
    %3047 = vmatpush.msra.mxu0 0.0
    %3048 = vmatpush.msra.mxu0 0.0
    %3049 = vmatpush.msra.mxu0 0.0
    %3050 = vmatpush.msra.mxu0 0.0
    %3051 = vmatpush.msra.mxu0 0.0
    %3052 = vmatpush.msra.mxu0 0.0
    %3053 = vmatpush.msra.mxu0 0.0
    %3054 = vmatpush.msra.mxu0 0.0
    %3055 = vmatpush.msra.mxu0 %v1945
    %3056 = vmatmul.f32.gmra.mxu0 %v3038
    %v3057 = vpop.f32.mrf.mxu0
    %v3058 = vadd.f32 %v3034, %v3057
    %3059 = vdwg.mxu0
    %3060 = vrot.lane.b32.xlu0 %v1967, 84
    %v3061 = vpop.permute.xlu0 %3060
    %v3062 = vsel %vm1917, %v3061, 0
    %3064 = vmatpush.msra.mxu0 0.0
    %3065 = vmatpush.msra.mxu0 0.0
    %3066 = vmatpush.msra.mxu0 0.0
    %3067 = vmatpush.msra.mxu0 0.0
    %3068 = vmatpush.msra.mxu0 0.0
    %3069 = vmatpush.msra.mxu0 0.0
    %3070 = vmatpush.msra.mxu0 0.0
    %3071 = vmatpush.msra.mxu0 0.0
    %3072 = vmatpush.msra.mxu0 0.0
    %3073 = vmatpush.msra.mxu0 0.0
    %3074 = vmatpush.msra.mxu0 0.0
    %3075 = vmatpush.msra.mxu0 0.0
    %3076 = vmatpush.msra.mxu0 0.0
    %3077 = vmatpush.msra.mxu0 0.0
    %3078 = vmatpush.msra.mxu0 0.0
    %3079 = vmatpush.msra.mxu0 %v1971
    %3080 = vmatmul.f32.gmra.mxu0 %v3062
    %v3081 = vpop.f32.mrf.mxu0
    %v3082 = vadd.f32 0.0, %v3081
    %3083 = vdwg.mxu0
    %v3084 = vadd.f32 %v3058, %v3082
    %3085 = vrot.lane.b32.xlu0 %v1994, 84
    %v3086 = vpop.permute.xlu0 %3085
    %v3087 = vsel %vm1917, %v3086, 0
    %3089 = vmatpush.msra.mxu0 0.0
    %3090 = vmatpush.msra.mxu0 0.0
    %3091 = vmatpush.msra.mxu0 0.0
    %3092 = vmatpush.msra.mxu0 0.0
    %3093 = vmatpush.msra.mxu0 0.0
    %3094 = vmatpush.msra.mxu0 0.0
    %3095 = vmatpush.msra.mxu0 0.0
    %3096 = vmatpush.msra.mxu0 0.0
    %3097 = vmatpush.msra.mxu0 0.0
    %3098 = vmatpush.msra.mxu0 0.0
    %3099 = vmatpush.msra.mxu0 0.0
    %3100 = vmatpush.msra.mxu0 0.0
    %3101 = vmatpush.msra.mxu0 0.0
    %3102 = vmatpush.msra.mxu0 0.0
    %3103 = vmatpush.msra.mxu0 0.0
    %3104 = vmatpush.msra.mxu0 %v1998
    %3105 = vmatmul.f32.gmra.mxu0 %v3087
    %v3106 = vpop.f32.mrf.mxu0
    %v3107 = vadd.f32 0.0, %v3106
    %3108 = vdwg.mxu0
    %v3109 = vadd.f32 %v3084, %v3107
    %3110 = vst [vmem:[#allocation2 + $0x16] sm:$0x3] %v3109
    %3111 = vrot.lane.b32.xlu0 %v1914, 80
    %v3112 = vpop.permute.xlu0 %3111
    %v3113 = vsel %vm1917, %v3112, 0
    %3115 = vmatpush.msra.mxu0 0.0
    %3116 = vmatpush.msra.mxu0 0.0
    %3117 = vmatpush.msra.mxu0 0.0
    %3118 = vmatpush.msra.mxu0 0.0
    %3119 = vmatpush.msra.mxu0 0.0
    %3120 = vmatpush.msra.mxu0 0.0
    %3121 = vmatpush.msra.mxu0 0.0
    %3122 = vmatpush.msra.mxu0 0.0
    %3123 = vmatpush.msra.mxu0 0.0
    %3124 = vmatpush.msra.mxu0 0.0
    %3125 = vmatpush.msra.mxu0 0.0
    %3126 = vmatpush.msra.mxu0 0.0
    %3127 = vmatpush.msra.mxu0 0.0
    %3128 = vmatpush.msra.mxu0 0.0
    %3129 = vmatpush.msra.mxu0 0.0
    %3130 = vmatpush.msra.mxu0 %v1921
    %3131 = vmatmul.f32.gmra.mxu0 %v3113
    %v3132 = vpop.f32.mrf.mxu0
    %v3133 = vadd.f32 0.0, %v3132
    %3134 = vdwg.mxu0
    %3135 = vrot.lane.b32.xlu0 %v1910, 80
    %v3136 = vpop.permute.xlu0 %3135
    %v3137 = vsel %vm1917, %v3136, 0
    %3139 = vmatpush.msra.mxu0 0.0
    %3140 = vmatpush.msra.mxu0 0.0
    %3141 = vmatpush.msra.mxu0 0.0
    %3142 = vmatpush.msra.mxu0 0.0
    %3143 = vmatpush.msra.mxu0 0.0
    %3144 = vmatpush.msra.mxu0 0.0
    %3145 = vmatpush.msra.mxu0 0.0
    %3146 = vmatpush.msra.mxu0 0.0
    %3147 = vmatpush.msra.mxu0 0.0
    %3148 = vmatpush.msra.mxu0 0.0
    %3149 = vmatpush.msra.mxu0 0.0
    %3150 = vmatpush.msra.mxu0 0.0
    %3151 = vmatpush.msra.mxu0 0.0
    %3152 = vmatpush.msra.mxu0 0.0
    %3153 = vmatpush.msra.mxu0 0.0
    %3154 = vmatpush.msra.mxu0 %v1945
    %3155 = vmatmul.f32.gmra.mxu0 %v3137
    %v3156 = vpop.f32.mrf.mxu0
    %v3157 = vadd.f32 %v3133, %v3156
    %3158 = vdwg.mxu0
    %3159 = vrot.lane.b32.xlu0 %v1967, 80
    %v3160 = vpop.permute.xlu0 %3159
    %v3161 = vsel %vm1917, %v3160, 0
    %3163 = vmatpush.msra.mxu0 0.0
    %3164 = vmatpush.msra.mxu0 0.0
    %3165 = vmatpush.msra.mxu0 0.0
    %3166 = vmatpush.msra.mxu0 0.0
    %3167 = vmatpush.msra.mxu0 0.0
    %3168 = vmatpush.msra.mxu0 0.0
    %3169 = vmatpush.msra.mxu0 0.0
    %3170 = vmatpush.msra.mxu0 0.0
    %3171 = vmatpush.msra.mxu0 0.0
    %3172 = vmatpush.msra.mxu0 0.0
    %3173 = vmatpush.msra.mxu0 0.0
    %3174 = vmatpush.msra.mxu0 0.0
    %3175 = vmatpush.msra.mxu0 0.0
    %3176 = vmatpush.msra.mxu0 0.0
    %3177 = vmatpush.msra.mxu0 0.0
    %3178 = vmatpush.msra.mxu0 %v1971
    %3179 = vmatmul.f32.gmra.mxu0 %v3161
    %v3180 = vpop.f32.mrf.mxu0
    %v3181 = vadd.f32 0.0, %v3180
    %3182 = vdwg.mxu0
    %v3183 = vadd.f32 %v3157, %v3181
    %3184 = vrot.lane.b32.xlu0 %v1994, 80
    %v3185 = vpop.permute.xlu0 %3184
    %v3186 = vsel %vm1917, %v3185, 0
    %3188 = vmatpush.msra.mxu0 0.0
    %3189 = vmatpush.msra.mxu0 0.0
    %3190 = vmatpush.msra.mxu0 0.0
    %3191 = vmatpush.msra.mxu0 0.0
    %3192 = vmatpush.msra.mxu0 0.0
    %3193 = vmatpush.msra.mxu0 0.0
    %3194 = vmatpush.msra.mxu0 0.0
    %3195 = vmatpush.msra.mxu0 0.0
    %3196 = vmatpush.msra.mxu0 0.0
    %3197 = vmatpush.msra.mxu0 0.0
    %3198 = vmatpush.msra.mxu0 0.0
    %3199 = vmatpush.msra.mxu0 0.0
    %3200 = vmatpush.msra.mxu0 0.0
    %3201 = vmatpush.msra.mxu0 0.0
    %3202 = vmatpush.msra.mxu0 0.0
    %3203 = vmatpush.msra.mxu0 %v1998
    %3204 = vmatmul.f32.gmra.mxu0 %v3186
    %v3205 = vpop.f32.mrf.mxu0
    %v3206 = vadd.f32 0.0, %v3205
    %3207 = vdwg.mxu0
    %v3208 = vadd.f32 %v3183, %v3206
    %3209 = vst [vmem:[#allocation2 + $0x18] sm:$0x3] %v3208
    %3210 = vrot.lane.b32.xlu0 %v1914, 76
    %v3211 = vpop.permute.xlu0 %3210
    %v3212 = vsel %vm1917, %v3211, 0
    %3214 = vmatpush.msra.mxu0 0.0
    %3215 = vmatpush.msra.mxu0 0.0
    %3216 = vmatpush.msra.mxu0 0.0
    %3217 = vmatpush.msra.mxu0 0.0
    %3218 = vmatpush.msra.mxu0 0.0
    %3219 = vmatpush.msra.mxu0 0.0
    %3220 = vmatpush.msra.mxu0 0.0
    %3221 = vmatpush.msra.mxu0 0.0
    %3222 = vmatpush.msra.mxu0 0.0
    %3223 = vmatpush.msra.mxu0 0.0
    %3224 = vmatpush.msra.mxu0 0.0
    %3225 = vmatpush.msra.mxu0 0.0
    %3226 = vmatpush.msra.mxu0 0.0
    %3227 = vmatpush.msra.mxu0 0.0
    %3228 = vmatpush.msra.mxu0 0.0
    %3229 = vmatpush.msra.mxu0 %v1921
    %3230 = vmatmul.f32.gmra.mxu0 %v3212
    %v3231 = vpop.f32.mrf.mxu0
    %v3232 = vadd.f32 0.0, %v3231
    %3233 = vdwg.mxu0
    %3234 = vrot.lane.b32.xlu0 %v1910, 76
    %v3235 = vpop.permute.xlu0 %3234
    %v3236 = vsel %vm1917, %v3235, 0
    %3238 = vmatpush.msra.mxu0 0.0
    %3239 = vmatpush.msra.mxu0 0.0
    %3240 = vmatpush.msra.mxu0 0.0
    %3241 = vmatpush.msra.mxu0 0.0
    %3242 = vmatpush.msra.mxu0 0.0
    %3243 = vmatpush.msra.mxu0 0.0
    %3244 = vmatpush.msra.mxu0 0.0
    %3245 = vmatpush.msra.mxu0 0.0
    %3246 = vmatpush.msra.mxu0 0.0
    %3247 = vmatpush.msra.mxu0 0.0
    %3248 = vmatpush.msra.mxu0 0.0
    %3249 = vmatpush.msra.mxu0 0.0
    %3250 = vmatpush.msra.mxu0 0.0
    %3251 = vmatpush.msra.mxu0 0.0
    %3252 = vmatpush.msra.mxu0 0.0
    %3253 = vmatpush.msra.mxu0 %v1945
    %3254 = vmatmul.f32.gmra.mxu0 %v3236
    %v3255 = vpop.f32.mrf.mxu0
    %v3256 = vadd.f32 %v3232, %v3255
    %3257 = vdwg.mxu0
    %3258 = vrot.lane.b32.xlu0 %v1967, 76
    %v3259 = vpop.permute.xlu0 %3258
    %v3260 = vsel %vm1917, %v3259, 0
    %3262 = vmatpush.msra.mxu0 0.0
    %3263 = vmatpush.msra.mxu0 0.0
    %3264 = vmatpush.msra.mxu0 0.0
    %3265 = vmatpush.msra.mxu0 0.0
    %3266 = vmatpush.msra.mxu0 0.0
    %3267 = vmatpush.msra.mxu0 0.0
    %3268 = vmatpush.msra.mxu0 0.0
    %3269 = vmatpush.msra.mxu0 0.0
    %3270 = vmatpush.msra.mxu0 0.0
    %3271 = vmatpush.msra.mxu0 0.0
    %3272 = vmatpush.msra.mxu0 0.0
    %3273 = vmatpush.msra.mxu0 0.0
    %3274 = vmatpush.msra.mxu0 0.0
    %3275 = vmatpush.msra.mxu0 0.0
    %3276 = vmatpush.msra.mxu0 0.0
    %3277 = vmatpush.msra.mxu0 %v1971
    %3278 = vmatmul.f32.gmra.mxu0 %v3260
    %v3279 = vpop.f32.mrf.mxu0
    %v3280 = vadd.f32 0.0, %v3279
    %3281 = vdwg.mxu0
    %v3282 = vadd.f32 %v3256, %v3280
    %3283 = vrot.lane.b32.xlu0 %v1994, 76
    %v3284 = vpop.permute.xlu0 %3283
    %v3285 = vsel %vm1917, %v3284, 0
    %3287 = vmatpush.msra.mxu0 0.0
    %3288 = vmatpush.msra.mxu0 0.0
    %3289 = vmatpush.msra.mxu0 0.0
    %3290 = vmatpush.msra.mxu0 0.0
    %3291 = vmatpush.msra.mxu0 0.0
    %3292 = vmatpush.msra.mxu0 0.0
    %3293 = vmatpush.msra.mxu0 0.0
    %3294 = vmatpush.msra.mxu0 0.0
    %3295 = vmatpush.msra.mxu0 0.0
    %3296 = vmatpush.msra.mxu0 0.0
    %3297 = vmatpush.msra.mxu0 0.0
    %3298 = vmatpush.msra.mxu0 0.0
    %3299 = vmatpush.msra.mxu0 0.0
    %3300 = vmatpush.msra.mxu0 0.0
    %3301 = vmatpush.msra.mxu0 0.0
    %3302 = vmatpush.msra.mxu0 %v1998
    %3303 = vmatmul.f32.gmra.mxu0 %v3285
    %v3304 = vpop.f32.mrf.mxu0
    %v3305 = vadd.f32 0.0, %v3304
    %3306 = vdwg.mxu0
    %v3307 = vadd.f32 %v3282, %v3305
    %3308 = vst [vmem:[#allocation2 + $0x1a] sm:$0x3] %v3307
    %3309 = vrot.lane.b32.xlu0 %v1914, 72
    %v3310 = vpop.permute.xlu0 %3309
    %v3311 = vsel %vm1917, %v3310, 0
    %3313 = vmatpush.msra.mxu0 0.0
    %3314 = vmatpush.msra.mxu0 0.0
    %3315 = vmatpush.msra.mxu0 0.0
    %3316 = vmatpush.msra.mxu0 0.0
    %3317 = vmatpush.msra.mxu0 0.0
    %3318 = vmatpush.msra.mxu0 0.0
    %3319 = vmatpush.msra.mxu0 0.0
    %3320 = vmatpush.msra.mxu0 0.0
    %3321 = vmatpush.msra.mxu0 0.0
    %3322 = vmatpush.msra.mxu0 0.0
    %3323 = vmatpush.msra.mxu0 0.0
    %3324 = vmatpush.msra.mxu0 0.0
    %3325 = vmatpush.msra.mxu0 0.0
    %3326 = vmatpush.msra.mxu0 0.0
    %3327 = vmatpush.msra.mxu0 0.0
    %3328 = vmatpush.msra.mxu0 %v1921
    %3329 = vmatmul.f32.gmra.mxu0 %v3311
    %v3330 = vpop.f32.mrf.mxu0
    %v3331 = vadd.f32 0.0, %v3330
    %3332 = vdwg.mxu0
    %3333 = vrot.lane.b32.xlu0 %v1910, 72
    %v3334 = vpop.permute.xlu0 %3333
    %v3335 = vsel %vm1917, %v3334, 0
    %3337 = vmatpush.msra.mxu0 0.0
    %3338 = vmatpush.msra.mxu0 0.0
    %3339 = vmatpush.msra.mxu0 0.0
    %3340 = vmatpush.msra.mxu0 0.0
    %3341 = vmatpush.msra.mxu0 0.0
    %3342 = vmatpush.msra.mxu0 0.0
    %3343 = vmatpush.msra.mxu0 0.0
    %3344 = vmatpush.msra.mxu0 0.0
    %3345 = vmatpush.msra.mxu0 0.0
    %3346 = vmatpush.msra.mxu0 0.0
    %3347 = vmatpush.msra.mxu0 0.0
    %3348 = vmatpush.msra.mxu0 0.0
    %3349 = vmatpush.msra.mxu0 0.0
    %3350 = vmatpush.msra.mxu0 0.0
    %3351 = vmatpush.msra.mxu0 0.0
    %3352 = vmatpush.msra.mxu0 %v1945
    %3353 = vmatmul.f32.gmra.mxu0 %v3335
    %v3354 = vpop.f32.mrf.mxu0
    %v3355 = vadd.f32 %v3331, %v3354
    %3356 = vdwg.mxu0
    %3357 = vrot.lane.b32.xlu0 %v1967, 72
    %v3358 = vpop.permute.xlu0 %3357
    %v3359 = vsel %vm1917, %v3358, 0
    %3361 = vmatpush.msra.mxu0 0.0
    %3362 = vmatpush.msra.mxu0 0.0
    %3363 = vmatpush.msra.mxu0 0.0
    %3364 = vmatpush.msra.mxu0 0.0
    %3365 = vmatpush.msra.mxu0 0.0
    %3366 = vmatpush.msra.mxu0 0.0
    %3367 = vmatpush.msra.mxu0 0.0
    %3368 = vmatpush.msra.mxu0 0.0
    %3369 = vmatpush.msra.mxu0 0.0
    %3370 = vmatpush.msra.mxu0 0.0
    %3371 = vmatpush.msra.mxu0 0.0
    %3372 = vmatpush.msra.mxu0 0.0
    %3373 = vmatpush.msra.mxu0 0.0
    %3374 = vmatpush.msra.mxu0 0.0
    %3375 = vmatpush.msra.mxu0 0.0
    %3376 = vmatpush.msra.mxu0 %v1971
    %3377 = vmatmul.f32.gmra.mxu0 %v3359
    %v3378 = vpop.f32.mrf.mxu0
    %v3379 = vadd.f32 0.0, %v3378
    %3380 = vdwg.mxu0
    %v3381 = vadd.f32 %v3355, %v3379
    %3382 = vrot.lane.b32.xlu0 %v1994, 72
    %v3383 = vpop.permute.xlu0 %3382
    %v3384 = vsel %vm1917, %v3383, 0
    %3386 = vmatpush.msra.mxu0 0.0
    %3387 = vmatpush.msra.mxu0 0.0
    %3388 = vmatpush.msra.mxu0 0.0
    %3389 = vmatpush.msra.mxu0 0.0
    %3390 = vmatpush.msra.mxu0 0.0
    %3391 = vmatpush.msra.mxu0 0.0
    %3392 = vmatpush.msra.mxu0 0.0
    %3393 = vmatpush.msra.mxu0 0.0
    %3394 = vmatpush.msra.mxu0 0.0
    %3395 = vmatpush.msra.mxu0 0.0
    %3396 = vmatpush.msra.mxu0 0.0
    %3397 = vmatpush.msra.mxu0 0.0
    %3398 = vmatpush.msra.mxu0 0.0
    %3399 = vmatpush.msra.mxu0 0.0
    %3400 = vmatpush.msra.mxu0 0.0
    %3401 = vmatpush.msra.mxu0 %v1998
    %3402 = vmatmul.f32.gmra.mxu0 %v3384
    %v3403 = vpop.f32.mrf.mxu0
    %v3404 = vadd.f32 0.0, %v3403
    %3405 = vdwg.mxu0
    %v3406 = vadd.f32 %v3381, %v3404
    %3407 = vst [vmem:[#allocation2 + $0x1c] sm:$0x3] %v3406
    %3408 = vrot.lane.b32.xlu0 %v1914, 68
    %v3409 = vpop.permute.xlu0 %3408
    %v3410 = vsel %vm1917, %v3409, 0
    %3412 = vmatpush.msra.mxu0 0.0
    %3413 = vmatpush.msra.mxu0 0.0
    %3414 = vmatpush.msra.mxu0 0.0
    %3415 = vmatpush.msra.mxu0 0.0
    %3416 = vmatpush.msra.mxu0 0.0
    %3417 = vmatpush.msra.mxu0 0.0
    %3418 = vmatpush.msra.mxu0 0.0
    %3419 = vmatpush.msra.mxu0 0.0
    %3420 = vmatpush.msra.mxu0 0.0
    %3421 = vmatpush.msra.mxu0 0.0
    %3422 = vmatpush.msra.mxu0 0.0
    %3423 = vmatpush.msra.mxu0 0.0
    %3424 = vmatpush.msra.mxu0 0.0
    %3425 = vmatpush.msra.mxu0 0.0
    %3426 = vmatpush.msra.mxu0 0.0
    %3427 = vmatpush.msra.mxu0 %v1921
    %3428 = vmatmul.f32.gmra.mxu0 %v3410
    %v3429 = vpop.f32.mrf.mxu0
    %v3430 = vadd.f32 0.0, %v3429
    %3431 = vdwg.mxu0
    %3432 = vrot.lane.b32.xlu0 %v1910, 68
    %v3433 = vpop.permute.xlu0 %3432
    %v3434 = vsel %vm1917, %v3433, 0
    %3436 = vmatpush.msra.mxu0 0.0
    %3437 = vmatpush.msra.mxu0 0.0
    %3438 = vmatpush.msra.mxu0 0.0
    %3439 = vmatpush.msra.mxu0 0.0
    %3440 = vmatpush.msra.mxu0 0.0
    %3441 = vmatpush.msra.mxu0 0.0
    %3442 = vmatpush.msra.mxu0 0.0
    %3443 = vmatpush.msra.mxu0 0.0
    %3444 = vmatpush.msra.mxu0 0.0
    %3445 = vmatpush.msra.mxu0 0.0
    %3446 = vmatpush.msra.mxu0 0.0
    %3447 = vmatpush.msra.mxu0 0.0
    %3448 = vmatpush.msra.mxu0 0.0
    %3449 = vmatpush.msra.mxu0 0.0
    %3450 = vmatpush.msra.mxu0 0.0
    %3451 = vmatpush.msra.mxu0 %v1945
    %3452 = vmatmul.f32.gmra.mxu0 %v3434
    %v3453 = vpop.f32.mrf.mxu0
    %v3454 = vadd.f32 %v3430, %v3453
    %3455 = vdwg.mxu0
    %3456 = vrot.lane.b32.xlu0 %v1967, 68
    %v3457 = vpop.permute.xlu0 %3456
    %v3458 = vsel %vm1917, %v3457, 0
    %3460 = vmatpush.msra.mxu0 0.0
    %3461 = vmatpush.msra.mxu0 0.0
    %3462 = vmatpush.msra.mxu0 0.0
    %3463 = vmatpush.msra.mxu0 0.0
    %3464 = vmatpush.msra.mxu0 0.0
    %3465 = vmatpush.msra.mxu0 0.0
    %3466 = vmatpush.msra.mxu0 0.0
    %3467 = vmatpush.msra.mxu0 0.0
    %3468 = vmatpush.msra.mxu0 0.0
    %3469 = vmatpush.msra.mxu0 0.0
    %3470 = vmatpush.msra.mxu0 0.0
    %3471 = vmatpush.msra.mxu0 0.0
    %3472 = vmatpush.msra.mxu0 0.0
    %3473 = vmatpush.msra.mxu0 0.0
    %3474 = vmatpush.msra.mxu0 0.0
    %3475 = vmatpush.msra.mxu0 %v1971
    %3476 = vmatmul.f32.gmra.mxu0 %v3458
    %v3477 = vpop.f32.mrf.mxu0
    %v3478 = vadd.f32 0.0, %v3477
    %3479 = vdwg.mxu0
    %v3480 = vadd.f32 %v3454, %v3478
    %3481 = vrot.lane.b32.xlu0 %v1994, 68
    %v3482 = vpop.permute.xlu0 %3481
    %v3483 = vsel %vm1917, %v3482, 0
    %3485 = vmatpush.msra.mxu0 0.0
    %3486 = vmatpush.msra.mxu0 0.0
    %3487 = vmatpush.msra.mxu0 0.0
    %3488 = vmatpush.msra.mxu0 0.0
    %3489 = vmatpush.msra.mxu0 0.0
    %3490 = vmatpush.msra.mxu0 0.0
    %3491 = vmatpush.msra.mxu0 0.0
    %3492 = vmatpush.msra.mxu0 0.0
    %3493 = vmatpush.msra.mxu0 0.0
    %3494 = vmatpush.msra.mxu0 0.0
    %3495 = vmatpush.msra.mxu0 0.0
    %3496 = vmatpush.msra.mxu0 0.0
    %3497 = vmatpush.msra.mxu0 0.0
    %3498 = vmatpush.msra.mxu0 0.0
    %3499 = vmatpush.msra.mxu0 0.0
    %3500 = vmatpush.msra.mxu0 %v1998
    %3501 = vmatmul.f32.gmra.mxu0 %v3483
    %v3502 = vpop.f32.mrf.mxu0
    %v3503 = vadd.f32 0.0, %v3502
    %3504 = vdwg.mxu0
    %v3505 = vadd.f32 %v3480, %v3503
    %3506 = vst [vmem:[#allocation2 + $0x1e] sm:$0x3] %v3505
    loop: start=0, step=1, limit=10
    $region98: #{neural_net_forward.1} parent=1 // loop_pre_header
      _
    $region99: #{neural_net_forward.1} parent=1 // loop_header
      %s3508 = sphi 0, %s3512
      %p3509 = scmp.ge.s32.totalorder %s3508, 10
    $region100: #{neural_net_forward.1} parent=1 // loop_header_branch
      %3511 = sbr.rel (%p3509) target = $region104
    $region101: #{neural_net_forward.1} parent=1 // loop_body
      %s3513 = smul.u32 %s3508, 32
      %s3514 = scalar_lea.vmem [#allocation13], %s3513
      %v3515 = vld [vmem:[%s3514] sm:$0xff]
      %v3516 = vld [vmem:[%s3514 + $0x8] sm:$0xff]
      %v3517 = vld [vmem:[%s3514 + $0x10] sm:$0xff]
      %v3518 = vld [vmem:[%s3514 + $0x18] sm:$0xff]
      %s3519 = sadd.s32 %s3508, 1
      %s3520 = smul.u32 %s3519, 32
      %s3521 = scalar_lea.vmem %s10, %s3520
      %v3522 = vld [vmem:[%s3521] sm:$0xff]
      %v3523 = vld [vmem:[%s3521 + $0x8] sm:$0xff]
      %v3524 = vld [vmem:[%s3521 + $0x10] sm:$0xff]
      %v3525 = vld [vmem:[%s3521 + $0x18] sm:$0xff]
      %s3526 = scalar_lea.vmem %s12, %s3508
      %v3527 = vld [vmem:[%s3526] sm:$0x1]
      %v3528 = vld [vmem:[#allocation2] sm:$0x3]
      %v3530 = vsel %vm709, 0.0, 0
      %3532 = vmatpush.msra.mxu0 0.0
      %3533 = vmatpush.msra.mxu0 0.0
      %3534 = vmatpush.msra.mxu0 0.0
      %3535 = vmatpush.msra.mxu0 0.0
      %3536 = vmatpush.msra.mxu0 0.0
      %3537 = vmatpush.msra.mxu0 0.0
      %3538 = vmatpush.msra.mxu0 0.0
      %3539 = vmatpush.msra.mxu0 0.0
      %3540 = vmatpush.msra.mxu0 0.0
      %3541 = vmatpush.msra.mxu0 0.0
      %3542 = vmatpush.msra.mxu0 0.0
      %3543 = vmatpush.msra.mxu0 0.0
      %3544 = vmatpush.msra.mxu0 %v3518
      %3545 = vmatpush.msra.mxu0 %v3517
      %3546 = vmatpush.msra.mxu0 %v3516
      %3547 = vmatpush.msra.mxu0 %v3515
      %3548 = vmatmul.f32.gmra.mxu0 %v3530
      %v3549 = vpop.f32.mrf.mxu0
      %v3550 = vadd.f32 0.0, %v3549
      %3551 = vdwg.mxu0
      %v3552 = vadd.f32 %v3528, %v3550
      %v3554 = vperm.slane %v3527, 0
      %v3556 = vadd.f32 %v3552, %v3554
      %v3557 = vxor.u32 %v3556, 2147483648
      %v3558 = vmul.f32 %v3557, 1.442695
      %v3559 = vpow.pop %v3558
      %v3560 = vadd.f32 %v3559, 1.0
      %v3561 = vrcp.pop %v3560
      %v3562 = vmul.f32 %v3560, %v3561
      %v3563 = vsub.f32 1.0, %v3562
      %v3564 = vmul.f32 %v3561, %v3563
      %v3565 = vadd.f32 %v3561, %v3564
      %vm3566 = vweird.f32 %v3560
      %vm3567 = vweird.f32 %v3561
      %vm3568 = vmor %vm3566, %vm3567
      %v3569 = vsel %vm3568, %v3561, %v3565
      %v3570 = vand.u32 2147483647, %v3560
      %vm3571 = vcmp.eq.f32.partialorder %v3570, 8.507059e+37
      %v3572 = vand.u32 %v3560, 2147483648
      %v3573 = vor.u32 1.1754944e-38, %v3572
      %v3574 = vsel %vm3571, %v3573, %v3569
      %v3575 = vmul.f32 1.0, %v3574
      %v3576 = vtanh.pop %v3556
      %v3577 = vmul.f32 %v3575, 0.0
      %3579 = vrot.lane.b32.xlu0 %v3576, 64
      %v3580 = vpop.permute.xlu0 %3579
      %v3582 = vmul.f32 %v3575, %v3580
      %3584 = vrot.lane.b32.xlu0 %v3582, 32
      %v3585 = vpop.permute.xlu0 %3584
      %v3587 = vadd.f32 %v3577, %v3585
      %v3588 = vtanh.pop %v3587
      %3590 = vrot.lane.b32.xlu0 %v3588, 64
      %v3591 = vpop.permute.xlu0 %3590
      %v3593 = vmul.f32 %v3575, %v3591
      %3595 = vrot.lane.b32.xlu0 %v3593, 32
      %v3596 = vpop.permute.xlu0 %3595
      %v3597 = vsel %vm709, %v3596, 0
      %3599 = vmatpush.msra.mxu0 0.0
      %3600 = vmatpush.msra.mxu0 0.0
      %3601 = vmatpush.msra.mxu0 0.0
      %3602 = vmatpush.msra.mxu0 0.0
      %3603 = vmatpush.msra.mxu0 0.0
      %3604 = vmatpush.msra.mxu0 0.0
      %3605 = vmatpush.msra.mxu0 0.0
      %3606 = vmatpush.msra.mxu0 0.0
      %3607 = vmatpush.msra.mxu0 0.0
      %3608 = vmatpush.msra.mxu0 0.0
      %3609 = vmatpush.msra.mxu0 0.0
      %3610 = vmatpush.msra.mxu0 0.0
      %3611 = vmatpush.msra.mxu0 %v3525
      %3612 = vmatpush.msra.mxu0 %v3524
      %3613 = vmatpush.msra.mxu0 %v3523
      %3614 = vmatpush.msra.mxu0 %v3522
      %3615 = vmatmul.f32.gmra.mxu0 %v3597
      %v3616 = vpop.f32.mrf.mxu0
      %v3617 = vadd.f32 0.0, %v3616
      %3618 = vdwg.mxu0
      %3619 = vst [vmem:[#allocation2] sm:$0x3] %v3617
      %v3620 = vld [vmem:[#allocation2 + $0x2] sm:$0x3]
      %3621 = vmatpush.msra.mxu0 0.0
      %3622 = vmatpush.msra.mxu0 0.0
      %3623 = vmatpush.msra.mxu0 0.0
      %3624 = vmatpush.msra.mxu0 0.0
      %3625 = vmatpush.msra.mxu0 0.0
      %3626 = vmatpush.msra.mxu0 0.0
      %3627 = vmatpush.msra.mxu0 0.0
      %3628 = vmatpush.msra.mxu0 0.0
      %3629 = vmatpush.msra.mxu0 0.0
      %3630 = vmatpush.msra.mxu0 0.0
      %3631 = vmatpush.msra.mxu0 0.0
      %3632 = vmatpush.msra.mxu0 0.0
      %3633 = vmatpush.msra.mxu0 %v3518
      %3634 = vmatpush.msra.mxu0 %v3517
      %3635 = vmatpush.msra.mxu0 %v3516
      %3636 = vmatpush.msra.mxu0 %v3515
      %3637 = vmatmul.f32.gmra.mxu0 %v3597
      %v3638 = vpop.f32.mrf.mxu0
      %v3639 = vadd.f32 0.0, %v3638
      %3640 = vdwg.mxu0
      %v3641 = vadd.f32 %v3620, %v3639
      %v3642 = vadd.f32 %v3641, %v3554
      %v3643 = vxor.u32 %v3642, 2147483648
      %v3644 = vmul.f32 %v3643, 1.442695
      %v3645 = vpow.pop %v3644
      %v3646 = vadd.f32 %v3645, 1.0
      %v3647 = vrcp.pop %v3646
      %v3648 = vmul.f32 %v3646, %v3647
      %v3649 = vsub.f32 1.0, %v3648
      %v3650 = vmul.f32 %v3647, %v3649
      %v3651 = vadd.f32 %v3647, %v3650
      %vm3652 = vweird.f32 %v3646
      %vm3653 = vweird.f32 %v3647
      %vm3654 = vmor %vm3652, %vm3653
      %v3655 = vsel %vm3654, %v3647, %v3651
      %v3656 = vand.u32 2147483647, %v3646
      %vm3657 = vcmp.eq.f32.partialorder %v3656, 8.507059e+37
      %v3658 = vand.u32 %v3646, 2147483648
      %v3659 = vor.u32 1.1754944e-38, %v3658
      %v3660 = vsel %vm3657, %v3659, %v3655
      %v3661 = vmul.f32 1.0, %v3660
      %v3662 = vtanh.pop %v3642
      %v3663 = vmul.f32 %v3661, %v3587
      %3665 = vrot.lane.b32.xlu0 %v3662, 64
      %v3666 = vpop.permute.xlu0 %3665
      %v3668 = vmul.f32 %v3661, %v3666
      %3670 = vrot.lane.b32.xlu0 %v3668, 32
      %v3671 = vpop.permute.xlu0 %3670
      %v3673 = vadd.f32 %v3663, %v3671
      %v3674 = vtanh.pop %v3673
      %3676 = vrot.lane.b32.xlu0 %v3674, 64
      %v3677 = vpop.permute.xlu0 %3676
      %v3679 = vmul.f32 %v3661, %v3677
      %3681 = vrot.lane.b32.xlu0 %v3679, 32
      %v3682 = vpop.permute.xlu0 %3681
      %v3683 = vsel %vm709, %v3682, 0
      %3685 = vmatpush.msra.mxu0 0.0
      %3686 = vmatpush.msra.mxu0 0.0
      %3687 = vmatpush.msra.mxu0 0.0
      %3688 = vmatpush.msra.mxu0 0.0
      %3689 = vmatpush.msra.mxu0 0.0
      %3690 = vmatpush.msra.mxu0 0.0
      %3691 = vmatpush.msra.mxu0 0.0
      %3692 = vmatpush.msra.mxu0 0.0
      %3693 = vmatpush.msra.mxu0 0.0
      %3694 = vmatpush.msra.mxu0 0.0
      %3695 = vmatpush.msra.mxu0 0.0
      %3696 = vmatpush.msra.mxu0 0.0
      %3697 = vmatpush.msra.mxu0 %v3525
      %3698 = vmatpush.msra.mxu0 %v3524
      %3699 = vmatpush.msra.mxu0 %v3523
      %3700 = vmatpush.msra.mxu0 %v3522
      %3701 = vmatmul.f32.gmra.mxu0 %v3683
      %v3702 = vpop.f32.mrf.mxu0
      %v3703 = vadd.f32 0.0, %v3702
      %3704 = vdwg.mxu0
      %3705 = vst [vmem:[#allocation2 + $0x2] sm:$0x3] %v3703
      %v3706 = vld [vmem:[#allocation2 + $0x4] sm:$0x3]
      %3707 = vmatpush.msra.mxu0 0.0
      %3708 = vmatpush.msra.mxu0 0.0
      %3709 = vmatpush.msra.mxu0 0.0
      %3710 = vmatpush.msra.mxu0 0.0
      %3711 = vmatpush.msra.mxu0 0.0
      %3712 = vmatpush.msra.mxu0 0.0
      %3713 = vmatpush.msra.mxu0 0.0
      %3714 = vmatpush.msra.mxu0 0.0
      %3715 = vmatpush.msra.mxu0 0.0
      %3716 = vmatpush.msra.mxu0 0.0
      %3717 = vmatpush.msra.mxu0 0.0
      %3718 = vmatpush.msra.mxu0 0.0
      %3719 = vmatpush.msra.mxu0 %v3518
      %3720 = vmatpush.msra.mxu0 %v3517
      %3721 = vmatpush.msra.mxu0 %v3516
      %3722 = vmatpush.msra.mxu0 %v3515
      %3723 = vmatmul.f32.gmra.mxu0 %v3683
      %v3724 = vpop.f32.mrf.mxu0
      %v3725 = vadd.f32 0.0, %v3724
      %3726 = vdwg.mxu0
      %v3727 = vadd.f32 %v3706, %v3725
      %v3728 = vadd.f32 %v3727, %v3554
      %v3729 = vxor.u32 %v3728, 2147483648
      %v3730 = vmul.f32 %v3729, 1.442695
      %v3731 = vpow.pop %v3730
      %v3732 = vadd.f32 %v3731, 1.0
      %v3733 = vrcp.pop %v3732
      %v3734 = vmul.f32 %v3732, %v3733
      %v3735 = vsub.f32 1.0, %v3734
      %v3736 = vmul.f32 %v3733, %v3735
      %v3737 = vadd.f32 %v3733, %v3736
      %vm3738 = vweird.f32 %v3732
      %vm3739 = vweird.f32 %v3733
      %vm3740 = vmor %vm3738, %vm3739
      %v3741 = vsel %vm3740, %v3733, %v3737
      %v3742 = vand.u32 2147483647, %v3732
      %vm3743 = vcmp.eq.f32.partialorder %v3742, 8.507059e+37
      %v3744 = vand.u32 %v3732, 2147483648
      %v3745 = vor.u32 1.1754944e-38, %v3744
      %v3746 = vsel %vm3743, %v3745, %v3741
      %v3747 = vmul.f32 1.0, %v3746
      %v3748 = vtanh.pop %v3728
      %v3749 = vmul.f32 %v3747, %v3673
      %3751 = vrot.lane.b32.xlu0 %v3748, 64
      %v3752 = vpop.permute.xlu0 %3751
      %v3754 = vmul.f32 %v3747, %v3752
      %3756 = vrot.lane.b32.xlu0 %v3754, 32
      %v3757 = vpop.permute.xlu0 %3756
      %v3759 = vadd.f32 %v3749, %v3757
      %v3760 = vtanh.pop %v3759
      %3762 = vrot.lane.b32.xlu0 %v3760, 64
      %v3763 = vpop.permute.xlu0 %3762
      %v3765 = vmul.f32 %v3747, %v3763
      %3767 = vrot.lane.b32.xlu0 %v3765, 32
      %v3768 = vpop.permute.xlu0 %3767
      %v3769 = vsel %vm709, %v3768, 0
      %3771 = vmatpush.msra.mxu0 0.0
      %3772 = vmatpush.msra.mxu0 0.0
      %3773 = vmatpush.msra.mxu0 0.0
      %3774 = vmatpush.msra.mxu0 0.0
      %3775 = vmatpush.msra.mxu0 0.0
      %3776 = vmatpush.msra.mxu0 0.0
      %3777 = vmatpush.msra.mxu0 0.0
      %3778 = vmatpush.msra.mxu0 0.0
      %3779 = vmatpush.msra.mxu0 0.0
      %3780 = vmatpush.msra.mxu0 0.0
      %3781 = vmatpush.msra.mxu0 0.0
      %3782 = vmatpush.msra.mxu0 0.0
      %3783 = vmatpush.msra.mxu0 %v3525
      %3784 = vmatpush.msra.mxu0 %v3524
      %3785 = vmatpush.msra.mxu0 %v3523
      %3786 = vmatpush.msra.mxu0 %v3522
      %3787 = vmatmul.f32.gmra.mxu0 %v3769
      %v3788 = vpop.f32.mrf.mxu0
      %v3789 = vadd.f32 0.0, %v3788
      %3790 = vdwg.mxu0
      %3791 = vst [vmem:[#allocation2 + $0x4] sm:$0x3] %v3789
      %v3792 = vld [vmem:[#allocation2 + $0x6] sm:$0x3]
      %3793 = vmatpush.msra.mxu0 0.0
      %3794 = vmatpush.msra.mxu0 0.0
      %3795 = vmatpush.msra.mxu0 0.0
      %3796 = vmatpush.msra.mxu0 0.0
      %3797 = vmatpush.msra.mxu0 0.0
      %3798 = vmatpush.msra.mxu0 0.0
      %3799 = vmatpush.msra.mxu0 0.0
      %3800 = vmatpush.msra.mxu0 0.0
      %3801 = vmatpush.msra.mxu0 0.0
      %3802 = vmatpush.msra.mxu0 0.0
      %3803 = vmatpush.msra.mxu0 0.0
      %3804 = vmatpush.msra.mxu0 0.0
      %3805 = vmatpush.msra.mxu0 %v3518
      %3806 = vmatpush.msra.mxu0 %v3517
      %3807 = vmatpush.msra.mxu0 %v3516
      %3808 = vmatpush.msra.mxu0 %v3515
      %3809 = vmatmul.f32.gmra.mxu0 %v3769
      %v3810 = vpop.f32.mrf.mxu0
      %v3811 = vadd.f32 0.0, %v3810
      %3812 = vdwg.mxu0
      %v3813 = vadd.f32 %v3792, %v3811
      %v3814 = vadd.f32 %v3813, %v3554
      %v3815 = vxor.u32 %v3814, 2147483648
      %v3816 = vmul.f32 %v3815, 1.442695
      %v3817 = vpow.pop %v3816
      %v3818 = vadd.f32 %v3817, 1.0
      %v3819 = vrcp.pop %v3818
      %v3820 = vmul.f32 %v3818, %v3819
      %v3821 = vsub.f32 1.0, %v3820
      %v3822 = vmul.f32 %v3819, %v3821
      %v3823 = vadd.f32 %v3819, %v3822
      %vm3824 = vweird.f32 %v3818
      %vm3825 = vweird.f32 %v3819
      %vm3826 = vmor %vm3824, %vm3825
      %v3827 = vsel %vm3826, %v3819, %v3823
      %v3828 = vand.u32 2147483647, %v3818
      %vm3829 = vcmp.eq.f32.partialorder %v3828, 8.507059e+37
      %v3830 = vand.u32 %v3818, 2147483648
      %v3831 = vor.u32 1.1754944e-38, %v3830
      %v3832 = vsel %vm3829, %v3831, %v3827
      %v3833 = vmul.f32 1.0, %v3832
      %v3834 = vtanh.pop %v3814
      %v3835 = vmul.f32 %v3833, %v3759
      %3837 = vrot.lane.b32.xlu0 %v3834, 64
      %v3838 = vpop.permute.xlu0 %3837
      %v3840 = vmul.f32 %v3833, %v3838
      %3842 = vrot.lane.b32.xlu0 %v3840, 32
      %v3843 = vpop.permute.xlu0 %3842
      %v3845 = vadd.f32 %v3835, %v3843
      %v3846 = vtanh.pop %v3845
      %3848 = vrot.lane.b32.xlu0 %v3846, 64
      %v3849 = vpop.permute.xlu0 %3848
      %v3851 = vmul.f32 %v3833, %v3849
      %3853 = vrot.lane.b32.xlu0 %v3851, 32
      %v3854 = vpop.permute.xlu0 %3853
      %v3855 = vsel %vm709, %v3854, 0
      %3857 = vmatpush.msra.mxu0 0.0
      %3858 = vmatpush.msra.mxu0 0.0
      %3859 = vmatpush.msra.mxu0 0.0
      %3860 = vmatpush.msra.mxu0 0.0
      %3861 = vmatpush.msra.mxu0 0.0
      %3862 = vmatpush.msra.mxu0 0.0
      %3863 = vmatpush.msra.mxu0 0.0
      %3864 = vmatpush.msra.mxu0 0.0
      %3865 = vmatpush.msra.mxu0 0.0
      %3866 = vmatpush.msra.mxu0 0.0
      %3867 = vmatpush.msra.mxu0 0.0
      %3868 = vmatpush.msra.mxu0 0.0
      %3869 = vmatpush.msra.mxu0 %v3525
      %3870 = vmatpush.msra.mxu0 %v3524
      %3871 = vmatpush.msra.mxu0 %v3523
      %3872 = vmatpush.msra.mxu0 %v3522
      %3873 = vmatmul.f32.gmra.mxu0 %v3855
      %v3874 = vpop.f32.mrf.mxu0
      %v3875 = vadd.f32 0.0, %v3874
      %3876 = vdwg.mxu0
      %3877 = vst [vmem:[#allocation2 + $0x6] sm:$0x3] %v3875
      %v3878 = vld [vmem:[#allocation2 + $0x8] sm:$0x3]
      %3879 = vmatpush.msra.mxu0 0.0
      %3880 = vmatpush.msra.mxu0 0.0
      %3881 = vmatpush.msra.mxu0 0.0
      %3882 = vmatpush.msra.mxu0 0.0
      %3883 = vmatpush.msra.mxu0 0.0
      %3884 = vmatpush.msra.mxu0 0.0
      %3885 = vmatpush.msra.mxu0 0.0
      %3886 = vmatpush.msra.mxu0 0.0
      %3887 = vmatpush.msra.mxu0 0.0
      %3888 = vmatpush.msra.mxu0 0.0
      %3889 = vmatpush.msra.mxu0 0.0
      %3890 = vmatpush.msra.mxu0 0.0
      %3891 = vmatpush.msra.mxu0 %v3518
      %3892 = vmatpush.msra.mxu0 %v3517
      %3893 = vmatpush.msra.mxu0 %v3516
      %3894 = vmatpush.msra.mxu0 %v3515
      %3895 = vmatmul.f32.gmra.mxu0 %v3855
      %v3896 = vpop.f32.mrf.mxu0
      %v3897 = vadd.f32 0.0, %v3896
      %3898 = vdwg.mxu0
      %v3899 = vadd.f32 %v3878, %v3897
      %v3900 = vadd.f32 %v3899, %v3554
      %v3901 = vxor.u32 %v3900, 2147483648
      %v3902 = vmul.f32 %v3901, 1.442695
      %v3903 = vpow.pop %v3902
      %v3904 = vadd.f32 %v3903, 1.0
      %v3905 = vrcp.pop %v3904
      %v3906 = vmul.f32 %v3904, %v3905
      %v3907 = vsub.f32 1.0, %v3906
      %v3908 = vmul.f32 %v3905, %v3907
      %v3909 = vadd.f32 %v3905, %v3908
      %vm3910 = vweird.f32 %v3904
      %vm3911 = vweird.f32 %v3905
      %vm3912 = vmor %vm3910, %vm3911
      %v3913 = vsel %vm3912, %v3905, %v3909
      %v3914 = vand.u32 2147483647, %v3904
      %vm3915 = vcmp.eq.f32.partialorder %v3914, 8.507059e+37
      %v3916 = vand.u32 %v3904, 2147483648
      %v3917 = vor.u32 1.1754944e-38, %v3916
      %v3918 = vsel %vm3915, %v3917, %v3913
      %v3919 = vmul.f32 1.0, %v3918
      %v3920 = vtanh.pop %v3900
      %v3921 = vmul.f32 %v3919, %v3845
      %3923 = vrot.lane.b32.xlu0 %v3920, 64
      %v3924 = vpop.permute.xlu0 %3923
      %v3926 = vmul.f32 %v3919, %v3924
      %3928 = vrot.lane.b32.xlu0 %v3926, 32
      %v3929 = vpop.permute.xlu0 %3928
      %v3931 = vadd.f32 %v3921, %v3929
      %v3932 = vtanh.pop %v3931
      %3934 = vrot.lane.b32.xlu0 %v3932, 64
      %v3935 = vpop.permute.xlu0 %3934
      %v3937 = vmul.f32 %v3919, %v3935
      %3939 = vrot.lane.b32.xlu0 %v3937, 32
      %v3940 = vpop.permute.xlu0 %3939
      %v3941 = vsel %vm709, %v3940, 0
      %3943 = vmatpush.msra.mxu0 0.0
      %3944 = vmatpush.msra.mxu0 0.0
      %3945 = vmatpush.msra.mxu0 0.0
      %3946 = vmatpush.msra.mxu0 0.0
      %3947 = vmatpush.msra.mxu0 0.0
      %3948 = vmatpush.msra.mxu0 0.0
      %3949 = vmatpush.msra.mxu0 0.0
      %3950 = vmatpush.msra.mxu0 0.0
      %3951 = vmatpush.msra.mxu0 0.0
      %3952 = vmatpush.msra.mxu0 0.0
      %3953 = vmatpush.msra.mxu0 0.0
      %3954 = vmatpush.msra.mxu0 0.0
      %3955 = vmatpush.msra.mxu0 %v3525
      %3956 = vmatpush.msra.mxu0 %v3524
      %3957 = vmatpush.msra.mxu0 %v3523
      %3958 = vmatpush.msra.mxu0 %v3522
      %3959 = vmatmul.f32.gmra.mxu0 %v3941
      %v3960 = vpop.f32.mrf.mxu0
      %v3961 = vadd.f32 0.0, %v3960
      %3962 = vdwg.mxu0
      %3963 = vst [vmem:[#allocation2 + $0x8] sm:$0x3] %v3961
      %v3964 = vld [vmem:[#allocation2 + $0xa] sm:$0x3]
      %3965 = vmatpush.msra.mxu0 0.0
      %3966 = vmatpush.msra.mxu0 0.0
      %3967 = vmatpush.msra.mxu0 0.0
      %3968 = vmatpush.msra.mxu0 0.0
      %3969 = vmatpush.msra.mxu0 0.0
      %3970 = vmatpush.msra.mxu0 0.0
      %3971 = vmatpush.msra.mxu0 0.0
      %3972 = vmatpush.msra.mxu0 0.0
      %3973 = vmatpush.msra.mxu0 0.0
      %3974 = vmatpush.msra.mxu0 0.0
      %3975 = vmatpush.msra.mxu0 0.0
      %3976 = vmatpush.msra.mxu0 0.0
      %3977 = vmatpush.msra.mxu0 %v3518
      %3978 = vmatpush.msra.mxu0 %v3517
      %3979 = vmatpush.msra.mxu0 %v3516
      %3980 = vmatpush.msra.mxu0 %v3515
      %3981 = vmatmul.f32.gmra.mxu0 %v3941
      %v3982 = vpop.f32.mrf.mxu0
      %v3983 = vadd.f32 0.0, %v3982
      %3984 = vdwg.mxu0
      %v3985 = vadd.f32 %v3964, %v3983
      %v3986 = vadd.f32 %v3985, %v3554
      %v3987 = vxor.u32 %v3986, 2147483648
      %v3988 = vmul.f32 %v3987, 1.442695
      %v3989 = vpow.pop %v3988
      %v3990 = vadd.f32 %v3989, 1.0
      %v3991 = vrcp.pop %v3990
      %v3992 = vmul.f32 %v3990, %v3991
      %v3993 = vsub.f32 1.0, %v3992
      %v3994 = vmul.f32 %v3991, %v3993
      %v3995 = vadd.f32 %v3991, %v3994
      %vm3996 = vweird.f32 %v3990
      %vm3997 = vweird.f32 %v3991
      %vm3998 = vmor %vm3996, %vm3997
      %v3999 = vsel %vm3998, %v3991, %v3995
      %v4000 = vand.u32 2147483647, %v3990
      %vm4001 = vcmp.eq.f32.partialorder %v4000, 8.507059e+37
      %v4002 = vand.u32 %v3990, 2147483648
      %v4003 = vor.u32 1.1754944e-38, %v4002
      %v4004 = vsel %vm4001, %v4003, %v3999
      %v4005 = vmul.f32 1.0, %v4004
      %v4006 = vtanh.pop %v3986
      %v4007 = vmul.f32 %v4005, %v3931
      %4009 = vrot.lane.b32.xlu0 %v4006, 64
      %v4010 = vpop.permute.xlu0 %4009
      %v4012 = vmul.f32 %v4005, %v4010
      %4014 = vrot.lane.b32.xlu0 %v4012, 32
      %v4015 = vpop.permute.xlu0 %4014
      %v4017 = vadd.f32 %v4007, %v4015
      %v4018 = vtanh.pop %v4017
      %4020 = vrot.lane.b32.xlu0 %v4018, 64
      %v4021 = vpop.permute.xlu0 %4020
      %v4023 = vmul.f32 %v4005, %v4021
      %4025 = vrot.lane.b32.xlu0 %v4023, 32
      %v4026 = vpop.permute.xlu0 %4025
      %v4027 = vsel %vm709, %v4026, 0
      %4029 = vmatpush.msra.mxu0 0.0
      %4030 = vmatpush.msra.mxu0 0.0
      %4031 = vmatpush.msra.mxu0 0.0
      %4032 = vmatpush.msra.mxu0 0.0
      %4033 = vmatpush.msra.mxu0 0.0
      %4034 = vmatpush.msra.mxu0 0.0
      %4035 = vmatpush.msra.mxu0 0.0
      %4036 = vmatpush.msra.mxu0 0.0
      %4037 = vmatpush.msra.mxu0 0.0
      %4038 = vmatpush.msra.mxu0 0.0
      %4039 = vmatpush.msra.mxu0 0.0
      %4040 = vmatpush.msra.mxu0 0.0
      %4041 = vmatpush.msra.mxu0 %v3525
      %4042 = vmatpush.msra.mxu0 %v3524
      %4043 = vmatpush.msra.mxu0 %v3523
      %4044 = vmatpush.msra.mxu0 %v3522
      %4045 = vmatmul.f32.gmra.mxu0 %v4027
      %v4046 = vpop.f32.mrf.mxu0
      %v4047 = vadd.f32 0.0, %v4046
      %4048 = vdwg.mxu0
      %4049 = vst [vmem:[#allocation2 + $0xa] sm:$0x3] %v4047
      %v4050 = vld [vmem:[#allocation2 + $0xc] sm:$0x3]
      %4051 = vmatpush.msra.mxu0 0.0
      %4052 = vmatpush.msra.mxu0 0.0
      %4053 = vmatpush.msra.mxu0 0.0
      %4054 = vmatpush.msra.mxu0 0.0
      %4055 = vmatpush.msra.mxu0 0.0
      %4056 = vmatpush.msra.mxu0 0.0
      %4057 = vmatpush.msra.mxu0 0.0
      %4058 = vmatpush.msra.mxu0 0.0
      %4059 = vmatpush.msra.mxu0 0.0
      %4060 = vmatpush.msra.mxu0 0.0
      %4061 = vmatpush.msra.mxu0 0.0
      %4062 = vmatpush.msra.mxu0 0.0
      %4063 = vmatpush.msra.mxu0 %v3518
      %4064 = vmatpush.msra.mxu0 %v3517
      %4065 = vmatpush.msra.mxu0 %v3516
      %4066 = vmatpush.msra.mxu0 %v3515
      %4067 = vmatmul.f32.gmra.mxu0 %v4027
      %v4068 = vpop.f32.mrf.mxu0
      %v4069 = vadd.f32 0.0, %v4068
      %4070 = vdwg.mxu0
      %v4071 = vadd.f32 %v4050, %v4069
      %v4072 = vadd.f32 %v4071, %v3554
      %v4073 = vxor.u32 %v4072, 2147483648
      %v4074 = vmul.f32 %v4073, 1.442695
      %v4075 = vpow.pop %v4074
      %v4076 = vadd.f32 %v4075, 1.0
      %v4077 = vrcp.pop %v4076
      %v4078 = vmul.f32 %v4076, %v4077
      %v4079 = vsub.f32 1.0, %v4078
      %v4080 = vmul.f32 %v4077, %v4079
      %v4081 = vadd.f32 %v4077, %v4080
      %vm4082 = vweird.f32 %v4076
      %vm4083 = vweird.f32 %v4077
      %vm4084 = vmor %vm4082, %vm4083
      %v4085 = vsel %vm4084, %v4077, %v4081
      %v4086 = vand.u32 2147483647, %v4076
      %vm4087 = vcmp.eq.f32.partialorder %v4086, 8.507059e+37
      %v4088 = vand.u32 %v4076, 2147483648
      %v4089 = vor.u32 1.1754944e-38, %v4088
      %v4090 = vsel %vm4087, %v4089, %v4085
      %v4091 = vmul.f32 1.0, %v4090
      %v4092 = vtanh.pop %v4072
      %v4093 = vmul.f32 %v4091, %v4017
      %4095 = vrot.lane.b32.xlu0 %v4092, 64
      %v4096 = vpop.permute.xlu0 %4095
      %v4098 = vmul.f32 %v4091, %v4096
      %4100 = vrot.lane.b32.xlu0 %v4098, 32
      %v4101 = vpop.permute.xlu0 %4100
      %v4103 = vadd.f32 %v4093, %v4101
      %v4104 = vtanh.pop %v4103
      %4106 = vrot.lane.b32.xlu0 %v4104, 64
      %v4107 = vpop.permute.xlu0 %4106
      %v4109 = vmul.f32 %v4091, %v4107
      %4111 = vrot.lane.b32.xlu0 %v4109, 32
      %v4112 = vpop.permute.xlu0 %4111
      %v4113 = vsel %vm709, %v4112, 0
      %4115 = vmatpush.msra.mxu0 0.0
      %4116 = vmatpush.msra.mxu0 0.0
      %4117 = vmatpush.msra.mxu0 0.0
      %4118 = vmatpush.msra.mxu0 0.0
      %4119 = vmatpush.msra.mxu0 0.0
      %4120 = vmatpush.msra.mxu0 0.0
      %4121 = vmatpush.msra.mxu0 0.0
      %4122 = vmatpush.msra.mxu0 0.0
      %4123 = vmatpush.msra.mxu0 0.0
      %4124 = vmatpush.msra.mxu0 0.0
      %4125 = vmatpush.msra.mxu0 0.0
      %4126 = vmatpush.msra.mxu0 0.0
      %4127 = vmatpush.msra.mxu0 %v3525
      %4128 = vmatpush.msra.mxu0 %v3524
      %4129 = vmatpush.msra.mxu0 %v3523
      %4130 = vmatpush.msra.mxu0 %v3522
      %4131 = vmatmul.f32.gmra.mxu0 %v4113
      %v4132 = vpop.f32.mrf.mxu0
      %v4133 = vadd.f32 0.0, %v4132
      %4134 = vdwg.mxu0
      %4135 = vst [vmem:[#allocation2 + $0xc] sm:$0x3] %v4133
      %v4136 = vld [vmem:[#allocation2 + $0xe] sm:$0x3]
      %4137 = vmatpush.msra.mxu0 0.0
      %4138 = vmatpush.msra.mxu0 0.0
      %4139 = vmatpush.msra.mxu0 0.0
      %4140 = vmatpush.msra.mxu0 0.0
      %4141 = vmatpush.msra.mxu0 0.0
      %4142 = vmatpush.msra.mxu0 0.0
      %4143 = vmatpush.msra.mxu0 0.0
      %4144 = vmatpush.msra.mxu0 0.0
      %4145 = vmatpush.msra.mxu0 0.0
      %4146 = vmatpush.msra.mxu0 0.0
      %4147 = vmatpush.msra.mxu0 0.0
      %4148 = vmatpush.msra.mxu0 0.0
      %4149 = vmatpush.msra.mxu0 %v3518
      %4150 = vmatpush.msra.mxu0 %v3517
      %4151 = vmatpush.msra.mxu0 %v3516
      %4152 = vmatpush.msra.mxu0 %v3515
      %4153 = vmatmul.f32.gmra.mxu0 %v4113
      %v4154 = vpop.f32.mrf.mxu0
      %v4155 = vadd.f32 0.0, %v4154
      %4156 = vdwg.mxu0
      %v4157 = vadd.f32 %v4136, %v4155
      %v4158 = vadd.f32 %v4157, %v3554
      %v4159 = vxor.u32 %v4158, 2147483648
      %v4160 = vmul.f32 %v4159, 1.442695
      %v4161 = vpow.pop %v4160
      %v4162 = vadd.f32 %v4161, 1.0
      %v4163 = vrcp.pop %v4162
      %v4164 = vmul.f32 %v4162, %v4163
      %v4165 = vsub.f32 1.0, %v4164
      %v4166 = vmul.f32 %v4163, %v4165
      %v4167 = vadd.f32 %v4163, %v4166
      %vm4168 = vweird.f32 %v4162
      %vm4169 = vweird.f32 %v4163
      %vm4170 = vmor %vm4168, %vm4169
      %v4171 = vsel %vm4170, %v4163, %v4167
      %v4172 = vand.u32 2147483647, %v4162
      %vm4173 = vcmp.eq.f32.partialorder %v4172, 8.507059e+37
      %v4174 = vand.u32 %v4162, 2147483648
      %v4175 = vor.u32 1.1754944e-38, %v4174
      %v4176 = vsel %vm4173, %v4175, %v4171
      %v4177 = vmul.f32 1.0, %v4176
      %v4178 = vtanh.pop %v4158
      %v4179 = vmul.f32 %v4177, %v4103
      %4181 = vrot.lane.b32.xlu0 %v4178, 64
      %v4182 = vpop.permute.xlu0 %4181
      %v4184 = vmul.f32 %v4177, %v4182
      %4186 = vrot.lane.b32.xlu0 %v4184, 32
      %v4187 = vpop.permute.xlu0 %4186
      %v4189 = vadd.f32 %v4179, %v4187
      %v4190 = vtanh.pop %v4189
      %4192 = vrot.lane.b32.xlu0 %v4190, 64
      %v4193 = vpop.permute.xlu0 %4192
      %v4195 = vmul.f32 %v4177, %v4193
      %4197 = vrot.lane.b32.xlu0 %v4195, 32
      %v4198 = vpop.permute.xlu0 %4197
      %v4199 = vsel %vm709, %v4198, 0
      %4201 = vmatpush.msra.mxu0 0.0
      %4202 = vmatpush.msra.mxu0 0.0
      %4203 = vmatpush.msra.mxu0 0.0
      %4204 = vmatpush.msra.mxu0 0.0
      %4205 = vmatpush.msra.mxu0 0.0
      %4206 = vmatpush.msra.mxu0 0.0
      %4207 = vmatpush.msra.mxu0 0.0
      %4208 = vmatpush.msra.mxu0 0.0
      %4209 = vmatpush.msra.mxu0 0.0
      %4210 = vmatpush.msra.mxu0 0.0
      %4211 = vmatpush.msra.mxu0 0.0
      %4212 = vmatpush.msra.mxu0 0.0
      %4213 = vmatpush.msra.mxu0 %v3525
      %4214 = vmatpush.msra.mxu0 %v3524
      %4215 = vmatpush.msra.mxu0 %v3523
      %4216 = vmatpush.msra.mxu0 %v3522
      %4217 = vmatmul.f32.gmra.mxu0 %v4199
      %v4218 = vpop.f32.mrf.mxu0
      %v4219 = vadd.f32 0.0, %v4218
      %4220 = vdwg.mxu0
      %4221 = vst [vmem:[#allocation2 + $0xe] sm:$0x3] %v4219
      %v4222 = vld [vmem:[#allocation2 + $0x10] sm:$0x3]
      %4223 = vmatpush.msra.mxu0 0.0
      %4224 = vmatpush.msra.mxu0 0.0
      %4225 = vmatpush.msra.mxu0 0.0
      %4226 = vmatpush.msra.mxu0 0.0
      %4227 = vmatpush.msra.mxu0 0.0
      %4228 = vmatpush.msra.mxu0 0.0
      %4229 = vmatpush.msra.mxu0 0.0
      %4230 = vmatpush.msra.mxu0 0.0
      %4231 = vmatpush.msra.mxu0 0.0
      %4232 = vmatpush.msra.mxu0 0.0
      %4233 = vmatpush.msra.mxu0 0.0
      %4234 = vmatpush.msra.mxu0 0.0
      %4235 = vmatpush.msra.mxu0 %v3518
      %4236 = vmatpush.msra.mxu0 %v3517
      %4237 = vmatpush.msra.mxu0 %v3516
      %4238 = vmatpush.msra.mxu0 %v3515
      %4239 = vmatmul.f32.gmra.mxu0 %v4199
      %v4240 = vpop.f32.mrf.mxu0
      %v4241 = vadd.f32 0.0, %v4240
      %4242 = vdwg.mxu0
      %v4243 = vadd.f32 %v4222, %v4241
      %v4244 = vadd.f32 %v4243, %v3554
      %v4245 = vxor.u32 %v4244, 2147483648
      %v4246 = vmul.f32 %v4245, 1.442695
      %v4247 = vpow.pop %v4246
      %v4248 = vadd.f32 %v4247, 1.0
      %v4249 = vrcp.pop %v4248
      %v4250 = vmul.f32 %v4248, %v4249
      %v4251 = vsub.f32 1.0, %v4250
      %v4252 = vmul.f32 %v4249, %v4251
      %v4253 = vadd.f32 %v4249, %v4252
      %vm4254 = vweird.f32 %v4248
      %vm4255 = vweird.f32 %v4249
      %vm4256 = vmor %vm4254, %vm4255
      %v4257 = vsel %vm4256, %v4249, %v4253
      %v4258 = vand.u32 2147483647, %v4248
      %vm4259 = vcmp.eq.f32.partialorder %v4258, 8.507059e+37
      %v4260 = vand.u32 %v4248, 2147483648
      %v4261 = vor.u32 1.1754944e-38, %v4260
      %v4262 = vsel %vm4259, %v4261, %v4257
      %v4263 = vmul.f32 1.0, %v4262
      %v4264 = vtanh.pop %v4244
      %v4265 = vmul.f32 %v4263, %v4189
      %4267 = vrot.lane.b32.xlu0 %v4264, 64
      %v4268 = vpop.permute.xlu0 %4267
      %v4270 = vmul.f32 %v4263, %v4268
      %4272 = vrot.lane.b32.xlu0 %v4270, 32
      %v4273 = vpop.permute.xlu0 %4272
      %v4275 = vadd.f32 %v4265, %v4273
      %v4276 = vtanh.pop %v4275
      %4278 = vrot.lane.b32.xlu0 %v4276, 64
      %v4279 = vpop.permute.xlu0 %4278
      %v4281 = vmul.f32 %v4263, %v4279
      %4283 = vrot.lane.b32.xlu0 %v4281, 32
      %v4284 = vpop.permute.xlu0 %4283
      %v4285 = vsel %vm709, %v4284, 0
      %4287 = vmatpush.msra.mxu0 0.0
      %4288 = vmatpush.msra.mxu0 0.0
      %4289 = vmatpush.msra.mxu0 0.0
      %4290 = vmatpush.msra.mxu0 0.0
      %4291 = vmatpush.msra.mxu0 0.0
      %4292 = vmatpush.msra.mxu0 0.0
      %4293 = vmatpush.msra.mxu0 0.0
      %4294 = vmatpush.msra.mxu0 0.0
      %4295 = vmatpush.msra.mxu0 0.0
      %4296 = vmatpush.msra.mxu0 0.0
      %4297 = vmatpush.msra.mxu0 0.0
      %4298 = vmatpush.msra.mxu0 0.0
      %4299 = vmatpush.msra.mxu0 %v3525
      %4300 = vmatpush.msra.mxu0 %v3524
      %4301 = vmatpush.msra.mxu0 %v3523
      %4302 = vmatpush.msra.mxu0 %v3522
      %4303 = vmatmul.f32.gmra.mxu0 %v4285
      %v4304 = vpop.f32.mrf.mxu0
      %v4305 = vadd.f32 0.0, %v4304
      %4306 = vdwg.mxu0
      %4307 = vst [vmem:[#allocation2 + $0x10] sm:$0x3] %v4305
      %v4308 = vld [vmem:[#allocation2 + $0x12] sm:$0x3]
      %4309 = vmatpush.msra.mxu0 0.0
      %4310 = vmatpush.msra.mxu0 0.0
      %4311 = vmatpush.msra.mxu0 0.0
      %4312 = vmatpush.msra.mxu0 0.0
      %4313 = vmatpush.msra.mxu0 0.0
      %4314 = vmatpush.msra.mxu0 0.0
      %4315 = vmatpush.msra.mxu0 0.0
      %4316 = vmatpush.msra.mxu0 0.0
      %4317 = vmatpush.msra.mxu0 0.0
      %4318 = vmatpush.msra.mxu0 0.0
      %4319 = vmatpush.msra.mxu0 0.0
      %4320 = vmatpush.msra.mxu0 0.0
      %4321 = vmatpush.msra.mxu0 %v3518
      %4322 = vmatpush.msra.mxu0 %v3517
      %4323 = vmatpush.msra.mxu0 %v3516
      %4324 = vmatpush.msra.mxu0 %v3515
      %4325 = vmatmul.f32.gmra.mxu0 %v4285
      %v4326 = vpop.f32.mrf.mxu0
      %v4327 = vadd.f32 0.0, %v4326
      %4328 = vdwg.mxu0
      %v4329 = vadd.f32 %v4308, %v4327
      %v4330 = vadd.f32 %v4329, %v3554
      %v4331 = vxor.u32 %v4330, 2147483648
      %v4332 = vmul.f32 %v4331, 1.442695
      %v4333 = vpow.pop %v4332
      %v4334 = vadd.f32 %v4333, 1.0
      %v4335 = vrcp.pop %v4334
      %v4336 = vmul.f32 %v4334, %v4335
      %v4337 = vsub.f32 1.0, %v4336
      %v4338 = vmul.f32 %v4335, %v4337
      %v4339 = vadd.f32 %v4335, %v4338
      %vm4340 = vweird.f32 %v4334
      %vm4341 = vweird.f32 %v4335
      %vm4342 = vmor %vm4340, %vm4341
      %v4343 = vsel %vm4342, %v4335, %v4339
      %v4344 = vand.u32 2147483647, %v4334
      %vm4345 = vcmp.eq.f32.partialorder %v4344, 8.507059e+37
      %v4346 = vand.u32 %v4334, 2147483648
      %v4347 = vor.u32 1.1754944e-38, %v4346
      %v4348 = vsel %vm4345, %v4347, %v4343
      %v4349 = vmul.f32 1.0, %v4348
      %v4350 = vtanh.pop %v4330
      %v4351 = vmul.f32 %v4349, %v4275
      %4353 = vrot.lane.b32.xlu0 %v4350, 64
      %v4354 = vpop.permute.xlu0 %4353
      %v4356 = vmul.f32 %v4349, %v4354
      %4358 = vrot.lane.b32.xlu0 %v4356, 32
      %v4359 = vpop.permute.xlu0 %4358
      %v4361 = vadd.f32 %v4351, %v4359
      %v4362 = vtanh.pop %v4361
      %4364 = vrot.lane.b32.xlu0 %v4362, 64
      %v4365 = vpop.permute.xlu0 %4364
      %v4367 = vmul.f32 %v4349, %v4365
      %4369 = vrot.lane.b32.xlu0 %v4367, 32
      %v4370 = vpop.permute.xlu0 %4369
      %v4371 = vsel %vm709, %v4370, 0
      %4373 = vmatpush.msra.mxu0 0.0
      %4374 = vmatpush.msra.mxu0 0.0
      %4375 = vmatpush.msra.mxu0 0.0
      %4376 = vmatpush.msra.mxu0 0.0
      %4377 = vmatpush.msra.mxu0 0.0
      %4378 = vmatpush.msra.mxu0 0.0
      %4379 = vmatpush.msra.mxu0 0.0
      %4380 = vmatpush.msra.mxu0 0.0
      %4381 = vmatpush.msra.mxu0 0.0
      %4382 = vmatpush.msra.mxu0 0.0
      %4383 = vmatpush.msra.mxu0 0.0
      %4384 = vmatpush.msra.mxu0 0.0
      %4385 = vmatpush.msra.mxu0 %v3525
      %4386 = vmatpush.msra.mxu0 %v3524
      %4387 = vmatpush.msra.mxu0 %v3523
      %4388 = vmatpush.msra.mxu0 %v3522
      %4389 = vmatmul.f32.gmra.mxu0 %v4371
      %v4390 = vpop.f32.mrf.mxu0
      %v4391 = vadd.f32 0.0, %v4390
      %4392 = vdwg.mxu0
      %4393 = vst [vmem:[#allocation2 + $0x12] sm:$0x3] %v4391
      %v4394 = vld [vmem:[#allocation2 + $0x14] sm:$0x3]
      %4395 = vmatpush.msra.mxu0 0.0
      %4396 = vmatpush.msra.mxu0 0.0
      %4397 = vmatpush.msra.mxu0 0.0
      %4398 = vmatpush.msra.mxu0 0.0
      %4399 = vmatpush.msra.mxu0 0.0
      %4400 = vmatpush.msra.mxu0 0.0
      %4401 = vmatpush.msra.mxu0 0.0
      %4402 = vmatpush.msra.mxu0 0.0
      %4403 = vmatpush.msra.mxu0 0.0
      %4404 = vmatpush.msra.mxu0 0.0
      %4405 = vmatpush.msra.mxu0 0.0
      %4406 = vmatpush.msra.mxu0 0.0
      %4407 = vmatpush.msra.mxu0 %v3518
      %4408 = vmatpush.msra.mxu0 %v3517
      %4409 = vmatpush.msra.mxu0 %v3516
      %4410 = vmatpush.msra.mxu0 %v3515
      %4411 = vmatmul.f32.gmra.mxu0 %v4371
      %v4412 = vpop.f32.mrf.mxu0
      %v4413 = vadd.f32 0.0, %v4412
      %4414 = vdwg.mxu0
      %v4415 = vadd.f32 %v4394, %v4413
      %v4416 = vadd.f32 %v4415, %v3554
      %v4417 = vxor.u32 %v4416, 2147483648
      %v4418 = vmul.f32 %v4417, 1.442695
      %v4419 = vpow.pop %v4418
      %v4420 = vadd.f32 %v4419, 1.0
      %v4421 = vrcp.pop %v4420
      %v4422 = vmul.f32 %v4420, %v4421
      %v4423 = vsub.f32 1.0, %v4422
      %v4424 = vmul.f32 %v4421, %v4423
      %v4425 = vadd.f32 %v4421, %v4424
      %vm4426 = vweird.f32 %v4420
      %vm4427 = vweird.f32 %v4421
      %vm4428 = vmor %vm4426, %vm4427
      %v4429 = vsel %vm4428, %v4421, %v4425
      %v4430 = vand.u32 2147483647, %v4420
      %vm4431 = vcmp.eq.f32.partialorder %v4430, 8.507059e+37
      %v4432 = vand.u32 %v4420, 2147483648
      %v4433 = vor.u32 1.1754944e-38, %v4432
      %v4434 = vsel %vm4431, %v4433, %v4429
      %v4435 = vmul.f32 1.0, %v4434
      %v4436 = vtanh.pop %v4416
      %v4437 = vmul.f32 %v4435, %v4361
      %4439 = vrot.lane.b32.xlu0 %v4436, 64
      %v4440 = vpop.permute.xlu0 %4439
      %v4442 = vmul.f32 %v4435, %v4440
      %4444 = vrot.lane.b32.xlu0 %v4442, 32
      %v4445 = vpop.permute.xlu0 %4444
      %v4447 = vadd.f32 %v4437, %v4445
      %v4448 = vtanh.pop %v4447
      %4450 = vrot.lane.b32.xlu0 %v4448, 64
      %v4451 = vpop.permute.xlu0 %4450
      %v4453 = vmul.f32 %v4435, %v4451
      %4455 = vrot.lane.b32.xlu0 %v4453, 32
      %v4456 = vpop.permute.xlu0 %4455
      %v4457 = vsel %vm709, %v4456, 0
      %4459 = vmatpush.msra.mxu0 0.0
      %4460 = vmatpush.msra.mxu0 0.0
      %4461 = vmatpush.msra.mxu0 0.0
      %4462 = vmatpush.msra.mxu0 0.0
      %4463 = vmatpush.msra.mxu0 0.0
      %4464 = vmatpush.msra.mxu0 0.0
      %4465 = vmatpush.msra.mxu0 0.0
      %4466 = vmatpush.msra.mxu0 0.0
      %4467 = vmatpush.msra.mxu0 0.0
      %4468 = vmatpush.msra.mxu0 0.0
      %4469 = vmatpush.msra.mxu0 0.0
      %4470 = vmatpush.msra.mxu0 0.0
      %4471 = vmatpush.msra.mxu0 %v3525
      %4472 = vmatpush.msra.mxu0 %v3524
      %4473 = vmatpush.msra.mxu0 %v3523
      %4474 = vmatpush.msra.mxu0 %v3522
      %4475 = vmatmul.f32.gmra.mxu0 %v4457
      %v4476 = vpop.f32.mrf.mxu0
      %v4477 = vadd.f32 0.0, %v4476
      %4478 = vdwg.mxu0
      %4479 = vst [vmem:[#allocation2 + $0x14] sm:$0x3] %v4477
      %v4480 = vld [vmem:[#allocation2 + $0x16] sm:$0x3]
      %4481 = vmatpush.msra.mxu0 0.0
      %4482 = vmatpush.msra.mxu0 0.0
      %4483 = vmatpush.msra.mxu0 0.0
      %4484 = vmatpush.msra.mxu0 0.0
      %4485 = vmatpush.msra.mxu0 0.0
      %4486 = vmatpush.msra.mxu0 0.0
      %4487 = vmatpush.msra.mxu0 0.0
      %4488 = vmatpush.msra.mxu0 0.0
      %4489 = vmatpush.msra.mxu0 0.0
      %4490 = vmatpush.msra.mxu0 0.0
      %4491 = vmatpush.msra.mxu0 0.0
      %4492 = vmatpush.msra.mxu0 0.0
      %4493 = vmatpush.msra.mxu0 %v3518
      %4494 = vmatpush.msra.mxu0 %v3517
      %4495 = vmatpush.msra.mxu0 %v3516
      %4496 = vmatpush.msra.mxu0 %v3515
      %4497 = vmatmul.f32.gmra.mxu0 %v4457
      %v4498 = vpop.f32.mrf.mxu0
      %v4499 = vadd.f32 0.0, %v4498
      %4500 = vdwg.mxu0
      %v4501 = vadd.f32 %v4480, %v4499
      %v4502 = vadd.f32 %v4501, %v3554
      %v4503 = vxor.u32 %v4502, 2147483648
      %v4504 = vmul.f32 %v4503, 1.442695
      %v4505 = vpow.pop %v4504
      %v4506 = vadd.f32 %v4505, 1.0
      %v4507 = vrcp.pop %v4506
      %v4508 = vmul.f32 %v4506, %v4507
      %v4509 = vsub.f32 1.0, %v4508
      %v4510 = vmul.f32 %v4507, %v4509
      %v4511 = vadd.f32 %v4507, %v4510
      %vm4512 = vweird.f32 %v4506
      %vm4513 = vweird.f32 %v4507
      %vm4514 = vmor %vm4512, %vm4513
      %v4515 = vsel %vm4514, %v4507, %v4511
      %v4516 = vand.u32 2147483647, %v4506
      %vm4517 = vcmp.eq.f32.partialorder %v4516, 8.507059e+37
      %v4518 = vand.u32 %v4506, 2147483648
      %v4519 = vor.u32 1.1754944e-38, %v4518
      %v4520 = vsel %vm4517, %v4519, %v4515
      %v4521 = vmul.f32 1.0, %v4520
      %v4522 = vtanh.pop %v4502
      %v4523 = vmul.f32 %v4521, %v4447
      %4525 = vrot.lane.b32.xlu0 %v4522, 64
      %v4526 = vpop.permute.xlu0 %4525
      %v4528 = vmul.f32 %v4521, %v4526
      %4530 = vrot.lane.b32.xlu0 %v4528, 32
      %v4531 = vpop.permute.xlu0 %4530
      %v4533 = vadd.f32 %v4523, %v4531
      %v4534 = vtanh.pop %v4533
      %4536 = vrot.lane.b32.xlu0 %v4534, 64
      %v4537 = vpop.permute.xlu0 %4536
      %v4539 = vmul.f32 %v4521, %v4537
      %4541 = vrot.lane.b32.xlu0 %v4539, 32
      %v4542 = vpop.permute.xlu0 %4541
      %v4543 = vsel %vm709, %v4542, 0
      %4545 = vmatpush.msra.mxu0 0.0
      %4546 = vmatpush.msra.mxu0 0.0
      %4547 = vmatpush.msra.mxu0 0.0
      %4548 = vmatpush.msra.mxu0 0.0
      %4549 = vmatpush.msra.mxu0 0.0
      %4550 = vmatpush.msra.mxu0 0.0
      %4551 = vmatpush.msra.mxu0 0.0
      %4552 = vmatpush.msra.mxu0 0.0
      %4553 = vmatpush.msra.mxu0 0.0
      %4554 = vmatpush.msra.mxu0 0.0
      %4555 = vmatpush.msra.mxu0 0.0
      %4556 = vmatpush.msra.mxu0 0.0
      %4557 = vmatpush.msra.mxu0 %v3525
      %4558 = vmatpush.msra.mxu0 %v3524
      %4559 = vmatpush.msra.mxu0 %v3523
      %4560 = vmatpush.msra.mxu0 %v3522
      %4561 = vmatmul.f32.gmra.mxu0 %v4543
      %v4562 = vpop.f32.mrf.mxu0
      %v4563 = vadd.f32 0.0, %v4562
      %4564 = vdwg.mxu0
      %4565 = vst [vmem:[#allocation2 + $0x16] sm:$0x3] %v4563
      %v4566 = vld [vmem:[#allocation2 + $0x18] sm:$0x3]
      %4567 = vmatpush.msra.mxu0 0.0
      %4568 = vmatpush.msra.mxu0 0.0
      %4569 = vmatpush.msra.mxu0 0.0
      %4570 = vmatpush.msra.mxu0 0.0
      %4571 = vmatpush.msra.mxu0 0.0
      %4572 = vmatpush.msra.mxu0 0.0
      %4573 = vmatpush.msra.mxu0 0.0
      %4574 = vmatpush.msra.mxu0 0.0
      %4575 = vmatpush.msra.mxu0 0.0
      %4576 = vmatpush.msra.mxu0 0.0
      %4577 = vmatpush.msra.mxu0 0.0
      %4578 = vmatpush.msra.mxu0 0.0
      %4579 = vmatpush.msra.mxu0 %v3518
      %4580 = vmatpush.msra.mxu0 %v3517
      %4581 = vmatpush.msra.mxu0 %v3516
      %4582 = vmatpush.msra.mxu0 %v3515
      %4583 = vmatmul.f32.gmra.mxu0 %v4543
      %v4584 = vpop.f32.mrf.mxu0
      %v4585 = vadd.f32 0.0, %v4584
      %4586 = vdwg.mxu0
      %v4587 = vadd.f32 %v4566, %v4585
      %v4588 = vadd.f32 %v4587, %v3554
      %v4589 = vxor.u32 %v4588, 2147483648
      %v4590 = vmul.f32 %v4589, 1.442695
      %v4591 = vpow.pop %v4590
      %v4592 = vadd.f32 %v4591, 1.0
      %v4593 = vrcp.pop %v4592
      %v4594 = vmul.f32 %v4592, %v4593
      %v4595 = vsub.f32 1.0, %v4594
      %v4596 = vmul.f32 %v4593, %v4595
      %v4597 = vadd.f32 %v4593, %v4596
      %vm4598 = vweird.f32 %v4592
      %vm4599 = vweird.f32 %v4593
      %vm4600 = vmor %vm4598, %vm4599
      %v4601 = vsel %vm4600, %v4593, %v4597
      %v4602 = vand.u32 2147483647, %v4592
      %vm4603 = vcmp.eq.f32.partialorder %v4602, 8.507059e+37
      %v4604 = vand.u32 %v4592, 2147483648
      %v4605 = vor.u32 1.1754944e-38, %v4604
      %v4606 = vsel %vm4603, %v4605, %v4601
      %v4607 = vmul.f32 1.0, %v4606
      %v4608 = vtanh.pop %v4588
      %v4609 = vmul.f32 %v4607, %v4533
      %4611 = vrot.lane.b32.xlu0 %v4608, 64
      %v4612 = vpop.permute.xlu0 %4611
      %v4614 = vmul.f32 %v4607, %v4612
      %4616 = vrot.lane.b32.xlu0 %v4614, 32
      %v4617 = vpop.permute.xlu0 %4616
      %v4619 = vadd.f32 %v4609, %v4617
      %v4620 = vtanh.pop %v4619
      %4622 = vrot.lane.b32.xlu0 %v4620, 64
      %v4623 = vpop.permute.xlu0 %4622
      %v4625 = vmul.f32 %v4607, %v4623
      %4627 = vrot.lane.b32.xlu0 %v4625, 32
      %v4628 = vpop.permute.xlu0 %4627
      %v4629 = vsel %vm709, %v4628, 0
      %4631 = vmatpush.msra.mxu0 0.0
      %4632 = vmatpush.msra.mxu0 0.0
      %4633 = vmatpush.msra.mxu0 0.0
      %4634 = vmatpush.msra.mxu0 0.0
      %4635 = vmatpush.msra.mxu0 0.0
      %4636 = vmatpush.msra.mxu0 0.0
      %4637 = vmatpush.msra.mxu0 0.0
      %4638 = vmatpush.msra.mxu0 0.0
      %4639 = vmatpush.msra.mxu0 0.0
      %4640 = vmatpush.msra.mxu0 0.0
      %4641 = vmatpush.msra.mxu0 0.0
      %4642 = vmatpush.msra.mxu0 0.0
      %4643 = vmatpush.msra.mxu0 %v3525
      %4644 = vmatpush.msra.mxu0 %v3524
      %4645 = vmatpush.msra.mxu0 %v3523
      %4646 = vmatpush.msra.mxu0 %v3522
      %4647 = vmatmul.f32.gmra.mxu0 %v4629
      %v4648 = vpop.f32.mrf.mxu0
      %v4649 = vadd.f32 0.0, %v4648
      %4650 = vdwg.mxu0
      %4651 = vst [vmem:[#allocation2 + $0x18] sm:$0x3] %v4649
      %v4652 = vld [vmem:[#allocation2 + $0x1a] sm:$0x3]
      %4653 = vmatpush.msra.mxu0 0.0
      %4654 = vmatpush.msra.mxu0 0.0
      %4655 = vmatpush.msra.mxu0 0.0
      %4656 = vmatpush.msra.mxu0 0.0
      %4657 = vmatpush.msra.mxu0 0.0
      %4658 = vmatpush.msra.mxu0 0.0
      %4659 = vmatpush.msra.mxu0 0.0
      %4660 = vmatpush.msra.mxu0 0.0
      %4661 = vmatpush.msra.mxu0 0.0
      %4662 = vmatpush.msra.mxu0 0.0
      %4663 = vmatpush.msra.mxu0 0.0
      %4664 = vmatpush.msra.mxu0 0.0
      %4665 = vmatpush.msra.mxu0 %v3518
      %4666 = vmatpush.msra.mxu0 %v3517
      %4667 = vmatpush.msra.mxu0 %v3516
      %4668 = vmatpush.msra.mxu0 %v3515
      %4669 = vmatmul.f32.gmra.mxu0 %v4629
      %v4670 = vpop.f32.mrf.mxu0
      %v4671 = vadd.f32 0.0, %v4670
      %4672 = vdwg.mxu0
      %v4673 = vadd.f32 %v4652, %v4671
      %v4674 = vadd.f32 %v4673, %v3554
      %v4675 = vxor.u32 %v4674, 2147483648
      %v4676 = vmul.f32 %v4675, 1.442695
      %v4677 = vpow.pop %v4676
      %v4678 = vadd.f32 %v4677, 1.0
      %v4679 = vrcp.pop %v4678
      %v4680 = vmul.f32 %v4678, %v4679
      %v4681 = vsub.f32 1.0, %v4680
      %v4682 = vmul.f32 %v4679, %v4681
      %v4683 = vadd.f32 %v4679, %v4682
      %vm4684 = vweird.f32 %v4678
      %vm4685 = vweird.f32 %v4679
      %vm4686 = vmor %vm4684, %vm4685
      %v4687 = vsel %vm4686, %v4679, %v4683
      %v4688 = vand.u32 2147483647, %v4678
      %vm4689 = vcmp.eq.f32.partialorder %v4688, 8.507059e+37
      %v4690 = vand.u32 %v4678, 2147483648
      %v4691 = vor.u32 1.1754944e-38, %v4690
      %v4692 = vsel %vm4689, %v4691, %v4687
      %v4693 = vmul.f32 1.0, %v4692
      %v4694 = vtanh.pop %v4674
      %v4695 = vmul.f32 %v4693, %v4619
      %4697 = vrot.lane.b32.xlu0 %v4694, 64
      %v4698 = vpop.permute.xlu0 %4697
      %v4700 = vmul.f32 %v4693, %v4698
      %4702 = vrot.lane.b32.xlu0 %v4700, 32
      %v4703 = vpop.permute.xlu0 %4702
      %v4705 = vadd.f32 %v4695, %v4703
      %v4706 = vtanh.pop %v4705
      %4708 = vrot.lane.b32.xlu0 %v4706, 64
      %v4709 = vpop.permute.xlu0 %4708
      %v4711 = vmul.f32 %v4693, %v4709
      %4713 = vrot.lane.b32.xlu0 %v4711, 32
      %v4714 = vpop.permute.xlu0 %4713
      %v4715 = vsel %vm709, %v4714, 0
      %4717 = vmatpush.msra.mxu0 0.0
      %4718 = vmatpush.msra.mxu0 0.0
      %4719 = vmatpush.msra.mxu0 0.0
      %4720 = vmatpush.msra.mxu0 0.0
      %4721 = vmatpush.msra.mxu0 0.0
      %4722 = vmatpush.msra.mxu0 0.0
      %4723 = vmatpush.msra.mxu0 0.0
      %4724 = vmatpush.msra.mxu0 0.0
      %4725 = vmatpush.msra.mxu0 0.0
      %4726 = vmatpush.msra.mxu0 0.0
      %4727 = vmatpush.msra.mxu0 0.0
      %4728 = vmatpush.msra.mxu0 0.0
      %4729 = vmatpush.msra.mxu0 %v3525
      %4730 = vmatpush.msra.mxu0 %v3524
      %4731 = vmatpush.msra.mxu0 %v3523
      %4732 = vmatpush.msra.mxu0 %v3522
      %4733 = vmatmul.f32.gmra.mxu0 %v4715
      %v4734 = vpop.f32.mrf.mxu0
      %v4735 = vadd.f32 0.0, %v4734
      %4736 = vdwg.mxu0
      %4737 = vst [vmem:[#allocation2 + $0x1a] sm:$0x3] %v4735
      %v4738 = vld [vmem:[#allocation2 + $0x1c] sm:$0x3]
      %4739 = vmatpush.msra.mxu0 0.0
      %4740 = vmatpush.msra.mxu0 0.0
      %4741 = vmatpush.msra.mxu0 0.0
      %4742 = vmatpush.msra.mxu0 0.0
      %4743 = vmatpush.msra.mxu0 0.0
      %4744 = vmatpush.msra.mxu0 0.0
      %4745 = vmatpush.msra.mxu0 0.0
      %4746 = vmatpush.msra.mxu0 0.0
      %4747 = vmatpush.msra.mxu0 0.0
      %4748 = vmatpush.msra.mxu0 0.0
      %4749 = vmatpush.msra.mxu0 0.0
      %4750 = vmatpush.msra.mxu0 0.0
      %4751 = vmatpush.msra.mxu0 %v3518
      %4752 = vmatpush.msra.mxu0 %v3517
      %4753 = vmatpush.msra.mxu0 %v3516
      %4754 = vmatpush.msra.mxu0 %v3515
      %4755 = vmatmul.f32.gmra.mxu0 %v4715
      %v4756 = vpop.f32.mrf.mxu0
      %v4757 = vadd.f32 0.0, %v4756
      %4758 = vdwg.mxu0
      %v4759 = vadd.f32 %v4738, %v4757
      %v4760 = vadd.f32 %v4759, %v3554
      %v4761 = vxor.u32 %v4760, 2147483648
      %v4762 = vmul.f32 %v4761, 1.442695
      %v4763 = vpow.pop %v4762
      %v4764 = vadd.f32 %v4763, 1.0
      %v4765 = vrcp.pop %v4764
      %v4766 = vmul.f32 %v4764, %v4765
      %v4767 = vsub.f32 1.0, %v4766
      %v4768 = vmul.f32 %v4765, %v4767
      %v4769 = vadd.f32 %v4765, %v4768
      %vm4770 = vweird.f32 %v4764
      %vm4771 = vweird.f32 %v4765
      %vm4772 = vmor %vm4770, %vm4771
      %v4773 = vsel %vm4772, %v4765, %v4769
      %v4774 = vand.u32 2147483647, %v4764
      %vm4775 = vcmp.eq.f32.partialorder %v4774, 8.507059e+37
      %v4776 = vand.u32 %v4764, 2147483648
      %v4777 = vor.u32 1.1754944e-38, %v4776
      %v4778 = vsel %vm4775, %v4777, %v4773
      %v4779 = vmul.f32 1.0, %v4778
      %v4780 = vtanh.pop %v4760
      %v4781 = vmul.f32 %v4779, %v4705
      %4783 = vrot.lane.b32.xlu0 %v4780, 64
      %v4784 = vpop.permute.xlu0 %4783
      %v4786 = vmul.f32 %v4779, %v4784
      %4788 = vrot.lane.b32.xlu0 %v4786, 32
      %v4789 = vpop.permute.xlu0 %4788
      %v4791 = vadd.f32 %v4781, %v4789
      %v4792 = vtanh.pop %v4791
      %4794 = vrot.lane.b32.xlu0 %v4792, 64
      %v4795 = vpop.permute.xlu0 %4794
      %v4797 = vmul.f32 %v4779, %v4795
      %4799 = vrot.lane.b32.xlu0 %v4797, 32
      %v4800 = vpop.permute.xlu0 %4799
      %v4801 = vsel %vm709, %v4800, 0
      %4803 = vmatpush.msra.mxu0 0.0
      %4804 = vmatpush.msra.mxu0 0.0
      %4805 = vmatpush.msra.mxu0 0.0
      %4806 = vmatpush.msra.mxu0 0.0
      %4807 = vmatpush.msra.mxu0 0.0
      %4808 = vmatpush.msra.mxu0 0.0
      %4809 = vmatpush.msra.mxu0 0.0
      %4810 = vmatpush.msra.mxu0 0.0
      %4811 = vmatpush.msra.mxu0 0.0
      %4812 = vmatpush.msra.mxu0 0.0
      %4813 = vmatpush.msra.mxu0 0.0
      %4814 = vmatpush.msra.mxu0 0.0
      %4815 = vmatpush.msra.mxu0 %v3525
      %4816 = vmatpush.msra.mxu0 %v3524
      %4817 = vmatpush.msra.mxu0 %v3523
      %4818 = vmatpush.msra.mxu0 %v3522
      %4819 = vmatmul.f32.gmra.mxu0 %v4801
      %v4820 = vpop.f32.mrf.mxu0
      %v4821 = vadd.f32 0.0, %v4820
      %4822 = vdwg.mxu0
      %4823 = vst [vmem:[#allocation2 + $0x1c] sm:$0x3] %v4821
      %v4824 = vld [vmem:[#allocation2 + $0x1e] sm:$0x3]
      %4825 = vmatpush.msra.mxu0 0.0
      %4826 = vmatpush.msra.mxu0 0.0
      %4827 = vmatpush.msra.mxu0 0.0
      %4828 = vmatpush.msra.mxu0 0.0
      %4829 = vmatpush.msra.mxu0 0.0
      %4830 = vmatpush.msra.mxu0 0.0
      %4831 = vmatpush.msra.mxu0 0.0
      %4832 = vmatpush.msra.mxu0 0.0
      %4833 = vmatpush.msra.mxu0 0.0
      %4834 = vmatpush.msra.mxu0 0.0
      %4835 = vmatpush.msra.mxu0 0.0
      %4836 = vmatpush.msra.mxu0 0.0
      %4837 = vmatpush.msra.mxu0 %v3518
      %4838 = vmatpush.msra.mxu0 %v3517
      %4839 = vmatpush.msra.mxu0 %v3516
      %4840 = vmatpush.msra.mxu0 %v3515
      %4841 = vmatmul.f32.gmra.mxu0 %v4801
      %v4842 = vpop.f32.mrf.mxu0
      %v4843 = vadd.f32 0.0, %v4842
      %4844 = vdwg.mxu0
      %v4845 = vadd.f32 %v4824, %v4843
      %v4846 = vadd.f32 %v4845, %v3554
      %v4847 = vxor.u32 %v4846, 2147483648
      %v4848 = vmul.f32 %v4847, 1.442695
      %v4849 = vpow.pop %v4848
      %v4850 = vadd.f32 %v4849, 1.0
      %v4851 = vrcp.pop %v4850
      %v4852 = vmul.f32 %v4850, %v4851
      %v4853 = vsub.f32 1.0, %v4852
      %v4854 = vmul.f32 %v4851, %v4853
      %v4855 = vadd.f32 %v4851, %v4854
      %vm4856 = vweird.f32 %v4850
      %vm4857 = vweird.f32 %v4851
      %vm4858 = vmor %vm4856, %vm4857
      %v4859 = vsel %vm4858, %v4851, %v4855
      %v4860 = vand.u32 2147483647, %v4850
      %vm4861 = vcmp.eq.f32.partialorder %v4860, 8.507059e+37
      %v4862 = vand.u32 %v4850, 2147483648
      %v4863 = vor.u32 1.1754944e-38, %v4862
      %v4864 = vsel %vm4861, %v4863, %v4859
      %v4865 = vmul.f32 1.0, %v4864
      %v4866 = vtanh.pop %v4846
      %v4867 = vmul.f32 %v4865, %v4791
      %4869 = vrot.lane.b32.xlu0 %v4866, 64
      %v4870 = vpop.permute.xlu0 %4869
      %v4872 = vmul.f32 %v4865, %v4870
      %4874 = vrot.lane.b32.xlu0 %v4872, 32
      %v4875 = vpop.permute.xlu0 %4874
      %v4877 = vadd.f32 %v4867, %v4875
      %v4878 = vtanh.pop %v4877
      %4880 = vrot.lane.b32.xlu0 %v4878, 64
      %v4881 = vpop.permute.xlu0 %4880
      %v4883 = vmul.f32 %v4865, %v4881
      %4885 = vrot.lane.b32.xlu0 %v4883, 32
      %v4886 = vpop.permute.xlu0 %4885
      %v4887 = vsel %vm709, %v4886, 0
      %4889 = vmatpush.msra.mxu0 0.0
      %4890 = vmatpush.msra.mxu0 0.0
      %4891 = vmatpush.msra.mxu0 0.0
      %4892 = vmatpush.msra.mxu0 0.0
      %4893 = vmatpush.msra.mxu0 0.0
      %4894 = vmatpush.msra.mxu0 0.0
      %4895 = vmatpush.msra.mxu0 0.0
      %4896 = vmatpush.msra.mxu0 0.0
      %4897 = vmatpush.msra.mxu0 0.0
      %4898 = vmatpush.msra.mxu0 0.0
      %4899 = vmatpush.msra.mxu0 0.0
      %4900 = vmatpush.msra.mxu0 0.0
      %4901 = vmatpush.msra.mxu0 %v3525
      %4902 = vmatpush.msra.mxu0 %v3524
      %4903 = vmatpush.msra.mxu0 %v3523
      %4904 = vmatpush.msra.mxu0 %v3522
      %4905 = vmatmul.f32.gmra.mxu0 %v4887
      %v4906 = vpop.f32.mrf.mxu0
      %v4907 = vadd.f32 0.0, %v4906
      %4908 = vdwg.mxu0
      %4909 = vst [vmem:[#allocation2 + $0x1e] sm:$0x3] %v4907
    $region102: #{neural_net_forward.1} parent=1 // loop_footer
      %s3512 = sadd.s32 1, %s3508
    $region103: #{neural_net_forward.1} parent=1 // loop_footer_branch
      %3507 = sbr.rel target = $region99
    $region104: #{neural_net_forward.1} parent=1 // loop_exit
      _
    %v4910 = vld [vmem:[#allocation2] sm:$0xff]
    %v4911 = vld [vmem:[#allocation2 + $0x8] sm:$0xff]
    %v4912 = vld [vmem:[#allocation2 + $0x10] sm:$0xff]
    %v4913 = vld [vmem:[#allocation2 + $0x18] sm:$0xff]
    %v4914 = vld [vmem:[#allocation14] sm:$0xff]
    %v4915 = vld [vmem:[#allocation14 + $0x8] sm:$0xff]
    %v4916 = vld [vmem:[#allocation14 + $0x10] sm:$0xff]
    %v4917 = vld [vmem:[#allocation14 + $0x18] sm:$0xff]
    %4919 = vset.pattern.permute.xlu0 0
    %4920 = vperm.xlu0 %4919, %v4910
    %v4921 = vpop.permute.xlu0 %4920
    %4924 = vset.pattern.permute.xlu0 0
    %4925 = vperm.xlu0 %4924, %v4911
    %v4926 = vpop.permute.xlu0 %4925
    %4929 = vset.pattern.permute.xlu0 0
    %4930 = vperm.xlu0 %4929, %v4912
    %v4931 = vpop.permute.xlu0 %4930
    %4934 = vset.pattern.permute.xlu0 0
    %4935 = vperm.xlu0 %4934, %v4913
    %v4936 = vpop.permute.xlu0 %4935
    %v4938 = vmul.f32 %v4914, %v4921
    %v4939 = vmul.f32 %v4915, %v4926
    %v4940 = vmul.f32 %v4916, %v4931
    %v4941 = vmul.f32 %v4917, %v4936
    %vm4942 = vcmask 64512
    %v4943 = vsel %vm4942, %v4938, 0.0
    %v4944 = vsel %vm4942, %v4939, 0.0
    %v4945 = vadd.f32 %v4943, %v4944
    %v4946 = vsel %vm4942, %v4940, 0.0
    %v4947 = vadd.f32 %v4945, %v4946
    %v4948 = vsel %vm4942, %v4941, 0.0
    %v4949 = vadd.f32 %v4947, %v4948
    %v4950 = vrot.slane %v4949, 4
    %v4951 = vadd.f32 %v4949, %v4950
    %v4952 = vrot.slane %v4951, 2
    %v4953 = vadd.f32 %v4951, %v4952
    %v4954 = vrot.slane %v4953, 1
    %v4955 = vadd.f32 %v4953, %v4954
    %v4956 = vld [vmem:[#allocation16] sm:$0x1]
    %v4957 = vadd.f32 %v4955, %v4956
    %vm4958 = vcmask 57344
    %4959 = vst.msk [vmem:[%s15] sm:$0x1] %vm4958, %v4957
    // Predicated region
    $region105: #{neural_net_forward.1} parent=1 // pred_check
      _
    $region106: #{neural_net_forward.1} parent=1 // pred_check_branch
      %4961 = sbr.rel (0) target = $region108
    $region107: #{neural_net_forward.1} parent=1 // pred_region
      _
    $region108: #{neural_net_forward.1} parent=1 // pred_fallthru
      _
    // Predicated region
    $region109: #{neural_net_forward.1} parent=1 // pred_check
      _
    $region110: #{neural_net_forward.1} parent=1 // pred_check_branch
      %4963 = sbr.rel (0) target = $region112
    $region111: #{neural_net_forward.1} parent=1 // pred_region
      _
    $region112: #{neural_net_forward.1} parent=1 // pred_fallthru
      _
    %4964 = vsyncpa [#allocation4], 1
    %4965 = vsyncpa [#allocation6], 1
    %4966 = vsyncpa [#allocation9], 1
    %4967 = vsyncpa [#allocation12], 1
    %4968 = vsyncpa [#allocation15], 1

</llo_original>
